<compile_context>
chip_gen: v7x
topology: tpu7x:2x2x1
jax: 0.10.0
libtpu: 0.0.40
codegen_flags: <defaults>
</compile_context>

<pallas_src>
import functools
import math

import jax
import jax.numpy as jnp
from jax import lax
from jax.experimental import pallas as pl
from jax.experimental.pallas import tpu as pltpu


EMB_SIZE = 400          # 16 channels * 5 * 5 after the conv embeddings


# ----------------------------- conv kernel ---------------------------------

def _conv_pool_kernel(p_ref, w_ref, b_ref, o_ref):
    """Fused (3-branch Conv2d 3x3 'same' + ReLU + MaxPool 6x6) for one image.

    p_ref: (1, 27, 900) bf16  im2col patches, col = (di*6+dj)*25 + ph*5+pw
    w_ref: (16, 27)     bf16  block-diagonal im2col weight (channel-major rows)
    b_ref: (16, 1)      f32   conv bias
    o_ref: (1, 16, 25)  f32   pooled, channel-major -> flattens to torch order
    """
    c = jnp.dot(w_ref[...], p_ref[0], preferred_element_type=jnp.float32)
    c = jnp.maximum(c + b_ref[...], 0.0)              # bias + ReLU, (16, 900)
    acc = c[:, 0:25]
    for wi in range(1, 36):                           # 36 pool offsets, VPU max
        acc = jnp.maximum(acc, c[:, wi * 25:(wi + 1) * 25])
    o_ref[0] = acc.astype(o_ref.dtype)


def conv_pool(patches, conv_wT, conv_b):
    N = patches.shape[0]
    return pl.pallas_call(
        _conv_pool_kernel,
        out_shape=jax.ShapeDtypeStruct((N, 16, 25), jnp.float32),
        grid=(N,),
        in_specs=[
            pl.BlockSpec((1, 27, 900), lambda n: (n, 0, 0)),
            pl.BlockSpec((16, 27), lambda n: (0, 0)),
            pl.BlockSpec((16, 1), lambda n: (0, 0)),
        ],
        out_specs=pl.BlockSpec((1, 16, 25), lambda n: (n, 0, 0)),
        compiler_params=pltpu.CompilerParams(dimension_semantics=("parallel",)),
    )(patches, conv_wT, conv_b)


# ----------------- fused encoder stack + readout kernel --------------------

def _encoder_readout_kernel(*refs, bs, S, nhead, hdp, scale, eps,
                            num_layers, disable_transformer):
    """num_layers x TransformerEncoderLayer (post-norm, ReLU, eval) + readout.

    refs layout:
      [0]                x        (M, E) f32, M = bs*S
      [1 : 1+12*L]       per layer: wqkv,bqkv,wo,bo,w1,b1,w2,b2,g1,be1,g2,be2
      [.. +4]            ro1_w, ro1_b, ro2_w, ro2_b
      [out]              o_ref    (M, 1) f32
      [scratch]          attn_ref (M, nhead*hdp) f32
    """
    x_ref = refs[0]
    nlr = 12 * num_layers
    layer_refs = [refs[1 + i * 12: 1 + (i + 1) * 12] for i in range(num_layers)]
    ro1_w, ro1_b, ro2_w, ro2_b = refs[1 + nlr: 5 + nlr]
    o_ref = refs[5 + nlr]
    attn_ref = refs[6 + nlr]

    x = x_ref[...]                                   # (M, E) f32
    KV = nhead * hdp

    if not disable_transformer:
        for (wqkv, bqkv, wo, bo, w1, b1, w2, b2,
             g1, be1, g2, be2) in layer_refs:
            # --- self attention (padded head dim -> 128-aligned slices) ----
            xb = x.astype(jnp.bfloat16)
            qkv = jnp.dot(xb, wqkv[...],
                          preferred_element_type=jnp.float32) + bqkv[...]
            for b in range(bs):
                r0 = b * S
                for h in range(nhead):
                    c0 = h * hdp
                    q = qkv[r0:r0 + S, c0:c0 + hdp].astype(jnp.bfloat16)
                    k = qkv[r0:r0 + S, KV + c0:KV + c0 + hdp].astype(jnp.bfloat16)
                    v = qkv[r0:r0 + S, 2 * KV + c0:2 * KV + c0 + hdp].astype(jnp.bfloat16)
                    s = lax.dot_general(q, k, (((1,), (1,)), ((), ())),
                                        preferred_element_type=jnp.float32) * scale
                    m = jnp.max(s, axis=-1, keepdims=True)
                    p = jnp.exp(s - m)
                    p = p / jnp.sum(p, axis=-1, keepdims=True)   # exact softmax
                    oh = jnp.dot(p.astype(jnp.bfloat16), v,
                                 preferred_element_type=jnp.float32)
                    attn_ref[pl.ds(r0, S), pl.ds(c0, hdp)] = oh
            sa = jnp.dot(attn_ref[...].astype(jnp.bfloat16), wo[...],
                         preferred_element_type=jnp.float32) + bo[...]

            # --- residual + LayerNorm 1 (f32) -------------------------------
            y = x + sa
            mu = jnp.mean(y, axis=-1, keepdims=True)
            cy = y - mu
            var = jnp.mean(cy * cy, axis=-1, keepdims=True)
            y1 = cy * lax.rsqrt(var + eps) * g1[...] + be1[...]

            # --- feed forward ----------------------------------------------
            h1 = jnp.dot(y1.astype(jnp.bfloat16), w1[...],
                         preferred_element_type=jnp.float32) + b1[...]
            h1 = jnp.maximum(h1, 0.0)
            h2 = jnp.dot(h1.astype(jnp.bfloat16), w2[...],
                         preferred_element_type=jnp.float32) + b2[...]

            # --- residual + LayerNorm 2 (f32) -------------------------------
            y2 = y1 + h2
            mu2 = jnp.mean(y2, axis=-1, keepdims=True)
            cy2 = y2 - mu2
            var2 = jnp.mean(cy2 * cy2, axis=-1, keepdims=True)
            x = cy2 * lax.rsqrt(var2 + eps) * g2[...] + be2[...]

    # --- fused readout (Linear 400->400 + ReLU) + readout2 (400->1) --------
    h = jnp.dot(x.astype(jnp.bfloat16), ro1_w[...],
                preferred_element_type=jnp.float32) + ro1_b[...]
    h = jnp.maximum(h, 0.0)
    y = jnp.sum(h * ro2_w[...], axis=-1, keepdims=True) + ro2_b[...]
    o_ref[...] = y.astype(o_ref.dtype)


def encoder_readout(x, params, *, bs, S, nhead, disable_transformer):
    M, E = x.shape
    layers = params['layers']
    nl = len(layers)
    hd = E // nhead
    hdp = layers[0]['wqkv'].shape[1] // (3 * nhead)   # padded head dim (128)

    names = ('wqkv', 'bqkv', 'wo', 'bo', 'w1', 'b1', 'w2', 'b2',
             'ln1_g', 'ln1_b', 'ln2_g', 'ln2_b')
    args = [x]
    for p in layers:
        args += [p[n] for n in names]
    args += [params['ro1_w'], params['ro1_b'], params['ro2_w'], params['ro2_b']]

    kern = functools.partial(
        _encoder_readout_kernel, bs=bs, S=S, nhead=nhead, hdp=hdp,
        scale=1.0 / math.sqrt(hd), eps=1e-5, num_layers=nl,
        disable_transformer=disable_transformer)

    in_specs = [pl.BlockSpec(a.shape, lambda i: (0, 0)) for a in args]

    return pl.pallas_call(
        kern,
        out_shape=jax.ShapeDtypeStruct((M, 1), jnp.float32),
        grid=(1,),
        in_specs=in_specs,
        out_specs=pl.BlockSpec((M, 1), lambda i: (0, 0)),
        scratch_shapes=[pltpu.VMEM((M, nhead * hdp), jnp.float32)],
        compiler_params=pltpu.CompilerParams(dimension_semantics=("arbitrary",)),
    )(*args)


# -------------------------- params (pre-packed) ----------------------------

def init_params(key, *, nhead, dim_feedforward, num_layers, add_token):
    E = EMB_SIZE
    hd = E // nhead
    hdp = ((hd + 127) // 128) * 128                   # pad head dim to 128 lanes
    s = 0.05
    keys = iter(jax.random.split(key, 16 + 16 * num_layers))

    def rnd(shape, scale=s, dtype=jnp.float32):
        return (jax.random.normal(next(keys), shape) * scale).astype(dtype)

    # Conv2d(1->3/5/8, 3x3) weights packed into a block-diagonal, channel-major
    # im2col weight of shape (16, 27); row = out channel, col = cin*9 + a*3+b.
    w1, w2, w3 = rnd((3, 9)), rnd((5, 9)), rnd((8, 9))
    conv_wT = jnp.zeros((16, 27), jnp.float32)
    conv_wT = conv_wT.at[0:3, 0:9].set(w1)
    conv_wT = conv_wT.at[3:8, 9:18].set(w2)
    conv_wT = conv_wT.at[8:16, 18:27].set(w3)
    conv_b = rnd((16, 1))

    # Per-head lane masks: real head dims live in lanes [h*128, h*128+hd).
    head_mask = jnp.zeros((hdp,), jnp.float32).at[:hd].set(1.0)
    o_mask = jnp.tile(head_mask, nhead)               # (nhead*hdp,)
    qkv_mask = jnp.tile(head_mask, 3 * nhead)         # (3*nhead*hdp,)

    layers = []
    for _ in range(num_layers):
        layers.append(dict(
            wqkv=(rnd((E, 3 * nhead * hdp)) * qkv_mask).astype(jnp.bfloat16),
            bqkv=rnd((1, 3 * nhead * hdp)) * qkv_mask,
            wo=(rnd((nhead * hdp, E)) * o_mask[:, None]).astype(jnp.bfloat16),
            bo=rnd((1, E)),
            w1=rnd((E, dim_feedforward), dtype=jnp.bfloat16),
            b1=rnd((1, dim_feedforward)),
            w2=rnd((dim_feedforward, E), dtype=jnp.bfloat16),
            b2=rnd((1, E)),
            ln1_g=jnp.ones((1, E), jnp.float32),
            ln1_b=jnp.zeros((1, E), jnp.float32),
            ln2_g=jnp.ones((1, E), jnp.float32),
            ln2_b=jnp.zeros((1, E), jnp.float32),
        ))

    params = dict(
        conv_wT=conv_wT.astype(jnp.bfloat16), conv_b=conv_b, layers=layers,
        ro1_w=rnd((E, 400), dtype=jnp.bfloat16), ro1_b=rnd((1, 400)),
        ro2_w=rnd((1, 400)), ro2_b=rnd((1, 1)),       # readout2 as row vector
    )
    if add_token:
        params['token'] = rnd((1, 1, E), 1.0)
    # positional_encoding / conv1d / readout3 are never used in the reference
    # forward(), so their parameters are not materialized here.
    return params


# -------------------------- forward (jitted glue) ---------------------------

def _forward(params, input_x, *, nhead, add_token, disable_transformer):
    bs, src_len = input_x.shape[0], input_x.shape[1]
    N = bs * src_len
    imgs = input_x.reshape(N, 3, 30, 30).astype(jnp.float32)

    # im2col for the 3x3 'same' conv, in pool-friendly single-matmul layout:
    # slab[n, cin*9 + a*3+b, (di*6+dj)*25 + ph*5+pw] = xpad[n,cin,6ph+di+a,6pw+dj+b]
    # TODO(synk): move this im2col fully in-kernel (static ref slices of the
    # padded image) to drop the (N,27,900) HBM materialization entirely.
    xpad = jnp.pad(imgs, ((0, 0), (0, 0), (1, 1), (1, 1)))
    shifts = [xpad[:, :, a:a + 30, b:b + 30] for a in range(3) for b in range(3)]
    pat = jnp.stack(shifts, axis=2)                   # (N,3,9,30,30)
    pat = pat.reshape(N, 3, 9, 5, 6, 5, 6)            # [n,cin,k9,ph,di,pw,dj]
    pat = pat.transpose(0, 1, 2, 4, 6, 3, 5)          # [n,cin,k9,di,dj,ph,pw]
    pat = pat.reshape(N, 27, 900).astype(jnp.bfloat16)

    # Fused conv + ReLU + MaxPool(6,6); output already channel-major.
    pooled = conv_pool(pat, params['conv_wT'], params['conv_b'])   # (N,16,25)
    x = pooled.reshape(bs, src_len, EMB_SIZE)         # matches torch flatten

    if add_token:
        token = jnp.broadcast_to(params['token'], (bs, 1, EMB_SIZE))
        x = jnp.concatenate([token, x], axis=1)

    S = x.shape[1]
    xm = x.reshape(bs * S, EMB_SIZE)

    # Single fused pallas_call: all encoder layers + readout head.
    y = encoder_readout(xm, params, bs=bs, S=S, nhead=nhead,
                        disable_transformer=disable_transformer)   # (bs*S, 1)

    if add_token:
        return y.reshape(bs, S)[:, 0]                 # token row -> (bs,)
    return y.reshape(bs, src_len)                     # -> (bs, src_len)


multitask_transformer_forward = jax.jit(
    _forward, static_argnames=("nhead", "add_token", "disable_transformer"))


# --------------------------------- main -----------------------------------

if __name__ == "__main__":
    key = jax.random.PRNGKey(0)
    k_params, k_input = jax.random.split(key)

    NHEAD = 4
    DIM_FF = 64
    NUM_LAYERS = 2
    ADD_TOKEN = True
    DISABLE_TRANSFORMER = False

    params = init_params(k_params, nhead=NHEAD, dim_feedforward=DIM_FF,
                         num_layers=NUM_LAYERS, add_token=ADD_TOKEN)

    bs, src_len = 2, 4
    input_x = jax.random.normal(k_input, (bs, src_len, 3, 30, 30), dtype=jnp.float32)

    out = multitask_transformer_forward(
        params, input_x, nhead=NHEAD,
        add_token=ADD_TOKEN, disable_transformer=DISABLE_TRANSFORMER)
    out = jax.block_until_ready(out)
    assert out.shape == (bs,), out.shape
    assert bool(jnp.all(jnp.isfinite(out)))
    print("KERNEL_OK")
</pallas_src>

<mosaic_0001>
module attributes {stable_mosaic.version = 11 : i64} {
  func.func @_conv_pool_kernel(%arg0: i32, %arg1: memref<1x27x900xbf16, #tpu.memory_space<vmem>>, %arg2: memref<16x27xbf16, #tpu.memory_space<vmem>>, %arg3: memref<16x1xf32, #tpu.memory_space<vmem>>, %arg4: memref<1x16x25xf32, #tpu.memory_space<vmem>>) attributes {dimension_semantics = [#tpu.dimension_semantics<parallel>], iteration_bounds = array<i64: 8>, scalar_prefetch = 0 : i64, scratch_operands = 0 : i64, tpu.core_type = #tpu.core_type<tc>, window_params = [{transform_indices = @transform_0, window_bounds = array<i64: 1, 27, 900>}, {pipeline_mode = #tpu.pipeline_mode<synchronous>, transform_indices = @transform_1, window_bounds = array<i64: 16, 27>}, {pipeline_mode = #tpu.pipeline_mode<synchronous>, transform_indices = @transform_2, window_bounds = array<i64: 16, 1>}, {transform_indices = @transform_3, window_bounds = array<i64: 1, 16, 25>}]} {
    %c0 = arith.constant 0 : index
    %c0_0 = arith.constant 0 : index
    %0 = vector.load %arg2[%c0, %c0_0] : memref<16x27xbf16, #tpu.memory_space<vmem>>, vector<16x27xbf16>
    %c0_1 = arith.constant 0 : index
    %c0_2 = arith.constant 0 : index
    %c0_3 = arith.constant 0 : index
    %1 = vector.load %arg1[%c0_1, %c0_2, %c0_3] : memref<1x27x900xbf16, #tpu.memory_space<vmem>>, vector<1x27x900xbf16>
    %2 = vector.shape_cast %1 : vector<1x27x900xbf16> to vector<27x900xbf16>
    %cst = arith.constant dense<0.000000e+00> : vector<16x900xf32>
    %3 = tpu.matmul %0, %2, %cst {dimension_numbers = #tpu.dot_dimension_numbers<[1], [0], [0], [1], [0, 0, 1, 1], [], []>} : vector<16x27xbf16>, vector<27x900xbf16>, vector<16x900xf32> -> vector<16x900xf32>
    %c0_4 = arith.constant 0 : index
    %c0_5 = arith.constant 0 : index
    %4 = vector.load %arg3[%c0_4, %c0_5] : memref<16x1xf32, #tpu.memory_space<vmem>>, vector<16x1xf32>
    %5 = vector.broadcast %4 : vector<16x1xf32> to vector<16x900xf32>
    %6 = arith.addf %3, %5 : vector<16x900xf32>
    %cst_6 = arith.constant 0.000000e+00 : f32
    %7 = vector.broadcast %cst_6 : f32 to vector<16x900xf32>
    %8 = arith.maximumf %6, %7 : vector<16x900xf32>
    %9 = vector.extract_strided_slice %8 {offsets = [0, 0], sizes = [16, 25], strides = [1, 1]} : vector<16x900xf32> to vector<16x25xf32>
    %10 = vector.extract_strided_slice %8 {offsets = [0, 25], sizes = [16, 25], strides = [1, 1]} : vector<16x900xf32> to vector<16x25xf32>
    %11 = arith.maximumf %9, %10 : vector<16x25xf32>
    %12 = vector.extract_strided_slice %8 {offsets = [0, 50], sizes = [16, 25], strides = [1, 1]} : vector<16x900xf32> to vector<16x25xf32>
    %13 = arith.maximumf %11, %12 : vector<16x25xf32>
    %14 = vector.extract_strided_slice %8 {offsets = [0, 75], sizes = [16, 25], strides = [1, 1]} : vector<16x900xf32> to vector<16x25xf32>
    %15 = arith.maximumf %13, %14 : vector<16x25xf32>
    %16 = vector.extract_strided_slice %8 {offsets = [0, 100], sizes = [16, 25], strides = [1, 1]} : vector<16x900xf32> to vector<16x25xf32>
    %17 = arith.maximumf %15, %16 : vector<16x25xf32>
    %18 = vector.extract_strided_slice %8 {offsets = [0, 125], sizes = [16, 25], strides = [1, 1]} : vector<16x900xf32> to vector<16x25xf32>
    %19 = arith.maximumf %17, %18 : vector<16x25xf32>
    %20 = vector.extract_strided_slice %8 {offsets = [0, 150], sizes = [16, 25], strides = [1, 1]} : vector<16x900xf32> to vector<16x25xf32>
    %21 = arith.maximumf %19, %20 : vector<16x25xf32>
    %22 = vector.extract_strided_slice %8 {offsets = [0, 175], sizes = [16, 25], strides = [1, 1]} : vector<16x900xf32> to vector<16x25xf32>
    %23 = arith.maximumf %21, %22 : vector<16x25xf32>
    %24 = vector.extract_strided_slice %8 {offsets = [0, 200], sizes = [16, 25], strides = [1, 1]} : vector<16x900xf32> to vector<16x25xf32>
    %25 = arith.maximumf %23, %24 : vector<16x25xf32>
    %26 = vector.extract_strided_slice %8 {offsets = [0, 225], sizes = [16, 25], strides = [1, 1]} : vector<16x900xf32> to vector<16x25xf32>
    %27 = arith.maximumf %25, %26 : vector<16x25xf32>
    %28 = vector.extract_strided_slice %8 {offsets = [0, 250], sizes = [16, 25], strides = [1, 1]} : vector<16x900xf32> to vector<16x25xf32>
    %29 = arith.maximumf %27, %28 : vector<16x25xf32>
    %30 = vector.extract_strided_slice %8 {offsets = [0, 275], sizes = [16, 25], strides = [1, 1]} : vector<16x900xf32> to vector<16x25xf32>
    %31 = arith.maximumf %29, %30 : vector<16x25xf32>
    %32 = vector.extract_strided_slice %8 {offsets = [0, 300], sizes = [16, 25], strides = [1, 1]} : vector<16x900xf32> to vector<16x25xf32>
    %33 = arith.maximumf %31, %32 : vector<16x25xf32>
    %34 = vector.extract_strided_slice %8 {offsets = [0, 325], sizes = [16, 25], strides = [1, 1]} : vector<16x900xf32> to vector<16x25xf32>
    %35 = arith.maximumf %33, %34 : vector<16x25xf32>
    %36 = vector.extract_strided_slice %8 {offsets = [0, 350], sizes = [16, 25], strides = [1, 1]} : vector<16x900xf32> to vector<16x25xf32>
    %37 = arith.maximumf %35, %36 : vector<16x25xf32>
    %38 = vector.extract_strided_slice %8 {offsets = [0, 375], sizes = [16, 25], strides = [1, 1]} : vector<16x900xf32> to vector<16x25xf32>
    %39 = arith.maximumf %37, %38 : vector<16x25xf32>
    %40 = vector.extract_strided_slice %8 {offsets = [0, 400], sizes = [16, 25], strides = [1, 1]} : vector<16x900xf32> to vector<16x25xf32>
    %41 = arith.maximumf %39, %40 : vector<16x25xf32>
    %42 = vector.extract_strided_slice %8 {offsets = [0, 425], sizes = [16, 25], strides = [1, 1]} : vector<16x900xf32> to vector<16x25xf32>
    %43 = arith.maximumf %41, %42 : vector<16x25xf32>
    %44 = vector.extract_strided_slice %8 {offsets = [0, 450], sizes = [16, 25], strides = [1, 1]} : vector<16x900xf32> to vector<16x25xf32>
    %45 = arith.maximumf %43, %44 : vector<16x25xf32>
    %46 = vector.extract_strided_slice %8 {offsets = [0, 475], sizes = [16, 25], strides = [1, 1]} : vector<16x900xf32> to vector<16x25xf32>
    %47 = arith.maximumf %45, %46 : vector<16x25xf32>
    %48 = vector.extract_strided_slice %8 {offsets = [0, 500], sizes = [16, 25], strides = [1, 1]} : vector<16x900xf32> to vector<16x25xf32>
    %49 = arith.maximumf %47, %48 : vector<16x25xf32>
    %50 = vector.extract_strided_slice %8 {offsets = [0, 525], sizes = [16, 25], strides = [1, 1]} : vector<16x900xf32> to vector<16x25xf32>
    %51 = arith.maximumf %49, %50 : vector<16x25xf32>
    %52 = vector.extract_strided_slice %8 {offsets = [0, 550], sizes = [16, 25], strides = [1, 1]} : vector<16x900xf32> to vector<16x25xf32>
    %53 = arith.maximumf %51, %52 : vector<16x25xf32>
    %54 = vector.extract_strided_slice %8 {offsets = [0, 575], sizes = [16, 25], strides = [1, 1]} : vector<16x900xf32> to vector<16x25xf32>
    %55 = arith.maximumf %53, %54 : vector<16x25xf32>
    %56 = vector.extract_strided_slice %8 {offsets = [0, 600], sizes = [16, 25], strides = [1, 1]} : vector<16x900xf32> to vector<16x25xf32>
    %57 = arith.maximumf %55, %56 : vector<16x25xf32>
    %58 = vector.extract_strided_slice %8 {offsets = [0, 625], sizes = [16, 25], strides = [1, 1]} : vector<16x900xf32> to vector<16x25xf32>
    %59 = arith.maximumf %57, %58 : vector<16x25xf32>
    %60 = vector.extract_strided_slice %8 {offsets = [0, 650], sizes = [16, 25], strides = [1, 1]} : vector<16x900xf32> to vector<16x25xf32>
    %61 = arith.maximumf %59, %60 : vector<16x25xf32>
    %62 = vector.extract_strided_slice %8 {offsets = [0, 675], sizes = [16, 25], strides = [1, 1]} : vector<16x900xf32> to vector<16x25xf32>
    %63 = arith.maximumf %61, %62 : vector<16x25xf32>
    %64 = vector.extract_strided_slice %8 {offsets = [0, 700], sizes = [16, 25], strides = [1, 1]} : vector<16x900xf32> to vector<16x25xf32>
    %65 = arith.maximumf %63, %64 : vector<16x25xf32>
    %66 = vector.extract_strided_slice %8 {offsets = [0, 725], sizes = [16, 25], strides = [1, 1]} : vector<16x900xf32> to vector<16x25xf32>
    %67 = arith.maximumf %65, %66 : vector<16x25xf32>
    %68 = vector.extract_strided_slice %8 {offsets = [0, 750], sizes = [16, 25], strides = [1, 1]} : vector<16x900xf32> to vector<16x25xf32>
    %69 = arith.maximumf %67, %68 : vector<16x25xf32>
    %70 = vector.extract_strided_slice %8 {offsets = [0, 775], sizes = [16, 25], strides = [1, 1]} : vector<16x900xf32> to vector<16x25xf32>
    %71 = arith.maximumf %69, %70 : vector<16x25xf32>
    %72 = vector.extract_strided_slice %8 {offsets = [0, 800], sizes = [16, 25], strides = [1, 1]} : vector<16x900xf32> to vector<16x25xf32>
    %73 = arith.maximumf %71, %72 : vector<16x25xf32>
    %74 = vector.extract_strided_slice %8 {offsets = [0, 825], sizes = [16, 25], strides = [1, 1]} : vector<16x900xf32> to vector<16x25xf32>
    %75 = arith.maximumf %73, %74 : vector<16x25xf32>
    %76 = vector.extract_strided_slice %8 {offsets = [0, 850], sizes = [16, 25], strides = [1, 1]} : vector<16x900xf32> to vector<16x25xf32>
    %77 = arith.maximumf %75, %76 : vector<16x25xf32>
    %78 = vector.extract_strided_slice %8 {offsets = [0, 875], sizes = [16, 25], strides = [1, 1]} : vector<16x900xf32> to vector<16x25xf32>
    %79 = arith.maximumf %77, %78 : vector<16x25xf32>
    %c0_7 = arith.constant 0 : index
    %c0_8 = arith.constant 0 : index
    %c0_9 = arith.constant 0 : index
    %80 = vector.load %arg4[%c0_7, %c0_8, %c0_9] : memref<1x16x25xf32, #tpu.memory_space<vmem>>, vector<1x16x25xf32>
    %81 = vector.shape_cast %80 : vector<1x16x25xf32> to vector<16x25xf32>
    %82 = vector.shape_cast %79 : vector<16x25xf32> to vector<1x16x25xf32>
    tpu.vector_store %arg4[%c0_7, %c0_8, %c0_9], %82 {strides = array<i32>} : memref<1x16x25xf32, #tpu.memory_space<vmem>>, vector<1x16x25xf32>,
    return
  }
  func.func @transform_0(%arg0: i32) -> (i32, i32, i32) {
    %c0_i32 = arith.constant 0 : i32
    %c0_i32_0 = arith.constant 0 : i32
    %c0_i32_1 = arith.constant 0 : i32
    return %arg0, %c0_i32, %c0_i32_0 : i32, i32, i32
  }
  func.func @transform_1(%arg0: i32) -> (i32, i32) {
    %c0_i32 = arith.constant 0 : i32
    %c0_i32_0 = arith.constant 0 : i32
    %c0_i32_1 = arith.constant 0 : i32
    return %c0_i32, %c0_i32_0 : i32, i32
  }
  func.func @transform_2(%arg0: i32) -> (i32, i32) {
    %c0_i32 = arith.constant 0 : i32
    %c0_i32_0 = arith.constant 0 : i32
    %c0_i32_1 = arith.constant 0 : i32
    return %c0_i32, %c0_i32_0 : i32, i32
  }
  func.func @transform_3(%arg0: i32) -> (i32, i32, i32) {
    %c0_i32 = arith.constant 0 : i32
    %c0_i32_0 = arith.constant 0 : i32
    %c0_i32_1 = arith.constant 0 : i32
    return %arg0, %c0_i32, %c0_i32_0 : i32, i32, i32
  }
}

module attributes {stable_mosaic.version = 11 : i64} {
  func.func @_encoder_readout_kernel(%arg0: i32, %arg1: memref<10x400xf32, #tpu.memory_space<vmem>>, %arg2: memref<400x1536xbf16, #tpu.memory_space<vmem>>, %arg3: memref<1x1536xf32, #tpu.memory_space<vmem>>, %arg4: memref<512x400xbf16, #tpu.memory_space<vmem>>, %arg5: memref<1x400xf32, #tpu.memory_space<vmem>>, %arg6: memref<400x64xbf16, #tpu.memory_space<vmem>>, %arg7: memref<1x64xf32, #tpu.memory_space<vmem>>, %arg8: memref<64x400xbf16, #tpu.memory_space<vmem>>, %arg9: memref<1x400xf32, #tpu.memory_space<vmem>>, %arg10: memref<1x400xf32, #tpu.memory_space<vmem>>, %arg11: memref<1x400xf32, #tpu.memory_space<vmem>>, %arg12: memref<1x400xf32, #tpu.memory_space<vmem>>, %arg13: memref<1x400xf32, #tpu.memory_space<vmem>>, %arg14: memref<400x1536xbf16, #tpu.memory_space<vmem>>, %arg15: memref<1x1536xf32, #tpu.memory_space<vmem>>, %arg16: memref<512x400xbf16, #tpu.memory_space<vmem>>, %arg17: memref<1x400xf32, #tpu.memory_space<vmem>>, %arg18: memref<400x64xbf16, #tpu.memory_space<vmem>>, %arg19: memref<1x64xf32, #tpu.memory_space<vmem>>, %arg20: memref<64x400xbf16, #tpu.memory_space<vmem>>, %arg21: memref<1x400xf32, #tpu.memory_space<vmem>>, %arg22: memref<1x400xf32, #tpu.memory_space<vmem>>, %arg23: memref<1x400xf32, #tpu.memory_space<vmem>>, %arg24: memref<1x400xf32, #tpu.memory_space<vmem>>, %arg25: memref<1x400xf32, #tpu.memory_space<vmem>>, %arg26: memref<400x400xbf16, #tpu.memory_space<vmem>>, %arg27: memref<1x400xf32, #tpu.memory_space<vmem>>, %arg28: memref<1x400xf32, #tpu.memory_space<vmem>>, %arg29: memref<1x1xf32, #tpu.memory_space<vmem>>, %arg30: memref<10x1xf32, #tpu.memory_space<vmem>>, %arg31: memref<10x512xf32, #tpu.memory_space<vmem>>) attributes {dimension_semantics = [#tpu.dimension_semantics<arbitrary>], iteration_bounds = array<i64: 1>, scalar_prefetch = 0 : i64, scratch_operands = 1 : i64, tpu.core_type = #tpu.core_type<tc>, window_params = [{pipeline_mode = #tpu.pipeline_mode<synchronous>, transform_indices = @transform_0, window_bounds = array<i64: 10, 400>}, {pipeline_mode = #tpu.pipeline_mode<synchronous>, transform_indices = @transform_1, window_bounds = array<i64: 400, 1536>}, {pipeline_mode = #tpu.pipeline_mode<synchronous>, transform_indices = @transform_2, window_bounds = array<i64: 1, 1536>}, {pipeline_mode = #tpu.pipeline_mode<synchronous>, transform_indices = @transform_3, window_bounds = array<i64: 512, 400>}, {pipeline_mode = #tpu.pipeline_mode<synchronous>, transform_indices = @transform_4, window_bounds = array<i64: 1, 400>}, {pipeline_mode = #tpu.pipeline_mode<synchronous>, transform_indices = @transform_5, window_bounds = array<i64: 400, 64>}, {pipeline_mode = #tpu.pipeline_mode<synchronous>, transform_indices = @transform_6, window_bounds = array<i64: 1, 64>}, {pipeline_mode = #tpu.pipeline_mode<synchronous>, transform_indices = @transform_7, window_bounds = array<i64: 64, 400>}, {pipeline_mode = #tpu.pipeline_mode<synchronous>, transform_indices = @transform_8, window_bounds = array<i64: 1, 400>}, {pipeline_mode = #tpu.pipeline_mode<synchronous>, transform_indices = @transform_9, window_bounds = array<i64: 1, 400>}, {pipeline_mode = #tpu.pipeline_mode<synchronous>, transform_indices = @transform_10, window_bounds = array<i64: 1, 400>}, {pipeline_mode = #tpu.pipeline_mode<synchronous>, transform_indices = @transform_11, window_bounds = array<i64: 1, 400>}, {pipeline_mode = #tpu.pipeline_mode<synchronous>, transform_indices = @transform_12, window_bounds = array<i64: 1, 400>}, {pipeline_mode = #tpu.pipeline_mode<synchronous>, transform_indices = @transform_13, window_bounds = array<i64: 400, 1536>}, {pipeline_mode = #tpu.pipeline_mode<synchronous>, transform_indices = @transform_14, window_bounds = array<i64: 1, 1536>}, {pipeline_mode = #tpu.pipeline_mode<synchronous>, transform_indices = @transform_15, window_bounds = array<i64: 512, 400>}, {pipeline_mode = #tpu.pipeline_mode<synchronous>, transform_indices = @transform_16, window_bounds = array<i64: 1, 400>}, {pipeline_mode = #tpu.pipeline_mode<synchronous>, transform_indices = @transform_17, window_bounds = array<i64: 400, 64>}, {pipeline_mode = #tpu.pipeline_mode<synchronous>, transform_indices = @transform_18, window_bounds = array<i64: 1, 64>}, {pipeline_mode = #tpu.pipeline_mode<synchronous>, transform_indices = @transform_19, window_bounds = array<i64: 64, 400>}, {pipeline_mode = #tpu.pipeline_mode<synchronous>, transform_indices = @transform_20, window_bounds = array<i64: 1, 400>}, {pipeline_mode = #tpu.pipeline_mode<synchronous>, transform_indices = @transform_21, window_bounds = array<i64: 1, 400>}, {pipeline_mode = #tpu.pipeline_mode<synchronous>, transform_indices = @transform_22, window_bounds = array<i64: 1, 400>}, {pipeline_mode = #tpu.pipeline_mode<synchronous>, transform_indices = @transform_23, window_bounds = array<i64: 1, 400>}, {pipeline_mode = #tpu.pipeline_mode<synchronous>, transform_indices = @transform_24, window_bounds = array<i64: 1, 400>}, {pipeline_mode = #tpu.pipeline_mode<synchronous>, transform_indices = @transform_25, window_bounds = array<i64: 400, 400>}, {pipeline_mode = #tpu.pipeline_mode<synchronous>, transform_indices = @transform_26, window_bounds = array<i64: 1, 400>}, {pipeline_mode = #tpu.pipeline_mode<synchronous>, transform_indices = @transform_27, window_bounds = array<i64: 1, 400>}, {pipeline_mode = #tpu.pipeline_mode<synchronous>, transform_indices = @transform_28, window_bounds = array<i64: 1, 1>}, {pipeline_mode = #tpu.pipeline_mode<synchronous>, transform_indices = @transform_29, window_bounds = array<i64: 10, 1>}]} {
    %c0 = arith.constant 0 : index
    %c0_0 = arith.constant 0 : index
    %0 = vector.load %arg1[%c0, %c0_0] : memref<10x400xf32, #tpu.memory_space<vmem>>, vector<10x400xf32>
    %1 = arith.truncf %0 : vector<10x400xf32> to vector<10x400xbf16>
    %c0_1 = arith.constant 0 : index
    %c0_2 = arith.constant 0 : index
    %2 = vector.load %arg2[%c0_1, %c0_2] : memref<400x1536xbf16, #tpu.memory_space<vmem>>, vector<400x1536xbf16>
    %cst = arith.constant dense<0.000000e+00> : vector<10x1536xf32>
    %3 = tpu.matmul %1, %2, %cst {dimension_numbers = #tpu.dot_dimension_numbers<[1], [0], [0], [1], [0, 0, 1, 1], [], []>} : vector<10x400xbf16>, vector<400x1536xbf16>, vector<10x1536xf32> -> vector<10x1536xf32>
    %c0_3 = arith.constant 0 : index
    %c0_4 = arith.constant 0 : index
    %4 = vector.load %arg3[%c0_3, %c0_4] : memref<1x1536xf32, #tpu.memory_space<vmem>>, vector<1x1536xf32>
    %5 = vector.broadcast %4 : vector<1x1536xf32> to vector<10x1536xf32>
    %6 = arith.addf %3, %5 : vector<10x1536xf32>
    %7 = vector.extract_strided_slice %6 {offsets = [0, 0], sizes = [5, 128], strides = [1, 1]} : vector<10x1536xf32> to vector<5x128xf32>
    %8 = arith.truncf %7 : vector<5x128xf32> to vector<5x128xbf16>
    %9 = vector.extract_strided_slice %6 {offsets = [0, 512], sizes = [5, 128], strides = [1, 1]} : vector<10x1536xf32> to vector<5x128xf32>
    %10 = arith.truncf %9 : vector<5x128xf32> to vector<5x128xbf16>
    %11 = vector.extract_strided_slice %6 {offsets = [0, 1024], sizes = [5, 128], strides = [1, 1]} : vector<10x1536xf32> to vector<5x128xf32>
    %12 = arith.truncf %11 : vector<5x128xf32> to vector<5x128xbf16>
    %cst_5 = arith.constant dense<0.000000e+00> : vector<5x5xf32>
    %13 = tpu.matmul %8, %10, %cst_5 {dimension_numbers = #tpu.dot_dimension_numbers<[1], [1], [0], [0], [0, 0, 1, 0], [], []>} : vector<5x128xbf16>, vector<5x128xbf16>, vector<5x5xf32> -> vector<5x5xf32>
    %cst_6 = arith.constant 1.000000e-01 : f32
    %14 = vector.broadcast %cst_6 : f32 to vector<5x5xf32>
    %15 = arith.mulf %13, %14 : vector<5x5xf32>
    %cst_7 = arith.constant dense<0xFF800000> : vector<5xf32>
    %16 = vector.multi_reduction <maximumf>, %15, %cst_7 [1] : vector<5x5xf32> to vector<5xf32>
    %17 = vector.shape_cast %16 : vector<5xf32> to vector<5x1xf32>
    %18 = vector.broadcast %17 : vector<5x1xf32> to vector<5x5xf32>
    %19 = arith.subf %15, %18 : vector<5x5xf32>
    %20 = math.exp %19 : vector<5x5xf32>
    %cst_8 = arith.constant dense<0.000000e+00> : vector<5xf32>
    %21 = vector.multi_reduction <add>, %20, %cst_8 [1] : vector<5x5xf32> to vector<5xf32>
    %22 = vector.shape_cast %21 : vector<5xf32> to vector<5x1xf32>
    %23 = vector.broadcast %22 : vector<5x1xf32> to vector<5x5xf32>
    %24 = arith.divf %20, %23 : vector<5x5xf32>
    %25 = arith.truncf %24 : vector<5x5xf32> to vector<5x5xbf16>
    %cst_9 = arith.constant dense<0.000000e+00> : vector<5x128xf32>
    %26 = tpu.matmul %25, %12, %cst_9 {dimension_numbers = #tpu.dot_dimension_numbers<[1], [0], [0], [1], [0, 0, 1, 1], [], []>} : vector<5x5xbf16>, vector<5x128xbf16>, vector<5x128xf32> -> vector<5x128xf32>
    %c0_10 = arith.constant 0 : index
    %c0_11 = arith.constant 0 : index
    %27 = vector.load %arg31[%c0_10, %c0_11] : memref<10x512xf32, #tpu.memory_space<vmem>>, vector<5x128xf32>
    tpu.vector_store %arg31[%c0_10, %c0_11], %26 {strides = array<i32>} : memref<10x512xf32, #tpu.memory_space<vmem>>, vector<5x128xf32>,
    %28 = vector.extract_strided_slice %6 {offsets = [0, 128], sizes = [5, 128], strides = [1, 1]} : vector<10x1536xf32> to vector<5x128xf32>
    %29 = arith.truncf %28 : vector<5x128xf32> to vector<5x128xbf16>
    %30 = vector.extract_strided_slice %6 {offsets = [0, 640], sizes = [5, 128], strides = [1, 1]} : vector<10x1536xf32> to vector<5x128xf32>
    %31 = arith.truncf %30 : vector<5x128xf32> to vector<5x128xbf16>
    %32 = vector.extract_strided_slice %6 {offsets = [0, 1152], sizes = [5, 128], strides = [1, 1]} : vector<10x1536xf32> to vector<5x128xf32>
    %33 = arith.truncf %32 : vector<5x128xf32> to vector<5x128xbf16>
    %cst_12 = arith.constant dense<0.000000e+00> : vector<5x5xf32>
    %34 = tpu.matmul %29, %31, %cst_12 {dimension_numbers = #tpu.dot_dimension_numbers<[1], [1], [0], [0], [0, 0, 1, 0], [], []>} : vector<5x128xbf16>, vector<5x128xbf16>, vector<5x5xf32> -> vector<5x5xf32>
    %cst_13 = arith.constant 1.000000e-01 : f32
    %35 = vector.broadcast %cst_13 : f32 to vector<5x5xf32>
    %36 = arith.mulf %34, %35 : vector<5x5xf32>
    %cst_14 = arith.constant dense<0xFF800000> : vector<5xf32>
    %37 = vector.multi_reduction <maximumf>, %36, %cst_14 [1] : vector<5x5xf32> to vector<5xf32>
    %38 = vector.shape_cast %37 : vector<5xf32> to vector<5x1xf32>
    %39 = vector.broadcast %38 : vector<5x1xf32> to vector<5x5xf32>
    %40 = arith.subf %36, %39 : vector<5x5xf32>
    %41 = math.exp %40 : vector<5x5xf32>
    %cst_15 = arith.constant dense<0.000000e+00> : vector<5xf32>
    %42 = vector.multi_reduction <add>, %41, %cst_15 [1] : vector<5x5xf32> to vector<5xf32>
    %43 = vector.shape_cast %42 : vector<5xf32> to vector<5x1xf32>
    %44 = vector.broadcast %43 : vector<5x1xf32> to vector<5x5xf32>
    %45 = arith.divf %41, %44 : vector<5x5xf32>
    %46 = arith.truncf %45 : vector<5x5xf32> to vector<5x5xbf16>
    %cst_16 = arith.constant dense<0.000000e+00> : vector<5x128xf32>
    %47 = tpu.matmul %46, %33, %cst_16 {dimension_numbers = #tpu.dot_dimension_numbers<[1], [0], [0], [1], [0, 0, 1, 1], [], []>} : vector<5x5xbf16>, vector<5x128xbf16>, vector<5x128xf32> -> vector<5x128xf32>
    %c0_17 = arith.constant 0 : index
    %c128 = arith.constant 128 : index
    %48 = vector.load %arg31[%c0_17, %c128] : memref<10x512xf32, #tpu.memory_space<vmem>>, vector<5x128xf32>
    tpu.vector_store %arg31[%c0_17, %c128], %47 {strides = array<i32>} : memref<10x512xf32, #tpu.memory_space<vmem>>, vector<5x128xf32>,
    %49 = vector.extract_strided_slice %6 {offsets = [0, 256], sizes = [5, 128], strides = [1, 1]} : vector<10x1536xf32> to vector<5x128xf32>
    %50 = arith.truncf %49 : vector<5x128xf32> to vector<5x128xbf16>
    %51 = vector.extract_strided_slice %6 {offsets = [0, 768], sizes = [5, 128], strides = [1, 1]} : vector<10x1536xf32> to vector<5x128xf32>
    %52 = arith.truncf %51 : vector<5x128xf32> to vector<5x128xbf16>
    %53 = vector.extract_strided_slice %6 {offsets = [0, 1280], sizes = [5, 128], strides = [1, 1]} : vector<10x1536xf32> to vector<5x128xf32>
    %54 = arith.truncf %53 : vector<5x128xf32> to vector<5x128xbf16>
    %cst_18 = arith.constant dense<0.000000e+00> : vector<5x5xf32>
    %55 = tpu.matmul %50, %52, %cst_18 {dimension_numbers = #tpu.dot_dimension_numbers<[1], [1], [0], [0], [0, 0, 1, 0], [], []>} : vector<5x128xbf16>, vector<5x128xbf16>, vector<5x5xf32> -> vector<5x5xf32>
    %cst_19 = arith.constant 1.000000e-01 : f32
    %56 = vector.broadcast %cst_19 : f32 to vector<5x5xf32>
    %57 = arith.mulf %55, %56 : vector<5x5xf32>
    %cst_20 = arith.constant dense<0xFF800000> : vector<5xf32>
    %58 = vector.multi_reduction <maximumf>, %57, %cst_20 [1] : vector<5x5xf32> to vector<5xf32>
    %59 = vector.shape_cast %58 : vector<5xf32> to vector<5x1xf32>
    %60 = vector.broadcast %59 : vector<5x1xf32> to vector<5x5xf32>
    %61 = arith.subf %57, %60 : vector<5x5xf32>
    %62 = math.exp %61 : vector<5x5xf32>
    %cst_21 = arith.constant dense<0.000000e+00> : vector<5xf32>
    %63 = vector.multi_reduction <add>, %62, %cst_21 [1] : vector<5x5xf32> to vector<5xf32>
    %64 = vector.shape_cast %63 : vector<5xf32> to vector<5x1xf32>
    %65 = vector.broadcast %64 : vector<5x1xf32> to vector<5x5xf32>
    %66 = arith.divf %62, %65 : vector<5x5xf32>
    %67 = arith.truncf %66 : vector<5x5xf32> to vector<5x5xbf16>
    %cst_22 = arith.constant dense<0.000000e+00> : vector<5x128xf32>
    %68 = tpu.matmul %67, %54, %cst_22 {dimension_numbers = #tpu.dot_dimension_numbers<[1], [0], [0], [1], [0, 0, 1, 1], [], []>} : vector<5x5xbf16>, vector<5x128xbf16>, vector<5x128xf32> -> vector<5x128xf32>
    %c0_23 = arith.constant 0 : index
    %c256 = arith.constant 256 : index
    %69 = vector.load %arg31[%c0_23, %c256] : memref<10x512xf32, #tpu.memory_space<vmem>>, vector<5x128xf32>
    tpu.vector_store %arg31[%c0_23, %c256], %68 {strides = array<i32>} : memref<10x512xf32, #tpu.memory_space<vmem>>, vector<5x128xf32>,
    %70 = vector.extract_strided_slice %6 {offsets = [0, 384], sizes = [5, 128], strides = [1, 1]} : vector<10x1536xf32> to vector<5x128xf32>
    %71 = arith.truncf %70 : vector<5x128xf32> to vector<5x128xbf16>
    %72 = vector.extract_strided_slice %6 {offsets = [0, 896], sizes = [5, 128], strides = [1, 1]} : vector<10x1536xf32> to vector<5x128xf32>
    %73 = arith.truncf %72 : vector<5x128xf32> to vector<5x128xbf16>
    %74 = vector.extract_strided_slice %6 {offsets = [0, 1408], sizes = [5, 128], strides = [1, 1]} : vector<10x1536xf32> to vector<5x128xf32>
    %75 = arith.truncf %74 : vector<5x128xf32> to vector<5x128xbf16>
    %cst_24 = arith.constant dense<0.000000e+00> : vector<5x5xf32>
    %76 = tpu.matmul %71, %73, %cst_24 {dimension_numbers = #tpu.dot_dimension_numbers<[1], [1], [0], [0], [0, 0, 1, 0], [], []>} : vector<5x128xbf16>, vector<5x128xbf16>, vector<5x5xf32> -> vector<5x5xf32>
    %cst_25 = arith.constant 1.000000e-01 : f32
    %77 = vector.broadcast %cst_25 : f32 to vector<5x5xf32>
    %78 = arith.mulf %76, %77 : vector<5x5xf32>
    %cst_26 = arith.constant dense<0xFF800000> : vector<5xf32>
    %79 = vector.multi_reduction <maximumf>, %78, %cst_26 [1] : vector<5x5xf32> to vector<5xf32>
    %80 = vector.shape_cast %79 : vector<5xf32> to vector<5x1xf32>
    %81 = vector.broadcast %80 : vector<5x1xf32> to vector<5x5xf32>
    %82 = arith.subf %78, %81 : vector<5x5xf32>
    %83 = math.exp %82 : vector<5x5xf32>
    %cst_27 = arith.constant dense<0.000000e+00> : vector<5xf32>
    %84 = vector.multi_reduction <add>, %83, %cst_27 [1] : vector<5x5xf32> to vector<5xf32>
    %85 = vector.shape_cast %84 : vector<5xf32> to vector<5x1xf32>
    %86 = vector.broadcast %85 : vector<5x1xf32> to vector<5x5xf32>
    %87 = arith.divf %83, %86 : vector<5x5xf32>
    %88 = arith.truncf %87 : vector<5x5xf32> to vector<5x5xbf16>
    %cst_28 = arith.constant dense<0.000000e+00> : vector<5x128xf32>
    %89 = tpu.matmul %88, %75, %cst_28 {dimension_numbers = #tpu.dot_dimension_numbers<[1], [0], [0], [1], [0, 0, 1, 1], [], []>} : vector<5x5xbf16>, vector<5x128xbf16>, vector<5x128xf32> -> vector<5x128xf32>
    %c0_29 = arith.constant 0 : index
    %c384 = arith.constant 384 : index
    %90 = vector.load %arg31[%c0_29, %c384] : memref<10x512xf32, #tpu.memory_space<vmem>>, vector<5x128xf32>
    tpu.vector_store %arg31[%c0_29, %c384], %89 {strides = array<i32>} : memref<10x512xf32, #tpu.memory_space<vmem>>, vector<5x128xf32>,
    %91 = vector.extract_strided_slice %6 {offsets = [5, 0], sizes = [5, 128], strides = [1, 1]} : vector<10x1536xf32> to vector<5x128xf32>
    %92 = arith.truncf %91 : vector<5x128xf32> to vector<5x128xbf16>
    %93 = vector.extract_strided_slice %6 {offsets = [5, 512], sizes = [5, 128], strides = [1, 1]} : vector<10x1536xf32> to vector<5x128xf32>
    %94 = arith.truncf %93 : vector<5x128xf32> to vector<5x128xbf16>
    %95 = vector.extract_strided_slice %6 {offsets = [5, 1024], sizes = [5, 128], strides = [1, 1]} : vector<10x1536xf32> to vector<5x128xf32>
    %96 = arith.truncf %95 : vector<5x128xf32> to vector<5x128xbf16>
    %cst_30 = arith.constant dense<0.000000e+00> : vector<5x5xf32>
    %97 = tpu.matmul %92, %94, %cst_30 {dimension_numbers = #tpu.dot_dimension_numbers<[1], [1], [0], [0], [0, 0, 1, 0], [], []>} : vector<5x128xbf16>, vector<5x128xbf16>, vector<5x5xf32> -> vector<5x5xf32>
    %cst_31 = arith.constant 1.000000e-01 : f32
    %98 = vector.broadcast %cst_31 : f32 to vector<5x5xf32>
    %99 = arith.mulf %97, %98 : vector<5x5xf32>
    %cst_32 = arith.constant dense<0xFF800000> : vector<5xf32>
    %100 = vector.multi_reduction <maximumf>, %99, %cst_32 [1] : vector<5x5xf32> to vector<5xf32>
    %101 = vector.shape_cast %100 : vector<5xf32> to vector<5x1xf32>
    %102 = vector.broadcast %101 : vector<5x1xf32> to vector<5x5xf32>
    %103 = arith.subf %99, %102 : vector<5x5xf32>
    %104 = math.exp %103 : vector<5x5xf32>
    %cst_33 = arith.constant dense<0.000000e+00> : vector<5xf32>
    %105 = vector.multi_reduction <add>, %104, %cst_33 [1] : vector<5x5xf32> to vector<5xf32>
    %106 = vector.shape_cast %105 : vector<5xf32> to vector<5x1xf32>
    %107 = vector.broadcast %106 : vector<5x1xf32> to vector<5x5xf32>
    %108 = arith.divf %104, %107 : vector<5x5xf32>
    %109 = arith.truncf %108 : vector<5x5xf32> to vector<5x5xbf16>
    %cst_34 = arith.constant dense<0.000000e+00> : vector<5x128xf32>
    %110 = tpu.matmul %109, %96, %cst_34 {dimension_numbers = #tpu.dot_dimension_numbers<[1], [0], [0], [1], [0, 0, 1, 1], [], []>} : vector<5x5xbf16>, vector<5x128xbf16>, vector<5x128xf32> -> vector<5x128xf32>
    %c5 = arith.constant 5 : index
    %c0_35 = arith.constant 0 : index
    %111 = vector.load %arg31[%c5, %c0_35] : memref<10x512xf32, #tpu.memory_space<vmem>>, vector<5x128xf32>
    tpu.vector_store %arg31[%c5, %c0_35], %110 {strides = array<i32>} : memref<10x512xf32, #tpu.memory_space<vmem>>, vector<5x128xf32>,
    %112 = vector.extract_strided_slice %6 {offsets = [5, 128], sizes = [5, 128], strides = [1, 1]} : vector<10x1536xf32> to vector<5x128xf32>
    %113 = arith.truncf %112 : vector<5x128xf32> to vector<5x128xbf16>
    %114 = vector.extract_strided_slice %6 {offsets = [5, 640], sizes = [5, 128], strides = [1, 1]} : vector<10x1536xf32> to vector<5x128xf32>
    %115 = arith.truncf %114 : vector<5x128xf32> to vector<5x128xbf16>
    %116 = vector.extract_strided_slice %6 {offsets = [5, 1152], sizes = [5, 128], strides = [1, 1]} : vector<10x1536xf32> to vector<5x128xf32>
    %117 = arith.truncf %116 : vector<5x128xf32> to vector<5x128xbf16>
    %cst_36 = arith.constant dense<0.000000e+00> : vector<5x5xf32>
    %118 = tpu.matmul %113, %115, %cst_36 {dimension_numbers = #tpu.dot_dimension_numbers<[1], [1], [0], [0], [0, 0, 1, 0], [], []>} : vector<5x128xbf16>, vector<5x128xbf16>, vector<5x5xf32> -> vector<5x5xf32>
    %cst_37 = arith.constant 1.000000e-01 : f32
    %119 = vector.broadcast %cst_37 : f32 to vector<5x5xf32>
    %120 = arith.mulf %118, %119 : vector<5x5xf32>
    %cst_38 = arith.constant dense<0xFF800000> : vector<5xf32>
    %121 = vector.multi_reduction <maximumf>, %120, %cst_38 [1] : vector<5x5xf32> to vector<5xf32>
    %122 = vector.shape_cast %121 : vector<5xf32> to vector<5x1xf32>
    %123 = vector.broadcast %122 : vector<5x1xf32> to vector<5x5xf32>
    %124 = arith.subf %120, %123 : vector<5x5xf32>
    %125 = math.exp %124 : vector<5x5xf32>
    %cst_39 = arith.constant dense<0.000000e+00> : vector<5xf32>
    %126 = vector.multi_reduction <add>, %125, %cst_39 [1] : vector<5x5xf32> to vector<5xf32>
    %127 = vector.shape_cast %126 : vector<5xf32> to vector<5x1xf32>
    %128 = vector.broadcast %127 : vector<5x1xf32> to vector<5x5xf32>
    %129 = arith.divf %125, %128 : vector<5x5xf32>
    %130 = arith.truncf %129 : vector<5x5xf32> to vector<5x5xbf16>
    %cst_40 = arith.constant dense<0.000000e+00> : vector<5x128xf32>
    %131 = tpu.matmul %130, %117, %cst_40 {dimension_numbers = #tpu.dot_dimension_numbers<[1], [0], [0], [1], [0, 0, 1, 1], [], []>} : vector<5x5xbf16>, vector<5x128xbf16>, vector<5x128xf32> -> vector<5x128xf32>
    %c5_41 = arith.constant 5 : index
    %c128_42 = arith.constant 128 : index
    %132 = vector.load %arg31[%c5_41, %c128_42] : memref<10x512xf32, #tpu.memory_space<vmem>>, vector<5x128xf32>
    tpu.vector_store %arg31[%c5_41, %c128_42], %131 {strides = array<i32>} : memref<10x512xf32, #tpu.memory_space<vmem>>, vector<5x128xf32>,
    %133 = vector.extract_strided_slice %6 {offsets = [5, 256], sizes = [5, 128], strides = [1, 1]} : vector<10x1536xf32> to vector<5x128xf32>
    %134 = arith.truncf %133 : vector<5x128xf32> to vector<5x128xbf16>
    %135 = vector.extract_strided_slice %6 {offsets = [5, 768], sizes = [5, 128], strides = [1, 1]} : vector<10x1536xf32> to vector<5x128xf32>
    %136 = arith.truncf %135 : vector<5x128xf32> to vector<5x128xbf16>
    %137 = vector.extract_strided_slice %6 {offsets = [5, 1280], sizes = [5, 128], strides = [1, 1]} : vector<10x1536xf32> to vector<5x128xf32>
    %138 = arith.truncf %137 : vector<5x128xf32> to vector<5x128xbf16>
    %cst_43 = arith.constant dense<0.000000e+00> : vector<5x5xf32>
    %139 = tpu.matmul %134, %136, %cst_43 {dimension_numbers = #tpu.dot_dimension_numbers<[1], [1], [0], [0], [0, 0, 1, 0], [], []>} : vector<5x128xbf16>, vector<5x128xbf16>, vector<5x5xf32> -> vector<5x5xf32>
    %cst_44 = arith.constant 1.000000e-01 : f32
    %140 = vector.broadcast %cst_44 : f32 to vector<5x5xf32>
    %141 = arith.mulf %139, %140 : vector<5x5xf32>
    %cst_45 = arith.constant dense<0xFF800000> : vector<5xf32>
    %142 = vector.multi_reduction <maximumf>, %141, %cst_45 [1] : vector<5x5xf32> to vector<5xf32>
    %143 = vector.shape_cast %142 : vector<5xf32> to vector<5x1xf32>
    %144 = vector.broadcast %143 : vector<5x1xf32> to vector<5x5xf32>
    %145 = arith.subf %141, %144 : vector<5x5xf32>
    %146 = math.exp %145 : vector<5x5xf32>
    %cst_46 = arith.constant dense<0.000000e+00> : vector<5xf32>
    %147 = vector.multi_reduction <add>, %146, %cst_46 [1] : vector<5x5xf32> to vector<5xf32>
    %148 = vector.shape_cast %147 : vector<5xf32> to vector<5x1xf32>
    %149 = vector.broadcast %148 : vector<5x1xf32> to vector<5x5xf32>
    %150 = arith.divf %146, %149 : vector<5x5xf32>
    %151 = arith.truncf %150 : vector<5x5xf32> to vector<5x5xbf16>
    %cst_47 = arith.constant dense<0.000000e+00> : vector<5x128xf32>
    %152 = tpu.matmul %151, %138, %cst_47 {dimension_numbers = #tpu.dot_dimension_numbers<[1], [0], [0], [1], [0, 0, 1, 1], [], []>} : vector<5x5xbf16>, vector<5x128xbf16>, vector<5x128xf32> -> vector<5x128xf32>
    %c5_48 = arith.constant 5 : index
    %c256_49 = arith.constant 256 : index
    %153 = vector.load %arg31[%c5_48, %c256_49] : memref<10x512xf32, #tpu.memory_space<vmem>>, vector<5x128xf32>
    tpu.vector_store %arg31[%c5_48, %c256_49], %152 {strides = array<i32>} : memref<10x512xf32, #tpu.memory_space<vmem>>, vector<5x128xf32>,
    %154 = vector.extract_strided_slice %6 {offsets = [5, 384], sizes = [5, 128], strides = [1, 1]} : vector<10x1536xf32> to vector<5x128xf32>
    %155 = arith.truncf %154 : vector<5x128xf32> to vector<5x128xbf16>
    %156 = vector.extract_strided_slice %6 {offsets = [5, 896], sizes = [5, 128], strides = [1, 1]} : vector<10x1536xf32> to vector<5x128xf32>
    %157 = arith.truncf %156 : vector<5x128xf32> to vector<5x128xbf16>
    %158 = vector.extract_strided_slice %6 {offsets = [5, 1408], sizes = [5, 128], strides = [1, 1]} : vector<10x1536xf32> to vector<5x128xf32>
    %159 = arith.truncf %158 : vector<5x128xf32> to vector<5x128xbf16>
    %cst_50 = arith.constant dense<0.000000e+00> : vector<5x5xf32>
    %160 = tpu.matmul %155, %157, %cst_50 {dimension_numbers = #tpu.dot_dimension_numbers<[1], [1], [0], [0], [0, 0, 1, 0], [], []>} : vector<5x128xbf16>, vector<5x128xbf16>, vector<5x5xf32> -> vector<5x5xf32>
    %cst_51 = arith.constant 1.000000e-01 : f32
    %161 = vector.broadcast %cst_51 : f32 to vector<5x5xf32>
    %162 = arith.mulf %160, %161 : vector<5x5xf32>
    %cst_52 = arith.constant dense<0xFF800000> : vector<5xf32>
    %163 = vector.multi_reduction <maximumf>, %162, %cst_52 [1] : vector<5x5xf32> to vector<5xf32>
    %164 = vector.shape_cast %163 : vector<5xf32> to vector<5x1xf32>
    %165 = vector.broadcast %164 : vector<5x1xf32> to vector<5x5xf32>
    %166 = arith.subf %162, %165 : vector<5x5xf32>
    %167 = math.exp %166 : vector<5x5xf32>
    %cst_53 = arith.constant dense<0.000000e+00> : vector<5xf32>
    %168 = vector.multi_reduction <add>, %167, %cst_53 [1] : vector<5x5xf32> to vector<5xf32>
    %169 = vector.shape_cast %168 : vector<5xf32> to vector<5x1xf32>
    %170 = vector.broadcast %169 : vector<5x1xf32> to vector<5x5xf32>
    %171 = arith.divf %167, %170 : vector<5x5xf32>
    %172 = arith.truncf %171 : vector<5x5xf32> to vector<5x5xbf16>
    %cst_54 = arith.constant dense<0.000000e+00> : vector<5x128xf32>
    %173 = tpu.matmul %172, %159, %cst_54 {dimension_numbers = #tpu.dot_dimension_numbers<[1], [0], [0], [1], [0, 0, 1, 1], [], []>} : vector<5x5xbf16>, vector<5x128xbf16>, vector<5x128xf32> -> vector<5x128xf32>
    %c5_55 = arith.constant 5 : index
    %c384_56 = arith.constant 384 : index
    %174 = vector.load %arg31[%c5_55, %c384_56] : memref<10x512xf32, #tpu.memory_space<vmem>>, vector<5x128xf32>
    tpu.vector_store %arg31[%c5_55, %c384_56], %173 {strides = array<i32>} : memref<10x512xf32, #tpu.memory_space<vmem>>, vector<5x128xf32>,
    %c0_57 = arith.constant 0 : index
    %c0_58 = arith.constant 0 : index
    %175 = vector.load %arg31[%c0_57, %c0_58] : memref<10x512xf32, #tpu.memory_space<vmem>>, vector<10x512xf32>
    %176 = arith.truncf %175 : vector<10x512xf32> to vector<10x512xbf16>
    %c0_59 = arith.constant 0 : index
    %c0_60 = arith.constant 0 : index
    %177 = vector.load %arg4[%c0_59, %c0_60] : memref<512x400xbf16, #tpu.memory_space<vmem>>, vector<512x400xbf16>
    %cst_61 = arith.constant dense<0.000000e+00> : vector<10x400xf32>
    %178 = tpu.matmul %176, %177, %cst_61 {dimension_numbers = #tpu.dot_dimension_numbers<[1], [0], [0], [1], [0, 0, 1, 1], [], []>} : vector<10x512xbf16>, vector<512x400xbf16>, vector<10x400xf32> -> vector<10x400xf32>
    %c0_62 = arith.constant 0 : index
    %c0_63 = arith.constant 0 : index
    %179 = vector.load %arg5[%c0_62, %c0_63] : memref<1x400xf32, #tpu.memory_space<vmem>>, vector<1x400xf32>
    %180 = vector.broadcast %179 : vector<1x400xf32> to vector<10x400xf32>
    %181 = arith.addf %178, %180 : vector<10x400xf32>
    %182 = arith.addf %0, %181 : vector<10x400xf32>
    %cst_64 = arith.constant dense<0.000000e+00> : vector<10xf32>
    %183 = vector.multi_reduction <add>, %182, %cst_64 [1] : vector<10x400xf32> to vector<10xf32>
    %184 = vector.shape_cast %183 : vector<10xf32> to vector<10x1xf32>
    %cst_65 = arith.constant 4.000000e+02 : f32
    %185 = vector.broadcast %cst_65 : f32 to vector<10x1xf32>
    %186 = arith.divf %184, %185 : vector<10x1xf32>
    %187 = vector.broadcast %186 : vector<10x1xf32> to vector<10x400xf32>
    %188 = arith.subf %182, %187 : vector<10x400xf32>
    %189 = arith.mulf %188, %188 : vector<10x400xf32>
    %cst_66 = arith.constant dense<0.000000e+00> : vector<10xf32>
    %190 = vector.multi_reduction <add>, %189, %cst_66 [1] : vector<10x400xf32> to vector<10xf32>
    %191 = vector.shape_cast %190 : vector<10xf32> to vector<10x1xf32>
    %cst_67 = arith.constant 4.000000e+02 : f32
    %192 = vector.broadcast %cst_67 : f32 to vector<10x1xf32>
    %193 = arith.divf %191, %192 : vector<10x1xf32>
    %cst_68 = arith.constant 9.99999974E-6 : f32
    %194 = vector.broadcast %cst_68 : f32 to vector<10x1xf32>
    %195 = arith.addf %193, %194 : vector<10x1xf32>
    %196 = math.rsqrt %195 : vector<10x1xf32>
    %197 = vector.broadcast %196 : vector<10x1xf32> to vector<10x400xf32>
    %198 = arith.mulf %188, %197 : vector<10x400xf32>
    %c0_69 = arith.constant 0 : index
    %c0_70 = arith.constant 0 : index
    %199 = vector.load %arg10[%c0_69, %c0_70] : memref<1x400xf32, #tpu.memory_space<vmem>>, vector<1x400xf32>
    %200 = vector.broadcast %199 : vector<1x400xf32> to vector<10x400xf32>
    %201 = arith.mulf %198, %200 : vector<10x400xf32>
    %c0_71 = arith.constant 0 : index
    %c0_72 = arith.constant 0 : index
    %202 = vector.load %arg11[%c0_71, %c0_72] : memref<1x400xf32, #tpu.memory_space<vmem>>, vector<1x400xf32>
    %203 = vector.broadcast %202 : vector<1x400xf32> to vector<10x400xf32>
    %204 = arith.addf %201, %203 : vector<10x400xf32>
    %205 = arith.truncf %204 : vector<10x400xf32> to vector<10x400xbf16>
    %c0_73 = arith.constant 0 : index
    %c0_74 = arith.constant 0 : index
    %206 = vector.load %arg6[%c0_73, %c0_74] : memref<400x64xbf16, #tpu.memory_space<vmem>>, vector<400x64xbf16>
    %cst_75 = arith.constant dense<0.000000e+00> : vector<10x64xf32>
    %207 = tpu.matmul %205, %206, %cst_75 {dimension_numbers = #tpu.dot_dimension_numbers<[1], [0], [0], [1], [0, 0, 1, 1], [], []>} : vector<10x400xbf16>, vector<400x64xbf16>, vector<10x64xf32> -> vector<10x64xf32>
    %c0_76 = arith.constant 0 : index
    %c0_77 = arith.constant 0 : index
    %208 = vector.load %arg7[%c0_76, %c0_77] : memref<1x64xf32, #tpu.memory_space<vmem>>, vector<1x64xf32>
    %209 = vector.broadcast %208 : vector<1x64xf32> to vector<10x64xf32>
    %210 = arith.addf %207, %209 : vector<10x64xf32>
    %cst_78 = arith.constant 0.000000e+00 : f32
    %211 = vector.broadcast %cst_78 : f32 to vector<10x64xf32>
    %212 = arith.maximumf %210, %211 : vector<10x64xf32>
    %213 = arith.truncf %212 : vector<10x64xf32> to vector<10x64xbf16>
    %c0_79 = arith.constant 0 : index
    %c0_80 = arith.constant 0 : index
    %214 = vector.load %arg8[%c0_79, %c0_80] : memref<64x400xbf16, #tpu.memory_space<vmem>>, vector<64x400xbf16>
    %cst_81 = arith.constant dense<0.000000e+00> : vector<10x400xf32>
    %215 = tpu.matmul %213, %214, %cst_81 {dimension_numbers = #tpu.dot_dimension_numbers<[1], [0], [0], [1], [0, 0, 1, 1], [], []>} : vector<10x64xbf16>, vector<64x400xbf16>, vector<10x400xf32> -> vector<10x400xf32>
    %c0_82 = arith.constant 0 : index
    %c0_83 = arith.constant 0 : index
    %216 = vector.load %arg9[%c0_82, %c0_83] : memref<1x400xf32, #tpu.memory_space<vmem>>, vector<1x400xf32>
    %217 = vector.broadcast %216 : vector<1x400xf32> to vector<10x400xf32>
    %218 = arith.addf %215, %217 : vector<10x400xf32>
    %219 = arith.addf %204, %218 : vector<10x400xf32>
    %cst_84 = arith.constant dense<0.000000e+00> : vector<10xf32>
    %220 = vector.multi_reduction <add>, %219, %cst_84 [1] : vector<10x400xf32> to vector<10xf32>
    %221 = vector.shape_cast %220 : vector<10xf32> to vector<10x1xf32>
    %cst_85 = arith.constant 4.000000e+02 : f32
    %222 = vector.broadcast %cst_85 : f32 to vector<10x1xf32>
    %223 = arith.divf %221, %222 : vector<10x1xf32>
    %224 = vector.broadcast %223 : vector<10x1xf32> to vector<10x400xf32>
    %225 = arith.subf %219, %224 : vector<10x400xf32>
    %226 = arith.mulf %225, %225 : vector<10x400xf32>
    %cst_86 = arith.constant dense<0.000000e+00> : vector<10xf32>
    %227 = vector.multi_reduction <add>, %226, %cst_86 [1] : vector<10x400xf32> to vector<10xf32>
    %228 = vector.shape_cast %227 : vector<10xf32> to vector<10x1xf32>
    %cst_87 = arith.constant 4.000000e+02 : f32
    %229 = vector.broadcast %cst_87 : f32 to vector<10x1xf32>
    %230 = arith.divf %228, %229 : vector<10x1xf32>
    %cst_88 = arith.constant 9.99999974E-6 : f32
    %231 = vector.broadcast %cst_88 : f32 to vector<10x1xf32>
    %232 = arith.addf %230, %231 : vector<10x1xf32>
    %233 = math.rsqrt %232 : vector<10x1xf32>
    %234 = vector.broadcast %233 : vector<10x1xf32> to vector<10x400xf32>
    %235 = arith.mulf %225, %234 : vector<10x400xf32>
    %c0_89 = arith.constant 0 : index
    %c0_90 = arith.constant 0 : index
    %236 = vector.load %arg12[%c0_89, %c0_90] : memref<1x400xf32, #tpu.memory_space<vmem>>, vector<1x400xf32>
    %237 = vector.broadcast %236 : vector<1x400xf32> to vector<10x400xf32>
    %238 = arith.mulf %235, %237 : vector<10x400xf32>
    %c0_91 = arith.constant 0 : index
    %c0_92 = arith.constant 0 : index
    %239 = vector.load %arg13[%c0_91, %c0_92] : memref<1x400xf32, #tpu.memory_space<vmem>>, vector<1x400xf32>
    %240 = vector.broadcast %239 : vector<1x400xf32> to vector<10x400xf32>
    %241 = arith.addf %238, %240 : vector<10x400xf32>
    %242 = arith.truncf %241 : vector<10x400xf32> to vector<10x400xbf16>
    %c0_93 = arith.constant 0 : index
    %c0_94 = arith.constant 0 : index
    %243 = vector.load %arg14[%c0_93, %c0_94] : memref<400x1536xbf16, #tpu.memory_space<vmem>>, vector<400x1536xbf16>
    %cst_95 = arith.constant dense<0.000000e+00> : vector<10x1536xf32>
    %244 = tpu.matmul %242, %243, %cst_95 {dimension_numbers = #tpu.dot_dimension_numbers<[1], [0], [0], [1], [0, 0, 1, 1], [], []>} : vector<10x400xbf16>, vector<400x1536xbf16>, vector<10x1536xf32> -> vector<10x1536xf32>
    %c0_96 = arith.constant 0 : index
    %c0_97 = arith.constant 0 : index
    %245 = vector.load %arg15[%c0_96, %c0_97] : memref<1x1536xf32, #tpu.memory_space<vmem>>, vector<1x1536xf32>
    %246 = vector.broadcast %245 : vector<1x1536xf32> to vector<10x1536xf32>
    %247 = arith.addf %244, %246 : vector<10x1536xf32>
    %248 = vector.extract_strided_slice %247 {offsets = [0, 0], sizes = [5, 128], strides = [1, 1]} : vector<10x1536xf32> to vector<5x128xf32>
    %249 = arith.truncf %248 : vector<5x128xf32> to vector<5x128xbf16>
    %250 = vector.extract_strided_slice %247 {offsets = [0, 512], sizes = [5, 128], strides = [1, 1]} : vector<10x1536xf32> to vector<5x128xf32>
    %251 = arith.truncf %250 : vector<5x128xf32> to vector<5x128xbf16>
    %252 = vector.extract_strided_slice %247 {offsets = [0, 1024], sizes = [5, 128], strides = [1, 1]} : vector<10x1536xf32> to vector<5x128xf32>
    %253 = arith.truncf %252 : vector<5x128xf32> to vector<5x128xbf16>
    %cst_98 = arith.constant dense<0.000000e+00> : vector<5x5xf32>
    %254 = tpu.matmul %249, %251, %cst_98 {dimension_numbers = #tpu.dot_dimension_numbers<[1], [1], [0], [0], [0, 0, 1, 0], [], []>} : vector<5x128xbf16>, vector<5x128xbf16>, vector<5x5xf32> -> vector<5x5xf32>
    %cst_99 = arith.constant 1.000000e-01 : f32
    %255 = vector.broadcast %cst_99 : f32 to vector<5x5xf32>
    %256 = arith.mulf %254, %255 : vector<5x5xf32>
    %cst_100 = arith.constant dense<0xFF800000> : vector<5xf32>
    %257 = vector.multi_reduction <maximumf>, %256, %cst_100 [1] : vector<5x5xf32> to vector<5xf32>
    %258 = vector.shape_cast %257 : vector<5xf32> to vector<5x1xf32>
    %259 = vector.broadcast %258 : vector<5x1xf32> to vector<5x5xf32>
    %260 = arith.subf %256, %259 : vector<5x5xf32>
    %261 = math.exp %260 : vector<5x5xf32>
    %cst_101 = arith.constant dense<0.000000e+00> : vector<5xf32>
    %262 = vector.multi_reduction <add>, %261, %cst_101 [1] : vector<5x5xf32> to vector<5xf32>
    %263 = vector.shape_cast %262 : vector<5xf32> to vector<5x1xf32>
    %264 = vector.broadcast %263 : vector<5x1xf32> to vector<5x5xf32>
    %265 = arith.divf %261, %264 : vector<5x5xf32>
    %266 = arith.truncf %265 : vector<5x5xf32> to vector<5x5xbf16>
    %cst_102 = arith.constant dense<0.000000e+00> : vector<5x128xf32>
    %267 = tpu.matmul %266, %253, %cst_102 {dimension_numbers = #tpu.dot_dimension_numbers<[1], [0], [0], [1], [0, 0, 1, 1], [], []>} : vector<5x5xbf16>, vector<5x128xbf16>, vector<5x128xf32> -> vector<5x128xf32>
    %c0_103 = arith.constant 0 : index
    %c0_104 = arith.constant 0 : index
    %268 = vector.load %arg31[%c0_103, %c0_104] : memref<10x512xf32, #tpu.memory_space<vmem>>, vector<5x128xf32>
    tpu.vector_store %arg31[%c0_103, %c0_104], %267 {strides = array<i32>} : memref<10x512xf32, #tpu.memory_space<vmem>>, vector<5x128xf32>,
    %269 = vector.extract_strided_slice %247 {offsets = [0, 128], sizes = [5, 128], strides = [1, 1]} : vector<10x1536xf32> to vector<5x128xf32>
    %270 = arith.truncf %269 : vector<5x128xf32> to vector<5x128xbf16>
    %271 = vector.extract_strided_slice %247 {offsets = [0, 640], sizes = [5, 128], strides = [1, 1]} : vector<10x1536xf32> to vector<5x128xf32>
    %272 = arith.truncf %271 : vector<5x128xf32> to vector<5x128xbf16>
    %273 = vector.extract_strided_slice %247 {offsets = [0, 1152], sizes = [5, 128], strides = [1, 1]} : vector<10x1536xf32> to vector<5x128xf32>
    %274 = arith.truncf %273 : vector<5x128xf32> to vector<5x128xbf16>
    %cst_105 = arith.constant dense<0.000000e+00> : vector<5x5xf32>
    %275 = tpu.matmul %270, %272, %cst_105 {dimension_numbers = #tpu.dot_dimension_numbers<[1], [1], [0], [0], [0, 0, 1, 0], [], []>} : vector<5x128xbf16>, vector<5x128xbf16>, vector<5x5xf32> -> vector<5x5xf32>
    %cst_106 = arith.constant 1.000000e-01 : f32
    %276 = vector.broadcast %cst_106 : f32 to vector<5x5xf32>
    %277 = arith.mulf %275, %276 : vector<5x5xf32>
    %cst_107 = arith.constant dense<0xFF800000> : vector<5xf32>
    %278 = vector.multi_reduction <maximumf>, %277, %cst_107 [1] : vector<5x5xf32> to vector<5xf32>
    %279 = vector.shape_cast %278 : vector<5xf32> to vector<5x1xf32>
    %280 = vector.broadcast %279 : vector<5x1xf32> to vector<5x5xf32>
    %281 = arith.subf %277, %280 : vector<5x5xf32>
    %282 = math.exp %281 : vector<5x5xf32>
    %cst_108 = arith.constant dense<0.000000e+00> : vector<5xf32>
    %283 = vector.multi_reduction <add>, %282, %cst_108 [1] : vector<5x5xf32> to vector<5xf32>
    %284 = vector.shape_cast %283 : vector<5xf32> to vector<5x1xf32>
    %285 = vector.broadcast %284 : vector<5x1xf32> to vector<5x5xf32>
    %286 = arith.divf %282, %285 : vector<5x5xf32>
    %287 = arith.truncf %286 : vector<5x5xf32> to vector<5x5xbf16>
    %cst_109 = arith.constant dense<0.000000e+00> : vector<5x128xf32>
    %288 = tpu.matmul %287, %274, %cst_109 {dimension_numbers = #tpu.dot_dimension_numbers<[1], [0], [0], [1], [0, 0, 1, 1], [], []>} : vector<5x5xbf16>, vector<5x128xbf16>, vector<5x128xf32> -> vector<5x128xf32>
    %c0_110 = arith.constant 0 : index
    %c128_111 = arith.constant 128 : index
    %289 = vector.load %arg31[%c0_110, %c128_111] : memref<10x512xf32, #tpu.memory_space<vmem>>, vector<5x128xf32>
    tpu.vector_store %arg31[%c0_110, %c128_111], %288 {strides = array<i32>} : memref<10x512xf32, #tpu.memory_space<vmem>>, vector<5x128xf32>,
    %290 = vector.extract_strided_slice %247 {offsets = [0, 256], sizes = [5, 128], strides = [1, 1]} : vector<10x1536xf32> to vector<5x128xf32>
    %291 = arith.truncf %290 : vector<5x128xf32> to vector<5x128xbf16>
    %292 = vector.extract_strided_slice %247 {offsets = [0, 768], sizes = [5, 128], strides = [1, 1]} : vector<10x1536xf32> to vector<5x128xf32>
    %293 = arith.truncf %292 : vector<5x128xf32> to vector<5x128xbf16>
    %294 = vector.extract_strided_slice %247 {offsets = [0, 1280], sizes = [5, 128], strides = [1, 1]} : vector<10x1536xf32> to vector<5x128xf32>
    %295 = arith.truncf %294 : vector<5x128xf32> to vector<5x128xbf16>
    %cst_112 = arith.constant dense<0.000000e+00> : vector<5x5xf32>
    %296 = tpu.matmul %291, %293, %cst_112 {dimension_numbers = #tpu.dot_dimension_numbers<[1], [1], [0], [0], [0, 0, 1, 0], [], []>} : vector<5x128xbf16>, vector<5x128xbf16>, vector<5x5xf32> -> vector<5x5xf32>
    %cst_113 = arith.constant 1.000000e-01 : f32
    %297 = vector.broadcast %cst_113 : f32 to vector<5x5xf32>
    %298 = arith.mulf %296, %297 : vector<5x5xf32>
    %cst_114 = arith.constant dense<0xFF800000> : vector<5xf32>
    %299 = vector.multi_reduction <maximumf>, %298, %cst_114 [1] : vector<5x5xf32> to vector<5xf32>
    %300 = vector.shape_cast %299 : vector<5xf32> to vector<5x1xf32>
    %301 = vector.broadcast %300 : vector<5x1xf32> to vector<5x5xf32>
    %302 = arith.subf %298, %301 : vector<5x5xf32>
    %303 = math.exp %302 : vector<5x5xf32>
    %cst_115 = arith.constant dense<0.000000e+00> : vector<5xf32>
    %304 = vector.multi_reduction <add>, %303, %cst_115 [1] : vector<5x5xf32> to vector<5xf32>
    %305 = vector.shape_cast %304 : vector<5xf32> to vector<5x1xf32>
    %306 = vector.broadcast %305 : vector<5x1xf32> to vector<5x5xf32>
    %307 = arith.divf %303, %306 : vector<5x5xf32>
    %308 = arith.truncf %307 : vector<5x5xf32> to vector<5x5xbf16>
    %cst_116 = arith.constant dense<0.000000e+00> : vector<5x128xf32>
    %309 = tpu.matmul %308, %295, %cst_116 {dimension_numbers = #tpu.dot_dimension_numbers<[1], [0], [0], [1], [0, 0, 1, 1], [], []>} : vector<5x5xbf16>, vector<5x128xbf16>, vector<5x128xf32> -> vector<5x128xf32>
    %c0_117 = arith.constant 0 : index
    %c256_118 = arith.constant 256 : index
    %310 = vector.load %arg31[%c0_117, %c256_118] : memref<10x512xf32, #tpu.memory_space<vmem>>, vector<5x128xf32>
    tpu.vector_store %arg31[%c0_117, %c256_118], %309 {strides = array<i32>} : memref<10x512xf32, #tpu.memory_space<vmem>>, vector<5x128xf32>,
    %311 = vector.extract_strided_slice %247 {offsets = [0, 384], sizes = [5, 128], strides = [1, 1]} : vector<10x1536xf32> to vector<5x128xf32>
    %312 = arith.truncf %311 : vector<5x128xf32> to vector<5x128xbf16>
    %313 = vector.extract_strided_slice %247 {offsets = [0, 896], sizes = [5, 128], strides = [1, 1]} : vector<10x1536xf32> to vector<5x128xf32>
    %314 = arith.truncf %313 : vector<5x128xf32> to vector<5x128xbf16>
    %315 = vector.extract_strided_slice %247 {offsets = [0, 1408], sizes = [5, 128], strides = [1, 1]} : vector<10x1536xf32> to vector<5x128xf32>
    %316 = arith.truncf %315 : vector<5x128xf32> to vector<5x128xbf16>
    %cst_119 = arith.constant dense<0.000000e+00> : vector<5x5xf32>
    %317 = tpu.matmul %312, %314, %cst_119 {dimension_numbers = #tpu.dot_dimension_numbers<[1], [1], [0], [0], [0, 0, 1, 0], [], []>} : vector<5x128xbf16>, vector<5x128xbf16>, vector<5x5xf32> -> vector<5x5xf32>
    %cst_120 = arith.constant 1.000000e-01 : f32
    %318 = vector.broadcast %cst_120 : f32 to vector<5x5xf32>
    %319 = arith.mulf %317, %318 : vector<5x5xf32>
    %cst_121 = arith.constant dense<0xFF800000> : vector<5xf32>
    %320 = vector.multi_reduction <maximumf>, %319, %cst_121 [1] : vector<5x5xf32> to vector<5xf32>
    %321 = vector.shape_cast %320 : vector<5xf32> to vector<5x1xf32>
    %322 = vector.broadcast %321 : vector<5x1xf32> to vector<5x5xf32>
    %323 = arith.subf %319, %322 : vector<5x5xf32>
    %324 = math.exp %323 : vector<5x5xf32>
    %cst_122 = arith.constant dense<0.000000e+00> : vector<5xf32>
    %325 = vector.multi_reduction <add>, %324, %cst_122 [1] : vector<5x5xf32> to vector<5xf32>
    %326 = vector.shape_cast %325 : vector<5xf32> to vector<5x1xf32>
    %327 = vector.broadcast %326 : vector<5x1xf32> to vector<5x5xf32>
    %328 = arith.divf %324, %327 : vector<5x5xf32>
    %329 = arith.truncf %328 : vector<5x5xf32> to vector<5x5xbf16>
    %cst_123 = arith.constant dense<0.000000e+00> : vector<5x128xf32>
    %330 = tpu.matmul %329, %316, %cst_123 {dimension_numbers = #tpu.dot_dimension_numbers<[1], [0], [0], [1], [0, 0, 1, 1], [], []>} : vector<5x5xbf16>, vector<5x128xbf16>, vector<5x128xf32> -> vector<5x128xf32>
    %c0_124 = arith.constant 0 : index
    %c384_125 = arith.constant 384 : index
    %331 = vector.load %arg31[%c0_124, %c384_125] : memref<10x512xf32, #tpu.memory_space<vmem>>, vector<5x128xf32>
    tpu.vector_store %arg31[%c0_124, %c384_125], %330 {strides = array<i32>} : memref<10x512xf32, #tpu.memory_space<vmem>>, vector<5x128xf32>,
    %332 = vector.extract_strided_slice %247 {offsets = [5, 0], sizes = [5, 128], strides = [1, 1]} : vector<10x1536xf32> to vector<5x128xf32>
    %333 = arith.truncf %332 : vector<5x128xf32> to vector<5x128xbf16>
    %334 = vector.extract_strided_slice %247 {offsets = [5, 512], sizes = [5, 128], strides = [1, 1]} : vector<10x1536xf32> to vector<5x128xf32>
    %335 = arith.truncf %334 : vector<5x128xf32> to vector<5x128xbf16>
    %336 = vector.extract_strided_slice %247 {offsets = [5, 1024], sizes = [5, 128], strides = [1, 1]} : vector<10x1536xf32> to vector<5x128xf32>
    %337 = arith.truncf %336 : vector<5x128xf32> to vector<5x128xbf16>
    %cst_126 = arith.constant dense<0.000000e+00> : vector<5x5xf32>
    %338 = tpu.matmul %333, %335, %cst_126 {dimension_numbers = #tpu.dot_dimension_numbers<[1], [1], [0], [0], [0, 0, 1, 0], [], []>} : vector<5x128xbf16>, vector<5x128xbf16>, vector<5x5xf32> -> vector<5x5xf32>
    %cst_127 = arith.constant 1.000000e-01 : f32
    %339 = vector.broadcast %cst_127 : f32 to vector<5x5xf32>
    %340 = arith.mulf %338, %339 : vector<5x5xf32>
    %cst_128 = arith.constant dense<0xFF800000> : vector<5xf32>
    %341 = vector.multi_reduction <maximumf>, %340, %cst_128 [1] : vector<5x5xf32> to vector<5xf32>
    %342 = vector.shape_cast %341 : vector<5xf32> to vector<5x1xf32>
    %343 = vector.broadcast %342 : vector<5x1xf32> to vector<5x5xf32>
    %344 = arith.subf %340, %343 : vector<5x5xf32>
    %345 = math.exp %344 : vector<5x5xf32>
    %cst_129 = arith.constant dense<0.000000e+00> : vector<5xf32>
    %346 = vector.multi_reduction <add>, %345, %cst_129 [1] : vector<5x5xf32> to vector<5xf32>
    %347 = vector.shape_cast %346 : vector<5xf32> to vector<5x1xf32>
    %348 = vector.broadcast %347 : vector<5x1xf32> to vector<5x5xf32>
    %349 = arith.divf %345, %348 : vector<5x5xf32>
    %350 = arith.truncf %349 : vector<5x5xf32> to vector<5x5xbf16>
    %cst_130 = arith.constant dense<0.000000e+00> : vector<5x128xf32>
    %351 = tpu.matmul %350, %337, %cst_130 {dimension_numbers = #tpu.dot_dimension_numbers<[1], [0], [0], [1], [0, 0, 1, 1], [], []>} : vector<5x5xbf16>, vector<5x128xbf16>, vector<5x128xf32> -> vector<5x128xf32>
    %c5_131 = arith.constant 5 : index
    %c0_132 = arith.constant 0 : index
    %352 = vector.load %arg31[%c5_131, %c0_132] : memref<10x512xf32, #tpu.memory_space<vmem>>, vector<5x128xf32>
    tpu.vector_store %arg31[%c5_131, %c0_132], %351 {strides = array<i32>} : memref<10x512xf32, #tpu.memory_space<vmem>>, vector<5x128xf32>,
    %353 = vector.extract_strided_slice %247 {offsets = [5, 128], sizes = [5, 128], strides = [1, 1]} : vector<10x1536xf32> to vector<5x128xf32>
    %354 = arith.truncf %353 : vector<5x128xf32> to vector<5x128xbf16>
    %355 = vector.extract_strided_slice %247 {offsets = [5, 640], sizes = [5, 128], strides = [1, 1]} : vector<10x1536xf32> to vector<5x128xf32>
    %356 = arith.truncf %355 : vector<5x128xf32> to vector<5x128xbf16>
    %357 = vector.extract_strided_slice %247 {offsets = [5, 1152], sizes = [5, 128], strides = [1, 1]} : vector<10x1536xf32> to vector<5x128xf32>
    %358 = arith.truncf %357 : vector<5x128xf32> to vector<5x128xbf16>
    %cst_133 = arith.constant dense<0.000000e+00> : vector<5x5xf32>
    %359 = tpu.matmul %354, %356, %cst_133 {dimension_numbers = #tpu.dot_dimension_numbers<[1], [1], [0], [0], [0, 0, 1, 0], [], []>} : vector<5x128xbf16>, vector<5x128xbf16>, vector<5x5xf32> -> vector<5x5xf32>
    %cst_134 = arith.constant 1.000000e-01 : f32
    %360 = vector.broadcast %cst_134 : f32 to vector<5x5xf32>
    %361 = arith.mulf %359, %360 : vector<5x5xf32>
    %cst_135 = arith.constant dense<0xFF800000> : vector<5xf32>
    %362 = vector.multi_reduction <maximumf>, %361, %cst_135 [1] : vector<5x5xf32> to vector<5xf32>
    %363 = vector.shape_cast %362 : vector<5xf32> to vector<5x1xf32>
    %364 = vector.broadcast %363 : vector<5x1xf32> to vector<5x5xf32>
    %365 = arith.subf %361, %364 : vector<5x5xf32>
    %366 = math.exp %365 : vector<5x5xf32>
    %cst_136 = arith.constant dense<0.000000e+00> : vector<5xf32>
    %367 = vector.multi_reduction <add>, %366, %cst_136 [1] : vector<5x5xf32> to vector<5xf32>
    %368 = vector.shape_cast %367 : vector<5xf32> to vector<5x1xf32>
    %369 = vector.broadcast %368 : vector<5x1xf32> to vector<5x5xf32>
    %370 = arith.divf %366, %369 : vector<5x5xf32>
    %371 = arith.truncf %370 : vector<5x5xf32> to vector<5x5xbf16>
    %cst_137 = arith.constant dense<0.000000e+00> : vector<5x128xf32>
    %372 = tpu.matmul %371, %358, %cst_137 {dimension_numbers = #tpu.dot_dimension_numbers<[1], [0], [0], [1], [0, 0, 1, 1], [], []>} : vector<5x5xbf16>, vector<5x128xbf16>, vector<5x128xf32> -> vector<5x128xf32>
    %c5_138 = arith.constant 5 : index
    %c128_139 = arith.constant 128 : index
    %373 = vector.load %arg31[%c5_138, %c128_139] : memref<10x512xf32, #tpu.memory_space<vmem>>, vector<5x128xf32>
    tpu.vector_store %arg31[%c5_138, %c128_139], %372 {strides = array<i32>} : memref<10x512xf32, #tpu.memory_space<vmem>>, vector<5x128xf32>,
    %374 = vector.extract_strided_slice %247 {offsets = [5, 256], sizes = [5, 128], strides = [1, 1]} : vector<10x1536xf32> to vector<5x128xf32>
    %375 = arith.truncf %374 : vector<5x128xf32> to vector<5x128xbf16>
    %376 = vector.extract_strided_slice %247 {offsets = [5, 768], sizes = [5, 128], strides = [1, 1]} : vector<10x1536xf32> to vector<5x128xf32>
    %377 = arith.truncf %376 : vector<5x128xf32> to vector<5x128xbf16>
    %378 = vector.extract_strided_slice %247 {offsets = [5, 1280], sizes = [5, 128], strides = [1, 1]} : vector<10x1536xf32> to vector<5x128xf32>
    %379 = arith.truncf %378 : vector<5x128xf32> to vector<5x128xbf16>
    %cst_140 = arith.constant dense<0.000000e+00> : vector<5x5xf32>
    %380 = tpu.matmul %375, %377, %cst_140 {dimension_numbers = #tpu.dot_dimension_numbers<[1], [1], [0], [0], [0, 0, 1, 0], [], []>} : vector<5x128xbf16>, vector<5x128xbf16>, vector<5x5xf32> -> vector<5x5xf32>
    %cst_141 = arith.constant 1.000000e-01 : f32
    %381 = vector.broadcast %cst_141 : f32 to vector<5x5xf32>
    %382 = arith.mulf %380, %381 : vector<5x5xf32>
    %cst_142 = arith.constant dense<0xFF800000> : vector<5xf32>
    %383 = vector.multi_reduction <maximumf>, %382, %cst_142 [1] : vector<5x5xf32> to vector<5xf32>
    %384 = vector.shape_cast %383 : vector<5xf32> to vector<5x1xf32>
    %385 = vector.broadcast %384 : vector<5x1xf32> to vector<5x5xf32>
    %386 = arith.subf %382, %385 : vector<5x5xf32>
    %387 = math.exp %386 : vector<5x5xf32>
    %cst_143 = arith.constant dense<0.000000e+00> : vector<5xf32>
    %388 = vector.multi_reduction <add>, %387, %cst_143 [1] : vector<5x5xf32> to vector<5xf32>
    %389 = vector.shape_cast %388 : vector<5xf32> to vector<5x1xf32>
    %390 = vector.broadcast %389 : vector<5x1xf32> to vector<5x5xf32>
    %391 = arith.divf %387, %390 : vector<5x5xf32>
    %392 = arith.truncf %391 : vector<5x5xf32> to vector<5x5xbf16>
    %cst_144 = arith.constant dense<0.000000e+00> : vector<5x128xf32>
    %393 = tpu.matmul %392, %379, %cst_144 {dimension_numbers = #tpu.dot_dimension_numbers<[1], [0], [0], [1], [0, 0, 1, 1], [], []>} : vector<5x5xbf16>, vector<5x128xbf16>, vector<5x128xf32> -> vector<5x128xf32>
    %c5_145 = arith.constant 5 : index
    %c256_146 = arith.constant 256 : index
    %394 = vector.load %arg31[%c5_145, %c256_146] : memref<10x512xf32, #tpu.memory_space<vmem>>, vector<5x128xf32>
    tpu.vector_store %arg31[%c5_145, %c256_146], %393 {strides = array<i32>} : memref<10x512xf32, #tpu.memory_space<vmem>>, vector<5x128xf32>,
    %395 = vector.extract_strided_slice %247 {offsets = [5, 384], sizes = [5, 128], strides = [1, 1]} : vector<10x1536xf32> to vector<5x128xf32>
    %396 = arith.truncf %395 : vector<5x128xf32> to vector<5x128xbf16>
    %397 = vector.extract_strided_slice %247 {offsets = [5, 896], sizes = [5, 128], strides = [1, 1]} : vector<10x1536xf32> to vector<5x128xf32>
    %398 = arith.truncf %397 : vector<5x128xf32> to vector<5x128xbf16>
    %399 = vector.extract_strided_slice %247 {offsets = [5, 1408], sizes = [5, 128], strides = [1, 1]} : vector<10x1536xf32> to vector<5x128xf32>
    %400 = arith.truncf %399 : vector<5x128xf32> to vector<5x128xbf16>
    %cst_147 = arith.constant dense<0.000000e+00> : vector<5x5xf32>
    %401 = tpu.matmul %396, %398, %cst_147 {dimension_numbers = #tpu.dot_dimension_numbers<[1], [1], [0], [0], [0, 0, 1, 0], [], []>} : vector<5x128xbf16>, vector<5x128xbf16>, vector<5x5xf32> -> vector<5x5xf32>
    %cst_148 = arith.constant 1.000000e-01 : f32
    %402 = vector.broadcast %cst_148 : f32 to vector<5x5xf32>
    %403 = arith.mulf %401, %402 : vector<5x5xf32>
    %cst_149 = arith.constant dense<0xFF800000> : vector<5xf32>
    %404 = vector.multi_reduction <maximumf>, %403, %cst_149 [1] : vector<5x5xf32> to vector<5xf32>
    %405 = vector.shape_cast %404 : vector<5xf32> to vector<5x1xf32>
    %406 = vector.broadcast %405 : vector<5x1xf32> to vector<5x5xf32>
    %407 = arith.subf %403, %406 : vector<5x5xf32>
    %408 = math.exp %407 : vector<5x5xf32>
    %cst_150 = arith.constant dense<0.000000e+00> : vector<5xf32>
    %409 = vector.multi_reduction <add>, %408, %cst_150 [1] : vector<5x5xf32> to vector<5xf32>
    %410 = vector.shape_cast %409 : vector<5xf32> to vector<5x1xf32>
    %411 = vector.broadcast %410 : vector<5x1xf32> to vector<5x5xf32>
    %412 = arith.divf %408, %411 : vector<5x5xf32>
    %413 = arith.truncf %412 : vector<5x5xf32> to vector<5x5xbf16>
    %cst_151 = arith.constant dense<0.000000e+00> : vector<5x128xf32>
    %414 = tpu.matmul %413, %400, %cst_151 {dimension_numbers = #tpu.dot_dimension_numbers<[1], [0], [0], [1], [0, 0, 1, 1], [], []>} : vector<5x5xbf16>, vector<5x128xbf16>, vector<5x128xf32> -> vector<5x128xf32>
    %c5_152 = arith.constant 5 : index
    %c384_153 = arith.constant 384 : index
    %415 = vector.load %arg31[%c5_152, %c384_153] : memref<10x512xf32, #tpu.memory_space<vmem>>, vector<5x128xf32>
    tpu.vector_store %arg31[%c5_152, %c384_153], %414 {strides = array<i32>} : memref<10x512xf32, #tpu.memory_space<vmem>>, vector<5x128xf32>,
    %c0_154 = arith.constant 0 : index
    %c0_155 = arith.constant 0 : index
    %416 = vector.load %arg31[%c0_154, %c0_155] : memref<10x512xf32, #tpu.memory_space<vmem>>, vector<10x512xf32>
    %417 = arith.truncf %416 : vector<10x512xf32> to vector<10x512xbf16>
    %c0_156 = arith.constant 0 : index
    %c0_157 = arith.constant 0 : index
    %418 = vector.load %arg16[%c0_156, %c0_157] : memref<512x400xbf16, #tpu.memory_space<vmem>>, vector<512x400xbf16>
    %cst_158 = arith.constant dense<0.000000e+00> : vector<10x400xf32>
    %419 = tpu.matmul %417, %418, %cst_158 {dimension_numbers = #tpu.dot_dimension_numbers<[1], [0], [0], [1], [0, 0, 1, 1], [], []>} : vector<10x512xbf16>, vector<512x400xbf16>, vector<10x400xf32> -> vector<10x400xf32>
    %c0_159 = arith.constant 0 : index
    %c0_160 = arith.constant 0 : index
    %420 = vector.load %arg17[%c0_159, %c0_160] : memref<1x400xf32, #tpu.memory_space<vmem>>, vector<1x400xf32>
    %421 = vector.broadcast %420 : vector<1x400xf32> to vector<10x400xf32>
    %422 = arith.addf %419, %421 : vector<10x400xf32>
    %423 = arith.addf %241, %422 : vector<10x400xf32>
    %cst_161 = arith.constant dense<0.000000e+00> : vector<10xf32>
    %424 = vector.multi_reduction <add>, %423, %cst_161 [1] : vector<10x400xf32> to vector<10xf32>
    %425 = vector.shape_cast %424 : vector<10xf32> to vector<10x1xf32>
    %cst_162 = arith.constant 4.000000e+02 : f32
    %426 = vector.broadcast %cst_162 : f32 to vector<10x1xf32>
    %427 = arith.divf %425, %426 : vector<10x1xf32>
    %428 = vector.broadcast %427 : vector<10x1xf32> to vector<10x400xf32>
    %429 = arith.subf %423, %428 : vector<10x400xf32>
    %430 = arith.mulf %429, %429 : vector<10x400xf32>
    %cst_163 = arith.constant dense<0.000000e+00> : vector<10xf32>
    %431 = vector.multi_reduction <add>, %430, %cst_163 [1] : vector<10x400xf32> to vector<10xf32>
    %432 = vector.shape_cast %431 : vector<10xf32> to vector<10x1xf32>
    %cst_164 = arith.constant 4.000000e+02 : f32
    %433 = vector.broadcast %cst_164 : f32 to vector<10x1xf32>
    %434 = arith.divf %432, %433 : vector<10x1xf32>
    %cst_165 = arith.constant 9.99999974E-6 : f32
    %435 = vector.broadcast %cst_165 : f32 to vector<10x1xf32>
    %436 = arith.addf %434, %435 : vector<10x1xf32>
    %437 = math.rsqrt %436 : vector<10x1xf32>
    %438 = vector.broadcast %437 : vector<10x1xf32> to vector<10x400xf32>
    %439 = arith.mulf %429, %438 : vector<10x400xf32>
    %c0_166 = arith.constant 0 : index
    %c0_167 = arith.constant 0 : index
    %440 = vector.load %arg22[%c0_166, %c0_167] : memref<1x400xf32, #tpu.memory_space<vmem>>, vector<1x400xf32>
    %441 = vector.broadcast %440 : vector<1x400xf32> to vector<10x400xf32>
    %442 = arith.mulf %439, %441 : vector<10x400xf32>
    %c0_168 = arith.constant 0 : index
    %c0_169 = arith.constant 0 : index
    %443 = vector.load %arg23[%c0_168, %c0_169] : memref<1x400xf32, #tpu.memory_space<vmem>>, vector<1x400xf32>
    %444 = vector.broadcast %443 : vector<1x400xf32> to vector<10x400xf32>
    %445 = arith.addf %442, %444 : vector<10x400xf32>
    %446 = arith.truncf %445 : vector<10x400xf32> to vector<10x400xbf16>
    %c0_170 = arith.constant 0 : index
    %c0_171 = arith.constant 0 : index
    %447 = vector.load %arg18[%c0_170, %c0_171] : memref<400x64xbf16, #tpu.memory_space<vmem>>, vector<400x64xbf16>
    %cst_172 = arith.constant dense<0.000000e+00> : vector<10x64xf32>
    %448 = tpu.matmul %446, %447, %cst_172 {dimension_numbers = #tpu.dot_dimension_numbers<[1], [0], [0], [1], [0, 0, 1, 1], [], []>} : vector<10x400xbf16>, vector<400x64xbf16>, vector<10x64xf32> -> vector<10x64xf32>
    %c0_173 = arith.constant 0 : index
    %c0_174 = arith.constant 0 : index
    %449 = vector.load %arg19[%c0_173, %c0_174] : memref<1x64xf32, #tpu.memory_space<vmem>>, vector<1x64xf32>
    %450 = vector.broadcast %449 : vector<1x64xf32> to vector<10x64xf32>
    %451 = arith.addf %448, %450 : vector<10x64xf32>
    %cst_175 = arith.constant 0.000000e+00 : f32
    %452 = vector.broadcast %cst_175 : f32 to vector<10x64xf32>
    %453 = arith.maximumf %451, %452 : vector<10x64xf32>
    %454 = arith.truncf %453 : vector<10x64xf32> to vector<10x64xbf16>
    %c0_176 = arith.constant 0 : index
    %c0_177 = arith.constant 0 : index
    %455 = vector.load %arg20[%c0_176, %c0_177] : memref<64x400xbf16, #tpu.memory_space<vmem>>, vector<64x400xbf16>
    %cst_178 = arith.constant dense<0.000000e+00> : vector<10x400xf32>
    %456 = tpu.matmul %454, %455, %cst_178 {dimension_numbers = #tpu.dot_dimension_numbers<[1], [0], [0], [1], [0, 0, 1, 1], [], []>} : vector<10x64xbf16>, vector<64x400xbf16>, vector<10x400xf32> -> vector<10x400xf32>
    %c0_179 = arith.constant 0 : index
    %c0_180 = arith.constant 0 : index
    %457 = vector.load %arg21[%c0_179, %c0_180] : memref<1x400xf32, #tpu.memory_space<vmem>>, vector<1x400xf32>
    %458 = vector.broadcast %457 : vector<1x400xf32> to vector<10x400xf32>
    %459 = arith.addf %456, %458 : vector<10x400xf32>
    %460 = arith.addf %445, %459 : vector<10x400xf32>
    %cst_181 = arith.constant dense<0.000000e+00> : vector<10xf32>
    %461 = vector.multi_reduction <add>, %460, %cst_181 [1] : vector<10x400xf32> to vector<10xf32>
    %462 = vector.shape_cast %461 : vector<10xf32> to vector<10x1xf32>
    %cst_182 = arith.constant 4.000000e+02 : f32
    %463 = vector.broadcast %cst_182 : f32 to vector<10x1xf32>
    %464 = arith.divf %462, %463 : vector<10x1xf32>
    %465 = vector.broadcast %464 : vector<10x1xf32> to vector<10x400xf32>
    %466 = arith.subf %460, %465 : vector<10x400xf32>
    %467 = arith.mulf %466, %466 : vector<10x400xf32>
    %cst_183 = arith.constant dense<0.000000e+00> : vector<10xf32>
    %468 = vector.multi_reduction <add>, %467, %cst_183 [1] : vector<10x400xf32> to vector<10xf32>
    %469 = vector.shape_cast %468 : vector<10xf32> to vector<10x1xf32>
    %cst_184 = arith.constant 4.000000e+02 : f32
    %470 = vector.broadcast %cst_184 : f32 to vector<10x1xf32>
    %471 = arith.divf %469, %470 : vector<10x1xf32>
    %cst_185 = arith.constant 9.99999974E-6 : f32
    %472 = vector.broadcast %cst_185 : f32 to vector<10x1xf32>
    %473 = arith.addf %471, %472 : vector<10x1xf32>
    %474 = math.rsqrt %473 : vector<10x1xf32>
    %475 = vector.broadcast %474 : vector<10x1xf32> to vector<10x400xf32>
    %476 = arith.mulf %466, %475 : vector<10x400xf32>
    %c0_186 = arith.constant 0 : index
    %c0_187 = arith.constant 0 : index
    %477 = vector.load %arg24[%c0_186, %c0_187] : memref<1x400xf32, #tpu.memory_space<vmem>>, vector<1x400xf32>
    %478 = vector.broadcast %477 : vector<1x400xf32> to vector<10x400xf32>
    %479 = arith.mulf %476, %478 : vector<10x400xf32>
    %c0_188 = arith.constant 0 : index
    %c0_189 = arith.constant 0 : index
    %480 = vector.load %arg25[%c0_188, %c0_189] : memref<1x400xf32, #tpu.memory_space<vmem>>, vector<1x400xf32>
    %481 = vector.broadcast %480 : vector<1x400xf32> to vector<10x400xf32>
    %482 = arith.addf %479, %481 : vector<10x400xf32>
    %483 = arith.truncf %482 : vector<10x400xf32> to vector<10x400xbf16>
    %c0_190 = arith.constant 0 : index
    %c0_191 = arith.constant 0 : index
    %484 = vector.load %arg26[%c0_190, %c0_191] : memref<400x400xbf16, #tpu.memory_space<vmem>>, vector<400x400xbf16>
    %cst_192 = arith.constant dense<0.000000e+00> : vector<10x400xf32>
    %485 = tpu.matmul %483, %484, %cst_192 {dimension_numbers = #tpu.dot_dimension_numbers<[1], [0], [0], [1], [0, 0, 1, 1], [], []>} : vector<10x400xbf16>, vector<400x400xbf16>, vector<10x400xf32> -> vector<10x400xf32>
    %c0_193 = arith.constant 0 : index
    %c0_194 = arith.constant 0 : index
    %486 = vector.load %arg27[%c0_193, %c0_194] : memref<1x400xf32, #tpu.memory_space<vmem>>, vector<1x400xf32>
    %487 = vector.broadcast %486 : vector<1x400xf32> to vector<10x400xf32>
    %488 = arith.addf %485, %487 : vector<10x400xf32>
    %cst_195 = arith.constant 0.000000e+00 : f32
    %489 = vector.broadcast %cst_195 : f32 to vector<10x400xf32>
    %490 = arith.maximumf %488, %489 : vector<10x400xf32>
    %c0_196 = arith.constant 0 : index
    %c0_197 = arith.constant 0 : index
    %491 = vector.load %arg28[%c0_196, %c0_197] : memref<1x400xf32, #tpu.memory_space<vmem>>, vector<1x400xf32>
    %492 = vector.broadcast %491 : vector<1x400xf32> to vector<10x400xf32>
    %493 = arith.mulf %490, %492 : vector<10x400xf32>
    %cst_198 = arith.constant dense<0.000000e+00> : vector<10xf32>
    %494 = vector.multi_reduction <add>, %493, %cst_198 [1] : vector<10x400xf32> to vector<10xf32>
    %495 = vector.shape_cast %494 : vector<10xf32> to vector<10x1xf32>
    %c0_199 = arith.constant 0 : index
    %c0_200 = arith.constant 0 : index
    %496 = vector.load %arg29[%c0_199, %c0_200] : memref<1x1xf32, #tpu.memory_space<vmem>>, vector<1x1xf32>
    %497 = vector.broadcast %496 : vector<1x1xf32> to vector<10x1xf32>
    %498 = arith.addf %495, %497 : vector<10x1xf32>
    %c0_201 = arith.constant 0 : index
    %c0_202 = arith.constant 0 : index
    %499 = vector.load %arg30[%c0_201, %c0_202] : memref<10x1xf32, #tpu.memory_space<vmem>>, vector<10x1xf32>
    tpu.vector_store %arg30[%c0_201, %c0_202], %498 {strides = array<i32>} : memref<10x1xf32, #tpu.memory_space<vmem>>, vector<10x1xf32>,
    return
  }
  func.func @transform_0(%arg0: i32) -> (i32, i32) {
    %c0_i32 = arith.constant 0 : i32
    %c0_i32_0 = arith.constant 0 : i32
    %c0_i32_1 = arith.constant 0 : i32
    return %c0_i32, %c0_i32_0 : i32, i32
  }
  func.func @transform_1(%arg0: i32) -> (i32, i32) {
    %c0_i32 = arith.constant 0 : i32
    %c0_i32_0 = arith.constant 0 : i32
    %c0_i32_1 = arith.constant 0 : i32
    return %c0_i32, %c0_i32_0 : i32, i32
  }
  func.func @transform_2(%arg0: i32) -> (i32, i32) {
    %c0_i32 = arith.constant 0 : i32
    %c0_i32_0 = arith.constant 0 : i32
    %c0_i32_1 = arith.constant 0 : i32
    return %c0_i32, %c0_i32_0 : i32, i32
  }
  func.func @transform_3(%arg0: i32) -> (i32, i32) {
    %c0_i32 = arith.constant 0 : i32
    %c0_i32_0 = arith.constant 0 : i32
    %c0_i32_1 = arith.constant 0 : i32
    return %c0_i32, %c0_i32_0 : i32, i32
  }
  func.func @transform_4(%arg0: i32) -> (i32, i32) {
    %c0_i32 = arith.constant 0 : i32
    %c0_i32_0 = arith.constant 0 : i32
    %c0_i32_1 = arith.constant 0 : i32
    return %c0_i32, %c0_i32_0 : i32, i32
  }
  func.func @transform_5(%arg0: i32) -> (i32, i32) {
    %c0_i32 = arith.constant 0 : i32
    %c0_i32_0 = arith.constant 0 : i32
    %c0_i32_1 = arith.constant 0 : i32
    return %c0_i32, %c0_i32_0 : i32, i32
  }
  func.func @transform_6(%arg0: i32) -> (i32, i32) {
    %c0_i32 = arith.constant 0 : i32
    %c0_i32_0 = arith.constant 0 : i32
    %c0_i32_1 = arith.constant 0 : i32
    return %c0_i32, %c0_i32_0 : i32, i32
  }
  func.func @transform_7(%arg0: i32) -> (i32, i32) {
    %c0_i32 = arith.constant 0 : i32
    %c0_i32_0 = arith.constant 0 : i32
    %c0_i32_1 = arith.constant 0 : i32
    return %c0_i32, %c0_i32_0 : i32, i32
  }
  func.func @transform_8(%arg0: i32) -> (i32, i32) {
    %c0_i32 = arith.constant 0 : i32
    %c0_i32_0 = arith.constant 0 : i32
    %c0_i32_1 = arith.constant 0 : i32
    return %c0_i32, %c0_i32_0 : i32, i32
  }
  func.func @transform_9(%arg0: i32) -> (i32, i32) {
    %c0_i32 = arith.constant 0 : i32
    %c0_i32_0 = arith.constant 0 : i32
    %c0_i32_1 = arith.constant 0 : i32
    return %c0_i32, %c0_i32_0 : i32, i32
  }
  func.func @transform_10(%arg0: i32) -> (i32, i32) {
    %c0_i32 = arith.constant 0 : i32
    %c0_i32_0 = arith.constant 0 : i32
    %c0_i32_1 = arith.constant 0 : i32
    return %c0_i32, %c0_i32_0 : i32, i32
  }
  func.func @transform_11(%arg0: i32) -> (i32, i32) {
    %c0_i32 = arith.constant 0 : i32
    %c0_i32_0 = arith.constant 0 : i32
    %c0_i32_1 = arith.constant 0 : i32
    return %c0_i32, %c0_i32_0 : i32, i32
  }
  func.func @transform_12(%arg0: i32) -> (i32, i32) {
    %c0_i32 = arith.constant 0 : i32
    %c0_i32_0 = arith.constant 0 : i32
    %c0_i32_1 = arith.constant 0 : i32
    return %c0_i32, %c0_i32_0 : i32, i32
  }
  func.func @transform_13(%arg0: i32) -> (i32, i32) {
    %c0_i32 = arith.constant 0 : i32
    %c0_i32_0 = arith.constant 0 : i32
    %c0_i32_1 = arith.constant 0 : i32
    return %c0_i32, %c0_i32_0 : i32, i32
  }
  func.func @transform_14(%arg0: i32) -> (i32, i32) {
    %c0_i32 = arith.constant 0 : i32
    %c0_i32_0 = arith.constant 0 : i32
    %c0_i32_1 = arith.constant 0 : i32
    return %c0_i32, %c0_i32_0 : i32, i32
  }
  func.func @transform_15(%arg0: i32) -> (i32, i32) {
    %c0_i32 = arith.constant 0 : i32
    %c0_i32_0 = arith.constant 0 : i32
    %c0_i32_1 = arith.constant 0 : i32
    return %c0_i32, %c0_i32_0 : i32, i32
  }
  func.func @transform_16(%arg0: i32) -> (i32, i32) {
    %c0_i32 = arith.constant 0 : i32
    %c0_i32_0 = arith.constant 0 : i32
    %c0_i32_1 = arith.constant 0 : i32
    return %c0_i32, %c0_i32_0 : i32, i32
  }
  func.func @transform_17(%arg0: i32) -> (i32, i32) {
    %c0_i32 = arith.constant 0 : i32
    %c0_i32_0 = arith.constant 0 : i32
    %c0_i32_1 = arith.constant 0 : i32
    return %c0_i32, %c0_i32_0 : i32, i32
  }
  func.func @transform_18(%arg0: i32) -> (i32, i32) {
    %c0_i32 = arith.constant 0 : i32
    %c0_i32_0 = arith.constant 0 : i32
    %c0_i32_1 = arith.constant 0 : i32
    return %c0_i32, %c0_i32_0 : i32, i32
  }
  func.func @transform_19(%arg0: i32) -> (i32, i32) {
    %c0_i32 = arith.constant 0 : i32
    %c0_i32_0 = arith.constant 0 : i32
    %c0_i32_1 = arith.constant 0 : i32
    return %c0_i32, %c0_i32_0 : i32, i32
  }
  func.func @transform_20(%arg0: i32) -> (i32, i32) {
    %c0_i32 = arith.constant 0 : i32
    %c0_i32_0 = arith.constant 0 : i32
    %c0_i32_1 = arith.constant 0 : i32
    return %c0_i32, %c0_i32_0 : i32, i32
  }
  func.func @transform_21(%arg0: i32) -> (i32, i32) {
    %c0_i32 = arith.constant 0 : i32
    %c0_i32_0 = arith.constant 0 : i32
    %c0_i32_1 = arith.constant 0 : i32
    return %c0_i32, %c0_i32_0 : i32, i32
  }
  func.func @transform_22(%arg0: i32) -> (i32, i32) {
    %c0_i32 = arith.constant 0 : i32
    %c0_i32_0 = arith.constant 0 : i32
    %c0_i32_1 = arith.constant 0 : i32
    return %c0_i32, %c0_i32_0 : i32, i32
  }
  func.func @transform_23(%arg0: i32) -> (i32, i32) {
    %c0_i32 = arith.constant 0 : i32
    %c0_i32_0 = arith.constant 0 : i32
    %c0_i32_1 = arith.constant 0 : i32
    return %c0_i32, %c0_i32_0 : i32, i32
  }
  func.func @transform_24(%arg0: i32) -> (i32, i32) {
    %c0_i32 = arith.constant 0 : i32
    %c0_i32_0 = arith.constant 0 : i32
    %c0_i32_1 = arith.constant 0 : i32
    return %c0_i32, %c0_i32_0 : i32, i32
  }
  func.func @transform_25(%arg0: i32) -> (i32, i32) {
    %c0_i32 = arith.constant 0 : i32
    %c0_i32_0 = arith.constant 0 : i32
    %c0_i32_1 = arith.constant 0 : i32
    return %c0_i32, %c0_i32_0 : i32, i32
  }
  func.func @transform_26(%arg0: i32) -> (i32, i32) {
    %c0_i32 = arith.constant 0 : i32
    %c0_i32_0 = arith.constant 0 : i32
    %c0_i32_1 = arith.constant 0 : i32
    return %c0_i32, %c0_i32_0 : i32, i32
  }
  func.func @transform_27(%arg0: i32) -> (i32, i32) {
    %c0_i32 = arith.constant 0 : i32
    %c0_i32_0 = arith.constant 0 : i32
    %c0_i32_1 = arith.constant 0 : i32
    return %c0_i32, %c0_i32_0 : i32, i32
  }
  func.func @transform_28(%arg0: i32) -> (i32, i32) {
    %c0_i32 = arith.constant 0 : i32
    %c0_i32_0 = arith.constant 0 : i32
    %c0_i32_1 = arith.constant 0 : i32
    return %c0_i32, %c0_i32_0 : i32, i32
  }
  func.func @transform_29(%arg0: i32) -> (i32, i32) {
    %c0_i32 = arith.constant 0 : i32
    %c0_i32_0 = arith.constant 0 : i32
    %c0_i32_1 = arith.constant 0 : i32
    return %c0_i32, %c0_i32_0 : i32, i32
  }
}

</mosaic_0001>

<llo_original>
// kernel: _forward.2
$region0: #{_forward.2}
  #allocation0 [shape = 'u32[]', space=smem, size = 0x4, offset = 0x4, fixed_abs, tag = 'smem constant byte address 0x4 - core index']
  #allocation1 [shape = 'u32[144,128]{1,0:T(1,128)}', space=vmem, size = 0x12000, scoped, tag = 'internal scratch']
  %s0 = inlined_call_operand.vmem [shape: bf16[8,27,900], index: 0, kind: input, shape index: {}]
  %s1 = inlined_call_operand.vmem [shape: bf16[16,27], index: 1, kind: input, shape index: {}]
  %s2 = inlined_call_operand.vmem [shape: f32[16,1], index: 2, kind: input, shape index: {}]
  %s3 = inlined_call_operand.vmem [shape: f32[8,16,25], index: 3, kind: output, shape index: {}]
  %s4 = sld [smem:[#allocation0]]
  $region45: #{_forward.2} parent=0
    _
  %s6 = ssub.s32 1, %s4
  %s7 = scalar_select 0, %s6, %s4
  loop: start=0, step=1, limit=10
  $region2: #{_forward.2} parent=0 // loop_pre_header
    _
  $region3: #{_forward.2} parent=0 // loop_header
    %s9 = sphi 0, %s13
    %p10 = scmp.ge.s32.totalorder %s9, 10
    %s19 = sphi 0, %s21
    %s22 = sphi 0, %s19
    %s23 = sphi 0, %s22
    %s39 = sphi 0, %s23
    %s43 = sphi 0, %s43
    %s45 = sphi 0, %s43
    %s46 = sphi 0, %s45
    %s60 = sphi 0, %s46
    %s64 = sphi 0, %s64
    %s66 = sphi 0, %s64
    %s67 = sphi 0, %s66
    %s81 = sphi 0, %s67
    %s87 = sphi 0, %s89
    %s90 = sphi 0, %s87
    %s91 = sphi 0, %s90
    %s107 = sphi 0, %s91
  $region4: #{_forward.2} parent=0 // loop_header_branch
    %12 = sbr.rel (%p10) target = $region8
  $region5: #{_forward.2} parent=0 // loop_body
    %s14 = ssub.s32 %s9, 1
    %s15 = ssub.s32 %s9, 2
    %s16 = sadd.s32 %s9, 1
    %s17 = ssub.s32 %s9, %s16
    %p18 = scmp.eq.s32.totalorder %s17, 0
    %s20 = sadd.s32 %s19, 1
    %s21 = scalar_select %p18, %s19, %s20
    %p24 = pneg %p18
    %p25 = scmp.eq.s32.totalorder %s9, 7
    %p26 = por %p24, %p25
    %p27 = scmp.ne.s32.totalorder %s19, %s22
    %p28 = scmp.eq.s32.totalorder %s9, 0
    %p29 = por %p27, %p28
    %p30 = scmp.ne.s32.totalorder %s19, %s22
    %p31 = scmp.eq.s32.totalorder %s14, 7
    %p32 = por %p30, %p31
    %p33 = scmp.ne.s32.totalorder %s22, %s23
    %p34 = scmp.eq.s32.totalorder %s14, 0
    %p35 = por %p33, %p34
    %p36 = scmp.ne.s32.totalorder %s22, %s23
    %p37 = scmp.eq.s32.totalorder %s15, 7
    %p38 = por %p36, %p37
    %p40 = scmp.ne.s32.totalorder %s23, %s39
    %p41 = scmp.eq.s32.totalorder %s15, 0
    %p42 = por %p40, %p41
    %s44 = sadd.s32 %s43, 1
    %p47 = scmp.eq.s32.totalorder %s9, 7
    %p48 = scmp.ne.s32.totalorder %s43, %s45
    %p49 = scmp.eq.s32.totalorder %s9, 0
    %p50 = por %p48, %p49
    %p51 = scmp.ne.s32.totalorder %s43, %s45
    %p52 = scmp.eq.s32.totalorder %s14, 7
    %p53 = por %p51, %p52
    %p54 = scmp.ne.s32.totalorder %s45, %s46
    %p55 = scmp.eq.s32.totalorder %s14, 0
    %p56 = por %p54, %p55
    %p57 = scmp.ne.s32.totalorder %s45, %s46
    %p58 = scmp.eq.s32.totalorder %s15, 7
    %p59 = por %p57, %p58
    %p61 = scmp.ne.s32.totalorder %s46, %s60
    %p62 = scmp.eq.s32.totalorder %s15, 0
    %p63 = por %p61, %p62
    %s65 = sadd.s32 %s64, 1
    %p68 = scmp.eq.s32.totalorder %s9, 7
    %p69 = scmp.ne.s32.totalorder %s64, %s66
    %p70 = scmp.eq.s32.totalorder %s9, 0
    %p71 = por %p69, %p70
    %p72 = scmp.ne.s32.totalorder %s64, %s66
    %p73 = scmp.eq.s32.totalorder %s14, 7
    %p74 = por %p72, %p73
    %p75 = scmp.ne.s32.totalorder %s66, %s67
    %p76 = scmp.eq.s32.totalorder %s14, 0
    %p77 = por %p75, %p76
    %p78 = scmp.ne.s32.totalorder %s66, %s67
    %p79 = scmp.eq.s32.totalorder %s15, 7
    %p80 = por %p78, %p79
    %p82 = scmp.ne.s32.totalorder %s67, %s81
    %p83 = scmp.eq.s32.totalorder %s15, 0
    %p84 = por %p82, %p83
    %s85 = ssub.s32 %s9, %s16
    %p86 = scmp.eq.s32.totalorder %s85, 0
    %s88 = sadd.s32 %s87, 1
    %s89 = scalar_select %p86, %s87, %s88
    %p92 = pneg %p86
    %p93 = scmp.eq.s32.totalorder %s9, 7
    %p94 = por %p92, %p93
    %p95 = scmp.ne.s32.totalorder %s87, %s90
    %p96 = scmp.eq.s32.totalorder %s9, 0
    %p97 = por %p95, %p96
    %p98 = scmp.ne.s32.totalorder %s87, %s90
    %p99 = scmp.eq.s32.totalorder %s14, 7
    %p100 = por %p98, %p99
    %p101 = scmp.ne.s32.totalorder %s90, %s91
    %p102 = scmp.eq.s32.totalorder %s14, 0
    %p103 = por %p101, %p102
    %p104 = scmp.ne.s32.totalorder %s90, %s91
    %p105 = scmp.eq.s32.totalorder %s15, 7
    %p106 = por %p104, %p105
    %p108 = scmp.ne.s32.totalorder %s91, %s107
    %p109 = scmp.eq.s32.totalorder %s15, 0
    %p110 = por %p108, %p109
    %p111 = scmp.le.s32.totalorder 1, %s9
    %p112 = scmp.lt.s32.totalorder %s9, 9
    %p113 = pnand %p111, %p112
    %p114 = pneg %p113
    // Predicated region
    $region9: #{_forward.2} parent=5 // pred_check
      _
    $region10: #{_forward.2} parent=5 // pred_check_branch
      %116 = sbr.rel (%p113) target = $region12
    $region11: #{_forward.2} parent=5 // pred_region
      %s117 = ssub.s32 %s9, 1
      // Predicated region
      $region13: #{_forward.2} parent=11 // pred_check
        %p118 = pneg %p56
      $region14: #{_forward.2} parent=11 // pred_check_branch
        %120 = sbr.rel (%p118) target = $region16
      $region15: #{_forward.2} parent=11 // pred_region
        _
      $region16: #{_forward.2} parent=11 // pred_fallthru
        _
      // Predicated region
      $region17: #{_forward.2} parent=11 // pred_check
        %p121 = pneg %p77
      $region18: #{_forward.2} parent=11 // pred_check_branch
        %123 = sbr.rel (%p121) target = $region20
      $region19: #{_forward.2} parent=11 // pred_region
        _
      $region20: #{_forward.2} parent=11 // pred_fallthru
        _
    $region12: #{_forward.2} parent=5 // pred_fallthru
      _
    %p124 = scmp.lt.s32.totalorder %s9, 8
    // Predicated region
    $region21: #{_forward.2} parent=5 // pred_check
      %p125 = pneg %p124
    $region22: #{_forward.2} parent=5 // pred_check_branch
      %127 = sbr.rel (%p125) target = $region24
    $region23: #{_forward.2} parent=5 // pred_region
      // Predicated region
      $region25: #{_forward.2} parent=23 // pred_check
        %p128 = pneg %p29
      $region26: #{_forward.2} parent=23 // pred_check_branch
        %130 = sbr.rel (%p128) target = $region28
      $region27: #{_forward.2} parent=23 // pred_region
        %p131 = scmp.lt.s32.totalorder %s9, 7
        %s132 = scalar_select %p131, %s9, 7
        %s133 = smul.addr %s132, 32
        %s134 = smul.addr %s133, 4
        %s135 = scalar_lea.vmem %s0, %s134
      $region28: #{_forward.2} parent=23 // pred_fallthru
        _
    $region24: #{_forward.2} parent=5 // pred_fallthru
      _
    %p136 = scmp.le.s32.totalorder 1, %s9
    %p137 = scmp.lt.s32.totalorder %s9, 9
    %p138 = pnand %p136, %p137
    %p139 = pneg %p138
    // Predicated region
    $region29: #{_forward.2} parent=5 // pred_check
      _
    $region30: #{_forward.2} parent=5 // pred_check_branch
      %141 = sbr.rel (%p138) target = $region32
    $region31: #{_forward.2} parent=5 // pred_region
      %s142 = ssub.s32 %s9, 1
      %p143 = scmp.lt.s32.totalorder %s14, 7
      %s144 = scalar_select %p143, %s14, 7
      %s145 = smul.addr %s144, 32
      %s146 = smul.addr %s145, 4
      %s147 = scalar_lea.vmem %s0, %s146
      %p148 = pneg %p35
      %p149 = pneg %p32
      %p150 = pneg %p56
      %p151 = pneg %p53
      %p152 = pneg %p77
      %p153 = pneg %p74
      %p154 = pneg %p103
      %p155 = pneg %p100
      %p156 = scmp.lt.s32.totalorder %s14, 7
      %s157 = scalar_select %p156, %s14, 7
      %s158 = smul.addr %s157, 2
      %s159 = smul.addr %s158, 8
      %s160 = scalar_lea.vmem %s3, %s159
      %p161 = scmp.lt.s32.totalorder %s14, 7
      %s162 = scalar_select %p161, %s14, 7
      %s163 = smul.addr %s162, 32
      %s164 = smul.addr %s163, 4
      %s165 = scalar_lea.vmem %s0, %s164
      %p166 = scmp.lt.s32.totalorder %s14, 7
      %s167 = scalar_select %p166, %s14, 7
      %s168 = smul.addr %s167, 2
      %s169 = smul.addr %s168, 8
      %s170 = scalar_lea.vmem %s3, %s169
      %v172 = vld [vmem:[%s1] sm:$0xf]
      %v173 = vld [vmem:[%s1 + $0x4] sm:$0xf]
      %v174 = vld [vmem:[%s165] sm:$0xff]
      %v175 = vld [vmem:[%s165 + $0x8] sm:$0xff]
      %v176 = vld [vmem:[%s165 + $0x10] sm:$0xff]
      %v177 = vld [vmem:[%s165 + $0x18] sm:$0xff]
      %v178 = vld [vmem:[%s165 + $0x20] sm:$0xff]
      %v179 = vld [vmem:[%s165 + $0x28] sm:$0xff]
      %v180 = vld [vmem:[%s165 + $0x30] sm:$0xff]
      %v181 = vld [vmem:[%s165 + $0x38] sm:$0xff]
      %v182 = vld [vmem:[%s165 + $0x40] sm:$0xff]
      %v183 = vld [vmem:[%s165 + $0x48] sm:$0xff]
      %v184 = vld [vmem:[%s165 + $0x50] sm:$0xff]
      %v185 = vld [vmem:[%s165 + $0x58] sm:$0xff]
      %v186 = vld [vmem:[%s165 + $0x60] sm:$0x33]
      %v187 = vld [vmem:[%s165 + $0x68] sm:$0x33]
      %v188 = vld [vmem:[%s165 + $0x70] sm:$0x33]
      %v189 = vld [vmem:[%s165 + $0x78] sm:$0x33]
      %v190 = vld [vmem:[%s2] sm:$0xff]
      %v191 = vld [vmem:[%s2 + $0x8] sm:$0xff]
      %193 = vset.pattern.permute.xlu0 0
      %194 = vperm.xlu0 %193, %v190
      %v195 = vpop.permute.xlu0 %194
      %198 = vset.pattern.permute.xlu0 0
      %199 = vperm.xlu0 %198, %v191
      %v200 = vpop.permute.xlu0 %199
      %v204 = vunpack.c.l.b16 %v172
      %v205 = vunpack.c.l.b16 %v173
      %v206 = vpack.c.b16 %v205, %v204
      %v223 = vunpack.c.l.b16 %v174
      %v224 = vunpack.c.h.b16 %v174
      %v225 = vunpack.c.l.b16 %v175
      %v226 = vunpack.c.h.b16 %v175
      %v227 = vunpack.c.l.b16 %v176
      %v228 = vunpack.c.h.b16 %v176
      %v229 = vunpack.c.l.b16 %v177
      %v230 = vunpack.c.h.b16 %v177
      %v231 = vunpack.c.l.b16 %v178
      %v232 = vunpack.c.h.b16 %v178
      %v233 = vunpack.c.l.b16 %v179
      %v234 = vunpack.c.h.b16 %v179
      %v235 = vunpack.c.l.b16 %v180
      %v236 = vunpack.c.h.b16 %v180
      %v237 = vunpack.c.l.b16 %v181
      %v238 = vunpack.c.h.b16 %v181
      %v239 = vunpack.c.l.b16 %v182
      %v240 = vunpack.c.h.b16 %v182
      %v241 = vunpack.c.l.b16 %v183
      %v242 = vunpack.c.h.b16 %v183
      %v243 = vunpack.c.l.b16 %v184
      %v244 = vunpack.c.h.b16 %v184
      %v245 = vunpack.c.l.b16 %v185
      %v246 = vunpack.c.h.b16 %v185
      %v247 = vunpack.c.l.b16 %v186
      %v248 = vunpack.c.h.b16 %v186
      %v249 = vunpack.c.l.b16 %v187
      %v250 = vunpack.c.h.b16 %v187
      %v251 = vunpack.c.l.b16 %v188
      %v252 = vunpack.c.h.b16 %v188
      %v253 = vunpack.c.l.b16 %v189
      %v254 = vunpack.c.h.b16 %v189
      %v255 = vpack.c.b16 %v231, %v223
      %v256 = vpack.c.b16 %v232, %v224
      %v257 = vpack.c.b16 %v233, %v225
      %v258 = vpack.c.b16 %v234, %v226
      %v259 = vpack.c.b16 %v235, %v227
      %v260 = vpack.c.b16 %v236, %v228
      %v261 = vpack.c.b16 %v237, %v229
      %v262 = vpack.c.b16 %v238, %v230
      %v263 = vpack.c.b16 %v247, %v239
      %v264 = vpack.c.b16 %v248, %v240
      %v265 = vpack.c.b16 %v249, %v241
      %v266 = vpack.c.b16 %v250, %v242
      %v267 = vpack.c.b16 %v251, %v243
      %v268 = vpack.c.b16 %v252, %v244
      %v269 = vpack.c.b16 %v253, %v245
      %v270 = vpack.c.b16 %v254, %v246
      %vm279 = vcmask 220160
      %v281 = vsel %vm279, %v206, 0
      %vm283 = vcmask 1044480
      %vm284 = vcmask 1045504
      %v285 = vsel %vm283, 4294967295, 65535
      %v286 = vsel %vm284, %v285, 0
      %v288 = vand.u32 %v263, %v286
      %v291 = vand.u32 %v264, %v286
      %v294 = vand.u32 %v265, %v286
      %v297 = vand.u32 %v266, %v286
      %v300 = vand.u32 %v267, %v286
      %v303 = vand.u32 %v268, %v286
      %v306 = vand.u32 %v269, %v286
      %v309 = vand.u32 %v270, %v286
      %311 = vmatprep.subr.bf16.mxu0 %v256
      %312 = vmatpush1.bf16.msra.mxu0 %v255
      %313 = vmatprep.subr.bf16.mxu0 %v291
      %314 = vmatpush1.bf16.msra.mxu0 %v288
      %315 = vmatprep.subr.bf16.mxu0 0
      %316 = vmatpush1.bf16.msra.mxu0 0
      %317 = vmatprep.subr.bf16.mxu0 0
      %318 = vmatpush1.bf16.msra.mxu0 0
      %319 = vmatprep.subr.bf16.mxu0 0
      %320 = vmatpush1.bf16.msra.mxu0 0
      %321 = vmatprep.subr.bf16.mxu0 0
      %322 = vmatpush1.bf16.msra.mxu0 0
      %323 = vmatprep.subr.bf16.mxu0 0
      %324 = vmatpush1.bf16.msra.mxu0 0
      %325 = vmatprep.subr.bf16.mxu0 0
      %326 = vmatpush1.bf16.msra.mxu0 0
      %327 = vmatprep.subr.bf16.mxu0 0
      %328 = vmatpush1.bf16.msra.mxu0 0
      %329 = vmatprep.subr.bf16.mxu0 0
      %330 = vmatpush1.bf16.msra.mxu0 0
      %331 = vmatprep.subr.bf16.mxu0 0
      %332 = vmatpush1.bf16.msra.mxu0 0
      %333 = vmatprep.subr.bf16.mxu0 0
      %334 = vmatpush1.bf16.msra.mxu0 0
      %335 = vmatprep.subr.bf16.mxu0 0
      %336 = vmatpush1.bf16.msra.mxu0 0
      %337 = vmatprep.subr.bf16.mxu0 0
      %338 = vmatpush1.bf16.msra.mxu0 0
      %339 = vmatprep.subr.bf16.mxu0 0
      %340 = vmatpush1.bf16.msra.mxu0 0
      %341 = vmatprep.subr.bf16.mxu0 0
      %342 = vmatpush1.bf16.msra.mxu0 0
      %343 = vmatprep.mubr.bf16.mxu0 0
      %344 = vmatmul.mubr.bf16.gmra.mrb[0].mxu0 %v281
      %v345 = vpop.f32.mrb[0].mxu0
      %v346 = vadd.f32 %v195, %v345
      %v347 = vpop.f32.mrb[0].mxu0
      %v348 = vadd.f32 %v195, %v347
      %v349 = vpop.f32.mrb[0].mxu0
      %v350 = vadd.f32 %v200, %v349
      %v351 = vpop.f32.mrb[0].mxu0
      %v352 = vadd.f32 %v200, %v351
      %353 = vdwg.mxu0
      %354 = vmatprep.subr.bf16.mxu0 %v258
      %355 = vmatpush1.bf16.msra.mxu0 %v257
      %356 = vmatprep.subr.bf16.mxu0 %v297
      %357 = vmatpush1.bf16.msra.mxu0 %v294
      %358 = vmatprep.subr.bf16.mxu0 0
      %359 = vmatpush1.bf16.msra.mxu0 0
      %360 = vmatprep.subr.bf16.mxu0 0
      %361 = vmatpush1.bf16.msra.mxu0 0
      %362 = vmatprep.subr.bf16.mxu0 0
      %363 = vmatpush1.bf16.msra.mxu0 0
      %364 = vmatprep.subr.bf16.mxu0 0
      %365 = vmatpush1.bf16.msra.mxu0 0
      %366 = vmatprep.subr.bf16.mxu0 0
      %367 = vmatpush1.bf16.msra.mxu0 0
      %368 = vmatprep.subr.bf16.mxu0 0
      %369 = vmatpush1.bf16.msra.mxu0 0
      %370 = vmatprep.subr.bf16.mxu0 0
      %371 = vmatpush1.bf16.msra.mxu0 0
      %372 = vmatprep.subr.bf16.mxu0 0
      %373 = vmatpush1.bf16.msra.mxu0 0
      %374 = vmatprep.subr.bf16.mxu0 0
      %375 = vmatpush1.bf16.msra.mxu0 0
      %376 = vmatprep.subr.bf16.mxu0 0
      %377 = vmatpush1.bf16.msra.mxu0 0
      %378 = vmatprep.subr.bf16.mxu0 0
      %379 = vmatpush1.bf16.msra.mxu0 0
      %380 = vmatprep.subr.bf16.mxu0 0
      %381 = vmatpush1.bf16.msra.mxu0 0
      %382 = vmatprep.subr.bf16.mxu0 0
      %383 = vmatpush1.bf16.msra.mxu0 0
      %384 = vmatprep.subr.bf16.mxu0 0
      %385 = vmatpush1.bf16.msra.mxu0 0
      %386 = vmatprep.mubr.bf16.mxu0 0
      %387 = vmatmul.mubr.bf16.gmra.mrb[0].mxu0 %v281
      %v388 = vpop.f32.mrb[0].mxu0
      %v389 = vadd.f32 %v195, %v388
      %v390 = vpop.f32.mrb[0].mxu0
      %v391 = vadd.f32 %v195, %v390
      %v392 = vpop.f32.mrb[0].mxu0
      %v393 = vadd.f32 %v200, %v392
      %v394 = vpop.f32.mrb[0].mxu0
      %v395 = vadd.f32 %v200, %v394
      %396 = vdwg.mxu0
      %397 = vmatprep.subr.bf16.mxu0 %v260
      %398 = vmatpush1.bf16.msra.mxu0 %v259
      %399 = vmatprep.subr.bf16.mxu0 %v303
      %400 = vmatpush1.bf16.msra.mxu0 %v300
      %401 = vmatprep.subr.bf16.mxu0 0
      %402 = vmatpush1.bf16.msra.mxu0 0
      %403 = vmatprep.subr.bf16.mxu0 0
      %404 = vmatpush1.bf16.msra.mxu0 0
      %405 = vmatprep.subr.bf16.mxu0 0
      %406 = vmatpush1.bf16.msra.mxu0 0
      %407 = vmatprep.subr.bf16.mxu0 0
      %408 = vmatpush1.bf16.msra.mxu0 0
      %409 = vmatprep.subr.bf16.mxu0 0
      %410 = vmatpush1.bf16.msra.mxu0 0
      %411 = vmatprep.subr.bf16.mxu0 0
      %412 = vmatpush1.bf16.msra.mxu0 0
      %413 = vmatprep.subr.bf16.mxu0 0
      %414 = vmatpush1.bf16.msra.mxu0 0
      %415 = vmatprep.subr.bf16.mxu0 0
      %416 = vmatpush1.bf16.msra.mxu0 0
      %417 = vmatprep.subr.bf16.mxu0 0
      %418 = vmatpush1.bf16.msra.mxu0 0
      %419 = vmatprep.subr.bf16.mxu0 0
      %420 = vmatpush1.bf16.msra.mxu0 0
      %421 = vmatprep.subr.bf16.mxu0 0
      %422 = vmatpush1.bf16.msra.mxu0 0
      %423 = vmatprep.subr.bf16.mxu0 0
      %424 = vmatpush1.bf16.msra.mxu0 0
      %425 = vmatprep.subr.bf16.mxu0 0
      %426 = vmatpush1.bf16.msra.mxu0 0
      %427 = vmatprep.subr.bf16.mxu0 0
      %428 = vmatpush1.bf16.msra.mxu0 0
      %429 = vmatprep.mubr.bf16.mxu0 0
      %430 = vmatmul.mubr.bf16.gmra.mrb[0].mxu0 %v281
      %v431 = vpop.f32.mrb[0].mxu0
      %v432 = vadd.f32 %v195, %v431
      %v433 = vpop.f32.mrb[0].mxu0
      %v434 = vadd.f32 %v195, %v433
      %v435 = vpop.f32.mrb[0].mxu0
      %v436 = vadd.f32 %v200, %v435
      %v437 = vpop.f32.mrb[0].mxu0
      %v438 = vadd.f32 %v200, %v437
      %439 = vdwg.mxu0
      %440 = vmatprep.subr.bf16.mxu0 %v262
      %441 = vmatpush1.bf16.msra.mxu0 %v261
      %442 = vmatprep.subr.bf16.mxu0 %v309
      %443 = vmatpush1.bf16.msra.mxu0 %v306
      %444 = vmatprep.subr.bf16.mxu0 0
      %445 = vmatpush1.bf16.msra.mxu0 0
      %446 = vmatprep.subr.bf16.mxu0 0
      %447 = vmatpush1.bf16.msra.mxu0 0
      %448 = vmatprep.subr.bf16.mxu0 0
      %449 = vmatpush1.bf16.msra.mxu0 0
      %450 = vmatprep.subr.bf16.mxu0 0
      %451 = vmatpush1.bf16.msra.mxu0 0
      %452 = vmatprep.subr.bf16.mxu0 0
      %453 = vmatpush1.bf16.msra.mxu0 0
      %454 = vmatprep.subr.bf16.mxu0 0
      %455 = vmatpush1.bf16.msra.mxu0 0
      %456 = vmatprep.subr.bf16.mxu0 0
      %457 = vmatpush1.bf16.msra.mxu0 0
      %458 = vmatprep.subr.bf16.mxu0 0
      %459 = vmatpush1.bf16.msra.mxu0 0
      %460 = vmatprep.subr.bf16.mxu0 0
      %461 = vmatpush1.bf16.msra.mxu0 0
      %462 = vmatprep.subr.bf16.mxu0 0
      %463 = vmatpush1.bf16.msra.mxu0 0
      %464 = vmatprep.subr.bf16.mxu0 0
      %465 = vmatpush1.bf16.msra.mxu0 0
      %466 = vmatprep.subr.bf16.mxu0 0
      %467 = vmatpush1.bf16.msra.mxu0 0
      %468 = vmatprep.subr.bf16.mxu0 0
      %469 = vmatpush1.bf16.msra.mxu0 0
      %470 = vmatprep.subr.bf16.mxu0 0
      %471 = vmatpush1.bf16.msra.mxu0 0
      %472 = vmatprep.mubr.bf16.mxu0 0
      %473 = vmatmul.mubr.bf16.gmra.mrb[0].mxu0 %v281
      %v474 = vpop.f32.mrb[0].mxu0
      %v475 = vadd.f32 %v195, %v474
      %v476 = vpop.f32.mrb[0].mxu0
      %v477 = vadd.f32 %v195, %v476
      %v478 = vpop.f32.mrb[0].mxu0
      %v479 = vadd.f32 %v200, %v478
      %v480 = vpop.f32.mrb[0].mxu0
      %v481 = vadd.f32 %v200, %v480
      %482 = vdwg.mxu0
      %v483 = vmax.f32 %v346, 0.0
      %v484 = vmax.f32 %v348, 0.0
      %v485 = vmax.f32 %v389, 0.0
      %v486 = vmax.f32 %v391, 0.0
      %v487 = vmax.f32 %v432, 0.0
      %v488 = vmax.f32 %v434, 0.0
      %v489 = vmax.f32 %v475, 0.0
      %v490 = vmax.f32 %v477, 0.0
      %v491 = vmax.f32 %v350, 0.0
      %v492 = vmax.f32 %v352, 0.0
      %v493 = vmax.f32 %v393, 0.0
      %v494 = vmax.f32 %v395, 0.0
      %v495 = vmax.f32 %v436, 0.0
      %v496 = vmax.f32 %v438, 0.0
      %v497 = vmax.f32 %v479, 0.0
      %v498 = vmax.f32 %v481, 0.0
      %501 = vrot.lane.b32.xlu0 %v483, 103
      %v502 = vpop.permute.xlu0 %501
      %503 = vrot.lane.b32.xlu0 %v491, 103
      %v504 = vpop.permute.xlu0 %503
      %v507 = vmax.f32 %v483, %v502
      %v508 = vmax.f32 %v491, %v504
      %509 = vrot.lane.b32.xlu0 %v483, 78
      %v510 = vpop.permute.xlu0 %509
      %511 = vrot.lane.b32.xlu0 %v491, 78
      %v512 = vpop.permute.xlu0 %511
      %v515 = vmax.f32 %v507, %v510
      %v516 = vmax.f32 %v508, %v512
      %517 = vrot.lane.b32.xlu0 %v483, 53
      %v518 = vpop.permute.xlu0 %517
      %519 = vrot.lane.b32.xlu0 %v491, 53
      %v520 = vpop.permute.xlu0 %519
      %v523 = vmax.f32 %v515, %v518
      %v524 = vmax.f32 %v516, %v520
      %525 = vrot.lane.b32.xlu0 %v483, 28
      %v526 = vpop.permute.xlu0 %525
      %527 = vrot.lane.b32.xlu0 %v491, 28
      %v528 = vpop.permute.xlu0 %527
      %v531 = vmax.f32 %v523, %v526
      %v532 = vmax.f32 %v524, %v528
      %535 = vrot.lane.b32.xlu0 %v483, 3
      %v536 = vpop.permute.xlu0 %535
      %537 = vrot.lane.b32.xlu0 %v484, 3
      %v538 = vpop.permute.xlu0 %537
      %539 = vrot.lane.b32.xlu0 %v491, 3
      %v540 = vpop.permute.xlu0 %539
      %541 = vrot.lane.b32.xlu0 %v492, 3
      %v542 = vpop.permute.xlu0 %541
      %vm543 = vcmask 23552
      %v544 = vsel %vm543, %v536, %v538
      %v545 = vsel %vm543, %v540, %v542
      %v548 = vmax.f32 %v531, %v544
      %v549 = vmax.f32 %v532, %v545
      %550 = vrot.lane.b32.xlu0 %v484, 106
      %v551 = vpop.permute.xlu0 %550
      %552 = vrot.lane.b32.xlu0 %v492, 106
      %v553 = vpop.permute.xlu0 %552
      %v556 = vmax.f32 %v548, %v551
      %v557 = vmax.f32 %v549, %v553
      %558 = vrot.lane.b32.xlu0 %v484, 81
      %v559 = vpop.permute.xlu0 %558
      %560 = vrot.lane.b32.xlu0 %v492, 81
      %v561 = vpop.permute.xlu0 %560
      %v564 = vmax.f32 %v556, %v559
      %v565 = vmax.f32 %v557, %v561
      %566 = vrot.lane.b32.xlu0 %v484, 56
      %v567 = vpop.permute.xlu0 %566
      %568 = vrot.lane.b32.xlu0 %v492, 56
      %v569 = vpop.permute.xlu0 %568
      %v572 = vmax.f32 %v564, %v567
      %v573 = vmax.f32 %v565, %v569
      %574 = vrot.lane.b32.xlu0 %v484, 31
      %v575 = vpop.permute.xlu0 %574
      %576 = vrot.lane.b32.xlu0 %v492, 31
      %v577 = vpop.permute.xlu0 %576
      %v580 = vmax.f32 %v572, %v575
      %v581 = vmax.f32 %v573, %v577
      %584 = vrot.lane.b32.xlu0 %v484, 6
      %v585 = vpop.permute.xlu0 %584
      %586 = vrot.lane.b32.xlu0 %v485, 6
      %v587 = vpop.permute.xlu0 %586
      %588 = vrot.lane.b32.xlu0 %v492, 6
      %v589 = vpop.permute.xlu0 %588
      %590 = vrot.lane.b32.xlu0 %v493, 6
      %v591 = vpop.permute.xlu0 %590
      %vm592 = vcmask 48128
      %v593 = vsel %vm592, %v585, %v587
      %v594 = vsel %vm592, %v589, %v591
      %v597 = vmax.f32 %v580, %v593
      %v598 = vmax.f32 %v581, %v594
      %599 = vrot.lane.b32.xlu0 %v485, 109
      %v600 = vpop.permute.xlu0 %599
      %601 = vrot.lane.b32.xlu0 %v493, 109
      %v602 = vpop.permute.xlu0 %601
      %v605 = vmax.f32 %v597, %v600
      %v606 = vmax.f32 %v598, %v602
      %607 = vrot.lane.b32.xlu0 %v485, 84
      %v608 = vpop.permute.xlu0 %607
      %609 = vrot.lane.b32.xlu0 %v493, 84
      %v610 = vpop.permute.xlu0 %609
      %v613 = vmax.f32 %v605, %v608
      %v614 = vmax.f32 %v606, %v610
      %615 = vrot.lane.b32.xlu0 %v485, 59
      %v616 = vpop.permute.xlu0 %615
      %617 = vrot.lane.b32.xlu0 %v493, 59
      %v618 = vpop.permute.xlu0 %617
      %v621 = vmax.f32 %v613, %v616
      %v622 = vmax.f32 %v614, %v618
      %623 = vrot.lane.b32.xlu0 %v485, 34
      %v624 = vpop.permute.xlu0 %623
      %625 = vrot.lane.b32.xlu0 %v493, 34
      %v626 = vpop.permute.xlu0 %625
      %v629 = vmax.f32 %v621, %v624
      %v630 = vmax.f32 %v622, %v626
      %633 = vrot.lane.b32.xlu0 %v485, 9
      %v634 = vpop.permute.xlu0 %633
      %635 = vrot.lane.b32.xlu0 %v486, 9
      %v636 = vpop.permute.xlu0 %635
      %637 = vrot.lane.b32.xlu0 %v493, 9
      %v638 = vpop.permute.xlu0 %637
      %639 = vrot.lane.b32.xlu0 %v494, 9
      %v640 = vpop.permute.xlu0 %639
      %vm641 = vcmask 72704
      %v642 = vsel %vm641, %v634, %v636
      %v643 = vsel %vm641, %v638, %v640
      %v646 = vmax.f32 %v629, %v642
      %v647 = vmax.f32 %v630, %v643
      %648 = vrot.lane.b32.xlu0 %v486, 112
      %v649 = vpop.permute.xlu0 %648
      %650 = vrot.lane.b32.xlu0 %v494, 112
      %v651 = vpop.permute.xlu0 %650
      %v654 = vmax.f32 %v646, %v649
      %v655 = vmax.f32 %v647, %v651
      %656 = vrot.lane.b32.xlu0 %v486, 87
      %v657 = vpop.permute.xlu0 %656
      %658 = vrot.lane.b32.xlu0 %v494, 87
      %v659 = vpop.permute.xlu0 %658
      %v662 = vmax.f32 %v654, %v657
      %v663 = vmax.f32 %v655, %v659
      %664 = vrot.lane.b32.xlu0 %v486, 62
      %v665 = vpop.permute.xlu0 %664
      %666 = vrot.lane.b32.xlu0 %v494, 62
      %v667 = vpop.permute.xlu0 %666
      %v670 = vmax.f32 %v662, %v665
      %v671 = vmax.f32 %v663, %v667
      %672 = vrot.lane.b32.xlu0 %v486, 37
      %v673 = vpop.permute.xlu0 %672
      %674 = vrot.lane.b32.xlu0 %v494, 37
      %v675 = vpop.permute.xlu0 %674
      %v678 = vmax.f32 %v670, %v673
      %v679 = vmax.f32 %v671, %v675
      %682 = vrot.lane.b32.xlu0 %v486, 12
      %v683 = vpop.permute.xlu0 %682
      %684 = vrot.lane.b32.xlu0 %v487, 12
      %v685 = vpop.permute.xlu0 %684
      %686 = vrot.lane.b32.xlu0 %v494, 12
      %v687 = vpop.permute.xlu0 %686
      %688 = vrot.lane.b32.xlu0 %v495, 12
      %v689 = vpop.permute.xlu0 %688
      %vm690 = vcmask 97280
      %v691 = vsel %vm690, %v683, %v685
      %v692 = vsel %vm690, %v687, %v689
      %v695 = vmax.f32 %v678, %v691
      %v696 = vmax.f32 %v679, %v692
      %697 = vrot.lane.b32.xlu0 %v487, 115
      %v698 = vpop.permute.xlu0 %697
      %699 = vrot.lane.b32.xlu0 %v495, 115
      %v700 = vpop.permute.xlu0 %699
      %v703 = vmax.f32 %v695, %v698
      %v704 = vmax.f32 %v696, %v700
      %705 = vrot.lane.b32.xlu0 %v487, 90
      %v706 = vpop.permute.xlu0 %705
      %707 = vrot.lane.b32.xlu0 %v495, 90
      %v708 = vpop.permute.xlu0 %707
      %v711 = vmax.f32 %v703, %v706
      %v712 = vmax.f32 %v704, %v708
      %713 = vrot.lane.b32.xlu0 %v487, 65
      %v714 = vpop.permute.xlu0 %713
      %715 = vrot.lane.b32.xlu0 %v495, 65
      %v716 = vpop.permute.xlu0 %715
      %v719 = vmax.f32 %v711, %v714
      %v720 = vmax.f32 %v712, %v716
      %721 = vrot.lane.b32.xlu0 %v487, 40
      %v722 = vpop.permute.xlu0 %721
      %723 = vrot.lane.b32.xlu0 %v495, 40
      %v724 = vpop.permute.xlu0 %723
      %v727 = vmax.f32 %v719, %v722
      %v728 = vmax.f32 %v720, %v724
      %731 = vrot.lane.b32.xlu0 %v487, 15
      %v732 = vpop.permute.xlu0 %731
      %733 = vrot.lane.b32.xlu0 %v488, 15
      %v734 = vpop.permute.xlu0 %733
      %735 = vrot.lane.b32.xlu0 %v495, 15
      %v736 = vpop.permute.xlu0 %735
      %737 = vrot.lane.b32.xlu0 %v496, 15
      %v738 = vpop.permute.xlu0 %737
      %vm739 = vcmask 121856
      %v740 = vsel %vm739, %v732, %v734
      %v741 = vsel %vm739, %v736, %v738
      %v744 = vmax.f32 %v727, %v740
      %v745 = vmax.f32 %v728, %v741
      %746 = vrot.lane.b32.xlu0 %v488, 118
      %v747 = vpop.permute.xlu0 %746
      %748 = vrot.lane.b32.xlu0 %v496, 118
      %v749 = vpop.permute.xlu0 %748
      %v752 = vmax.f32 %v744, %v747
      %v753 = vmax.f32 %v745, %v749
      %754 = vrot.lane.b32.xlu0 %v488, 93
      %v755 = vpop.permute.xlu0 %754
      %756 = vrot.lane.b32.xlu0 %v496, 93
      %v757 = vpop.permute.xlu0 %756
      %v760 = vmax.f32 %v752, %v755
      %v761 = vmax.f32 %v753, %v757
      %762 = vrot.lane.b32.xlu0 %v488, 68
      %v763 = vpop.permute.xlu0 %762
      %764 = vrot.lane.b32.xlu0 %v496, 68
      %v765 = vpop.permute.xlu0 %764
      %v768 = vmax.f32 %v760, %v763
      %v769 = vmax.f32 %v761, %v765
      %770 = vrot.lane.b32.xlu0 %v488, 43
      %v771 = vpop.permute.xlu0 %770
      %772 = vrot.lane.b32.xlu0 %v496, 43
      %v773 = vpop.permute.xlu0 %772
      %v776 = vmax.f32 %v768, %v771
      %v777 = vmax.f32 %v769, %v773
      %780 = vrot.lane.b32.xlu0 %v488, 18
      %v781 = vpop.permute.xlu0 %780
      %782 = vrot.lane.b32.xlu0 %v489, 18
      %v783 = vpop.permute.xlu0 %782
      %784 = vrot.lane.b32.xlu0 %v496, 18
      %v785 = vpop.permute.xlu0 %784
      %786 = vrot.lane.b32.xlu0 %v497, 18
      %v787 = vpop.permute.xlu0 %786
      %vm788 = vcmask 146432
      %v789 = vsel %vm788, %v781, %v783
      %v790 = vsel %vm788, %v785, %v787
      %v793 = vmax.f32 %v776, %v789
      %v794 = vmax.f32 %v777, %v790
      %795 = vrot.lane.b32.xlu0 %v489, 121
      %v796 = vpop.permute.xlu0 %795
      %797 = vrot.lane.b32.xlu0 %v497, 121
      %v798 = vpop.permute.xlu0 %797
      %v801 = vmax.f32 %v793, %v796
      %v802 = vmax.f32 %v794, %v798
      %803 = vrot.lane.b32.xlu0 %v489, 96
      %v804 = vpop.permute.xlu0 %803
      %805 = vrot.lane.b32.xlu0 %v497, 96
      %v806 = vpop.permute.xlu0 %805
      %v809 = vmax.f32 %v801, %v804
      %v810 = vmax.f32 %v802, %v806
      %811 = vrot.lane.b32.xlu0 %v489, 71
      %v812 = vpop.permute.xlu0 %811
      %813 = vrot.lane.b32.xlu0 %v497, 71
      %v814 = vpop.permute.xlu0 %813
      %v817 = vmax.f32 %v809, %v812
      %v818 = vmax.f32 %v810, %v814
      %819 = vrot.lane.b32.xlu0 %v489, 46
      %v820 = vpop.permute.xlu0 %819
      %821 = vrot.lane.b32.xlu0 %v497, 46
      %v822 = vpop.permute.xlu0 %821
      %v825 = vmax.f32 %v817, %v820
      %v826 = vmax.f32 %v818, %v822
      %829 = vrot.lane.b32.xlu0 %v489, 21
      %v830 = vpop.permute.xlu0 %829
      %831 = vrot.lane.b32.xlu0 %v490, 21
      %v832 = vpop.permute.xlu0 %831
      %833 = vrot.lane.b32.xlu0 %v497, 21
      %v834 = vpop.permute.xlu0 %833
      %835 = vrot.lane.b32.xlu0 %v498, 21
      %v836 = vpop.permute.xlu0 %835
      %vm837 = vcmask 171008
      %v838 = vsel %vm837, %v830, %v832
      %v839 = vsel %vm837, %v834, %v836
      %v842 = vmax.f32 %v825, %v838
      %v843 = vmax.f32 %v826, %v839
      %vm844 = vcmask 203776
      %845 = vst.msk [vmem:[%s170] sm:$0xff] %vm844, %v842
      %846 = vst.msk [vmem:[%s170 + $0x8] sm:$0xff] %vm844, %v843
      %p847 = scmp.lt.s32.totalorder %s14, 7
      %s848 = scalar_select %p847, %s14, 7
      %s849 = smul.addr %s848, 2
      %s850 = smul.addr %s849, 8
      %s851 = scalar_lea.vmem %s3, %s850
      // Predicated region
      $region33: #{_forward.2} parent=31 // pred_check
        %p852 = pneg %p100
      $region34: #{_forward.2} parent=31 // pred_check_branch
        %854 = sbr.rel (%p852) target = $region36
      $region35: #{_forward.2} parent=31 // pred_region
        _
      $region36: #{_forward.2} parent=31 // pred_fallthru
        _
    $region32: #{_forward.2} parent=5 // pred_fallthru
      _
    %p855 = scmp.le.s32.totalorder 2, %s9
    // Predicated region
    $region37: #{_forward.2} parent=5 // pred_check
      %p856 = pneg %p855
    $region38: #{_forward.2} parent=5 // pred_check_branch
      %858 = sbr.rel (%p856) target = $region40
    $region39: #{_forward.2} parent=5 // pred_region
      %s859 = ssub.s32 %s9, 2
      // Predicated region
      $region41: #{_forward.2} parent=39 // pred_check
        %p860 = pneg %p106
      $region42: #{_forward.2} parent=39 // pred_check_branch
        %862 = sbr.rel (%p860) target = $region44
      $region43: #{_forward.2} parent=39 // pred_region
        %p863 = scmp.lt.s32.totalorder %s15, 7
        %s864 = scalar_select %p863, %s15, 7
        %s865 = smul.addr %s864, 2
        %s866 = smul.addr %s865, 8
        %s867 = scalar_lea.vmem %s3, %s866
      $region44: #{_forward.2} parent=39 // pred_fallthru
        _
    $region40: #{_forward.2} parent=5 // pred_fallthru
      _
  $region6: #{_forward.2} parent=0 // loop_footer
    %s13 = sadd.s32 1, %s9
  $region7: #{_forward.2} parent=0 // loop_footer_branch
    %8 = sbr.rel target = $region3
  $region8: #{_forward.2} parent=0 // loop_exit
    _

// kernel: _forward.3
$region0: #{_forward.3}
  #allocation0 [shape = 'u32[]', space=smem, size = 0x4, offset = 0x4, fixed_abs, tag = 'smem constant byte address 0x4 - core index']
  #allocation1 [shape = 'u32[144,128]{1,0:T(1,128)}', space=vmem, size = 0x12000, scoped, tag = 'internal scratch']
  #allocation2 [shape = 'f32[10,512]{1,0:T(8,128)}', space=vmem, size = 0x8000, scoped, tag = 'scratch operand']
  #allocation3 [shape = 'f32[1,1]{1,0:T(1,128)S(1)}', space=vmem, size = 0x200, scoped, tag = 'scoped memory for _forward.3']
  %s0 = inlined_call_operand.smem [shape: u32[30], index: -1, kind: input, shape index: {}]
  %s1 = sld [smem:[%s0]]
  %s2 = scalar_lea.smem %s0, 1
  %s3 = sld [smem:[%s2]]
  %s4 = scalar_lea.smem %s0, 2
  %s5 = sld [smem:[%s4]]
  %s6 = scalar_lea.smem %s0, 3
  %s7 = sld [smem:[%s6]]
  %s8 = scalar_lea.smem %s0, 4
  %s9 = sld [smem:[%s8]]
  %s10 = scalar_lea.smem %s0, 5
  %s11 = sld [smem:[%s10]]
  %s12 = scalar_lea.smem %s0, 6
  %s13 = sld [smem:[%s12]]
  %s14 = scalar_lea.smem %s0, 7
  %s15 = sld [smem:[%s14]]
  %s16 = scalar_lea.smem %s0, 8
  %s17 = sld [smem:[%s16]]
  %s18 = scalar_lea.smem %s0, 9
  %s19 = sld [smem:[%s18]]
  %s20 = scalar_lea.smem %s0, 10
  %s21 = sld [smem:[%s20]]
  %s22 = scalar_lea.smem %s0, 11
  %s23 = sld [smem:[%s22]]
  %s24 = scalar_lea.smem %s0, 12
  %s25 = sld [smem:[%s24]]
  %s26 = scalar_lea.smem %s0, 13
  %s27 = sld [smem:[%s26]]
  %s28 = scalar_lea.smem %s0, 14
  %s29 = sld [smem:[%s28]]
  %s30 = scalar_lea.smem %s0, 15
  %s31 = sld [smem:[%s30]]
  %s32 = scalar_lea.smem %s0, 16
  %s33 = sld [smem:[%s32]]
  %s34 = scalar_lea.smem %s0, 17
  %s35 = sld [smem:[%s34]]
  %s36 = scalar_lea.smem %s0, 18
  %s37 = sld [smem:[%s36]]
  %s38 = scalar_lea.smem %s0, 19
  %s39 = sld [smem:[%s38]]
  %s40 = scalar_lea.smem %s0, 20
  %s41 = sld [smem:[%s40]]
  %s42 = scalar_lea.smem %s0, 21
  %s43 = sld [smem:[%s42]]
  %s44 = scalar_lea.smem %s0, 22
  %s45 = sld [smem:[%s44]]
  %s46 = scalar_lea.smem %s0, 23
  %s47 = sld [smem:[%s46]]
  %s48 = scalar_lea.smem %s0, 24
  %s49 = sld [smem:[%s48]]
  %s50 = scalar_lea.smem %s0, 25
  %s51 = sld [smem:[%s50]]
  %s52 = scalar_lea.smem %s0, 26
  %s53 = sld [smem:[%s52]]
  %s54 = scalar_lea.smem %s0, 27
  %s55 = sld [smem:[%s54]]
  %s56 = scalar_lea.smem %s0, 28
  %s57 = sld [smem:[%s56]]
  %s58 = scalar_lea.smem %s0, 29
  %s59 = sld [smem:[%s58]]
  %s60 = sld [smem:[#allocation0]]
  $region126: #{_forward.3} parent=0
    _
  %s62 = ssub.s32 1, %s60
  %s63 = scalar_select 0, %s62, %s60
  %v64 = vstv %s57
  %65 = vst [vmem:[#allocation3] sm:$0x1] %v64
  // Predicated region
  $region2: #{_forward.3} parent=0 // pred_check
    _
  $region3: #{_forward.3} parent=0 // pred_check_branch
    %67 = sbr.rel (0) target = $region5
  $region4: #{_forward.3} parent=0 // pred_region
    _
  $region5: #{_forward.3} parent=0 // pred_fallthru
    _
  // Predicated region
  $region6: #{_forward.3} parent=0 // pred_check
    _
  $region7: #{_forward.3} parent=0 // pred_check_branch
    %69 = sbr.rel (0) target = $region9
  $region8: #{_forward.3} parent=0 // pred_region
    _
  $region9: #{_forward.3} parent=0 // pred_fallthru
    _
  // Predicated region
  $region10: #{_forward.3} parent=0 // pred_check
    _
  $region11: #{_forward.3} parent=0 // pred_check_branch
    %71 = sbr.rel (0) target = $region13
  $region12: #{_forward.3} parent=0 // pred_region
    _
  $region13: #{_forward.3} parent=0 // pred_fallthru
    _
  // Predicated region
  $region14: #{_forward.3} parent=0 // pred_check
    _
  $region15: #{_forward.3} parent=0 // pred_check_branch
    %73 = sbr.rel (0) target = $region17
  $region16: #{_forward.3} parent=0 // pred_region
    _
  $region17: #{_forward.3} parent=0 // pred_fallthru
    _
  // Predicated region
  $region18: #{_forward.3} parent=0 // pred_check
    _
  $region19: #{_forward.3} parent=0 // pred_check_branch
    %75 = sbr.rel (0) target = $region21
  $region20: #{_forward.3} parent=0 // pred_region
    _
  $region21: #{_forward.3} parent=0 // pred_fallthru
    _
  // Predicated region
  $region22: #{_forward.3} parent=0 // pred_check
    _
  $region23: #{_forward.3} parent=0 // pred_check_branch
    %77 = sbr.rel (0) target = $region25
  $region24: #{_forward.3} parent=0 // pred_region
    _
  $region25: #{_forward.3} parent=0 // pred_fallthru
    _
  // Predicated region
  $region26: #{_forward.3} parent=0 // pred_check
    _
  $region27: #{_forward.3} parent=0 // pred_check_branch
    %79 = sbr.rel (0) target = $region29
  $region28: #{_forward.3} parent=0 // pred_region
    _
  $region29: #{_forward.3} parent=0 // pred_fallthru
    _
  // Predicated region
  $region30: #{_forward.3} parent=0 // pred_check
    _
  $region31: #{_forward.3} parent=0 // pred_check_branch
    %81 = sbr.rel (0) target = $region33
  $region32: #{_forward.3} parent=0 // pred_region
    _
  $region33: #{_forward.3} parent=0 // pred_fallthru
    _
  // Predicated region
  $region34: #{_forward.3} parent=0 // pred_check
    _
  $region35: #{_forward.3} parent=0 // pred_check_branch
    %83 = sbr.rel (0) target = $region37
  $region36: #{_forward.3} parent=0 // pred_region
    _
  $region37: #{_forward.3} parent=0 // pred_fallthru
    _
  // Predicated region
  $region38: #{_forward.3} parent=0 // pred_check
    _
  $region39: #{_forward.3} parent=0 // pred_check_branch
    %85 = sbr.rel (0) target = $region41
  $region40: #{_forward.3} parent=0 // pred_region
    _
  $region41: #{_forward.3} parent=0 // pred_fallthru
    _
  // Predicated region
  $region42: #{_forward.3} parent=0 // pred_check
    _
  $region43: #{_forward.3} parent=0 // pred_check_branch
    %87 = sbr.rel (0) target = $region45
  $region44: #{_forward.3} parent=0 // pred_region
    _
  $region45: #{_forward.3} parent=0 // pred_fallthru
    _
  // Predicated region
  $region46: #{_forward.3} parent=0 // pred_check
    _
  $region47: #{_forward.3} parent=0 // pred_check_branch
    %89 = sbr.rel (0) target = $region49
  $region48: #{_forward.3} parent=0 // pred_region
    _
  $region49: #{_forward.3} parent=0 // pred_fallthru
    _
  // Predicated region
  $region50: #{_forward.3} parent=0 // pred_check
    _
  $region51: #{_forward.3} parent=0 // pred_check_branch
    %91 = sbr.rel (0) target = $region53
  $region52: #{_forward.3} parent=0 // pred_region
    _
  $region53: #{_forward.3} parent=0 // pred_fallthru
    _
  // Predicated region
  $region54: #{_forward.3} parent=0 // pred_check
    _
  $region55: #{_forward.3} parent=0 // pred_check_branch
    %93 = sbr.rel (0) target = $region57
  $region56: #{_forward.3} parent=0 // pred_region
    _
  $region57: #{_forward.3} parent=0 // pred_fallthru
    _
  // Predicated region
  $region58: #{_forward.3} parent=0 // pred_check
    _
  $region59: #{_forward.3} parent=0 // pred_check_branch
    %95 = sbr.rel (0) target = $region61
  $region60: #{_forward.3} parent=0 // pred_region
    _
  $region61: #{_forward.3} parent=0 // pred_fallthru
    _
  // Predicated region
  $region62: #{_forward.3} parent=0 // pred_check
    _
  $region63: #{_forward.3} parent=0 // pred_check_branch
    %97 = sbr.rel (0) target = $region65
  $region64: #{_forward.3} parent=0 // pred_region
    _
  $region65: #{_forward.3} parent=0 // pred_fallthru
    _
  // Predicated region
  $region66: #{_forward.3} parent=0 // pred_check
    _
  $region67: #{_forward.3} parent=0 // pred_check_branch
    %99 = sbr.rel (0) target = $region69
  $region68: #{_forward.3} parent=0 // pred_region
    _
  $region69: #{_forward.3} parent=0 // pred_fallthru
    _
  // Predicated region
  $region70: #{_forward.3} parent=0 // pred_check
    _
  $region71: #{_forward.3} parent=0 // pred_check_branch
    %101 = sbr.rel (0) target = $region73
  $region72: #{_forward.3} parent=0 // pred_region
    _
  $region73: #{_forward.3} parent=0 // pred_fallthru
    _
  // Predicated region
  $region74: #{_forward.3} parent=0 // pred_check
    _
  $region75: #{_forward.3} parent=0 // pred_check_branch
    %103 = sbr.rel (0) target = $region77
  $region76: #{_forward.3} parent=0 // pred_region
    _
  $region77: #{_forward.3} parent=0 // pred_fallthru
    _
  // Predicated region
  $region78: #{_forward.3} parent=0 // pred_check
    _
  $region79: #{_forward.3} parent=0 // pred_check_branch
    %105 = sbr.rel (0) target = $region81
  $region80: #{_forward.3} parent=0 // pred_region
    _
  $region81: #{_forward.3} parent=0 // pred_fallthru
    _
  // Predicated region
  $region82: #{_forward.3} parent=0 // pred_check
    _
  $region83: #{_forward.3} parent=0 // pred_check_branch
    %107 = sbr.rel (0) target = $region85
  $region84: #{_forward.3} parent=0 // pred_region
    _
  $region85: #{_forward.3} parent=0 // pred_fallthru
    _
  // Predicated region
  $region86: #{_forward.3} parent=0 // pred_check
    _
  $region87: #{_forward.3} parent=0 // pred_check_branch
    %109 = sbr.rel (0) target = $region89
  $region88: #{_forward.3} parent=0 // pred_region
    _
  $region89: #{_forward.3} parent=0 // pred_fallthru
    _
  // Predicated region
  $region90: #{_forward.3} parent=0 // pred_check
    _
  $region91: #{_forward.3} parent=0 // pred_check_branch
    %111 = sbr.rel (0) target = $region93
  $region92: #{_forward.3} parent=0 // pred_region
    _
  $region93: #{_forward.3} parent=0 // pred_fallthru
    _
  // Predicated region
  $region94: #{_forward.3} parent=0 // pred_check
    _
  $region95: #{_forward.3} parent=0 // pred_check_branch
    %113 = sbr.rel (0) target = $region97
  $region96: #{_forward.3} parent=0 // pred_region
    _
  $region97: #{_forward.3} parent=0 // pred_fallthru
    _
  // Predicated region
  $region98: #{_forward.3} parent=0 // pred_check
    _
  $region99: #{_forward.3} parent=0 // pred_check_branch
    %115 = sbr.rel (0) target = $region101
  $region100: #{_forward.3} parent=0 // pred_region
    _
  $region101: #{_forward.3} parent=0 // pred_fallthru
    _
  // Predicated region
  $region102: #{_forward.3} parent=0 // pred_check
    _
  $region103: #{_forward.3} parent=0 // pred_check_branch
    %117 = sbr.rel (0) target = $region105
  $region104: #{_forward.3} parent=0 // pred_region
    _
  $region105: #{_forward.3} parent=0 // pred_fallthru
    _
  // Predicated region
  $region106: #{_forward.3} parent=0 // pred_check
    _
  $region107: #{_forward.3} parent=0 // pred_check_branch
    %119 = sbr.rel (0) target = $region109
  $region108: #{_forward.3} parent=0 // pred_region
    _
  $region109: #{_forward.3} parent=0 // pred_fallthru
    _
  // Predicated region
  $region110: #{_forward.3} parent=0 // pred_check
    _
  $region111: #{_forward.3} parent=0 // pred_check_branch
    %121 = sbr.rel (0) target = $region113
  $region112: #{_forward.3} parent=0 // pred_region
    _
  $region113: #{_forward.3} parent=0 // pred_fallthru
    _
  // Predicated region
  $region114: #{_forward.3} parent=0 // pred_check
    _
  $region115: #{_forward.3} parent=0 // pred_check_branch
    %123 = sbr.rel (0) target = $region117
  $region116: #{_forward.3} parent=0 // pred_region
    _
  $region117: #{_forward.3} parent=0 // pred_fallthru
    _
  %v125 = vld [vmem:[%s1] sm:$0xff]
  %v126 = vld [vmem:[%s1 + $0x8] sm:$0xff]
  %v127 = vld [vmem:[%s1 + $0x10] sm:$0xff]
  %v128 = vld [vmem:[%s1 + $0x18] sm:$0xff]
  %v129 = vld [vmem:[%s1 + $0x20] sm:$0x3]
  %v130 = vld [vmem:[%s1 + $0x28] sm:$0x3]
  %v131 = vld [vmem:[%s1 + $0x30] sm:$0x3]
  %v132 = vld [vmem:[%s1 + $0x38] sm:$0x3]
  %v133 = vpack.c.bf16 %v129, %v125
  %v134 = vpack.c.bf16 %v130, %v126
  %v135 = vpack.c.bf16 %v131, %v127
  %v136 = vpack.c.bf16 %v132, %v128
  %v137 = vld [vmem:[%s3] sm:$0xff]
  %v138 = vld [vmem:[%s3 + $0x8] sm:$0xff]
  %v139 = vld [vmem:[%s3 + $0x10] sm:$0xff]
  %v140 = vld [vmem:[%s3 + $0x18] sm:$0xff]
  %v141 = vld [vmem:[%s3 + $0x20] sm:$0xff]
  %v142 = vld [vmem:[%s3 + $0x28] sm:$0xff]
  %v143 = vld [vmem:[%s3 + $0x30] sm:$0xff]
  %v144 = vld [vmem:[%s3 + $0x38] sm:$0xff]
  %v145 = vld [vmem:[%s3 + $0x40] sm:$0xff]
  %v146 = vld [vmem:[%s3 + $0x48] sm:$0xff]
  %v147 = vld [vmem:[%s3 + $0x50] sm:$0xff]
  %v148 = vld [vmem:[%s3 + $0x58] sm:$0xff]
  %v149 = vld [vmem:[%s3 + $0x60] sm:$0xff]
  %v150 = vld [vmem:[%s3 + $0x68] sm:$0xff]
  %v151 = vld [vmem:[%s3 + $0x70] sm:$0xff]
  %v152 = vld [vmem:[%s3 + $0x78] sm:$0xff]
  %v153 = vld [vmem:[%s3 + $0x80] sm:$0xff]
  %v154 = vld [vmem:[%s3 + $0x88] sm:$0xff]
  %v155 = vld [vmem:[%s3 + $0x90] sm:$0xff]
  %v156 = vld [vmem:[%s3 + $0x98] sm:$0xff]
  %v157 = vld [vmem:[%s3 + $0xa0] sm:$0xff]
  %v158 = vld [vmem:[%s3 + $0xa8] sm:$0xff]
  %v159 = vld [vmem:[%s3 + $0xb0] sm:$0xff]
  %v160 = vld [vmem:[%s3 + $0xb8] sm:$0xff]
  %v161 = vld [vmem:[%s3 + $0xc0] sm:$0xff]
  %v162 = vld [vmem:[%s3 + $0xc8] sm:$0xff]
  %v163 = vld [vmem:[%s3 + $0xd0] sm:$0xff]
  %v164 = vld [vmem:[%s3 + $0xd8] sm:$0xff]
  %v165 = vld [vmem:[%s3 + $0xe0] sm:$0xff]
  %v166 = vld [vmem:[%s3 + $0xe8] sm:$0xff]
  %v167 = vld [vmem:[%s3 + $0xf0] sm:$0xff]
  %v168 = vld [vmem:[%s3 + $0xf8] sm:$0xff]
  %v169 = vld [vmem:[%s3 + $0x100] sm:$0xff]
  %v170 = vld [vmem:[%s3 + $0x108] sm:$0xff]
  %v171 = vld [vmem:[%s3 + $0x110] sm:$0xff]
  %v172 = vld [vmem:[%s3 + $0x118] sm:$0xff]
  %v173 = vld [vmem:[%s3 + $0x120] sm:$0xff]
  %v174 = vld [vmem:[%s3 + $0x128] sm:$0xff]
  %v175 = vld [vmem:[%s3 + $0x130] sm:$0xff]
  %v176 = vld [vmem:[%s3 + $0x138] sm:$0xff]
  %v177 = vld [vmem:[%s3 + $0x140] sm:$0xff]
  %v178 = vld [vmem:[%s3 + $0x148] sm:$0xff]
  %v179 = vld [vmem:[%s3 + $0x150] sm:$0xff]
  %v180 = vld [vmem:[%s3 + $0x158] sm:$0xff]
  %v181 = vld [vmem:[%s3 + $0x160] sm:$0xff]
  %v182 = vld [vmem:[%s3 + $0x168] sm:$0xff]
  %v183 = vld [vmem:[%s3 + $0x170] sm:$0xff]
  %v184 = vld [vmem:[%s3 + $0x178] sm:$0xff]
  %v185 = vld [vmem:[%s3 + $0x180] sm:$0xff]
  %v186 = vld [vmem:[%s3 + $0x188] sm:$0xff]
  %v187 = vld [vmem:[%s3 + $0x190] sm:$0xff]
  %v188 = vld [vmem:[%s3 + $0x198] sm:$0xff]
  %v189 = vld [vmem:[%s3 + $0x1a0] sm:$0xff]
  %v190 = vld [vmem:[%s3 + $0x1a8] sm:$0xff]
  %v191 = vld [vmem:[%s3 + $0x1b0] sm:$0xff]
  %v192 = vld [vmem:[%s3 + $0x1b8] sm:$0xff]
  %v193 = vld [vmem:[%s3 + $0x1c0] sm:$0xff]
  %v194 = vld [vmem:[%s3 + $0x1c8] sm:$0xff]
  %v195 = vld [vmem:[%s3 + $0x1d0] sm:$0xff]
  %v196 = vld [vmem:[%s3 + $0x1d8] sm:$0xff]
  %v197 = vld [vmem:[%s3 + $0x1e0] sm:$0xff]
  %v198 = vld [vmem:[%s3 + $0x1e8] sm:$0xff]
  %v199 = vld [vmem:[%s3 + $0x1f0] sm:$0xff]
  %v200 = vld [vmem:[%s3 + $0x1f8] sm:$0xff]
  %v201 = vld [vmem:[%s3 + $0x200] sm:$0xff]
  %v202 = vld [vmem:[%s3 + $0x208] sm:$0xff]
  %v203 = vld [vmem:[%s3 + $0x210] sm:$0xff]
  %v204 = vld [vmem:[%s3 + $0x218] sm:$0xff]
  %v205 = vld [vmem:[%s3 + $0x220] sm:$0xff]
  %v206 = vld [vmem:[%s3 + $0x228] sm:$0xff]
  %v207 = vld [vmem:[%s3 + $0x230] sm:$0xff]
  %v208 = vld [vmem:[%s3 + $0x238] sm:$0xff]
  %v209 = vld [vmem:[%s3 + $0x240] sm:$0xff]
  %v210 = vld [vmem:[%s3 + $0x248] sm:$0xff]
  %v211 = vld [vmem:[%s3 + $0x250] sm:$0xff]
  %v212 = vld [vmem:[%s3 + $0x258] sm:$0xff]
  %v213 = vld [vmem:[%s3 + $0x260] sm:$0xff]
  %v214 = vld [vmem:[%s3 + $0x268] sm:$0xff]
  %v215 = vld [vmem:[%s3 + $0x270] sm:$0xff]
  %v216 = vld [vmem:[%s3 + $0x278] sm:$0xff]
  %v217 = vld [vmem:[%s3 + $0x280] sm:$0xff]
  %v218 = vld [vmem:[%s3 + $0x288] sm:$0xff]
  %v219 = vld [vmem:[%s3 + $0x290] sm:$0xff]
  %v220 = vld [vmem:[%s3 + $0x298] sm:$0xff]
  %v221 = vld [vmem:[%s3 + $0x2a0] sm:$0xff]
  %v222 = vld [vmem:[%s3 + $0x2a8] sm:$0xff]
  %v223 = vld [vmem:[%s3 + $0x2b0] sm:$0xff]
  %v224 = vld [vmem:[%s3 + $0x2b8] sm:$0xff]
  %v225 = vld [vmem:[%s3 + $0x2c0] sm:$0xff]
  %v226 = vld [vmem:[%s3 + $0x2c8] sm:$0xff]
  %v227 = vld [vmem:[%s3 + $0x2d0] sm:$0xff]
  %v228 = vld [vmem:[%s3 + $0x2d8] sm:$0xff]
  %v229 = vld [vmem:[%s3 + $0x2e0] sm:$0xff]
  %v230 = vld [vmem:[%s3 + $0x2e8] sm:$0xff]
  %v231 = vld [vmem:[%s3 + $0x2f0] sm:$0xff]
  %v232 = vld [vmem:[%s3 + $0x2f8] sm:$0xff]
  %v233 = vld [vmem:[%s3 + $0x300] sm:$0xff]
  %v234 = vld [vmem:[%s3 + $0x308] sm:$0xff]
  %v235 = vld [vmem:[%s3 + $0x310] sm:$0xff]
  %v236 = vld [vmem:[%s3 + $0x318] sm:$0xff]
  %v237 = vld [vmem:[%s3 + $0x320] sm:$0xff]
  %v238 = vld [vmem:[%s3 + $0x328] sm:$0xff]
  %v239 = vld [vmem:[%s3 + $0x330] sm:$0xff]
  %v240 = vld [vmem:[%s3 + $0x338] sm:$0xff]
  %v241 = vld [vmem:[%s3 + $0x340] sm:$0xff]
  %v242 = vld [vmem:[%s3 + $0x348] sm:$0xff]
  %v243 = vld [vmem:[%s3 + $0x350] sm:$0xff]
  %v244 = vld [vmem:[%s3 + $0x358] sm:$0xff]
  %v245 = vld [vmem:[%s3 + $0x360] sm:$0xff]
  %v246 = vld [vmem:[%s3 + $0x368] sm:$0xff]
  %v247 = vld [vmem:[%s3 + $0x370] sm:$0xff]
  %v248 = vld [vmem:[%s3 + $0x378] sm:$0xff]
  %v249 = vld [vmem:[%s3 + $0x380] sm:$0xff]
  %v250 = vld [vmem:[%s3 + $0x388] sm:$0xff]
  %v251 = vld [vmem:[%s3 + $0x390] sm:$0xff]
  %v252 = vld [vmem:[%s3 + $0x398] sm:$0xff]
  %v253 = vld [vmem:[%s3 + $0x3a0] sm:$0xff]
  %v254 = vld [vmem:[%s3 + $0x3a8] sm:$0xff]
  %v255 = vld [vmem:[%s3 + $0x3b0] sm:$0xff]
  %v256 = vld [vmem:[%s3 + $0x3b8] sm:$0xff]
  %v257 = vld [vmem:[%s3 + $0x3c0] sm:$0xff]
  %v258 = vld [vmem:[%s3 + $0x3c8] sm:$0xff]
  %v259 = vld [vmem:[%s3 + $0x3d0] sm:$0xff]
  %v260 = vld [vmem:[%s3 + $0x3d8] sm:$0xff]
  %v261 = vld [vmem:[%s3 + $0x3e0] sm:$0xff]
  %v262 = vld [vmem:[%s3 + $0x3e8] sm:$0xff]
  %v263 = vld [vmem:[%s3 + $0x3f0] sm:$0xff]
  %v264 = vld [vmem:[%s3 + $0x3f8] sm:$0xff]
  %v265 = vld [vmem:[%s3 + $0x400] sm:$0xff]
  %v266 = vld [vmem:[%s3 + $0x408] sm:$0xff]
  %v267 = vld [vmem:[%s3 + $0x410] sm:$0xff]
  %v268 = vld [vmem:[%s3 + $0x418] sm:$0xff]
  %v269 = vld [vmem:[%s3 + $0x420] sm:$0xff]
  %v270 = vld [vmem:[%s3 + $0x428] sm:$0xff]
  %v271 = vld [vmem:[%s3 + $0x430] sm:$0xff]
  %v272 = vld [vmem:[%s3 + $0x438] sm:$0xff]
  %v273 = vld [vmem:[%s3 + $0x440] sm:$0xff]
  %v274 = vld [vmem:[%s3 + $0x448] sm:$0xff]
  %v275 = vld [vmem:[%s3 + $0x450] sm:$0xff]
  %v276 = vld [vmem:[%s3 + $0x458] sm:$0xff]
  %v277 = vld [vmem:[%s3 + $0x460] sm:$0xff]
  %v278 = vld [vmem:[%s3 + $0x468] sm:$0xff]
  %v279 = vld [vmem:[%s3 + $0x470] sm:$0xff]
  %v280 = vld [vmem:[%s3 + $0x478] sm:$0xff]
  %v281 = vld [vmem:[%s3 + $0x480] sm:$0xff]
  %v282 = vld [vmem:[%s3 + $0x488] sm:$0xff]
  %v283 = vld [vmem:[%s3 + $0x490] sm:$0xff]
  %v284 = vld [vmem:[%s3 + $0x498] sm:$0xff]
  %v285 = vld [vmem:[%s3 + $0x4a0] sm:$0xff]
  %v286 = vld [vmem:[%s3 + $0x4a8] sm:$0xff]
  %v287 = vld [vmem:[%s3 + $0x4b0] sm:$0xff]
  %v288 = vld [vmem:[%s3 + $0x4b8] sm:$0xff]
  %v289 = vld [vmem:[%s3 + $0x4c0] sm:$0xff]
  %v290 = vld [vmem:[%s3 + $0x4c8] sm:$0xff]
  %v291 = vld [vmem:[%s3 + $0x4d0] sm:$0xff]
  %v292 = vld [vmem:[%s3 + $0x4d8] sm:$0xff]
  %v293 = vld [vmem:[%s3 + $0x4e0] sm:$0xff]
  %v294 = vld [vmem:[%s3 + $0x4e8] sm:$0xff]
  %v295 = vld [vmem:[%s3 + $0x4f0] sm:$0xff]
  %v296 = vld [vmem:[%s3 + $0x4f8] sm:$0xff]
  %v297 = vld [vmem:[%s3 + $0x500] sm:$0xff]
  %v298 = vld [vmem:[%s3 + $0x508] sm:$0xff]
  %v299 = vld [vmem:[%s3 + $0x510] sm:$0xff]
  %v300 = vld [vmem:[%s3 + $0x518] sm:$0xff]
  %v301 = vld [vmem:[%s3 + $0x520] sm:$0xff]
  %v302 = vld [vmem:[%s3 + $0x528] sm:$0xff]
  %v303 = vld [vmem:[%s3 + $0x530] sm:$0xff]
  %v304 = vld [vmem:[%s3 + $0x538] sm:$0xff]
  %v305 = vld [vmem:[%s3 + $0x540] sm:$0xff]
  %v306 = vld [vmem:[%s3 + $0x548] sm:$0xff]
  %v307 = vld [vmem:[%s3 + $0x550] sm:$0xff]
  %v308 = vld [vmem:[%s3 + $0x558] sm:$0xff]
  %v309 = vld [vmem:[%s3 + $0x560] sm:$0xff]
  %v310 = vld [vmem:[%s3 + $0x568] sm:$0xff]
  %v311 = vld [vmem:[%s3 + $0x570] sm:$0xff]
  %v312 = vld [vmem:[%s3 + $0x578] sm:$0xff]
  %v313 = vld [vmem:[%s3 + $0x580] sm:$0xff]
  %v314 = vld [vmem:[%s3 + $0x588] sm:$0xff]
  %v315 = vld [vmem:[%s3 + $0x590] sm:$0xff]
  %v316 = vld [vmem:[%s3 + $0x598] sm:$0xff]
  %v317 = vld [vmem:[%s3 + $0x5a0] sm:$0xff]
  %v318 = vld [vmem:[%s3 + $0x5a8] sm:$0xff]
  %v319 = vld [vmem:[%s3 + $0x5b0] sm:$0xff]
  %v320 = vld [vmem:[%s3 + $0x5b8] sm:$0xff]
  %v321 = vld [vmem:[%s3 + $0x5c0] sm:$0xff]
  %v322 = vld [vmem:[%s3 + $0x5c8] sm:$0xff]
  %v323 = vld [vmem:[%s3 + $0x5d0] sm:$0xff]
  %v324 = vld [vmem:[%s3 + $0x5d8] sm:$0xff]
  %v325 = vld [vmem:[%s3 + $0x5e0] sm:$0xff]
  %v326 = vld [vmem:[%s3 + $0x5e8] sm:$0xff]
  %v327 = vld [vmem:[%s3 + $0x5f0] sm:$0xff]
  %v328 = vld [vmem:[%s3 + $0x5f8] sm:$0xff]
  %v329 = vld [vmem:[%s3 + $0x600] sm:$0xff]
  %v330 = vld [vmem:[%s3 + $0x608] sm:$0xff]
  %v331 = vld [vmem:[%s3 + $0x610] sm:$0xff]
  %v332 = vld [vmem:[%s3 + $0x618] sm:$0xff]
  %v333 = vld [vmem:[%s3 + $0x620] sm:$0xff]
  %v334 = vld [vmem:[%s3 + $0x628] sm:$0xff]
  %v335 = vld [vmem:[%s3 + $0x630] sm:$0xff]
  %v336 = vld [vmem:[%s3 + $0x638] sm:$0xff]
  %v337 = vld [vmem:[%s3 + $0x640] sm:$0xff]
  %v338 = vld [vmem:[%s3 + $0x648] sm:$0xff]
  %v339 = vld [vmem:[%s3 + $0x650] sm:$0xff]
  %v340 = vld [vmem:[%s3 + $0x658] sm:$0xff]
  %v341 = vld [vmem:[%s3 + $0x660] sm:$0xff]
  %v342 = vld [vmem:[%s3 + $0x668] sm:$0xff]
  %v343 = vld [vmem:[%s3 + $0x670] sm:$0xff]
  %v344 = vld [vmem:[%s3 + $0x678] sm:$0xff]
  %v345 = vld [vmem:[%s3 + $0x680] sm:$0xff]
  %v346 = vld [vmem:[%s3 + $0x688] sm:$0xff]
  %v347 = vld [vmem:[%s3 + $0x690] sm:$0xff]
  %v348 = vld [vmem:[%s3 + $0x698] sm:$0xff]
  %v349 = vld [vmem:[%s3 + $0x6a0] sm:$0xff]
  %v350 = vld [vmem:[%s3 + $0x6a8] sm:$0xff]
  %v351 = vld [vmem:[%s3 + $0x6b0] sm:$0xff]
  %v352 = vld [vmem:[%s3 + $0x6b8] sm:$0xff]
  %v353 = vld [vmem:[%s3 + $0x6c0] sm:$0xff]
  %v354 = vld [vmem:[%s3 + $0x6c8] sm:$0xff]
  %v355 = vld [vmem:[%s3 + $0x6d0] sm:$0xff]
  %v356 = vld [vmem:[%s3 + $0x6d8] sm:$0xff]
  %v357 = vld [vmem:[%s3 + $0x6e0] sm:$0xff]
  %v358 = vld [vmem:[%s3 + $0x6e8] sm:$0xff]
  %v359 = vld [vmem:[%s3 + $0x6f0] sm:$0xff]
  %v360 = vld [vmem:[%s3 + $0x6f8] sm:$0xff]
  %v361 = vld [vmem:[%s3 + $0x700] sm:$0xff]
  %v362 = vld [vmem:[%s3 + $0x708] sm:$0xff]
  %v363 = vld [vmem:[%s3 + $0x710] sm:$0xff]
  %v364 = vld [vmem:[%s3 + $0x718] sm:$0xff]
  %v365 = vld [vmem:[%s3 + $0x720] sm:$0xff]
  %v366 = vld [vmem:[%s3 + $0x728] sm:$0xff]
  %v367 = vld [vmem:[%s3 + $0x730] sm:$0xff]
  %v368 = vld [vmem:[%s3 + $0x738] sm:$0xff]
  %v369 = vld [vmem:[%s3 + $0x740] sm:$0xff]
  %v370 = vld [vmem:[%s3 + $0x748] sm:$0xff]
  %v371 = vld [vmem:[%s3 + $0x750] sm:$0xff]
  %v372 = vld [vmem:[%s3 + $0x758] sm:$0xff]
  %v373 = vld [vmem:[%s3 + $0x760] sm:$0xff]
  %v374 = vld [vmem:[%s3 + $0x768] sm:$0xff]
  %v375 = vld [vmem:[%s3 + $0x770] sm:$0xff]
  %v376 = vld [vmem:[%s3 + $0x778] sm:$0xff]
  %v377 = vld [vmem:[%s3 + $0x780] sm:$0xff]
  %v378 = vld [vmem:[%s3 + $0x788] sm:$0xff]
  %v379 = vld [vmem:[%s3 + $0x790] sm:$0xff]
  %v380 = vld [vmem:[%s3 + $0x798] sm:$0xff]
  %v381 = vld [vmem:[%s3 + $0x7a0] sm:$0xff]
  %v382 = vld [vmem:[%s3 + $0x7a8] sm:$0xff]
  %v383 = vld [vmem:[%s3 + $0x7b0] sm:$0xff]
  %v384 = vld [vmem:[%s3 + $0x7b8] sm:$0xff]
  %v385 = vld [vmem:[%s3 + $0x7c0] sm:$0xff]
  %v386 = vld [vmem:[%s3 + $0x7c8] sm:$0xff]
  %v387 = vld [vmem:[%s3 + $0x7d0] sm:$0xff]
  %v388 = vld [vmem:[%s3 + $0x7d8] sm:$0xff]
  %v389 = vld [vmem:[%s3 + $0x7e0] sm:$0xff]
  %v390 = vld [vmem:[%s3 + $0x7e8] sm:$0xff]
  %v391 = vld [vmem:[%s3 + $0x7f0] sm:$0xff]
  %v392 = vld [vmem:[%s3 + $0x7f8] sm:$0xff]
  %v393 = vld [vmem:[%s3 + $0x800] sm:$0xff]
  %v394 = vld [vmem:[%s3 + $0x808] sm:$0xff]
  %v395 = vld [vmem:[%s3 + $0x810] sm:$0xff]
  %v396 = vld [vmem:[%s3 + $0x818] sm:$0xff]
  %v397 = vld [vmem:[%s3 + $0x820] sm:$0xff]
  %v398 = vld [vmem:[%s3 + $0x828] sm:$0xff]
  %v399 = vld [vmem:[%s3 + $0x830] sm:$0xff]
  %v400 = vld [vmem:[%s3 + $0x838] sm:$0xff]
  %v401 = vld [vmem:[%s3 + $0x840] sm:$0xff]
  %v402 = vld [vmem:[%s3 + $0x848] sm:$0xff]
  %v403 = vld [vmem:[%s3 + $0x850] sm:$0xff]
  %v404 = vld [vmem:[%s3 + $0x858] sm:$0xff]
  %v405 = vld [vmem:[%s3 + $0x860] sm:$0xff]
  %v406 = vld [vmem:[%s3 + $0x868] sm:$0xff]
  %v407 = vld [vmem:[%s3 + $0x870] sm:$0xff]
  %v408 = vld [vmem:[%s3 + $0x878] sm:$0xff]
  %v409 = vld [vmem:[%s3 + $0x880] sm:$0xff]
  %v410 = vld [vmem:[%s3 + $0x888] sm:$0xff]
  %v411 = vld [vmem:[%s3 + $0x890] sm:$0xff]
  %v412 = vld [vmem:[%s3 + $0x898] sm:$0xff]
  %v413 = vld [vmem:[%s3 + $0x8a0] sm:$0xff]
  %v414 = vld [vmem:[%s3 + $0x8a8] sm:$0xff]
  %v415 = vld [vmem:[%s3 + $0x8b0] sm:$0xff]
  %v416 = vld [vmem:[%s3 + $0x8b8] sm:$0xff]
  %v417 = vld [vmem:[%s3 + $0x8c0] sm:$0xff]
  %v418 = vld [vmem:[%s3 + $0x8c8] sm:$0xff]
  %v419 = vld [vmem:[%s3 + $0x8d0] sm:$0xff]
  %v420 = vld [vmem:[%s3 + $0x8d8] sm:$0xff]
  %v421 = vld [vmem:[%s3 + $0x8e0] sm:$0xff]
  %v422 = vld [vmem:[%s3 + $0x8e8] sm:$0xff]
  %v423 = vld [vmem:[%s3 + $0x8f0] sm:$0xff]
  %v424 = vld [vmem:[%s3 + $0x8f8] sm:$0xff]
  %v425 = vld [vmem:[%s3 + $0x900] sm:$0xff]
  %v426 = vld [vmem:[%s3 + $0x908] sm:$0xff]
  %v427 = vld [vmem:[%s3 + $0x910] sm:$0xff]
  %v428 = vld [vmem:[%s3 + $0x918] sm:$0xff]
  %v429 = vld [vmem:[%s3 + $0x920] sm:$0xff]
  %v430 = vld [vmem:[%s3 + $0x928] sm:$0xff]
  %v431 = vld [vmem:[%s3 + $0x930] sm:$0xff]
  %v432 = vld [vmem:[%s3 + $0x938] sm:$0xff]
  %v433 = vld [vmem:[%s3 + $0x940] sm:$0xff]
  %v434 = vld [vmem:[%s3 + $0x948] sm:$0xff]
  %v435 = vld [vmem:[%s3 + $0x950] sm:$0xff]
  %v436 = vld [vmem:[%s3 + $0x958] sm:$0xff]
  %v437 = vld [vmem:[%s5] sm:$0xff]
  %v438 = vld [vmem:[%s5 + $0x8] sm:$0xf]
  %v441 = vlaneseq
  %v442 = vshrl.u32 %v441, 7
  %v443 = vsub.s32 0, %v442
  %v444 = vrot.slane %v437, %v443
  %v445 = vlaneseq
  %v446 = vshrl.u32 %v445, 7
  %v447 = vsub.s32 1, %v446
  %v448 = vrot.slane %v437, %v447
  %v449 = vlaneseq
  %v450 = vshrl.u32 %v449, 7
  %v451 = vsub.s32 2, %v450
  %v452 = vrot.slane %v437, %v451
  %v453 = vlaneseq
  %v454 = vshrl.u32 %v453, 7
  %v455 = vsub.s32 3, %v454
  %v456 = vrot.slane %v437, %v455
  %v457 = vlaneseq
  %v458 = vshrl.u32 %v457, 7
  %v459 = vsub.s32 4, %v458
  %v460 = vrot.slane %v437, %v459
  %v461 = vlaneseq
  %v462 = vshrl.u32 %v461, 7
  %v463 = vsub.s32 5, %v462
  %v464 = vrot.slane %v437, %v463
  %v465 = vlaneseq
  %v466 = vshrl.u32 %v465, 7
  %v467 = vsub.s32 6, %v466
  %v468 = vrot.slane %v437, %v467
  %v469 = vlaneseq
  %v470 = vshrl.u32 %v469, 7
  %v471 = vsub.s32 7, %v470
  %v472 = vrot.slane %v437, %v471
  %v473 = vlaneseq
  %v474 = vshrl.u32 %v473, 7
  %v475 = vsub.s32 0, %v474
  %v476 = vrot.slane %v438, %v475
  %v477 = vlaneseq
  %v478 = vshrl.u32 %v477, 7
  %v479 = vsub.s32 1, %v478
  %v480 = vrot.slane %v438, %v479
  %v481 = vlaneseq
  %v482 = vshrl.u32 %v481, 7
  %v483 = vsub.s32 2, %v482
  %v484 = vrot.slane %v438, %v483
  %v485 = vlaneseq
  %v486 = vshrl.u32 %v485, 7
  %v487 = vsub.s32 3, %v486
  %v488 = vrot.slane %v438, %v487
  %v801 = vunpack.c.l.b16 %v137
  %v802 = vunpack.c.h.b16 %v137
  %v803 = vunpack.c.l.b16 %v138
  %v804 = vunpack.c.h.b16 %v138
  %v805 = vunpack.c.l.b16 %v139
  %v806 = vunpack.c.h.b16 %v139
  %v807 = vunpack.c.l.b16 %v140
  %v808 = vunpack.c.h.b16 %v140
  %v809 = vunpack.c.l.b16 %v141
  %v810 = vunpack.c.h.b16 %v141
  %v811 = vunpack.c.l.b16 %v142
  %v812 = vunpack.c.h.b16 %v142
  %v813 = vunpack.c.l.b16 %v143
  %v814 = vunpack.c.h.b16 %v143
  %v815 = vunpack.c.l.b16 %v144
  %v816 = vunpack.c.h.b16 %v144
  %v817 = vunpack.c.l.b16 %v145
  %v818 = vunpack.c.h.b16 %v145
  %v819 = vunpack.c.l.b16 %v146
  %v820 = vunpack.c.h.b16 %v146
  %v821 = vunpack.c.l.b16 %v147
  %v822 = vunpack.c.h.b16 %v147
  %v823 = vunpack.c.l.b16 %v148
  %v824 = vunpack.c.h.b16 %v148
  %v825 = vunpack.c.l.b16 %v149
  %v826 = vunpack.c.h.b16 %v149
  %v827 = vunpack.c.l.b16 %v150
  %v828 = vunpack.c.h.b16 %v150
  %v829 = vunpack.c.l.b16 %v151
  %v830 = vunpack.c.h.b16 %v151
  %v831 = vunpack.c.l.b16 %v152
  %v832 = vunpack.c.h.b16 %v152
  %v833 = vunpack.c.l.b16 %v153
  %v834 = vunpack.c.h.b16 %v153
  %v835 = vunpack.c.l.b16 %v154
  %v836 = vunpack.c.h.b16 %v154
  %v837 = vunpack.c.l.b16 %v155
  %v838 = vunpack.c.h.b16 %v155
  %v839 = vunpack.c.l.b16 %v156
  %v840 = vunpack.c.h.b16 %v156
  %v841 = vunpack.c.l.b16 %v157
  %v842 = vunpack.c.h.b16 %v157
  %v843 = vunpack.c.l.b16 %v158
  %v844 = vunpack.c.h.b16 %v158
  %v845 = vunpack.c.l.b16 %v159
  %v846 = vunpack.c.h.b16 %v159
  %v847 = vunpack.c.l.b16 %v160
  %v848 = vunpack.c.h.b16 %v160
  %v849 = vunpack.c.l.b16 %v161
  %v850 = vunpack.c.h.b16 %v161
  %v851 = vunpack.c.l.b16 %v162
  %v852 = vunpack.c.h.b16 %v162
  %v853 = vunpack.c.l.b16 %v163
  %v854 = vunpack.c.h.b16 %v163
  %v855 = vunpack.c.l.b16 %v164
  %v856 = vunpack.c.h.b16 %v164
  %v857 = vunpack.c.l.b16 %v165
  %v858 = vunpack.c.h.b16 %v165
  %v859 = vunpack.c.l.b16 %v166
  %v860 = vunpack.c.h.b16 %v166
  %v861 = vunpack.c.l.b16 %v167
  %v862 = vunpack.c.h.b16 %v167
  %v863 = vunpack.c.l.b16 %v168
  %v864 = vunpack.c.h.b16 %v168
  %v865 = vunpack.c.l.b16 %v169
  %v866 = vunpack.c.h.b16 %v169
  %v867 = vunpack.c.l.b16 %v170
  %v868 = vunpack.c.h.b16 %v170
  %v869 = vunpack.c.l.b16 %v171
  %v870 = vunpack.c.h.b16 %v171
  %v871 = vunpack.c.l.b16 %v172
  %v872 = vunpack.c.h.b16 %v172
  %v873 = vunpack.c.l.b16 %v173
  %v874 = vunpack.c.h.b16 %v173
  %v875 = vunpack.c.l.b16 %v174
  %v876 = vunpack.c.h.b16 %v174
  %v877 = vunpack.c.l.b16 %v175
  %v878 = vunpack.c.h.b16 %v175
  %v879 = vunpack.c.l.b16 %v176
  %v880 = vunpack.c.h.b16 %v176
  %v881 = vunpack.c.l.b16 %v177
  %v882 = vunpack.c.h.b16 %v177
  %v883 = vunpack.c.l.b16 %v178
  %v884 = vunpack.c.h.b16 %v178
  %v885 = vunpack.c.l.b16 %v179
  %v886 = vunpack.c.h.b16 %v179
  %v887 = vunpack.c.l.b16 %v180
  %v888 = vunpack.c.h.b16 %v180
  %v889 = vunpack.c.l.b16 %v181
  %v890 = vunpack.c.h.b16 %v181
  %v891 = vunpack.c.l.b16 %v182
  %v892 = vunpack.c.h.b16 %v182
  %v893 = vunpack.c.l.b16 %v183
  %v894 = vunpack.c.h.b16 %v183
  %v895 = vunpack.c.l.b16 %v184
  %v896 = vunpack.c.h.b16 %v184
  %v897 = vunpack.c.l.b16 %v185
  %v898 = vunpack.c.h.b16 %v185
  %v899 = vunpack.c.l.b16 %v186
  %v900 = vunpack.c.h.b16 %v186
  %v901 = vunpack.c.l.b16 %v187
  %v902 = vunpack.c.h.b16 %v187
  %v903 = vunpack.c.l.b16 %v188
  %v904 = vunpack.c.h.b16 %v188
  %v905 = vunpack.c.l.b16 %v189
  %v906 = vunpack.c.h.b16 %v189
  %v907 = vunpack.c.l.b16 %v190
  %v908 = vunpack.c.h.b16 %v190
  %v909 = vunpack.c.l.b16 %v191
  %v910 = vunpack.c.h.b16 %v191
  %v911 = vunpack.c.l.b16 %v192
  %v912 = vunpack.c.h.b16 %v192
  %v913 = vunpack.c.l.b16 %v193
  %v914 = vunpack.c.h.b16 %v193
  %v915 = vunpack.c.l.b16 %v194
  %v916 = vunpack.c.h.b16 %v194
  %v917 = vunpack.c.l.b16 %v195
  %v918 = vunpack.c.h.b16 %v195
  %v919 = vunpack.c.l.b16 %v196
  %v920 = vunpack.c.h.b16 %v196
  %v921 = vunpack.c.l.b16 %v197
  %v922 = vunpack.c.h.b16 %v197
  %v923 = vunpack.c.l.b16 %v198
  %v924 = vunpack.c.h.b16 %v198
  %v925 = vunpack.c.l.b16 %v199
  %v926 = vunpack.c.h.b16 %v199
  %v927 = vunpack.c.l.b16 %v200
  %v928 = vunpack.c.h.b16 %v200
  %v929 = vunpack.c.l.b16 %v201
  %v930 = vunpack.c.h.b16 %v201
  %v931 = vunpack.c.l.b16 %v202
  %v932 = vunpack.c.h.b16 %v202
  %v933 = vunpack.c.l.b16 %v203
  %v934 = vunpack.c.h.b16 %v203
  %v935 = vunpack.c.l.b16 %v204
  %v936 = vunpack.c.h.b16 %v204
  %v937 = vunpack.c.l.b16 %v205
  %v938 = vunpack.c.h.b16 %v205
  %v939 = vunpack.c.l.b16 %v206
  %v940 = vunpack.c.h.b16 %v206
  %v941 = vunpack.c.l.b16 %v207
  %v942 = vunpack.c.h.b16 %v207
  %v943 = vunpack.c.l.b16 %v208
  %v944 = vunpack.c.h.b16 %v208
  %v945 = vunpack.c.l.b16 %v209
  %v946 = vunpack.c.h.b16 %v209
  %v947 = vunpack.c.l.b16 %v210
  %v948 = vunpack.c.h.b16 %v210
  %v949 = vunpack.c.l.b16 %v211
  %v950 = vunpack.c.h.b16 %v211
  %v951 = vunpack.c.l.b16 %v212
  %v952 = vunpack.c.h.b16 %v212
  %v953 = vunpack.c.l.b16 %v213
  %v954 = vunpack.c.h.b16 %v213
  %v955 = vunpack.c.l.b16 %v214
  %v956 = vunpack.c.h.b16 %v214
  %v957 = vunpack.c.l.b16 %v215
  %v958 = vunpack.c.h.b16 %v215
  %v959 = vunpack.c.l.b16 %v216
  %v960 = vunpack.c.h.b16 %v216
  %v961 = vunpack.c.l.b16 %v217
  %v962 = vunpack.c.h.b16 %v217
  %v963 = vunpack.c.l.b16 %v218
  %v964 = vunpack.c.h.b16 %v218
  %v965 = vunpack.c.l.b16 %v219
  %v966 = vunpack.c.h.b16 %v219
  %v967 = vunpack.c.l.b16 %v220
  %v968 = vunpack.c.h.b16 %v220
  %v969 = vunpack.c.l.b16 %v221
  %v970 = vunpack.c.h.b16 %v221
  %v971 = vunpack.c.l.b16 %v222
  %v972 = vunpack.c.h.b16 %v222
  %v973 = vunpack.c.l.b16 %v223
  %v974 = vunpack.c.h.b16 %v223
  %v975 = vunpack.c.l.b16 %v224
  %v976 = vunpack.c.h.b16 %v224
  %v977 = vunpack.c.l.b16 %v225
  %v978 = vunpack.c.h.b16 %v225
  %v979 = vunpack.c.l.b16 %v226
  %v980 = vunpack.c.h.b16 %v226
  %v981 = vunpack.c.l.b16 %v227
  %v982 = vunpack.c.h.b16 %v227
  %v983 = vunpack.c.l.b16 %v228
  %v984 = vunpack.c.h.b16 %v228
  %v985 = vunpack.c.l.b16 %v229
  %v986 = vunpack.c.h.b16 %v229
  %v987 = vunpack.c.l.b16 %v230
  %v988 = vunpack.c.h.b16 %v230
  %v989 = vunpack.c.l.b16 %v231
  %v990 = vunpack.c.h.b16 %v231
  %v991 = vunpack.c.l.b16 %v232
  %v992 = vunpack.c.h.b16 %v232
  %v993 = vunpack.c.l.b16 %v233
  %v994 = vunpack.c.h.b16 %v233
  %v995 = vunpack.c.l.b16 %v234
  %v996 = vunpack.c.h.b16 %v234
  %v997 = vunpack.c.l.b16 %v235
  %v998 = vunpack.c.h.b16 %v235
  %v999 = vunpack.c.l.b16 %v236
  %v1000 = vunpack.c.h.b16 %v236
  %v1001 = vunpack.c.l.b16 %v237
  %v1002 = vunpack.c.h.b16 %v237
  %v1003 = vunpack.c.l.b16 %v238
  %v1004 = vunpack.c.h.b16 %v238
  %v1005 = vunpack.c.l.b16 %v239
  %v1006 = vunpack.c.h.b16 %v239
  %v1007 = vunpack.c.l.b16 %v240
  %v1008 = vunpack.c.h.b16 %v240
  %v1009 = vunpack.c.l.b16 %v241
  %v1010 = vunpack.c.h.b16 %v241
  %v1011 = vunpack.c.l.b16 %v242
  %v1012 = vunpack.c.h.b16 %v242
  %v1013 = vunpack.c.l.b16 %v243
  %v1014 = vunpack.c.h.b16 %v243
  %v1015 = vunpack.c.l.b16 %v244
  %v1016 = vunpack.c.h.b16 %v244
  %v1017 = vunpack.c.l.b16 %v245
  %v1018 = vunpack.c.h.b16 %v245
  %v1019 = vunpack.c.l.b16 %v246
  %v1020 = vunpack.c.h.b16 %v246
  %v1021 = vunpack.c.l.b16 %v247
  %v1022 = vunpack.c.h.b16 %v247
  %v1023 = vunpack.c.l.b16 %v248
  %v1024 = vunpack.c.h.b16 %v248
  %v1025 = vunpack.c.l.b16 %v249
  %v1026 = vunpack.c.h.b16 %v249
  %v1027 = vunpack.c.l.b16 %v250
  %v1028 = vunpack.c.h.b16 %v250
  %v1029 = vunpack.c.l.b16 %v251
  %v1030 = vunpack.c.h.b16 %v251
  %v1031 = vunpack.c.l.b16 %v252
  %v1032 = vunpack.c.h.b16 %v252
  %v1033 = vunpack.c.l.b16 %v253
  %v1034 = vunpack.c.h.b16 %v253
  %v1035 = vunpack.c.l.b16 %v254
  %v1036 = vunpack.c.h.b16 %v254
  %v1037 = vunpack.c.l.b16 %v255
  %v1038 = vunpack.c.h.b16 %v255
  %v1039 = vunpack.c.l.b16 %v256
  %v1040 = vunpack.c.h.b16 %v256
  %v1041 = vunpack.c.l.b16 %v257
  %v1042 = vunpack.c.h.b16 %v257
  %v1043 = vunpack.c.l.b16 %v258
  %v1044 = vunpack.c.h.b16 %v258
  %v1045 = vunpack.c.l.b16 %v259
  %v1046 = vunpack.c.h.b16 %v259
  %v1047 = vunpack.c.l.b16 %v260
  %v1048 = vunpack.c.h.b16 %v260
  %v1049 = vunpack.c.l.b16 %v261
  %v1050 = vunpack.c.h.b16 %v261
  %v1051 = vunpack.c.l.b16 %v262
  %v1052 = vunpack.c.h.b16 %v262
  %v1053 = vunpack.c.l.b16 %v263
  %v1054 = vunpack.c.h.b16 %v263
  %v1055 = vunpack.c.l.b16 %v264
  %v1056 = vunpack.c.h.b16 %v264
  %v1057 = vunpack.c.l.b16 %v265
  %v1058 = vunpack.c.h.b16 %v265
  %v1059 = vunpack.c.l.b16 %v266
  %v1060 = vunpack.c.h.b16 %v266
  %v1061 = vunpack.c.l.b16 %v267
  %v1062 = vunpack.c.h.b16 %v267
  %v1063 = vunpack.c.l.b16 %v268
  %v1064 = vunpack.c.h.b16 %v268
  %v1065 = vunpack.c.l.b16 %v269
  %v1066 = vunpack.c.h.b16 %v269
  %v1067 = vunpack.c.l.b16 %v270
  %v1068 = vunpack.c.h.b16 %v270
  %v1069 = vunpack.c.l.b16 %v271
  %v1070 = vunpack.c.h.b16 %v271
  %v1071 = vunpack.c.l.b16 %v272
  %v1072 = vunpack.c.h.b16 %v272
  %v1073 = vunpack.c.l.b16 %v273
  %v1074 = vunpack.c.h.b16 %v273
  %v1075 = vunpack.c.l.b16 %v274
  %v1076 = vunpack.c.h.b16 %v274
  %v1077 = vunpack.c.l.b16 %v275
  %v1078 = vunpack.c.h.b16 %v275
  %v1079 = vunpack.c.l.b16 %v276
  %v1080 = vunpack.c.h.b16 %v276
  %v1081 = vunpack.c.l.b16 %v277
  %v1082 = vunpack.c.h.b16 %v277
  %v1083 = vunpack.c.l.b16 %v278
  %v1084 = vunpack.c.h.b16 %v278
  %v1085 = vunpack.c.l.b16 %v279
  %v1086 = vunpack.c.h.b16 %v279
  %v1087 = vunpack.c.l.b16 %v280
  %v1088 = vunpack.c.h.b16 %v280
  %v1089 = vunpack.c.l.b16 %v281
  %v1090 = vunpack.c.h.b16 %v281
  %v1091 = vunpack.c.l.b16 %v282
  %v1092 = vunpack.c.h.b16 %v282
  %v1093 = vunpack.c.l.b16 %v283
  %v1094 = vunpack.c.h.b16 %v283
  %v1095 = vunpack.c.l.b16 %v284
  %v1096 = vunpack.c.h.b16 %v284
  %v1097 = vunpack.c.l.b16 %v285
  %v1098 = vunpack.c.h.b16 %v285
  %v1099 = vunpack.c.l.b16 %v286
  %v1100 = vunpack.c.h.b16 %v286
  %v1101 = vunpack.c.l.b16 %v287
  %v1102 = vunpack.c.h.b16 %v287
  %v1103 = vunpack.c.l.b16 %v288
  %v1104 = vunpack.c.h.b16 %v288
  %v1105 = vunpack.c.l.b16 %v289
  %v1106 = vunpack.c.h.b16 %v289
  %v1107 = vunpack.c.l.b16 %v290
  %v1108 = vunpack.c.h.b16 %v290
  %v1109 = vunpack.c.l.b16 %v291
  %v1110 = vunpack.c.h.b16 %v291
  %v1111 = vunpack.c.l.b16 %v292
  %v1112 = vunpack.c.h.b16 %v292
  %v1113 = vunpack.c.l.b16 %v293
  %v1114 = vunpack.c.h.b16 %v293
  %v1115 = vunpack.c.l.b16 %v294
  %v1116 = vunpack.c.h.b16 %v294
  %v1117 = vunpack.c.l.b16 %v295
  %v1118 = vunpack.c.h.b16 %v295
  %v1119 = vunpack.c.l.b16 %v296
  %v1120 = vunpack.c.h.b16 %v296
  %v1121 = vunpack.c.l.b16 %v297
  %v1122 = vunpack.c.h.b16 %v297
  %v1123 = vunpack.c.l.b16 %v298
  %v1124 = vunpack.c.h.b16 %v298
  %v1125 = vunpack.c.l.b16 %v299
  %v1126 = vunpack.c.h.b16 %v299
  %v1127 = vunpack.c.l.b16 %v300
  %v1128 = vunpack.c.h.b16 %v300
  %v1129 = vunpack.c.l.b16 %v301
  %v1130 = vunpack.c.h.b16 %v301
  %v1131 = vunpack.c.l.b16 %v302
  %v1132 = vunpack.c.h.b16 %v302
  %v1133 = vunpack.c.l.b16 %v303
  %v1134 = vunpack.c.h.b16 %v303
  %v1135 = vunpack.c.l.b16 %v304
  %v1136 = vunpack.c.h.b16 %v304
  %v1137 = vunpack.c.l.b16 %v305
  %v1138 = vunpack.c.h.b16 %v305
  %v1139 = vunpack.c.l.b16 %v306
  %v1140 = vunpack.c.h.b16 %v306
  %v1141 = vunpack.c.l.b16 %v307
  %v1142 = vunpack.c.h.b16 %v307
  %v1143 = vunpack.c.l.b16 %v308
  %v1144 = vunpack.c.h.b16 %v308
  %v1145 = vunpack.c.l.b16 %v309
  %v1146 = vunpack.c.h.b16 %v309
  %v1147 = vunpack.c.l.b16 %v310
  %v1148 = vunpack.c.h.b16 %v310
  %v1149 = vunpack.c.l.b16 %v311
  %v1150 = vunpack.c.h.b16 %v311
  %v1151 = vunpack.c.l.b16 %v312
  %v1152 = vunpack.c.h.b16 %v312
  %v1153 = vunpack.c.l.b16 %v313
  %v1154 = vunpack.c.h.b16 %v313
  %v1155 = vunpack.c.l.b16 %v314
  %v1156 = vunpack.c.h.b16 %v314
  %v1157 = vunpack.c.l.b16 %v315
  %v1158 = vunpack.c.h.b16 %v315
  %v1159 = vunpack.c.l.b16 %v316
  %v1160 = vunpack.c.h.b16 %v316
  %v1161 = vunpack.c.l.b16 %v317
  %v1162 = vunpack.c.h.b16 %v317
  %v1163 = vunpack.c.l.b16 %v318
  %v1164 = vunpack.c.h.b16 %v318
  %v1165 = vunpack.c.l.b16 %v319
  %v1166 = vunpack.c.h.b16 %v319
  %v1167 = vunpack.c.l.b16 %v320
  %v1168 = vunpack.c.h.b16 %v320
  %v1169 = vunpack.c.l.b16 %v321
  %v1170 = vunpack.c.h.b16 %v321
  %v1171 = vunpack.c.l.b16 %v322
  %v1172 = vunpack.c.h.b16 %v322
  %v1173 = vunpack.c.l.b16 %v323
  %v1174 = vunpack.c.h.b16 %v323
  %v1175 = vunpack.c.l.b16 %v324
  %v1176 = vunpack.c.h.b16 %v324
  %v1177 = vunpack.c.l.b16 %v325
  %v1178 = vunpack.c.h.b16 %v325
  %v1179 = vunpack.c.l.b16 %v326
  %v1180 = vunpack.c.h.b16 %v326
  %v1181 = vunpack.c.l.b16 %v327
  %v1182 = vunpack.c.h.b16 %v327
  %v1183 = vunpack.c.l.b16 %v328
  %v1184 = vunpack.c.h.b16 %v328
  %v1185 = vunpack.c.l.b16 %v329
  %v1186 = vunpack.c.h.b16 %v329
  %v1187 = vunpack.c.l.b16 %v330
  %v1188 = vunpack.c.h.b16 %v330
  %v1189 = vunpack.c.l.b16 %v331
  %v1190 = vunpack.c.h.b16 %v331
  %v1191 = vunpack.c.l.b16 %v332
  %v1192 = vunpack.c.h.b16 %v332
  %v1193 = vunpack.c.l.b16 %v333
  %v1194 = vunpack.c.h.b16 %v333
  %v1195 = vunpack.c.l.b16 %v334
  %v1196 = vunpack.c.h.b16 %v334
  %v1197 = vunpack.c.l.b16 %v335
  %v1198 = vunpack.c.h.b16 %v335
  %v1199 = vunpack.c.l.b16 %v336
  %v1200 = vunpack.c.h.b16 %v336
  %v1201 = vunpack.c.l.b16 %v337
  %v1202 = vunpack.c.h.b16 %v337
  %v1203 = vunpack.c.l.b16 %v338
  %v1204 = vunpack.c.h.b16 %v338
  %v1205 = vunpack.c.l.b16 %v339
  %v1206 = vunpack.c.h.b16 %v339
  %v1207 = vunpack.c.l.b16 %v340
  %v1208 = vunpack.c.h.b16 %v340
  %v1209 = vunpack.c.l.b16 %v341
  %v1210 = vunpack.c.h.b16 %v341
  %v1211 = vunpack.c.l.b16 %v342
  %v1212 = vunpack.c.h.b16 %v342
  %v1213 = vunpack.c.l.b16 %v343
  %v1214 = vunpack.c.h.b16 %v343
  %v1215 = vunpack.c.l.b16 %v344
  %v1216 = vunpack.c.h.b16 %v344
  %v1217 = vunpack.c.l.b16 %v345
  %v1218 = vunpack.c.h.b16 %v345
  %v1219 = vunpack.c.l.b16 %v346
  %v1220 = vunpack.c.h.b16 %v346
  %v1221 = vunpack.c.l.b16 %v347
  %v1222 = vunpack.c.h.b16 %v347
  %v1223 = vunpack.c.l.b16 %v348
  %v1224 = vunpack.c.h.b16 %v348
  %v1225 = vunpack.c.l.b16 %v349
  %v1226 = vunpack.c.h.b16 %v349
  %v1227 = vunpack.c.l.b16 %v350
  %v1228 = vunpack.c.h.b16 %v350
  %v1229 = vunpack.c.l.b16 %v351
  %v1230 = vunpack.c.h.b16 %v351
  %v1231 = vunpack.c.l.b16 %v352
  %v1232 = vunpack.c.h.b16 %v352
  %v1233 = vunpack.c.l.b16 %v353
  %v1234 = vunpack.c.h.b16 %v353
  %v1235 = vunpack.c.l.b16 %v354
  %v1236 = vunpack.c.h.b16 %v354
  %v1237 = vunpack.c.l.b16 %v355
  %v1238 = vunpack.c.h.b16 %v355
  %v1239 = vunpack.c.l.b16 %v356
  %v1240 = vunpack.c.h.b16 %v356
  %v1241 = vunpack.c.l.b16 %v357
  %v1242 = vunpack.c.h.b16 %v357
  %v1243 = vunpack.c.l.b16 %v358
  %v1244 = vunpack.c.h.b16 %v358
  %v1245 = vunpack.c.l.b16 %v359
  %v1246 = vunpack.c.h.b16 %v359
  %v1247 = vunpack.c.l.b16 %v360
  %v1248 = vunpack.c.h.b16 %v360
  %v1249 = vunpack.c.l.b16 %v361
  %v1250 = vunpack.c.h.b16 %v361
  %v1251 = vunpack.c.l.b16 %v362
  %v1252 = vunpack.c.h.b16 %v362
  %v1253 = vunpack.c.l.b16 %v363
  %v1254 = vunpack.c.h.b16 %v363
  %v1255 = vunpack.c.l.b16 %v364
  %v1256 = vunpack.c.h.b16 %v364
  %v1257 = vunpack.c.l.b16 %v365
  %v1258 = vunpack.c.h.b16 %v365
  %v1259 = vunpack.c.l.b16 %v366
  %v1260 = vunpack.c.h.b16 %v366
  %v1261 = vunpack.c.l.b16 %v367
  %v1262 = vunpack.c.h.b16 %v367
  %v1263 = vunpack.c.l.b16 %v368
  %v1264 = vunpack.c.h.b16 %v368
  %v1265 = vunpack.c.l.b16 %v369
  %v1266 = vunpack.c.h.b16 %v369
  %v1267 = vunpack.c.l.b16 %v370
  %v1268 = vunpack.c.h.b16 %v370
  %v1269 = vunpack.c.l.b16 %v371
  %v1270 = vunpack.c.h.b16 %v371
  %v1271 = vunpack.c.l.b16 %v372
  %v1272 = vunpack.c.h.b16 %v372
  %v1273 = vunpack.c.l.b16 %v373
  %v1274 = vunpack.c.h.b16 %v373
  %v1275 = vunpack.c.l.b16 %v374
  %v1276 = vunpack.c.h.b16 %v374
  %v1277 = vunpack.c.l.b16 %v375
  %v1278 = vunpack.c.h.b16 %v375
  %v1279 = vunpack.c.l.b16 %v376
  %v1280 = vunpack.c.h.b16 %v376
  %v1281 = vunpack.c.l.b16 %v377
  %v1282 = vunpack.c.h.b16 %v377
  %v1283 = vunpack.c.l.b16 %v378
  %v1284 = vunpack.c.h.b16 %v378
  %v1285 = vunpack.c.l.b16 %v379
  %v1286 = vunpack.c.h.b16 %v379
  %v1287 = vunpack.c.l.b16 %v380
  %v1288 = vunpack.c.h.b16 %v380
  %v1289 = vunpack.c.l.b16 %v381
  %v1290 = vunpack.c.h.b16 %v381
  %v1291 = vunpack.c.l.b16 %v382
  %v1292 = vunpack.c.h.b16 %v382
  %v1293 = vunpack.c.l.b16 %v383
  %v1294 = vunpack.c.h.b16 %v383
  %v1295 = vunpack.c.l.b16 %v384
  %v1296 = vunpack.c.h.b16 %v384
  %v1297 = vunpack.c.l.b16 %v385
  %v1298 = vunpack.c.h.b16 %v385
  %v1299 = vunpack.c.l.b16 %v386
  %v1300 = vunpack.c.h.b16 %v386
  %v1301 = vunpack.c.l.b16 %v387
  %v1302 = vunpack.c.h.b16 %v387
  %v1303 = vunpack.c.l.b16 %v388
  %v1304 = vunpack.c.h.b16 %v388
  %v1305 = vunpack.c.l.b16 %v389
  %v1306 = vunpack.c.h.b16 %v389
  %v1307 = vunpack.c.l.b16 %v390
  %v1308 = vunpack.c.h.b16 %v390
  %v1309 = vunpack.c.l.b16 %v391
  %v1310 = vunpack.c.h.b16 %v391
  %v1311 = vunpack.c.l.b16 %v392
  %v1312 = vunpack.c.h.b16 %v392
  %v1313 = vunpack.c.l.b16 %v393
  %v1314 = vunpack.c.h.b16 %v393
  %v1315 = vunpack.c.l.b16 %v394
  %v1316 = vunpack.c.h.b16 %v394
  %v1317 = vunpack.c.l.b16 %v395
  %v1318 = vunpack.c.h.b16 %v395
  %v1319 = vunpack.c.l.b16 %v396
  %v1320 = vunpack.c.h.b16 %v396
  %v1321 = vunpack.c.l.b16 %v397
  %v1322 = vunpack.c.h.b16 %v397
  %v1323 = vunpack.c.l.b16 %v398
  %v1324 = vunpack.c.h.b16 %v398
  %v1325 = vunpack.c.l.b16 %v399
  %v1326 = vunpack.c.h.b16 %v399
  %v1327 = vunpack.c.l.b16 %v400
  %v1328 = vunpack.c.h.b16 %v400
  %v1329 = vunpack.c.l.b16 %v401
  %v1330 = vunpack.c.h.b16 %v401
  %v1331 = vunpack.c.l.b16 %v402
  %v1332 = vunpack.c.h.b16 %v402
  %v1333 = vunpack.c.l.b16 %v403
  %v1334 = vunpack.c.h.b16 %v403
  %v1335 = vunpack.c.l.b16 %v404
  %v1336 = vunpack.c.h.b16 %v404
  %v1337 = vunpack.c.l.b16 %v405
  %v1338 = vunpack.c.h.b16 %v405
  %v1339 = vunpack.c.l.b16 %v406
  %v1340 = vunpack.c.h.b16 %v406
  %v1341 = vunpack.c.l.b16 %v407
  %v1342 = vunpack.c.h.b16 %v407
  %v1343 = vunpack.c.l.b16 %v408
  %v1344 = vunpack.c.h.b16 %v408
  %v1345 = vunpack.c.l.b16 %v409
  %v1346 = vunpack.c.h.b16 %v409
  %v1347 = vunpack.c.l.b16 %v410
  %v1348 = vunpack.c.h.b16 %v410
  %v1349 = vunpack.c.l.b16 %v411
  %v1350 = vunpack.c.h.b16 %v411
  %v1351 = vunpack.c.l.b16 %v412
  %v1352 = vunpack.c.h.b16 %v412
  %v1353 = vunpack.c.l.b16 %v413
  %v1354 = vunpack.c.h.b16 %v413
  %v1355 = vunpack.c.l.b16 %v414
  %v1356 = vunpack.c.h.b16 %v414
  %v1357 = vunpack.c.l.b16 %v415
  %v1358 = vunpack.c.h.b16 %v415
  %v1359 = vunpack.c.l.b16 %v416
  %v1360 = vunpack.c.h.b16 %v416
  %v1361 = vunpack.c.l.b16 %v417
  %v1362 = vunpack.c.h.b16 %v417
  %v1363 = vunpack.c.l.b16 %v418
  %v1364 = vunpack.c.h.b16 %v418
  %v1365 = vunpack.c.l.b16 %v419
  %v1366 = vunpack.c.h.b16 %v419
  %v1367 = vunpack.c.l.b16 %v420
  %v1368 = vunpack.c.h.b16 %v420
  %v1369 = vunpack.c.l.b16 %v421
  %v1370 = vunpack.c.h.b16 %v421
  %v1371 = vunpack.c.l.b16 %v422
  %v1372 = vunpack.c.h.b16 %v422
  %v1373 = vunpack.c.l.b16 %v423
  %v1374 = vunpack.c.h.b16 %v423
  %v1375 = vunpack.c.l.b16 %v424
  %v1376 = vunpack.c.h.b16 %v424
  %v1377 = vunpack.c.l.b16 %v425
  %v1378 = vunpack.c.h.b16 %v425
  %v1379 = vunpack.c.l.b16 %v426
  %v1380 = vunpack.c.h.b16 %v426
  %v1381 = vunpack.c.l.b16 %v427
  %v1382 = vunpack.c.h.b16 %v427
  %v1383 = vunpack.c.l.b16 %v428
  %v1384 = vunpack.c.h.b16 %v428
  %v1385 = vunpack.c.l.b16 %v429
  %v1386 = vunpack.c.h.b16 %v429
  %v1387 = vunpack.c.l.b16 %v430
  %v1388 = vunpack.c.h.b16 %v430
  %v1389 = vunpack.c.l.b16 %v431
  %v1390 = vunpack.c.h.b16 %v431
  %v1391 = vunpack.c.l.b16 %v432
  %v1392 = vunpack.c.h.b16 %v432
  %v1393 = vunpack.c.l.b16 %v433
  %v1394 = vunpack.c.h.b16 %v433
  %v1395 = vunpack.c.l.b16 %v434
  %v1396 = vunpack.c.h.b16 %v434
  %v1397 = vunpack.c.l.b16 %v435
  %v1398 = vunpack.c.h.b16 %v435
  %v1399 = vunpack.c.l.b16 %v436
  %v1400 = vunpack.c.h.b16 %v436
  %v1401 = vpack.c.b16 %v813, %v801
  %v1402 = vpack.c.b16 %v814, %v802
  %v1403 = vpack.c.b16 %v815, %v803
  %v1404 = vpack.c.b16 %v816, %v804
  %v1405 = vpack.c.b16 %v817, %v805
  %v1406 = vpack.c.b16 %v818, %v806
  %v1407 = vpack.c.b16 %v819, %v807
  %v1408 = vpack.c.b16 %v820, %v808
  %v1409 = vpack.c.b16 %v821, %v809
  %v1410 = vpack.c.b16 %v822, %v810
  %v1411 = vpack.c.b16 %v823, %v811
  %v1412 = vpack.c.b16 %v824, %v812
  %v1413 = vpack.c.b16 %v837, %v825
  %v1414 = vpack.c.b16 %v838, %v826
  %v1415 = vpack.c.b16 %v839, %v827
  %v1416 = vpack.c.b16 %v840, %v828
  %v1417 = vpack.c.b16 %v841, %v829
  %v1418 = vpack.c.b16 %v842, %v830
  %v1419 = vpack.c.b16 %v843, %v831
  %v1420 = vpack.c.b16 %v844, %v832
  %v1421 = vpack.c.b16 %v845, %v833
  %v1422 = vpack.c.b16 %v846, %v834
  %v1423 = vpack.c.b16 %v847, %v835
  %v1424 = vpack.c.b16 %v848, %v836
  %v1425 = vpack.c.b16 %v861, %v849
  %v1426 = vpack.c.b16 %v862, %v850
  %v1427 = vpack.c.b16 %v863, %v851
  %v1428 = vpack.c.b16 %v864, %v852
  %v1429 = vpack.c.b16 %v865, %v853
  %v1430 = vpack.c.b16 %v866, %v854
  %v1431 = vpack.c.b16 %v867, %v855
  %v1432 = vpack.c.b16 %v868, %v856
  %v1433 = vpack.c.b16 %v869, %v857
  %v1434 = vpack.c.b16 %v870, %v858
  %v1435 = vpack.c.b16 %v871, %v859
  %v1436 = vpack.c.b16 %v872, %v860
  %v1437 = vpack.c.b16 %v885, %v873
  %v1438 = vpack.c.b16 %v886, %v874
  %v1439 = vpack.c.b16 %v887, %v875
  %v1440 = vpack.c.b16 %v888, %v876
  %v1441 = vpack.c.b16 %v889, %v877
  %v1442 = vpack.c.b16 %v890, %v878
  %v1443 = vpack.c.b16 %v891, %v879
  %v1444 = vpack.c.b16 %v892, %v880
  %v1445 = vpack.c.b16 %v893, %v881
  %v1446 = vpack.c.b16 %v894, %v882
  %v1447 = vpack.c.b16 %v895, %v883
  %v1448 = vpack.c.b16 %v896, %v884
  %v1449 = vpack.c.b16 %v909, %v897
  %v1450 = vpack.c.b16 %v910, %v898
  %v1451 = vpack.c.b16 %v911, %v899
  %v1452 = vpack.c.b16 %v912, %v900
  %v1453 = vpack.c.b16 %v913, %v901
  %v1454 = vpack.c.b16 %v914, %v902
  %v1455 = vpack.c.b16 %v915, %v903
  %v1456 = vpack.c.b16 %v916, %v904
  %v1457 = vpack.c.b16 %v917, %v905
  %v1458 = vpack.c.b16 %v918, %v906
  %v1459 = vpack.c.b16 %v919, %v907
  %v1460 = vpack.c.b16 %v920, %v908
  %v1461 = vpack.c.b16 %v933, %v921
  %v1462 = vpack.c.b16 %v934, %v922
  %v1463 = vpack.c.b16 %v935, %v923
  %v1464 = vpack.c.b16 %v936, %v924
  %v1465 = vpack.c.b16 %v937, %v925
  %v1466 = vpack.c.b16 %v938, %v926
  %v1467 = vpack.c.b16 %v939, %v927
  %v1468 = vpack.c.b16 %v940, %v928
  %v1469 = vpack.c.b16 %v941, %v929
  %v1470 = vpack.c.b16 %v942, %v930
  %v1471 = vpack.c.b16 %v943, %v931
  %v1472 = vpack.c.b16 %v944, %v932
  %v1473 = vpack.c.b16 %v957, %v945
  %v1474 = vpack.c.b16 %v958, %v946
  %v1475 = vpack.c.b16 %v959, %v947
  %v1476 = vpack.c.b16 %v960, %v948
  %v1477 = vpack.c.b16 %v961, %v949
  %v1478 = vpack.c.b16 %v962, %v950
  %v1479 = vpack.c.b16 %v963, %v951
  %v1480 = vpack.c.b16 %v964, %v952
  %v1481 = vpack.c.b16 %v965, %v953
  %v1482 = vpack.c.b16 %v966, %v954
  %v1483 = vpack.c.b16 %v967, %v955
  %v1484 = vpack.c.b16 %v968, %v956
  %v1485 = vpack.c.b16 %v981, %v969
  %v1486 = vpack.c.b16 %v982, %v970
  %v1487 = vpack.c.b16 %v983, %v971
  %v1488 = vpack.c.b16 %v984, %v972
  %v1489 = vpack.c.b16 %v985, %v973
  %v1490 = vpack.c.b16 %v986, %v974
  %v1491 = vpack.c.b16 %v987, %v975
  %v1492 = vpack.c.b16 %v988, %v976
  %v1493 = vpack.c.b16 %v989, %v977
  %v1494 = vpack.c.b16 %v990, %v978
  %v1495 = vpack.c.b16 %v991, %v979
  %v1496 = vpack.c.b16 %v992, %v980
  %v1497 = vpack.c.b16 %v1005, %v993
  %v1498 = vpack.c.b16 %v1006, %v994
  %v1499 = vpack.c.b16 %v1007, %v995
  %v1500 = vpack.c.b16 %v1008, %v996
  %v1501 = vpack.c.b16 %v1009, %v997
  %v1502 = vpack.c.b16 %v1010, %v998
  %v1503 = vpack.c.b16 %v1011, %v999
  %v1504 = vpack.c.b16 %v1012, %v1000
  %v1505 = vpack.c.b16 %v1013, %v1001
  %v1506 = vpack.c.b16 %v1014, %v1002
  %v1507 = vpack.c.b16 %v1015, %v1003
  %v1508 = vpack.c.b16 %v1016, %v1004
  %v1509 = vpack.c.b16 %v1029, %v1017
  %v1510 = vpack.c.b16 %v1030, %v1018
  %v1511 = vpack.c.b16 %v1031, %v1019
  %v1512 = vpack.c.b16 %v1032, %v1020
  %v1513 = vpack.c.b16 %v1033, %v1021
  %v1514 = vpack.c.b16 %v1034, %v1022
  %v1515 = vpack.c.b16 %v1035, %v1023
  %v1516 = vpack.c.b16 %v1036, %v1024
  %v1517 = vpack.c.b16 %v1037, %v1025
  %v1518 = vpack.c.b16 %v1038, %v1026
  %v1519 = vpack.c.b16 %v1039, %v1027
  %v1520 = vpack.c.b16 %v1040, %v1028
  %v1521 = vpack.c.b16 %v1053, %v1041
  %v1522 = vpack.c.b16 %v1054, %v1042
  %v1523 = vpack.c.b16 %v1055, %v1043
  %v1524 = vpack.c.b16 %v1056, %v1044
  %v1525 = vpack.c.b16 %v1057, %v1045
  %v1526 = vpack.c.b16 %v1058, %v1046
  %v1527 = vpack.c.b16 %v1059, %v1047
  %v1528 = vpack.c.b16 %v1060, %v1048
  %v1529 = vpack.c.b16 %v1061, %v1049
  %v1530 = vpack.c.b16 %v1062, %v1050
  %v1531 = vpack.c.b16 %v1063, %v1051
  %v1532 = vpack.c.b16 %v1064, %v1052
  %v1533 = vpack.c.b16 %v1077, %v1065
  %v1534 = vpack.c.b16 %v1078, %v1066
  %v1535 = vpack.c.b16 %v1079, %v1067
  %v1536 = vpack.c.b16 %v1080, %v1068
  %v1537 = vpack.c.b16 %v1081, %v1069
  %v1538 = vpack.c.b16 %v1082, %v1070
  %v1539 = vpack.c.b16 %v1083, %v1071
  %v1540 = vpack.c.b16 %v1084, %v1072
  %v1541 = vpack.c.b16 %v1085, %v1073
  %v1542 = vpack.c.b16 %v1086, %v1074
  %v1543 = vpack.c.b16 %v1087, %v1075
  %v1544 = vpack.c.b16 %v1088, %v1076
  %v1545 = vpack.c.b16 %v1101, %v1089
  %v1546 = vpack.c.b16 %v1102, %v1090
  %v1547 = vpack.c.b16 %v1103, %v1091
  %v1548 = vpack.c.b16 %v1104, %v1092
  %v1549 = vpack.c.b16 %v1105, %v1093
  %v1550 = vpack.c.b16 %v1106, %v1094
  %v1551 = vpack.c.b16 %v1107, %v1095
  %v1552 = vpack.c.b16 %v1108, %v1096
  %v1553 = vpack.c.b16 %v1109, %v1097
  %v1554 = vpack.c.b16 %v1110, %v1098
  %v1555 = vpack.c.b16 %v1111, %v1099
  %v1556 = vpack.c.b16 %v1112, %v1100
  %v1557 = vpack.c.b16 %v1125, %v1113
  %v1558 = vpack.c.b16 %v1126, %v1114
  %v1559 = vpack.c.b16 %v1127, %v1115
  %v1560 = vpack.c.b16 %v1128, %v1116
  %v1561 = vpack.c.b16 %v1129, %v1117
  %v1562 = vpack.c.b16 %v1130, %v1118
  %v1563 = vpack.c.b16 %v1131, %v1119
  %v1564 = vpack.c.b16 %v1132, %v1120
  %v1565 = vpack.c.b16 %v1133, %v1121
  %v1566 = vpack.c.b16 %v1134, %v1122
  %v1567 = vpack.c.b16 %v1135, %v1123
  %v1568 = vpack.c.b16 %v1136, %v1124
  %v1569 = vpack.c.b16 %v1149, %v1137
  %v1570 = vpack.c.b16 %v1150, %v1138
  %v1571 = vpack.c.b16 %v1151, %v1139
  %v1572 = vpack.c.b16 %v1152, %v1140
  %v1573 = vpack.c.b16 %v1153, %v1141
  %v1574 = vpack.c.b16 %v1154, %v1142
  %v1575 = vpack.c.b16 %v1155, %v1143
  %v1576 = vpack.c.b16 %v1156, %v1144
  %v1577 = vpack.c.b16 %v1157, %v1145
  %v1578 = vpack.c.b16 %v1158, %v1146
  %v1579 = vpack.c.b16 %v1159, %v1147
  %v1580 = vpack.c.b16 %v1160, %v1148
  %v1581 = vpack.c.b16 %v1173, %v1161
  %v1582 = vpack.c.b16 %v1174, %v1162
  %v1583 = vpack.c.b16 %v1175, %v1163
  %v1584 = vpack.c.b16 %v1176, %v1164
  %v1585 = vpack.c.b16 %v1177, %v1165
  %v1586 = vpack.c.b16 %v1178, %v1166
  %v1587 = vpack.c.b16 %v1179, %v1167
  %v1588 = vpack.c.b16 %v1180, %v1168
  %v1589 = vpack.c.b16 %v1181, %v1169
  %v1590 = vpack.c.b16 %v1182, %v1170
  %v1591 = vpack.c.b16 %v1183, %v1171
  %v1592 = vpack.c.b16 %v1184, %v1172
  %v1593 = vpack.c.b16 %v1197, %v1185
  %v1594 = vpack.c.b16 %v1198, %v1186
  %v1595 = vpack.c.b16 %v1199, %v1187
  %v1596 = vpack.c.b16 %v1200, %v1188
  %v1597 = vpack.c.b16 %v1201, %v1189
  %v1598 = vpack.c.b16 %v1202, %v1190
  %v1599 = vpack.c.b16 %v1203, %v1191
  %v1600 = vpack.c.b16 %v1204, %v1192
  %v1601 = vpack.c.b16 %v1205, %v1193
  %v1602 = vpack.c.b16 %v1206, %v1194
  %v1603 = vpack.c.b16 %v1207, %v1195
  %v1604 = vpack.c.b16 %v1208, %v1196
  %v1605 = vpack.c.b16 %v1221, %v1209
  %v1606 = vpack.c.b16 %v1222, %v1210
  %v1607 = vpack.c.b16 %v1223, %v1211
  %v1608 = vpack.c.b16 %v1224, %v1212
  %v1609 = vpack.c.b16 %v1225, %v1213
  %v1610 = vpack.c.b16 %v1226, %v1214
  %v1611 = vpack.c.b16 %v1227, %v1215
  %v1612 = vpack.c.b16 %v1228, %v1216
  %v1613 = vpack.c.b16 %v1229, %v1217
  %v1614 = vpack.c.b16 %v1230, %v1218
  %v1615 = vpack.c.b16 %v1231, %v1219
  %v1616 = vpack.c.b16 %v1232, %v1220
  %v1617 = vpack.c.b16 %v1245, %v1233
  %v1618 = vpack.c.b16 %v1246, %v1234
  %v1619 = vpack.c.b16 %v1247, %v1235
  %v1620 = vpack.c.b16 %v1248, %v1236
  %v1621 = vpack.c.b16 %v1249, %v1237
  %v1622 = vpack.c.b16 %v1250, %v1238
  %v1623 = vpack.c.b16 %v1251, %v1239
  %v1624 = vpack.c.b16 %v1252, %v1240
  %v1625 = vpack.c.b16 %v1253, %v1241
  %v1626 = vpack.c.b16 %v1254, %v1242
  %v1627 = vpack.c.b16 %v1255, %v1243
  %v1628 = vpack.c.b16 %v1256, %v1244
  %v1629 = vpack.c.b16 %v1269, %v1257
  %v1630 = vpack.c.b16 %v1270, %v1258
  %v1631 = vpack.c.b16 %v1271, %v1259
  %v1632 = vpack.c.b16 %v1272, %v1260
  %v1633 = vpack.c.b16 %v1273, %v1261
  %v1634 = vpack.c.b16 %v1274, %v1262
  %v1635 = vpack.c.b16 %v1275, %v1263
  %v1636 = vpack.c.b16 %v1276, %v1264
  %v1637 = vpack.c.b16 %v1277, %v1265
  %v1638 = vpack.c.b16 %v1278, %v1266
  %v1639 = vpack.c.b16 %v1279, %v1267
  %v1640 = vpack.c.b16 %v1280, %v1268
  %v1641 = vpack.c.b16 %v1293, %v1281
  %v1642 = vpack.c.b16 %v1294, %v1282
  %v1643 = vpack.c.b16 %v1295, %v1283
  %v1644 = vpack.c.b16 %v1296, %v1284
  %v1645 = vpack.c.b16 %v1297, %v1285
  %v1646 = vpack.c.b16 %v1298, %v1286
  %v1647 = vpack.c.b16 %v1299, %v1287
  %v1648 = vpack.c.b16 %v1300, %v1288
  %v1649 = vpack.c.b16 %v1301, %v1289
  %v1650 = vpack.c.b16 %v1302, %v1290
  %v1651 = vpack.c.b16 %v1303, %v1291
  %v1652 = vpack.c.b16 %v1304, %v1292
  %v1653 = vpack.c.b16 %v1317, %v1305
  %v1654 = vpack.c.b16 %v1318, %v1306
  %v1655 = vpack.c.b16 %v1319, %v1307
  %v1656 = vpack.c.b16 %v1320, %v1308
  %v1657 = vpack.c.b16 %v1321, %v1309
  %v1658 = vpack.c.b16 %v1322, %v1310
  %v1659 = vpack.c.b16 %v1323, %v1311
  %v1660 = vpack.c.b16 %v1324, %v1312
  %v1661 = vpack.c.b16 %v1325, %v1313
  %v1662 = vpack.c.b16 %v1326, %v1314
  %v1663 = vpack.c.b16 %v1327, %v1315
  %v1664 = vpack.c.b16 %v1328, %v1316
  %v1665 = vpack.c.b16 %v1341, %v1329
  %v1666 = vpack.c.b16 %v1342, %v1330
  %v1667 = vpack.c.b16 %v1343, %v1331
  %v1668 = vpack.c.b16 %v1344, %v1332
  %v1669 = vpack.c.b16 %v1345, %v1333
  %v1670 = vpack.c.b16 %v1346, %v1334
  %v1671 = vpack.c.b16 %v1347, %v1335
  %v1672 = vpack.c.b16 %v1348, %v1336
  %v1673 = vpack.c.b16 %v1349, %v1337
  %v1674 = vpack.c.b16 %v1350, %v1338
  %v1675 = vpack.c.b16 %v1351, %v1339
  %v1676 = vpack.c.b16 %v1352, %v1340
  %v1677 = vpack.c.b16 %v1365, %v1353
  %v1678 = vpack.c.b16 %v1366, %v1354
  %v1679 = vpack.c.b16 %v1367, %v1355
  %v1680 = vpack.c.b16 %v1368, %v1356
  %v1681 = vpack.c.b16 %v1369, %v1357
  %v1682 = vpack.c.b16 %v1370, %v1358
  %v1683 = vpack.c.b16 %v1371, %v1359
  %v1684 = vpack.c.b16 %v1372, %v1360
  %v1685 = vpack.c.b16 %v1373, %v1361
  %v1686 = vpack.c.b16 %v1374, %v1362
  %v1687 = vpack.c.b16 %v1375, %v1363
  %v1688 = vpack.c.b16 %v1376, %v1364
  %v1689 = vpack.c.b16 %v1389, %v1377
  %v1690 = vpack.c.b16 %v1390, %v1378
  %v1691 = vpack.c.b16 %v1391, %v1379
  %v1692 = vpack.c.b16 %v1392, %v1380
  %v1693 = vpack.c.b16 %v1393, %v1381
  %v1694 = vpack.c.b16 %v1394, %v1382
  %v1695 = vpack.c.b16 %v1395, %v1383
  %v1696 = vpack.c.b16 %v1396, %v1384
  %v1697 = vpack.c.b16 %v1397, %v1385
  %v1698 = vpack.c.b16 %v1398, %v1386
  %v1699 = vpack.c.b16 %v1399, %v1387
  %v1700 = vpack.c.b16 %v1400, %v1388
  %vm2001 = vcmask 130048
  %v2003 = vsel %vm2001, %v136, 0
  %2005 = vmatprep.subr.bf16.mxu0 %v1402
  %2006 = vmatpush1.bf16.msra.mxu0 %v1401
  %2007 = vmatprep.subr.bf16.mxu0 %v1414
  %2008 = vmatpush1.bf16.msra.mxu0 %v1413
  %2009 = vmatprep.subr.bf16.mxu0 %v1426
  %2010 = vmatpush1.bf16.msra.mxu0 %v1425
  %2011 = vmatprep.subr.bf16.mxu0 %v1438
  %2012 = vmatpush1.bf16.msra.mxu0 %v1437
  %2013 = vmatprep.subr.bf16.mxu0 %v1450
  %2014 = vmatpush1.bf16.msra.mxu0 %v1449
  %2015 = vmatprep.subr.bf16.mxu0 %v1462
  %2016 = vmatpush1.bf16.msra.mxu0 %v1461
  %2017 = vmatprep.subr.bf16.mxu0 %v1474
  %2018 = vmatpush1.bf16.msra.mxu0 %v1473
  %2019 = vmatprep.subr.bf16.mxu0 %v1486
  %2020 = vmatpush1.bf16.msra.mxu0 %v1485
  %2021 = vmatprep.subr.bf16.mxu0 %v1498
  %2022 = vmatpush1.bf16.msra.mxu0 %v1497
  %2023 = vmatprep.subr.bf16.mxu0 %v1510
  %2024 = vmatpush1.bf16.msra.mxu0 %v1509
  %2025 = vmatprep.subr.bf16.mxu0 %v1522
  %2026 = vmatpush1.bf16.msra.mxu0 %v1521
  %2027 = vmatprep.subr.bf16.mxu0 %v1534
  %2028 = vmatpush1.bf16.msra.mxu0 %v1533
  %2029 = vmatprep.subr.bf16.mxu0 %v1546
  %2030 = vmatpush1.bf16.msra.mxu0 %v1545
  %2031 = vmatprep.subr.bf16.mxu0 %v1558
  %2032 = vmatpush1.bf16.msra.mxu0 %v1557
  %2033 = vmatprep.subr.bf16.mxu0 %v1570
  %2034 = vmatpush1.bf16.msra.mxu0 %v1569
  %2035 = vmatprep.subr.bf16.mxu0 %v1582
  %2036 = vmatpush1.bf16.msra.mxu0 %v1581
  %2037 = vmatprep.mubr.bf16.mxu0 %v134
  %2038 = vmatmul.mubr.bf16.gmra.mrb[0].mxu0 %v133
  %v2039 = vpop.f32.mrb[0].mxu0
  %v2040 = vadd.f32 %v444, %v2039
  %v2041 = vpop.f32.mrb[0].mxu0
  %v2042 = vadd.f32 %v448, %v2041
  %v2043 = vpop.f32.mrb[0].mxu0
  %v2044 = vadd.f32 %v444, %v2043
  %v2045 = vpop.f32.mrb[0].mxu0
  %v2046 = vadd.f32 %v448, %v2045
  %2047 = vdwg.mxu0
  %2048 = vmatprep.subr.bf16.mxu0 %v1594
  %2049 = vmatpush1.bf16.msra.mxu0 %v1593
  %2050 = vmatprep.subr.bf16.mxu0 %v1606
  %2051 = vmatpush1.bf16.msra.mxu0 %v1605
  %2052 = vmatprep.subr.bf16.mxu0 %v1618
  %2053 = vmatpush1.bf16.msra.mxu0 %v1617
  %2054 = vmatprep.subr.bf16.mxu0 %v1630
  %2055 = vmatpush1.bf16.msra.mxu0 %v1629
  %2056 = vmatprep.subr.bf16.mxu0 %v1642
  %2057 = vmatpush1.bf16.msra.mxu0 %v1641
  %2058 = vmatprep.subr.bf16.mxu0 %v1654
  %2059 = vmatpush1.bf16.msra.mxu0 %v1653
  %2060 = vmatprep.subr.bf16.mxu0 %v1666
  %2061 = vmatpush1.bf16.msra.mxu0 %v1665
  %2062 = vmatprep.subr.bf16.mxu0 %v1678
  %2063 = vmatpush1.bf16.msra.mxu0 %v1677
  %2064 = vmatprep.subr.bf16.mxu0 %v1690
  %2065 = vmatpush1.bf16.msra.mxu0 %v1689
  %2066 = vmatprep.subr.bf16.mxu0 0
  %2067 = vmatpush1.bf16.msra.mxu0 0
  %2068 = vmatprep.subr.bf16.mxu0 0
  %2069 = vmatpush1.bf16.msra.mxu0 0
  %2070 = vmatprep.subr.bf16.mxu0 0
  %2071 = vmatpush1.bf16.msra.mxu0 0
  %2072 = vmatprep.subr.bf16.mxu0 0
  %2073 = vmatpush1.bf16.msra.mxu0 0
  %2074 = vmatprep.subr.bf16.mxu0 0
  %2075 = vmatpush1.bf16.msra.mxu0 0
  %2076 = vmatprep.subr.bf16.mxu0 0
  %2077 = vmatpush1.bf16.msra.mxu0 0
  %2078 = vmatprep.subr.bf16.mxu0 0
  %2079 = vmatpush1.bf16.msra.mxu0 0
  %2080 = vmatprep.mubr.bf16.mxu0 %v2003
  %2081 = vmatmul.mubr.bf16.gmra.mrb[0].mxu0 %v135
  %v2082 = vpop.f32.mrb[0].mxu0
  %v2083 = vadd.f32 %v2040, %v2082
  %v2084 = vpop.f32.mrb[0].mxu0
  %v2085 = vadd.f32 %v2042, %v2084
  %v2086 = vpop.f32.mrb[0].mxu0
  %v2087 = vadd.f32 %v2044, %v2086
  %v2088 = vpop.f32.mrb[0].mxu0
  %v2089 = vadd.f32 %v2046, %v2088
  %2090 = vdwg.mxu0
  %2091 = vmatprep.subr.bf16.mxu0 %v1404
  %2092 = vmatpush1.bf16.msra.mxu0 %v1403
  %2093 = vmatprep.subr.bf16.mxu0 %v1416
  %2094 = vmatpush1.bf16.msra.mxu0 %v1415
  %2095 = vmatprep.subr.bf16.mxu0 %v1428
  %2096 = vmatpush1.bf16.msra.mxu0 %v1427
  %2097 = vmatprep.subr.bf16.mxu0 %v1440
  %2098 = vmatpush1.bf16.msra.mxu0 %v1439
  %2099 = vmatprep.subr.bf16.mxu0 %v1452
  %2100 = vmatpush1.bf16.msra.mxu0 %v1451
  %2101 = vmatprep.subr.bf16.mxu0 %v1464
  %2102 = vmatpush1.bf16.msra.mxu0 %v1463
  %2103 = vmatprep.subr.bf16.mxu0 %v1476
  %2104 = vmatpush1.bf16.msra.mxu0 %v1475
  %2105 = vmatprep.subr.bf16.mxu0 %v1488
  %2106 = vmatpush1.bf16.msra.mxu0 %v1487
  %2107 = vmatprep.subr.bf16.mxu0 %v1500
  %2108 = vmatpush1.bf16.msra.mxu0 %v1499
  %2109 = vmatprep.subr.bf16.mxu0 %v1512
  %2110 = vmatpush1.bf16.msra.mxu0 %v1511
  %2111 = vmatprep.subr.bf16.mxu0 %v1524
  %2112 = vmatpush1.bf16.msra.mxu0 %v1523
  %2113 = vmatprep.subr.bf16.mxu0 %v1536
  %2114 = vmatpush1.bf16.msra.mxu0 %v1535
  %2115 = vmatprep.subr.bf16.mxu0 %v1548
  %2116 = vmatpush1.bf16.msra.mxu0 %v1547
  %2117 = vmatprep.subr.bf16.mxu0 %v1560
  %2118 = vmatpush1.bf16.msra.mxu0 %v1559
  %2119 = vmatprep.subr.bf16.mxu0 %v1572
  %2120 = vmatpush1.bf16.msra.mxu0 %v1571
  %2121 = vmatprep.subr.bf16.mxu0 %v1584
  %2122 = vmatpush1.bf16.msra.mxu0 %v1583
  %2123 = vmatprep.mubr.bf16.mxu0 %v134
  %2124 = vmatmul.mubr.bf16.gmra.mrb[0].mxu0 %v133
  %v2125 = vpop.f32.mrb[0].mxu0
  %v2126 = vadd.f32 %v452, %v2125
  %v2127 = vpop.f32.mrb[0].mxu0
  %v2128 = vadd.f32 %v456, %v2127
  %v2129 = vpop.f32.mrb[0].mxu0
  %v2130 = vadd.f32 %v452, %v2129
  %v2131 = vpop.f32.mrb[0].mxu0
  %v2132 = vadd.f32 %v456, %v2131
  %2133 = vdwg.mxu0
  %2134 = vmatprep.subr.bf16.mxu0 %v1596
  %2135 = vmatpush1.bf16.msra.mxu0 %v1595
  %2136 = vmatprep.subr.bf16.mxu0 %v1608
  %2137 = vmatpush1.bf16.msra.mxu0 %v1607
  %2138 = vmatprep.subr.bf16.mxu0 %v1620
  %2139 = vmatpush1.bf16.msra.mxu0 %v1619
  %2140 = vmatprep.subr.bf16.mxu0 %v1632
  %2141 = vmatpush1.bf16.msra.mxu0 %v1631
  %2142 = vmatprep.subr.bf16.mxu0 %v1644
  %2143 = vmatpush1.bf16.msra.mxu0 %v1643
  %2144 = vmatprep.subr.bf16.mxu0 %v1656
  %2145 = vmatpush1.bf16.msra.mxu0 %v1655
  %2146 = vmatprep.subr.bf16.mxu0 %v1668
  %2147 = vmatpush1.bf16.msra.mxu0 %v1667
  %2148 = vmatprep.subr.bf16.mxu0 %v1680
  %2149 = vmatpush1.bf16.msra.mxu0 %v1679
  %2150 = vmatprep.subr.bf16.mxu0 %v1692
  %2151 = vmatpush1.bf16.msra.mxu0 %v1691
  %2152 = vmatprep.subr.bf16.mxu0 0
  %2153 = vmatpush1.bf16.msra.mxu0 0
  %2154 = vmatprep.subr.bf16.mxu0 0
  %2155 = vmatpush1.bf16.msra.mxu0 0
  %2156 = vmatprep.subr.bf16.mxu0 0
  %2157 = vmatpush1.bf16.msra.mxu0 0
  %2158 = vmatprep.subr.bf16.mxu0 0
  %2159 = vmatpush1.bf16.msra.mxu0 0
  %2160 = vmatprep.subr.bf16.mxu0 0
  %2161 = vmatpush1.bf16.msra.mxu0 0
  %2162 = vmatprep.subr.bf16.mxu0 0
  %2163 = vmatpush1.bf16.msra.mxu0 0
  %2164 = vmatprep.subr.bf16.mxu0 0
  %2165 = vmatpush1.bf16.msra.mxu0 0
  %2166 = vmatprep.mubr.bf16.mxu0 %v2003
  %2167 = vmatmul.mubr.bf16.gmra.mrb[0].mxu0 %v135
  %v2168 = vpop.f32.mrb[0].mxu0
  %v2169 = vadd.f32 %v2126, %v2168
  %v2170 = vpop.f32.mrb[0].mxu0
  %v2171 = vadd.f32 %v2128, %v2170
  %v2172 = vpop.f32.mrb[0].mxu0
  %v2173 = vadd.f32 %v2130, %v2172
  %v2174 = vpop.f32.mrb[0].mxu0
  %v2175 = vadd.f32 %v2132, %v2174
  %2176 = vdwg.mxu0
  %2177 = vmatprep.subr.bf16.mxu0 %v1406
  %2178 = vmatpush1.bf16.msra.mxu0 %v1405
  %2179 = vmatprep.subr.bf16.mxu0 %v1418
  %2180 = vmatpush1.bf16.msra.mxu0 %v1417
  %2181 = vmatprep.subr.bf16.mxu0 %v1430
  %2182 = vmatpush1.bf16.msra.mxu0 %v1429
  %2183 = vmatprep.subr.bf16.mxu0 %v1442
  %2184 = vmatpush1.bf16.msra.mxu0 %v1441
  %2185 = vmatprep.subr.bf16.mxu0 %v1454
  %2186 = vmatpush1.bf16.msra.mxu0 %v1453
  %2187 = vmatprep.subr.bf16.mxu0 %v1466
  %2188 = vmatpush1.bf16.msra.mxu0 %v1465
  %2189 = vmatprep.subr.bf16.mxu0 %v1478
  %2190 = vmatpush1.bf16.msra.mxu0 %v1477
  %2191 = vmatprep.subr.bf16.mxu0 %v1490
  %2192 = vmatpush1.bf16.msra.mxu0 %v1489
  %2193 = vmatprep.subr.bf16.mxu0 %v1502
  %2194 = vmatpush1.bf16.msra.mxu0 %v1501
  %2195 = vmatprep.subr.bf16.mxu0 %v1514
  %2196 = vmatpush1.bf16.msra.mxu0 %v1513
  %2197 = vmatprep.subr.bf16.mxu0 %v1526
  %2198 = vmatpush1.bf16.msra.mxu0 %v1525
  %2199 = vmatprep.subr.bf16.mxu0 %v1538
  %2200 = vmatpush1.bf16.msra.mxu0 %v1537
  %2201 = vmatprep.subr.bf16.mxu0 %v1550
  %2202 = vmatpush1.bf16.msra.mxu0 %v1549
  %2203 = vmatprep.subr.bf16.mxu0 %v1562
  %2204 = vmatpush1.bf16.msra.mxu0 %v1561
  %2205 = vmatprep.subr.bf16.mxu0 %v1574
  %2206 = vmatpush1.bf16.msra.mxu0 %v1573
  %2207 = vmatprep.subr.bf16.mxu0 %v1586
  %2208 = vmatpush1.bf16.msra.mxu0 %v1585
  %2209 = vmatprep.mubr.bf16.mxu0 %v134
  %2210 = vmatmul.mubr.bf16.gmra.mrb[0].mxu0 %v133
  %v2211 = vpop.f32.mrb[0].mxu0
  %v2212 = vadd.f32 %v460, %v2211
  %v2213 = vpop.f32.mrb[0].mxu0
  %v2214 = vadd.f32 %v464, %v2213
  %v2215 = vpop.f32.mrb[0].mxu0
  %v2216 = vadd.f32 %v460, %v2215
  %v2217 = vpop.f32.mrb[0].mxu0
  %v2218 = vadd.f32 %v464, %v2217
  %2219 = vdwg.mxu0
  %2220 = vmatprep.subr.bf16.mxu0 %v1598
  %2221 = vmatpush1.bf16.msra.mxu0 %v1597
  %2222 = vmatprep.subr.bf16.mxu0 %v1610
  %2223 = vmatpush1.bf16.msra.mxu0 %v1609
  %2224 = vmatprep.subr.bf16.mxu0 %v1622
  %2225 = vmatpush1.bf16.msra.mxu0 %v1621
  %2226 = vmatprep.subr.bf16.mxu0 %v1634
  %2227 = vmatpush1.bf16.msra.mxu0 %v1633
  %2228 = vmatprep.subr.bf16.mxu0 %v1646
  %2229 = vmatpush1.bf16.msra.mxu0 %v1645
  %2230 = vmatprep.subr.bf16.mxu0 %v1658
  %2231 = vmatpush1.bf16.msra.mxu0 %v1657
  %2232 = vmatprep.subr.bf16.mxu0 %v1670
  %2233 = vmatpush1.bf16.msra.mxu0 %v1669
  %2234 = vmatprep.subr.bf16.mxu0 %v1682
  %2235 = vmatpush1.bf16.msra.mxu0 %v1681
  %2236 = vmatprep.subr.bf16.mxu0 %v1694
  %2237 = vmatpush1.bf16.msra.mxu0 %v1693
  %2238 = vmatprep.subr.bf16.mxu0 0
  %2239 = vmatpush1.bf16.msra.mxu0 0
  %2240 = vmatprep.subr.bf16.mxu0 0
  %2241 = vmatpush1.bf16.msra.mxu0 0
  %2242 = vmatprep.subr.bf16.mxu0 0
  %2243 = vmatpush1.bf16.msra.mxu0 0
  %2244 = vmatprep.subr.bf16.mxu0 0
  %2245 = vmatpush1.bf16.msra.mxu0 0
  %2246 = vmatprep.subr.bf16.mxu0 0
  %2247 = vmatpush1.bf16.msra.mxu0 0
  %2248 = vmatprep.subr.bf16.mxu0 0
  %2249 = vmatpush1.bf16.msra.mxu0 0
  %2250 = vmatprep.subr.bf16.mxu0 0
  %2251 = vmatpush1.bf16.msra.mxu0 0
  %2252 = vmatprep.mubr.bf16.mxu0 %v2003
  %2253 = vmatmul.mubr.bf16.gmra.mrb[0].mxu0 %v135
  %v2254 = vpop.f32.mrb[0].mxu0
  %v2255 = vadd.f32 %v2212, %v2254
  %v2256 = vpop.f32.mrb[0].mxu0
  %v2257 = vadd.f32 %v2214, %v2256
  %v2258 = vpop.f32.mrb[0].mxu0
  %v2259 = vadd.f32 %v2216, %v2258
  %v2260 = vpop.f32.mrb[0].mxu0
  %v2261 = vadd.f32 %v2218, %v2260
  %2262 = vdwg.mxu0
  %2263 = vmatprep.subr.bf16.mxu0 %v1408
  %2264 = vmatpush1.bf16.msra.mxu0 %v1407
  %2265 = vmatprep.subr.bf16.mxu0 %v1420
  %2266 = vmatpush1.bf16.msra.mxu0 %v1419
  %2267 = vmatprep.subr.bf16.mxu0 %v1432
  %2268 = vmatpush1.bf16.msra.mxu0 %v1431
  %2269 = vmatprep.subr.bf16.mxu0 %v1444
  %2270 = vmatpush1.bf16.msra.mxu0 %v1443
  %2271 = vmatprep.subr.bf16.mxu0 %v1456
  %2272 = vmatpush1.bf16.msra.mxu0 %v1455
  %2273 = vmatprep.subr.bf16.mxu0 %v1468
  %2274 = vmatpush1.bf16.msra.mxu0 %v1467
  %2275 = vmatprep.subr.bf16.mxu0 %v1480
  %2276 = vmatpush1.bf16.msra.mxu0 %v1479
  %2277 = vmatprep.subr.bf16.mxu0 %v1492
  %2278 = vmatpush1.bf16.msra.mxu0 %v1491
  %2279 = vmatprep.subr.bf16.mxu0 %v1504
  %2280 = vmatpush1.bf16.msra.mxu0 %v1503
  %2281 = vmatprep.subr.bf16.mxu0 %v1516
  %2282 = vmatpush1.bf16.msra.mxu0 %v1515
  %2283 = vmatprep.subr.bf16.mxu0 %v1528
  %2284 = vmatpush1.bf16.msra.mxu0 %v1527
  %2285 = vmatprep.subr.bf16.mxu0 %v1540
  %2286 = vmatpush1.bf16.msra.mxu0 %v1539
  %2287 = vmatprep.subr.bf16.mxu0 %v1552
  %2288 = vmatpush1.bf16.msra.mxu0 %v1551
  %2289 = vmatprep.subr.bf16.mxu0 %v1564
  %2290 = vmatpush1.bf16.msra.mxu0 %v1563
  %2291 = vmatprep.subr.bf16.mxu0 %v1576
  %2292 = vmatpush1.bf16.msra.mxu0 %v1575
  %2293 = vmatprep.subr.bf16.mxu0 %v1588
  %2294 = vmatpush1.bf16.msra.mxu0 %v1587
  %2295 = vmatprep.mubr.bf16.mxu0 %v134
  %2296 = vmatmul.mubr.bf16.gmra.mrb[0].mxu0 %v133
  %v2297 = vpop.f32.mrb[0].mxu0
  %v2298 = vadd.f32 %v468, %v2297
  %v2299 = vpop.f32.mrb[0].mxu0
  %v2300 = vadd.f32 %v472, %v2299
  %v2301 = vpop.f32.mrb[0].mxu0
  %v2302 = vadd.f32 %v468, %v2301
  %v2303 = vpop.f32.mrb[0].mxu0
  %v2304 = vadd.f32 %v472, %v2303
  %2305 = vdwg.mxu0
  %2306 = vmatprep.subr.bf16.mxu0 %v1600
  %2307 = vmatpush1.bf16.msra.mxu0 %v1599
  %2308 = vmatprep.subr.bf16.mxu0 %v1612
  %2309 = vmatpush1.bf16.msra.mxu0 %v1611
  %2310 = vmatprep.subr.bf16.mxu0 %v1624
  %2311 = vmatpush1.bf16.msra.mxu0 %v1623
  %2312 = vmatprep.subr.bf16.mxu0 %v1636
  %2313 = vmatpush1.bf16.msra.mxu0 %v1635
  %2314 = vmatprep.subr.bf16.mxu0 %v1648
  %2315 = vmatpush1.bf16.msra.mxu0 %v1647
  %2316 = vmatprep.subr.bf16.mxu0 %v1660
  %2317 = vmatpush1.bf16.msra.mxu0 %v1659
  %2318 = vmatprep.subr.bf16.mxu0 %v1672
  %2319 = vmatpush1.bf16.msra.mxu0 %v1671
  %2320 = vmatprep.subr.bf16.mxu0 %v1684
  %2321 = vmatpush1.bf16.msra.mxu0 %v1683
  %2322 = vmatprep.subr.bf16.mxu0 %v1696
  %2323 = vmatpush1.bf16.msra.mxu0 %v1695
  %2324 = vmatprep.subr.bf16.mxu0 0
  %2325 = vmatpush1.bf16.msra.mxu0 0
  %2326 = vmatprep.subr.bf16.mxu0 0
  %2327 = vmatpush1.bf16.msra.mxu0 0
  %2328 = vmatprep.subr.bf16.mxu0 0
  %2329 = vmatpush1.bf16.msra.mxu0 0
  %2330 = vmatprep.subr.bf16.mxu0 0
  %2331 = vmatpush1.bf16.msra.mxu0 0
  %2332 = vmatprep.subr.bf16.mxu0 0
  %2333 = vmatpush1.bf16.msra.mxu0 0
  %2334 = vmatprep.subr.bf16.mxu0 0
  %2335 = vmatpush1.bf16.msra.mxu0 0
  %2336 = vmatprep.subr.bf16.mxu0 0
  %2337 = vmatpush1.bf16.msra.mxu0 0
  %2338 = vmatprep.mubr.bf16.mxu0 %v2003
  %2339 = vmatmul.mubr.bf16.gmra.mrb[0].mxu0 %v135
  %v2340 = vpop.f32.mrb[0].mxu0
  %v2341 = vadd.f32 %v2298, %v2340
  %v2342 = vpop.f32.mrb[0].mxu0
  %v2343 = vadd.f32 %v2300, %v2342
  %v2344 = vpop.f32.mrb[0].mxu0
  %v2345 = vadd.f32 %v2302, %v2344
  %v2346 = vpop.f32.mrb[0].mxu0
  %v2347 = vadd.f32 %v2304, %v2346
  %2348 = vdwg.mxu0
  %2349 = vmatprep.subr.bf16.mxu0 %v1410
  %2350 = vmatpush1.bf16.msra.mxu0 %v1409
  %2351 = vmatprep.subr.bf16.mxu0 %v1422
  %2352 = vmatpush1.bf16.msra.mxu0 %v1421
  %2353 = vmatprep.subr.bf16.mxu0 %v1434
  %2354 = vmatpush1.bf16.msra.mxu0 %v1433
  %2355 = vmatprep.subr.bf16.mxu0 %v1446
  %2356 = vmatpush1.bf16.msra.mxu0 %v1445
  %2357 = vmatprep.subr.bf16.mxu0 %v1458
  %2358 = vmatpush1.bf16.msra.mxu0 %v1457
  %2359 = vmatprep.subr.bf16.mxu0 %v1470
  %2360 = vmatpush1.bf16.msra.mxu0 %v1469
  %2361 = vmatprep.subr.bf16.mxu0 %v1482
  %2362 = vmatpush1.bf16.msra.mxu0 %v1481
  %2363 = vmatprep.subr.bf16.mxu0 %v1494
  %2364 = vmatpush1.bf16.msra.mxu0 %v1493
  %2365 = vmatprep.subr.bf16.mxu0 %v1506
  %2366 = vmatpush1.bf16.msra.mxu0 %v1505
  %2367 = vmatprep.subr.bf16.mxu0 %v1518
  %2368 = vmatpush1.bf16.msra.mxu0 %v1517
  %2369 = vmatprep.subr.bf16.mxu0 %v1530
  %2370 = vmatpush1.bf16.msra.mxu0 %v1529
  %2371 = vmatprep.subr.bf16.mxu0 %v1542
  %2372 = vmatpush1.bf16.msra.mxu0 %v1541
  %2373 = vmatprep.subr.bf16.mxu0 %v1554
  %2374 = vmatpush1.bf16.msra.mxu0 %v1553
  %2375 = vmatprep.subr.bf16.mxu0 %v1566
  %2376 = vmatpush1.bf16.msra.mxu0 %v1565
  %2377 = vmatprep.subr.bf16.mxu0 %v1578
  %2378 = vmatpush1.bf16.msra.mxu0 %v1577
  %2379 = vmatprep.subr.bf16.mxu0 %v1590
  %2380 = vmatpush1.bf16.msra.mxu0 %v1589
  %2381 = vmatprep.mubr.bf16.mxu0 %v134
  %2382 = vmatmul.mubr.bf16.gmra.mrb[0].mxu0 %v133
  %v2383 = vpop.f32.mrb[0].mxu0
  %v2384 = vadd.f32 %v476, %v2383
  %v2385 = vpop.f32.mrb[0].mxu0
  %v2386 = vadd.f32 %v480, %v2385
  %v2387 = vpop.f32.mrb[0].mxu0
  %v2388 = vadd.f32 %v476, %v2387
  %v2389 = vpop.f32.mrb[0].mxu0
  %v2390 = vadd.f32 %v480, %v2389
  %2391 = vdwg.mxu0
  %2392 = vmatprep.subr.bf16.mxu0 %v1602
  %2393 = vmatpush1.bf16.msra.mxu0 %v1601
  %2394 = vmatprep.subr.bf16.mxu0 %v1614
  %2395 = vmatpush1.bf16.msra.mxu0 %v1613
  %2396 = vmatprep.subr.bf16.mxu0 %v1626
  %2397 = vmatpush1.bf16.msra.mxu0 %v1625
  %2398 = vmatprep.subr.bf16.mxu0 %v1638
  %2399 = vmatpush1.bf16.msra.mxu0 %v1637
  %2400 = vmatprep.subr.bf16.mxu0 %v1650
  %2401 = vmatpush1.bf16.msra.mxu0 %v1649
  %2402 = vmatprep.subr.bf16.mxu0 %v1662
  %2403 = vmatpush1.bf16.msra.mxu0 %v1661
  %2404 = vmatprep.subr.bf16.mxu0 %v1674
  %2405 = vmatpush1.bf16.msra.mxu0 %v1673
  %2406 = vmatprep.subr.bf16.mxu0 %v1686
  %2407 = vmatpush1.bf16.msra.mxu0 %v1685
  %2408 = vmatprep.subr.bf16.mxu0 %v1698
  %2409 = vmatpush1.bf16.msra.mxu0 %v1697
  %2410 = vmatprep.subr.bf16.mxu0 0
  %2411 = vmatpush1.bf16.msra.mxu0 0
  %2412 = vmatprep.subr.bf16.mxu0 0
  %2413 = vmatpush1.bf16.msra.mxu0 0
  %2414 = vmatprep.subr.bf16.mxu0 0
  %2415 = vmatpush1.bf16.msra.mxu0 0
  %2416 = vmatprep.subr.bf16.mxu0 0
  %2417 = vmatpush1.bf16.msra.mxu0 0
  %2418 = vmatprep.subr.bf16.mxu0 0
  %2419 = vmatpush1.bf16.msra.mxu0 0
  %2420 = vmatprep.subr.bf16.mxu0 0
  %2421 = vmatpush1.bf16.msra.mxu0 0
  %2422 = vmatprep.subr.bf16.mxu0 0
  %2423 = vmatpush1.bf16.msra.mxu0 0
  %2424 = vmatprep.mubr.bf16.mxu0 %v2003
  %2425 = vmatmul.mubr.bf16.gmra.mrb[0].mxu0 %v135
  %v2426 = vpop.f32.mrb[0].mxu0
  %v2427 = vadd.f32 %v2384, %v2426
  %v2428 = vpop.f32.mrb[0].mxu0
  %v2429 = vadd.f32 %v2386, %v2428
  %v2430 = vpop.f32.mrb[0].mxu0
  %v2431 = vadd.f32 %v2388, %v2430
  %v2432 = vpop.f32.mrb[0].mxu0
  %v2433 = vadd.f32 %v2390, %v2432
  %2434 = vdwg.mxu0
  %2435 = vmatprep.subr.bf16.mxu0 %v1412
  %2436 = vmatpush1.bf16.msra.mxu0 %v1411
  %2437 = vmatprep.subr.bf16.mxu0 %v1424
  %2438 = vmatpush1.bf16.msra.mxu0 %v1423
  %2439 = vmatprep.subr.bf16.mxu0 %v1436
  %2440 = vmatpush1.bf16.msra.mxu0 %v1435
  %2441 = vmatprep.subr.bf16.mxu0 %v1448
  %2442 = vmatpush1.bf16.msra.mxu0 %v1447
  %2443 = vmatprep.subr.bf16.mxu0 %v1460
  %2444 = vmatpush1.bf16.msra.mxu0 %v1459
  %2445 = vmatprep.subr.bf16.mxu0 %v1472
  %2446 = vmatpush1.bf16.msra.mxu0 %v1471
  %2447 = vmatprep.subr.bf16.mxu0 %v1484
  %2448 = vmatpush1.bf16.msra.mxu0 %v1483
  %2449 = vmatprep.subr.bf16.mxu0 %v1496
  %2450 = vmatpush1.bf16.msra.mxu0 %v1495
  %2451 = vmatprep.subr.bf16.mxu0 %v1508
  %2452 = vmatpush1.bf16.msra.mxu0 %v1507
  %2453 = vmatprep.subr.bf16.mxu0 %v1520
  %2454 = vmatpush1.bf16.msra.mxu0 %v1519
  %2455 = vmatprep.subr.bf16.mxu0 %v1532
  %2456 = vmatpush1.bf16.msra.mxu0 %v1531
  %2457 = vmatprep.subr.bf16.mxu0 %v1544
  %2458 = vmatpush1.bf16.msra.mxu0 %v1543
  %2459 = vmatprep.subr.bf16.mxu0 %v1556
  %2460 = vmatpush1.bf16.msra.mxu0 %v1555
  %2461 = vmatprep.subr.bf16.mxu0 %v1568
  %2462 = vmatpush1.bf16.msra.mxu0 %v1567
  %2463 = vmatprep.subr.bf16.mxu0 %v1580
  %2464 = vmatpush1.bf16.msra.mxu0 %v1579
  %2465 = vmatprep.subr.bf16.mxu0 %v1592
  %2466 = vmatpush1.bf16.msra.mxu0 %v1591
  %2467 = vmatprep.mubr.bf16.mxu0 %v134
  %2468 = vmatmul.mubr.bf16.gmra.mrb[0].mxu0 %v133
  %v2469 = vpop.f32.mrb[0].mxu0
  %v2470 = vadd.f32 %v484, %v2469
  %v2471 = vpop.f32.mrb[0].mxu0
  %v2472 = vadd.f32 %v488, %v2471
  %v2473 = vpop.f32.mrb[0].mxu0
  %v2474 = vadd.f32 %v484, %v2473
  %v2475 = vpop.f32.mrb[0].mxu0
  %v2476 = vadd.f32 %v488, %v2475
  %2477 = vdwg.mxu0
  %2478 = vmatprep.subr.bf16.mxu0 %v1604
  %2479 = vmatpush1.bf16.msra.mxu0 %v1603
  %2480 = vmatprep.subr.bf16.mxu0 %v1616
  %2481 = vmatpush1.bf16.msra.mxu0 %v1615
  %2482 = vmatprep.subr.bf16.mxu0 %v1628
  %2483 = vmatpush1.bf16.msra.mxu0 %v1627
  %2484 = vmatprep.subr.bf16.mxu0 %v1640
  %2485 = vmatpush1.bf16.msra.mxu0 %v1639
  %2486 = vmatprep.subr.bf16.mxu0 %v1652
  %2487 = vmatpush1.bf16.msra.mxu0 %v1651
  %2488 = vmatprep.subr.bf16.mxu0 %v1664
  %2489 = vmatpush1.bf16.msra.mxu0 %v1663
  %2490 = vmatprep.subr.bf16.mxu0 %v1676
  %2491 = vmatpush1.bf16.msra.mxu0 %v1675
  %2492 = vmatprep.subr.bf16.mxu0 %v1688
  %2493 = vmatpush1.bf16.msra.mxu0 %v1687
  %2494 = vmatprep.subr.bf16.mxu0 %v1700
  %2495 = vmatpush1.bf16.msra.mxu0 %v1699
  %2496 = vmatprep.subr.bf16.mxu0 0
  %2497 = vmatpush1.bf16.msra.mxu0 0
  %2498 = vmatprep.subr.bf16.mxu0 0
  %2499 = vmatpush1.bf16.msra.mxu0 0
  %2500 = vmatprep.subr.bf16.mxu0 0
  %2501 = vmatpush1.bf16.msra.mxu0 0
  %2502 = vmatprep.subr.bf16.mxu0 0
  %2503 = vmatpush1.bf16.msra.mxu0 0
  %2504 = vmatprep.subr.bf16.mxu0 0
  %2505 = vmatpush1.bf16.msra.mxu0 0
  %2506 = vmatprep.subr.bf16.mxu0 0
  %2507 = vmatpush1.bf16.msra.mxu0 0
  %2508 = vmatprep.subr.bf16.mxu0 0
  %2509 = vmatpush1.bf16.msra.mxu0 0
  %2510 = vmatprep.mubr.bf16.mxu0 %v2003
  %2511 = vmatmul.mubr.bf16.gmra.mrb[0].mxu0 %v135
  %v2512 = vpop.f32.mrb[0].mxu0
  %v2513 = vadd.f32 %v2470, %v2512
  %v2514 = vpop.f32.mrb[0].mxu0
  %v2515 = vadd.f32 %v2472, %v2514
  %v2516 = vpop.f32.mrb[0].mxu0
  %v2517 = vadd.f32 %v2474, %v2516
  %v2518 = vpop.f32.mrb[0].mxu0
  %v2519 = vadd.f32 %v2476, %v2518
  %2520 = vdwg.mxu0
  %v2521 = vpack.c.bf16 %v2083, %v2083
  %v2522 = vpack.c.bf16 %v2255, %v2255
  %v2523 = vpack.c.bf16 %v2427, %v2427
  %2524 = vmatprep.subr.bf16.mxu0 0
  %2525 = vmatpush1.bf16.xpose.msra.mxu0 %v2522
  %2526 = vmatprep.subr.bf16.mxu0 0
  %2527 = vmatpush1.bf16.xpose.msra.mxu0 0
  %2528 = vmatprep.subr.bf16.mxu0 0
  %2529 = vmatpush1.bf16.xpose.msra.mxu0 0
  %2530 = vmatprep.subr.bf16.mxu0 0
  %2531 = vmatpush1.bf16.xpose.msra.mxu0 0
  %2532 = vmatprep.subr.bf16.mxu0 0
  %2533 = vmatpush1.bf16.xpose.msra.mxu0 0
  %2534 = vmatprep.subr.bf16.mxu0 0
  %2535 = vmatpush1.bf16.xpose.msra.mxu0 0
  %2536 = vmatprep.subr.bf16.mxu0 0
  %2537 = vmatpush1.bf16.xpose.msra.mxu0 0
  %2538 = vmatprep.subr.bf16.mxu0 0
  %2539 = vmatpush1.bf16.xpose.msra.mxu0 0
  %2540 = vmatprep.subr.bf16.mxu0 0
  %2541 = vmatpush1.bf16.xpose.msra.mxu0 0
  %2542 = vmatprep.subr.bf16.mxu0 0
  %2543 = vmatpush1.bf16.xpose.msra.mxu0 0
  %2544 = vmatprep.subr.bf16.mxu0 0
  %2545 = vmatpush1.bf16.xpose.msra.mxu0 0
  %2546 = vmatprep.subr.bf16.mxu0 0
  %2547 = vmatpush1.bf16.xpose.msra.mxu0 0
  %2548 = vmatprep.subr.bf16.mxu0 0
  %2549 = vmatpush1.bf16.xpose.msra.mxu0 0
  %2550 = vmatprep.subr.bf16.mxu0 0
  %2551 = vmatpush1.bf16.xpose.msra.mxu0 0
  %2552 = vmatprep.subr.bf16.mxu0 0
  %2553 = vmatpush1.bf16.xpose.msra.mxu0 0
  %2554 = vmatprep.subr.bf16.mxu0 0
  %2555 = vmatpush1.bf16.xpose.msra.mxu0 0
  %2556 = vmatprep.mubr.bf16.mxu0 0
  %2557 = vmatmul.mubr.bf16.gmra.mrb[0].mxu0 %v2521
  %v2558 = vpop.f32.mrb[0].mxu0
  %v2559 = vadd.f32 0.0, %v2558
  %v2560 = vpop.f32.mrb[0].mxu0
  %v2561 = vpop.f32.mrb[0].mxu0
  %v2562 = vpop.f32.mrb[0].mxu0
  %2563 = vdwg.mxu0
  %v2564 = vmul.f32 %v2559, 0.1
  %vm2565 = vcmask 36864
  %v2566 = vsel %vm2565, %v2564, -inf
  %2567 = vmax.xlane.f32.xlu0 %v2566
  %v2568 = vpop.xlane.xlu0 %2567
  %v2569 = vsub.f32 %v2564, %v2568
  %v2570 = vmul.f32 %v2569, 1.442695
  %v2571 = vpow.pop %v2570
  %v2572 = vsel %vm2565, %v2571, 0.0
  %2573 = vadd.xlane.f32.xlu0 %v2572
  %v2574 = vpop.xlane.xlu0 %2573
  %v2575 = vrcp.pop %v2574
  %v2576 = vmul.f32 %v2571, %v2575
  %v2577 = vpack.c.bf16 %v2576, %v2576
  %vm2578 = vcmask 39936
  %v2580 = vsel %vm2578, %v2577, 0
  %vm2582 = vcmask 1041408
  %vm2583 = vcmask 1042432
  %v2584 = vsel %vm2582, 4294967295, 65535
  %v2585 = vsel %vm2583, %v2584, 0
  %v2587 = vand.u32 %v2523, %v2585
  %2589 = vmatprep.subr.bf16.mxu0 0
  %2590 = vmatpush1.bf16.msra.mxu0 %v2587
  %2591 = vmatprep.subr.bf16.mxu0 0
  %2592 = vmatpush1.bf16.msra.mxu0 0
  %2593 = vmatprep.subr.bf16.mxu0 0
  %2594 = vmatpush1.bf16.msra.mxu0 0
  %2595 = vmatprep.subr.bf16.mxu0 0
  %2596 = vmatpush1.bf16.msra.mxu0 0
  %2597 = vmatprep.subr.bf16.mxu0 0
  %2598 = vmatpush1.bf16.msra.mxu0 0
  %2599 = vmatprep.subr.bf16.mxu0 0
  %2600 = vmatpush1.bf16.msra.mxu0 0
  %2601 = vmatprep.subr.bf16.mxu0 0
  %2602 = vmatpush1.bf16.msra.mxu0 0
  %2603 = vmatprep.subr.bf16.mxu0 0
  %2604 = vmatpush1.bf16.msra.mxu0 0
  %2605 = vmatprep.subr.bf16.mxu0 0
  %2606 = vmatpush1.bf16.msra.mxu0 0
  %2607 = vmatprep.subr.bf16.mxu0 0
  %2608 = vmatpush1.bf16.msra.mxu0 0
  %2609 = vmatprep.subr.bf16.mxu0 0
  %2610 = vmatpush1.bf16.msra.mxu0 0
  %2611 = vmatprep.subr.bf16.mxu0 0
  %2612 = vmatpush1.bf16.msra.mxu0 0
  %2613 = vmatprep.subr.bf16.mxu0 0
  %2614 = vmatpush1.bf16.msra.mxu0 0
  %2615 = vmatprep.subr.bf16.mxu0 0
  %2616 = vmatpush1.bf16.msra.mxu0 0
  %2617 = vmatprep.subr.bf16.mxu0 0
  %2618 = vmatpush1.bf16.msra.mxu0 0
  %2619 = vmatprep.subr.bf16.mxu0 0
  %2620 = vmatpush1.bf16.msra.mxu0 0
  %2621 = vmatprep.mubr.bf16.mxu0 0
  %2622 = vmatmul.mubr.bf16.gmra.mrb[0].mxu0 %v2580
  %v2623 = vpop.f32.mrb[0].mxu0
  %v2624 = vadd.f32 0.0, %v2623
  %v2625 = vpop.f32.mrb[0].mxu0
  %v2626 = vpop.f32.mrb[0].mxu0
  %v2627 = vpop.f32.mrb[0].mxu0
  %2628 = vdwg.mxu0
  %2629 = vst [vmem:[#allocation2] sm:$0x1f] %v2624
  %v2630 = vpack.c.bf16 %v2085, %v2085
  %v2631 = vpack.c.bf16 %v2257, %v2257
  %v2632 = vpack.c.bf16 %v2429, %v2429
  %2633 = vmatprep.subr.bf16.mxu0 0
  %2634 = vmatpush1.bf16.xpose.msra.mxu0 %v2631
  %2635 = vmatprep.subr.bf16.mxu0 0
  %2636 = vmatpush1.bf16.xpose.msra.mxu0 0
  %2637 = vmatprep.subr.bf16.mxu0 0
  %2638 = vmatpush1.bf16.xpose.msra.mxu0 0
  %2639 = vmatprep.subr.bf16.mxu0 0
  %2640 = vmatpush1.bf16.xpose.msra.mxu0 0
  %2641 = vmatprep.subr.bf16.mxu0 0
  %2642 = vmatpush1.bf16.xpose.msra.mxu0 0
  %2643 = vmatprep.subr.bf16.mxu0 0
  %2644 = vmatpush1.bf16.xpose.msra.mxu0 0
  %2645 = vmatprep.subr.bf16.mxu0 0
  %2646 = vmatpush1.bf16.xpose.msra.mxu0 0
  %2647 = vmatprep.subr.bf16.mxu0 0
  %2648 = vmatpush1.bf16.xpose.msra.mxu0 0
  %2649 = vmatprep.subr.bf16.mxu0 0
  %2650 = vmatpush1.bf16.xpose.msra.mxu0 0
  %2651 = vmatprep.subr.bf16.mxu0 0
  %2652 = vmatpush1.bf16.xpose.msra.mxu0 0
  %2653 = vmatprep.subr.bf16.mxu0 0
  %2654 = vmatpush1.bf16.xpose.msra.mxu0 0
  %2655 = vmatprep.subr.bf16.mxu0 0
  %2656 = vmatpush1.bf16.xpose.msra.mxu0 0
  %2657 = vmatprep.subr.bf16.mxu0 0
  %2658 = vmatpush1.bf16.xpose.msra.mxu0 0
  %2659 = vmatprep.subr.bf16.mxu0 0
  %2660 = vmatpush1.bf16.xpose.msra.mxu0 0
  %2661 = vmatprep.subr.bf16.mxu0 0
  %2662 = vmatpush1.bf16.xpose.msra.mxu0 0
  %2663 = vmatprep.subr.bf16.mxu0 0
  %2664 = vmatpush1.bf16.xpose.msra.mxu0 0
  %2665 = vmatprep.mubr.bf16.mxu0 0
  %2666 = vmatmul.mubr.bf16.gmra.mrb[0].mxu0 %v2630
  %v2667 = vpop.f32.mrb[0].mxu0
  %v2668 = vadd.f32 0.0, %v2667
  %v2669 = vpop.f32.mrb[0].mxu0
  %v2670 = vpop.f32.mrb[0].mxu0
  %v2671 = vpop.f32.mrb[0].mxu0
  %2672 = vdwg.mxu0
  %v2673 = vmul.f32 %v2668, 0.1
  %v2674 = vsel %vm2565, %v2673, -inf
  %2675 = vmax.xlane.f32.xlu0 %v2674
  %v2676 = vpop.xlane.xlu0 %2675
  %v2677 = vsub.f32 %v2673, %v2676
  %v2678 = vmul.f32 %v2677, 1.442695
  %v2679 = vpow.pop %v2678
  %v2680 = vsel %vm2565, %v2679, 0.0
  %2681 = vadd.xlane.f32.xlu0 %v2680
  %v2682 = vpop.xlane.xlu0 %2681
  %v2683 = vrcp.pop %v2682
  %v2684 = vmul.f32 %v2679, %v2683
  %v2685 = vpack.c.bf16 %v2684, %v2684
  %v2687 = vsel %vm2578, %v2685, 0
  %v2690 = vand.u32 %v2632, %v2585
  %2692 = vmatprep.subr.bf16.mxu0 0
  %2693 = vmatpush1.bf16.msra.mxu0 %v2690
  %2694 = vmatprep.subr.bf16.mxu0 0
  %2695 = vmatpush1.bf16.msra.mxu0 0
  %2696 = vmatprep.subr.bf16.mxu0 0
  %2697 = vmatpush1.bf16.msra.mxu0 0
  %2698 = vmatprep.subr.bf16.mxu0 0
  %2699 = vmatpush1.bf16.msra.mxu0 0
  %2700 = vmatprep.subr.bf16.mxu0 0
  %2701 = vmatpush1.bf16.msra.mxu0 0
  %2702 = vmatprep.subr.bf16.mxu0 0
  %2703 = vmatpush1.bf16.msra.mxu0 0
  %2704 = vmatprep.subr.bf16.mxu0 0
  %2705 = vmatpush1.bf16.msra.mxu0 0
  %2706 = vmatprep.subr.bf16.mxu0 0
  %2707 = vmatpush1.bf16.msra.mxu0 0
  %2708 = vmatprep.subr.bf16.mxu0 0
  %2709 = vmatpush1.bf16.msra.mxu0 0
  %2710 = vmatprep.subr.bf16.mxu0 0
  %2711 = vmatpush1.bf16.msra.mxu0 0
  %2712 = vmatprep.subr.bf16.mxu0 0
  %2713 = vmatpush1.bf16.msra.mxu0 0
  %2714 = vmatprep.subr.bf16.mxu0 0
  %2715 = vmatpush1.bf16.msra.mxu0 0
  %2716 = vmatprep.subr.bf16.mxu0 0
  %2717 = vmatpush1.bf16.msra.mxu0 0
  %2718 = vmatprep.subr.bf16.mxu0 0
  %2719 = vmatpush1.bf16.msra.mxu0 0
  %2720 = vmatprep.subr.bf16.mxu0 0
  %2721 = vmatpush1.bf16.msra.mxu0 0
  %2722 = vmatprep.subr.bf16.mxu0 0
  %2723 = vmatpush1.bf16.msra.mxu0 0
  %2724 = vmatprep.mubr.bf16.mxu0 0
  %2725 = vmatmul.mubr.bf16.gmra.mrb[0].mxu0 %v2687
  %v2726 = vpop.f32.mrb[0].mxu0
  %v2727 = vadd.f32 0.0, %v2726
  %v2728 = vpop.f32.mrb[0].mxu0
  %v2729 = vpop.f32.mrb[0].mxu0
  %v2730 = vpop.f32.mrb[0].mxu0
  %2731 = vdwg.mxu0
  %2732 = vst [vmem:[#allocation2 + $0x8] sm:$0x1f] %v2727
  %v2733 = vpack.c.bf16 %v2169, %v2169
  %v2734 = vpack.c.bf16 %v2341, %v2341
  %v2735 = vpack.c.bf16 %v2513, %v2513
  %2736 = vmatprep.subr.bf16.mxu0 0
  %2737 = vmatpush1.bf16.xpose.msra.mxu0 %v2734
  %2738 = vmatprep.subr.bf16.mxu0 0
  %2739 = vmatpush1.bf16.xpose.msra.mxu0 0
  %2740 = vmatprep.subr.bf16.mxu0 0
  %2741 = vmatpush1.bf16.xpose.msra.mxu0 0
  %2742 = vmatprep.subr.bf16.mxu0 0
  %2743 = vmatpush1.bf16.xpose.msra.mxu0 0
  %2744 = vmatprep.subr.bf16.mxu0 0
  %2745 = vmatpush1.bf16.xpose.msra.mxu0 0
  %2746 = vmatprep.subr.bf16.mxu0 0
  %2747 = vmatpush1.bf16.xpose.msra.mxu0 0
  %2748 = vmatprep.subr.bf16.mxu0 0
  %2749 = vmatpush1.bf16.xpose.msra.mxu0 0
  %2750 = vmatprep.subr.bf16.mxu0 0
  %2751 = vmatpush1.bf16.xpose.msra.mxu0 0
  %2752 = vmatprep.subr.bf16.mxu0 0
  %2753 = vmatpush1.bf16.xpose.msra.mxu0 0
  %2754 = vmatprep.subr.bf16.mxu0 0
  %2755 = vmatpush1.bf16.xpose.msra.mxu0 0
  %2756 = vmatprep.subr.bf16.mxu0 0
  %2757 = vmatpush1.bf16.xpose.msra.mxu0 0
  %2758 = vmatprep.subr.bf16.mxu0 0
  %2759 = vmatpush1.bf16.xpose.msra.mxu0 0
  %2760 = vmatprep.subr.bf16.mxu0 0
  %2761 = vmatpush1.bf16.xpose.msra.mxu0 0
  %2762 = vmatprep.subr.bf16.mxu0 0
  %2763 = vmatpush1.bf16.xpose.msra.mxu0 0
  %2764 = vmatprep.subr.bf16.mxu0 0
  %2765 = vmatpush1.bf16.xpose.msra.mxu0 0
  %2766 = vmatprep.subr.bf16.mxu0 0
  %2767 = vmatpush1.bf16.xpose.msra.mxu0 0
  %2768 = vmatprep.mubr.bf16.mxu0 0
  %2769 = vmatmul.mubr.bf16.gmra.mrb[0].mxu0 %v2733
  %v2770 = vpop.f32.mrb[0].mxu0
  %v2771 = vadd.f32 0.0, %v2770
  %v2772 = vpop.f32.mrb[0].mxu0
  %v2773 = vpop.f32.mrb[0].mxu0
  %v2774 = vpop.f32.mrb[0].mxu0
  %2775 = vdwg.mxu0
  %v2776 = vmul.f32 %v2771, 0.1
  %v2777 = vsel %vm2565, %v2776, -inf
  %2778 = vmax.xlane.f32.xlu0 %v2777
  %v2779 = vpop.xlane.xlu0 %2778
  %v2780 = vsub.f32 %v2776, %v2779
  %v2781 = vmul.f32 %v2780, 1.442695
  %v2782 = vpow.pop %v2781
  %v2783 = vsel %vm2565, %v2782, 0.0
  %2784 = vadd.xlane.f32.xlu0 %v2783
  %v2785 = vpop.xlane.xlu0 %2784
  %v2786 = vrcp.pop %v2785
  %v2787 = vmul.f32 %v2782, %v2786
  %v2788 = vpack.c.bf16 %v2787, %v2787
  %v2790 = vsel %vm2578, %v2788, 0
  %v2793 = vand.u32 %v2735, %v2585
  %2795 = vmatprep.subr.bf16.mxu0 0
  %2796 = vmatpush1.bf16.msra.mxu0 %v2793
  %2797 = vmatprep.subr.bf16.mxu0 0
  %2798 = vmatpush1.bf16.msra.mxu0 0
  %2799 = vmatprep.subr.bf16.mxu0 0
  %2800 = vmatpush1.bf16.msra.mxu0 0
  %2801 = vmatprep.subr.bf16.mxu0 0
  %2802 = vmatpush1.bf16.msra.mxu0 0
  %2803 = vmatprep.subr.bf16.mxu0 0
  %2804 = vmatpush1.bf16.msra.mxu0 0
  %2805 = vmatprep.subr.bf16.mxu0 0
  %2806 = vmatpush1.bf16.msra.mxu0 0
  %2807 = vmatprep.subr.bf16.mxu0 0
  %2808 = vmatpush1.bf16.msra.mxu0 0
  %2809 = vmatprep.subr.bf16.mxu0 0
  %2810 = vmatpush1.bf16.msra.mxu0 0
  %2811 = vmatprep.subr.bf16.mxu0 0
  %2812 = vmatpush1.bf16.msra.mxu0 0
  %2813 = vmatprep.subr.bf16.mxu0 0
  %2814 = vmatpush1.bf16.msra.mxu0 0
  %2815 = vmatprep.subr.bf16.mxu0 0
  %2816 = vmatpush1.bf16.msra.mxu0 0
  %2817 = vmatprep.subr.bf16.mxu0 0
  %2818 = vmatpush1.bf16.msra.mxu0 0
  %2819 = vmatprep.subr.bf16.mxu0 0
  %2820 = vmatpush1.bf16.msra.mxu0 0
  %2821 = vmatprep.subr.bf16.mxu0 0
  %2822 = vmatpush1.bf16.msra.mxu0 0
  %2823 = vmatprep.subr.bf16.mxu0 0
  %2824 = vmatpush1.bf16.msra.mxu0 0
  %2825 = vmatprep.subr.bf16.mxu0 0
  %2826 = vmatpush1.bf16.msra.mxu0 0
  %2827 = vmatprep.mubr.bf16.mxu0 0
  %2828 = vmatmul.mubr.bf16.gmra.mrb[0].mxu0 %v2790
  %v2829 = vpop.f32.mrb[0].mxu0
  %v2830 = vadd.f32 0.0, %v2829
  %v2831 = vpop.f32.mrb[0].mxu0
  %v2832 = vpop.f32.mrb[0].mxu0
  %v2833 = vpop.f32.mrb[0].mxu0
  %2834 = vdwg.mxu0
  %2835 = vst [vmem:[#allocation2 + $0x10] sm:$0x1f] %v2830
  %v2836 = vpack.c.bf16 %v2171, %v2171
  %v2837 = vpack.c.bf16 %v2343, %v2343
  %v2838 = vpack.c.bf16 %v2515, %v2515
  %2839 = vmatprep.subr.bf16.mxu0 0
  %2840 = vmatpush1.bf16.xpose.msra.mxu0 %v2837
  %2841 = vmatprep.subr.bf16.mxu0 0
  %2842 = vmatpush1.bf16.xpose.msra.mxu0 0
  %2843 = vmatprep.subr.bf16.mxu0 0
  %2844 = vmatpush1.bf16.xpose.msra.mxu0 0
  %2845 = vmatprep.subr.bf16.mxu0 0
  %2846 = vmatpush1.bf16.xpose.msra.mxu0 0
  %2847 = vmatprep.subr.bf16.mxu0 0
  %2848 = vmatpush1.bf16.xpose.msra.mxu0 0
  %2849 = vmatprep.subr.bf16.mxu0 0
  %2850 = vmatpush1.bf16.xpose.msra.mxu0 0
  %2851 = vmatprep.subr.bf16.mxu0 0
  %2852 = vmatpush1.bf16.xpose.msra.mxu0 0
  %2853 = vmatprep.subr.bf16.mxu0 0
  %2854 = vmatpush1.bf16.xpose.msra.mxu0 0
  %2855 = vmatprep.subr.bf16.mxu0 0
  %2856 = vmatpush1.bf16.xpose.msra.mxu0 0
  %2857 = vmatprep.subr.bf16.mxu0 0
  %2858 = vmatpush1.bf16.xpose.msra.mxu0 0
  %2859 = vmatprep.subr.bf16.mxu0 0
  %2860 = vmatpush1.bf16.xpose.msra.mxu0 0
  %2861 = vmatprep.subr.bf16.mxu0 0
  %2862 = vmatpush1.bf16.xpose.msra.mxu0 0
  %2863 = vmatprep.subr.bf16.mxu0 0
  %2864 = vmatpush1.bf16.xpose.msra.mxu0 0
  %2865 = vmatprep.subr.bf16.mxu0 0
  %2866 = vmatpush1.bf16.xpose.msra.mxu0 0
  %2867 = vmatprep.subr.bf16.mxu0 0
  %2868 = vmatpush1.bf16.xpose.msra.mxu0 0
  %2869 = vmatprep.subr.bf16.mxu0 0
  %2870 = vmatpush1.bf16.xpose.msra.mxu0 0
  %2871 = vmatprep.mubr.bf16.mxu0 0
  %2872 = vmatmul.mubr.bf16.gmra.mrb[0].mxu0 %v2836
  %v2873 = vpop.f32.mrb[0].mxu0
  %v2874 = vadd.f32 0.0, %v2873
  %v2875 = vpop.f32.mrb[0].mxu0
  %v2876 = vpop.f32.mrb[0].mxu0
  %v2877 = vpop.f32.mrb[0].mxu0
  %2878 = vdwg.mxu0
  %v2879 = vmul.f32 %v2874, 0.1
  %v2880 = vsel %vm2565, %v2879, -inf
  %2881 = vmax.xlane.f32.xlu0 %v2880
  %v2882 = vpop.xlane.xlu0 %2881
  %v2883 = vsub.f32 %v2879, %v2882
  %v2884 = vmul.f32 %v2883, 1.442695
  %v2885 = vpow.pop %v2884
  %v2886 = vsel %vm2565, %v2885, 0.0
  %2887 = vadd.xlane.f32.xlu0 %v2886
  %v2888 = vpop.xlane.xlu0 %2887
  %v2889 = vrcp.pop %v2888
  %v2890 = vmul.f32 %v2885, %v2889
  %v2891 = vpack.c.bf16 %v2890, %v2890
  %v2893 = vsel %vm2578, %v2891, 0
  %v2896 = vand.u32 %v2838, %v2585
  %2898 = vmatprep.subr.bf16.mxu0 0
  %2899 = vmatpush1.bf16.msra.mxu0 %v2896
  %2900 = vmatprep.subr.bf16.mxu0 0
  %2901 = vmatpush1.bf16.msra.mxu0 0
  %2902 = vmatprep.subr.bf16.mxu0 0
  %2903 = vmatpush1.bf16.msra.mxu0 0
  %2904 = vmatprep.subr.bf16.mxu0 0
  %2905 = vmatpush1.bf16.msra.mxu0 0
  %2906 = vmatprep.subr.bf16.mxu0 0
  %2907 = vmatpush1.bf16.msra.mxu0 0
  %2908 = vmatprep.subr.bf16.mxu0 0
  %2909 = vmatpush1.bf16.msra.mxu0 0
  %2910 = vmatprep.subr.bf16.mxu0 0
  %2911 = vmatpush1.bf16.msra.mxu0 0
  %2912 = vmatprep.subr.bf16.mxu0 0
  %2913 = vmatpush1.bf16.msra.mxu0 0
  %2914 = vmatprep.subr.bf16.mxu0 0
  %2915 = vmatpush1.bf16.msra.mxu0 0
  %2916 = vmatprep.subr.bf16.mxu0 0
  %2917 = vmatpush1.bf16.msra.mxu0 0
  %2918 = vmatprep.subr.bf16.mxu0 0
  %2919 = vmatpush1.bf16.msra.mxu0 0
  %2920 = vmatprep.subr.bf16.mxu0 0
  %2921 = vmatpush1.bf16.msra.mxu0 0
  %2922 = vmatprep.subr.bf16.mxu0 0
  %2923 = vmatpush1.bf16.msra.mxu0 0
  %2924 = vmatprep.subr.bf16.mxu0 0
  %2925 = vmatpush1.bf16.msra.mxu0 0
  %2926 = vmatprep.subr.bf16.mxu0 0
  %2927 = vmatpush1.bf16.msra.mxu0 0
  %2928 = vmatprep.subr.bf16.mxu0 0
  %2929 = vmatpush1.bf16.msra.mxu0 0
  %2930 = vmatprep.mubr.bf16.mxu0 0
  %2931 = vmatmul.mubr.bf16.gmra.mrb[0].mxu0 %v2893
  %v2932 = vpop.f32.mrb[0].mxu0
  %v2933 = vadd.f32 0.0, %v2932
  %v2934 = vpop.f32.mrb[0].mxu0
  %v2935 = vpop.f32.mrb[0].mxu0
  %v2936 = vpop.f32.mrb[0].mxu0
  %2937 = vdwg.mxu0
  %2938 = vst [vmem:[#allocation2 + $0x18] sm:$0x1f] %v2933
  %v2939 = vpack.c.bf16 %v2087, %v2083
  %v2940 = vpack.c.bf16 %v2259, %v2255
  %v2941 = vpack.c.bf16 %v2431, %v2427
  %v2943 = vshrl.u32 %v2939, 16
  %v2945 = vrot.slane %v2943, 2
  %v2946 = vshll.u32 %v2939, 16
  %v2948 = vrot.slane %v2946, 3
  %v2949 = vor.u32 %v2945, %v2948
  %v2952 = vshrl.u32 %v2940, 16
  %v2954 = vrot.slane %v2952, 2
  %v2955 = vshll.u32 %v2940, 16
  %v2957 = vrot.slane %v2955, 3
  %v2958 = vor.u32 %v2954, %v2957
  %2960 = vmatprep.subr.bf16.mxu0 0
  %2961 = vmatpush1.bf16.xpose.msra.mxu0 %v2958
  %2962 = vmatprep.subr.bf16.mxu0 0
  %2963 = vmatpush1.bf16.xpose.msra.mxu0 0
  %2964 = vmatprep.subr.bf16.mxu0 0
  %2965 = vmatpush1.bf16.xpose.msra.mxu0 0
  %2966 = vmatprep.subr.bf16.mxu0 0
  %2967 = vmatpush1.bf16.xpose.msra.mxu0 0
  %2968 = vmatprep.subr.bf16.mxu0 0
  %2969 = vmatpush1.bf16.xpose.msra.mxu0 0
  %2970 = vmatprep.subr.bf16.mxu0 0
  %2971 = vmatpush1.bf16.xpose.msra.mxu0 0
  %2972 = vmatprep.subr.bf16.mxu0 0
  %2973 = vmatpush1.bf16.xpose.msra.mxu0 0
  %2974 = vmatprep.subr.bf16.mxu0 0
  %2975 = vmatpush1.bf16.xpose.msra.mxu0 0
  %2976 = vmatprep.subr.bf16.mxu0 0
  %2977 = vmatpush1.bf16.xpose.msra.mxu0 0
  %2978 = vmatprep.subr.bf16.mxu0 0
  %2979 = vmatpush1.bf16.xpose.msra.mxu0 0
  %2980 = vmatprep.subr.bf16.mxu0 0
  %2981 = vmatpush1.bf16.xpose.msra.mxu0 0
  %2982 = vmatprep.subr.bf16.mxu0 0
  %2983 = vmatpush1.bf16.xpose.msra.mxu0 0
  %2984 = vmatprep.subr.bf16.mxu0 0
  %2985 = vmatpush1.bf16.xpose.msra.mxu0 0
  %2986 = vmatprep.subr.bf16.mxu0 0
  %2987 = vmatpush1.bf16.xpose.msra.mxu0 0
  %2988 = vmatprep.subr.bf16.mxu0 0
  %2989 = vmatpush1.bf16.xpose.msra.mxu0 0
  %2990 = vmatprep.subr.bf16.mxu0 0
  %2991 = vmatpush1.bf16.xpose.msra.mxu0 0
  %2992 = vmatprep.mubr.bf16.mxu0 0
  %2993 = vmatmul.mubr.bf16.gmra.mrb[0].mxu0 %v2949
  %v2994 = vpop.f32.mrb[0].mxu0
  %v2995 = vadd.f32 0.0, %v2994
  %v2996 = vpop.f32.mrb[0].mxu0
  %v2997 = vpop.f32.mrb[0].mxu0
  %v2998 = vpop.f32.mrb[0].mxu0
  %2999 = vdwg.mxu0
  %v3000 = vmul.f32 %v2995, 0.1
  %v3001 = vsel %vm2565, %v3000, -inf
  %3002 = vmax.xlane.f32.xlu0 %v3001
  %v3003 = vpop.xlane.xlu0 %3002
  %v3004 = vsub.f32 %v3000, %v3003
  %v3005 = vmul.f32 %v3004, 1.442695
  %v3006 = vpow.pop %v3005
  %v3007 = vsel %vm2565, %v3006, 0.0
  %3008 = vadd.xlane.f32.xlu0 %v3007
  %v3009 = vpop.xlane.xlu0 %3008
  %v3010 = vrcp.pop %v3009
  %v3011 = vmul.f32 %v3006, %v3010
  %v3012 = vpack.c.bf16 %v3011, %v3011
  %v3014 = vshrl.u32 %v2941, 16
  %v3016 = vrot.slane %v3014, 2
  %v3017 = vshll.u32 %v2941, 16
  %v3019 = vrot.slane %v3017, 3
  %v3020 = vor.u32 %v3016, %v3019
  %v3022 = vsel %vm2578, %v3012, 0
  %v3025 = vand.u32 %v3020, %v2585
  %3027 = vmatprep.subr.bf16.mxu0 0
  %3028 = vmatpush1.bf16.msra.mxu0 %v3025
  %3029 = vmatprep.subr.bf16.mxu0 0
  %3030 = vmatpush1.bf16.msra.mxu0 0
  %3031 = vmatprep.subr.bf16.mxu0 0
  %3032 = vmatpush1.bf16.msra.mxu0 0
  %3033 = vmatprep.subr.bf16.mxu0 0
  %3034 = vmatpush1.bf16.msra.mxu0 0
  %3035 = vmatprep.subr.bf16.mxu0 0
  %3036 = vmatpush1.bf16.msra.mxu0 0
  %3037 = vmatprep.subr.bf16.mxu0 0
  %3038 = vmatpush1.bf16.msra.mxu0 0
  %3039 = vmatprep.subr.bf16.mxu0 0
  %3040 = vmatpush1.bf16.msra.mxu0 0
  %3041 = vmatprep.subr.bf16.mxu0 0
  %3042 = vmatpush1.bf16.msra.mxu0 0
  %3043 = vmatprep.subr.bf16.mxu0 0
  %3044 = vmatpush1.bf16.msra.mxu0 0
  %3045 = vmatprep.subr.bf16.mxu0 0
  %3046 = vmatpush1.bf16.msra.mxu0 0
  %3047 = vmatprep.subr.bf16.mxu0 0
  %3048 = vmatpush1.bf16.msra.mxu0 0
  %3049 = vmatprep.subr.bf16.mxu0 0
  %3050 = vmatpush1.bf16.msra.mxu0 0
  %3051 = vmatprep.subr.bf16.mxu0 0
  %3052 = vmatpush1.bf16.msra.mxu0 0
  %3053 = vmatprep.subr.bf16.mxu0 0
  %3054 = vmatpush1.bf16.msra.mxu0 0
  %3055 = vmatprep.subr.bf16.mxu0 0
  %3056 = vmatpush1.bf16.msra.mxu0 0
  %3057 = vmatprep.subr.bf16.mxu0 0
  %3058 = vmatpush1.bf16.msra.mxu0 0
  %3059 = vmatprep.mubr.bf16.mxu0 0
  %3060 = vmatmul.mubr.bf16.gmra.mrb[0].mxu0 %v3022
  %v3061 = vpop.f32.mrb[0].mxu0
  %v3062 = vadd.f32 0.0, %v3061
  %v3063 = vpop.f32.mrb[0].mxu0
  %v3064 = vpop.f32.mrb[0].mxu0
  %v3065 = vpop.f32.mrb[0].mxu0
  %3066 = vdwg.mxu0
  %v3068 = vrot.slane %v3062, 3
  %3070 = vst [vmem:[#allocation2] sm:$0xe0] %v3068
  %3071 = vst [vmem:[#allocation2 + $0x20] sm:$0x3] %v3068
  %v3072 = vpack.c.bf16 %v2089, %v2085
  %v3073 = vpack.c.bf16 %v2261, %v2257
  %v3074 = vpack.c.bf16 %v2433, %v2429
  %v3076 = vshrl.u32 %v3072, 16
  %v3078 = vrot.slane %v3076, 2
  %v3079 = vshll.u32 %v3072, 16
  %v3081 = vrot.slane %v3079, 3
  %v3082 = vor.u32 %v3078, %v3081
  %v3085 = vshrl.u32 %v3073, 16
  %v3087 = vrot.slane %v3085, 2
  %v3088 = vshll.u32 %v3073, 16
  %v3090 = vrot.slane %v3088, 3
  %v3091 = vor.u32 %v3087, %v3090
  %3093 = vmatprep.subr.bf16.mxu0 0
  %3094 = vmatpush1.bf16.xpose.msra.mxu0 %v3091
  %3095 = vmatprep.subr.bf16.mxu0 0
  %3096 = vmatpush1.bf16.xpose.msra.mxu0 0
  %3097 = vmatprep.subr.bf16.mxu0 0
  %3098 = vmatpush1.bf16.xpose.msra.mxu0 0
  %3099 = vmatprep.subr.bf16.mxu0 0
  %3100 = vmatpush1.bf16.xpose.msra.mxu0 0
  %3101 = vmatprep.subr.bf16.mxu0 0
  %3102 = vmatpush1.bf16.xpose.msra.mxu0 0
  %3103 = vmatprep.subr.bf16.mxu0 0
  %3104 = vmatpush1.bf16.xpose.msra.mxu0 0
  %3105 = vmatprep.subr.bf16.mxu0 0
  %3106 = vmatpush1.bf16.xpose.msra.mxu0 0
  %3107 = vmatprep.subr.bf16.mxu0 0
  %3108 = vmatpush1.bf16.xpose.msra.mxu0 0
  %3109 = vmatprep.subr.bf16.mxu0 0
  %3110 = vmatpush1.bf16.xpose.msra.mxu0 0
  %3111 = vmatprep.subr.bf16.mxu0 0
  %3112 = vmatpush1.bf16.xpose.msra.mxu0 0
  %3113 = vmatprep.subr.bf16.mxu0 0
  %3114 = vmatpush1.bf16.xpose.msra.mxu0 0
  %3115 = vmatprep.subr.bf16.mxu0 0
  %3116 = vmatpush1.bf16.xpose.msra.mxu0 0
  %3117 = vmatprep.subr.bf16.mxu0 0
  %3118 = vmatpush1.bf16.xpose.msra.mxu0 0
  %3119 = vmatprep.subr.bf16.mxu0 0
  %3120 = vmatpush1.bf16.xpose.msra.mxu0 0
  %3121 = vmatprep.subr.bf16.mxu0 0
  %3122 = vmatpush1.bf16.xpose.msra.mxu0 0
  %3123 = vmatprep.subr.bf16.mxu0 0
  %3124 = vmatpush1.bf16.xpose.msra.mxu0 0
  %3125 = vmatprep.mubr.bf16.mxu0 0
  %3126 = vmatmul.mubr.bf16.gmra.mrb[0].mxu0 %v3082
  %v3127 = vpop.f32.mrb[0].mxu0
  %v3128 = vadd.f32 0.0, %v3127
  %v3129 = vpop.f32.mrb[0].mxu0
  %v3130 = vpop.f32.mrb[0].mxu0
  %v3131 = vpop.f32.mrb[0].mxu0
  %3132 = vdwg.mxu0
  %v3133 = vmul.f32 %v3128, 0.1
  %v3134 = vsel %vm2565, %v3133, -inf
  %3135 = vmax.xlane.f32.xlu0 %v3134
  %v3136 = vpop.xlane.xlu0 %3135
  %v3137 = vsub.f32 %v3133, %v3136
  %v3138 = vmul.f32 %v3137, 1.442695
  %v3139 = vpow.pop %v3138
  %v3140 = vsel %vm2565, %v3139, 0.0
  %3141 = vadd.xlane.f32.xlu0 %v3140
  %v3142 = vpop.xlane.xlu0 %3141
  %v3143 = vrcp.pop %v3142
  %v3144 = vmul.f32 %v3139, %v3143
  %v3145 = vpack.c.bf16 %v3144, %v3144
  %v3147 = vshrl.u32 %v3074, 16
  %v3149 = vrot.slane %v3147, 2
  %v3150 = vshll.u32 %v3074, 16
  %v3152 = vrot.slane %v3150, 3
  %v3153 = vor.u32 %v3149, %v3152
  %v3155 = vsel %vm2578, %v3145, 0
  %v3158 = vand.u32 %v3153, %v2585
  %3160 = vmatprep.subr.bf16.mxu0 0
  %3161 = vmatpush1.bf16.msra.mxu0 %v3158
  %3162 = vmatprep.subr.bf16.mxu0 0
  %3163 = vmatpush1.bf16.msra.mxu0 0
  %3164 = vmatprep.subr.bf16.mxu0 0
  %3165 = vmatpush1.bf16.msra.mxu0 0
  %3166 = vmatprep.subr.bf16.mxu0 0
  %3167 = vmatpush1.bf16.msra.mxu0 0
  %3168 = vmatprep.subr.bf16.mxu0 0
  %3169 = vmatpush1.bf16.msra.mxu0 0
  %3170 = vmatprep.subr.bf16.mxu0 0
  %3171 = vmatpush1.bf16.msra.mxu0 0
  %3172 = vmatprep.subr.bf16.mxu0 0
  %3173 = vmatpush1.bf16.msra.mxu0 0
  %3174 = vmatprep.subr.bf16.mxu0 0
  %3175 = vmatpush1.bf16.msra.mxu0 0
  %3176 = vmatprep.subr.bf16.mxu0 0
  %3177 = vmatpush1.bf16.msra.mxu0 0
  %3178 = vmatprep.subr.bf16.mxu0 0
  %3179 = vmatpush1.bf16.msra.mxu0 0
  %3180 = vmatprep.subr.bf16.mxu0 0
  %3181 = vmatpush1.bf16.msra.mxu0 0
  %3182 = vmatprep.subr.bf16.mxu0 0
  %3183 = vmatpush1.bf16.msra.mxu0 0
  %3184 = vmatprep.subr.bf16.mxu0 0
  %3185 = vmatpush1.bf16.msra.mxu0 0
  %3186 = vmatprep.subr.bf16.mxu0 0
  %3187 = vmatpush1.bf16.msra.mxu0 0
  %3188 = vmatprep.subr.bf16.mxu0 0
  %3189 = vmatpush1.bf16.msra.mxu0 0
  %3190 = vmatprep.subr.bf16.mxu0 0
  %3191 = vmatpush1.bf16.msra.mxu0 0
  %3192 = vmatprep.mubr.bf16.mxu0 0
  %3193 = vmatmul.mubr.bf16.gmra.mrb[0].mxu0 %v3155
  %v3194 = vpop.f32.mrb[0].mxu0
  %v3195 = vadd.f32 0.0, %v3194
  %v3196 = vpop.f32.mrb[0].mxu0
  %v3197 = vpop.f32.mrb[0].mxu0
  %v3198 = vpop.f32.mrb[0].mxu0
  %3199 = vdwg.mxu0
  %v3201 = vrot.slane %v3195, 3
  %3203 = vst [vmem:[#allocation2 + $0x8] sm:$0xe0] %v3201
  %3204 = vst [vmem:[#allocation2 + $0x28] sm:$0x3] %v3201
  %v3205 = vpack.c.bf16 %v2173, %v2169
  %v3206 = vpack.c.bf16 %v2345, %v2341
  %v3207 = vpack.c.bf16 %v2517, %v2513
  %v3209 = vshrl.u32 %v3205, 16
  %v3211 = vrot.slane %v3209, 2
  %v3212 = vshll.u32 %v3205, 16
  %v3214 = vrot.slane %v3212, 3
  %v3215 = vor.u32 %v3211, %v3214
  %v3218 = vshrl.u32 %v3206, 16
  %v3220 = vrot.slane %v3218, 2
  %v3221 = vshll.u32 %v3206, 16
  %v3223 = vrot.slane %v3221, 3
  %v3224 = vor.u32 %v3220, %v3223
  %3226 = vmatprep.subr.bf16.mxu0 0
  %3227 = vmatpush1.bf16.xpose.msra.mxu0 %v3224
  %3228 = vmatprep.subr.bf16.mxu0 0
  %3229 = vmatpush1.bf16.xpose.msra.mxu0 0
  %3230 = vmatprep.subr.bf16.mxu0 0
  %3231 = vmatpush1.bf16.xpose.msra.mxu0 0
  %3232 = vmatprep.subr.bf16.mxu0 0
  %3233 = vmatpush1.bf16.xpose.msra.mxu0 0
  %3234 = vmatprep.subr.bf16.mxu0 0
  %3235 = vmatpush1.bf16.xpose.msra.mxu0 0
  %3236 = vmatprep.subr.bf16.mxu0 0
  %3237 = vmatpush1.bf16.xpose.msra.mxu0 0
  %3238 = vmatprep.subr.bf16.mxu0 0
  %3239 = vmatpush1.bf16.xpose.msra.mxu0 0
  %3240 = vmatprep.subr.bf16.mxu0 0
  %3241 = vmatpush1.bf16.xpose.msra.mxu0 0
  %3242 = vmatprep.subr.bf16.mxu0 0
  %3243 = vmatpush1.bf16.xpose.msra.mxu0 0
  %3244 = vmatprep.subr.bf16.mxu0 0
  %3245 = vmatpush1.bf16.xpose.msra.mxu0 0
  %3246 = vmatprep.subr.bf16.mxu0 0
  %3247 = vmatpush1.bf16.xpose.msra.mxu0 0
  %3248 = vmatprep.subr.bf16.mxu0 0
  %3249 = vmatpush1.bf16.xpose.msra.mxu0 0
  %3250 = vmatprep.subr.bf16.mxu0 0
  %3251 = vmatpush1.bf16.xpose.msra.mxu0 0
  %3252 = vmatprep.subr.bf16.mxu0 0
  %3253 = vmatpush1.bf16.xpose.msra.mxu0 0
  %3254 = vmatprep.subr.bf16.mxu0 0
  %3255 = vmatpush1.bf16.xpose.msra.mxu0 0
  %3256 = vmatprep.subr.bf16.mxu0 0
  %3257 = vmatpush1.bf16.xpose.msra.mxu0 0
  %3258 = vmatprep.mubr.bf16.mxu0 0
  %3259 = vmatmul.mubr.bf16.gmra.mrb[0].mxu0 %v3215
  %v3260 = vpop.f32.mrb[0].mxu0
  %v3261 = vadd.f32 0.0, %v3260
  %v3262 = vpop.f32.mrb[0].mxu0
  %v3263 = vpop.f32.mrb[0].mxu0
  %v3264 = vpop.f32.mrb[0].mxu0
  %3265 = vdwg.mxu0
  %v3266 = vmul.f32 %v3261, 0.1
  %v3267 = vsel %vm2565, %v3266, -inf
  %3268 = vmax.xlane.f32.xlu0 %v3267
  %v3269 = vpop.xlane.xlu0 %3268
  %v3270 = vsub.f32 %v3266, %v3269
  %v3271 = vmul.f32 %v3270, 1.442695
  %v3272 = vpow.pop %v3271
  %v3273 = vsel %vm2565, %v3272, 0.0
  %3274 = vadd.xlane.f32.xlu0 %v3273
  %v3275 = vpop.xlane.xlu0 %3274
  %v3276 = vrcp.pop %v3275
  %v3277 = vmul.f32 %v3272, %v3276
  %v3278 = vpack.c.bf16 %v3277, %v3277
  %v3280 = vshrl.u32 %v3207, 16
  %v3282 = vrot.slane %v3280, 2
  %v3283 = vshll.u32 %v3207, 16
  %v3285 = vrot.slane %v3283, 3
  %v3286 = vor.u32 %v3282, %v3285
  %v3288 = vsel %vm2578, %v3278, 0
  %v3291 = vand.u32 %v3286, %v2585
  %3293 = vmatprep.subr.bf16.mxu0 0
  %3294 = vmatpush1.bf16.msra.mxu0 %v3291
  %3295 = vmatprep.subr.bf16.mxu0 0
  %3296 = vmatpush1.bf16.msra.mxu0 0
  %3297 = vmatprep.subr.bf16.mxu0 0
  %3298 = vmatpush1.bf16.msra.mxu0 0
  %3299 = vmatprep.subr.bf16.mxu0 0
  %3300 = vmatpush1.bf16.msra.mxu0 0
  %3301 = vmatprep.subr.bf16.mxu0 0
  %3302 = vmatpush1.bf16.msra.mxu0 0
  %3303 = vmatprep.subr.bf16.mxu0 0
  %3304 = vmatpush1.bf16.msra.mxu0 0
  %3305 = vmatprep.subr.bf16.mxu0 0
  %3306 = vmatpush1.bf16.msra.mxu0 0
  %3307 = vmatprep.subr.bf16.mxu0 0
  %3308 = vmatpush1.bf16.msra.mxu0 0
  %3309 = vmatprep.subr.bf16.mxu0 0
  %3310 = vmatpush1.bf16.msra.mxu0 0
  %3311 = vmatprep.subr.bf16.mxu0 0
  %3312 = vmatpush1.bf16.msra.mxu0 0
  %3313 = vmatprep.subr.bf16.mxu0 0
  %3314 = vmatpush1.bf16.msra.mxu0 0
  %3315 = vmatprep.subr.bf16.mxu0 0
  %3316 = vmatpush1.bf16.msra.mxu0 0
  %3317 = vmatprep.subr.bf16.mxu0 0
  %3318 = vmatpush1.bf16.msra.mxu0 0
  %3319 = vmatprep.subr.bf16.mxu0 0
  %3320 = vmatpush1.bf16.msra.mxu0 0
  %3321 = vmatprep.subr.bf16.mxu0 0
  %3322 = vmatpush1.bf16.msra.mxu0 0
  %3323 = vmatprep.subr.bf16.mxu0 0
  %3324 = vmatpush1.bf16.msra.mxu0 0
  %3325 = vmatprep.mubr.bf16.mxu0 0
  %3326 = vmatmul.mubr.bf16.gmra.mrb[0].mxu0 %v3288
  %v3327 = vpop.f32.mrb[0].mxu0
  %v3328 = vadd.f32 0.0, %v3327
  %v3329 = vpop.f32.mrb[0].mxu0
  %v3330 = vpop.f32.mrb[0].mxu0
  %v3331 = vpop.f32.mrb[0].mxu0
  %3332 = vdwg.mxu0
  %v3334 = vrot.slane %v3328, 3
  %3336 = vst [vmem:[#allocation2 + $0x10] sm:$0xe0] %v3334
  %3337 = vst [vmem:[#allocation2 + $0x30] sm:$0x3] %v3334
  %v3338 = vpack.c.bf16 %v2175, %v2171
  %v3339 = vpack.c.bf16 %v2347, %v2343
  %v3340 = vpack.c.bf16 %v2519, %v2515
  %v3342 = vshrl.u32 %v3338, 16
  %v3344 = vrot.slane %v3342, 2
  %v3345 = vshll.u32 %v3338, 16
  %v3347 = vrot.slane %v3345, 3
  %v3348 = vor.u32 %v3344, %v3347
  %v3351 = vshrl.u32 %v3339, 16
  %v3353 = vrot.slane %v3351, 2
  %v3354 = vshll.u32 %v3339, 16
  %v3356 = vrot.slane %v3354, 3
  %v3357 = vor.u32 %v3353, %v3356
  %3359 = vmatprep.subr.bf16.mxu0 0
  %3360 = vmatpush1.bf16.xpose.msra.mxu0 %v3357
  %3361 = vmatprep.subr.bf16.mxu0 0
  %3362 = vmatpush1.bf16.xpose.msra.mxu0 0
  %3363 = vmatprep.subr.bf16.mxu0 0
  %3364 = vmatpush1.bf16.xpose.msra.mxu0 0
  %3365 = vmatprep.subr.bf16.mxu0 0
  %3366 = vmatpush1.bf16.xpose.msra.mxu0 0
  %3367 = vmatprep.subr.bf16.mxu0 0
  %3368 = vmatpush1.bf16.xpose.msra.mxu0 0
  %3369 = vmatprep.subr.bf16.mxu0 0
  %3370 = vmatpush1.bf16.xpose.msra.mxu0 0
  %3371 = vmatprep.subr.bf16.mxu0 0
  %3372 = vmatpush1.bf16.xpose.msra.mxu0 0
  %3373 = vmatprep.subr.bf16.mxu0 0
  %3374 = vmatpush1.bf16.xpose.msra.mxu0 0
  %3375 = vmatprep.subr.bf16.mxu0 0
  %3376 = vmatpush1.bf16.xpose.msra.mxu0 0
  %3377 = vmatprep.subr.bf16.mxu0 0
  %3378 = vmatpush1.bf16.xpose.msra.mxu0 0
  %3379 = vmatprep.subr.bf16.mxu0 0
  %3380 = vmatpush1.bf16.xpose.msra.mxu0 0
  %3381 = vmatprep.subr.bf16.mxu0 0
  %3382 = vmatpush1.bf16.xpose.msra.mxu0 0
  %3383 = vmatprep.subr.bf16.mxu0 0
  %3384 = vmatpush1.bf16.xpose.msra.mxu0 0
  %3385 = vmatprep.subr.bf16.mxu0 0
  %3386 = vmatpush1.bf16.xpose.msra.mxu0 0
  %3387 = vmatprep.subr.bf16.mxu0 0
  %3388 = vmatpush1.bf16.xpose.msra.mxu0 0
  %3389 = vmatprep.subr.bf16.mxu0 0
  %3390 = vmatpush1.bf16.xpose.msra.mxu0 0
  %3391 = vmatprep.mubr.bf16.mxu0 0
  %3392 = vmatmul.mubr.bf16.gmra.mrb[0].mxu0 %v3348
  %v3393 = vpop.f32.mrb[0].mxu0
  %v3394 = vadd.f32 0.0, %v3393
  %v3395 = vpop.f32.mrb[0].mxu0
  %v3396 = vpop.f32.mrb[0].mxu0
  %v3397 = vpop.f32.mrb[0].mxu0
  %3398 = vdwg.mxu0
  %v3399 = vmul.f32 %v3394, 0.1
  %v3400 = vsel %vm2565, %v3399, -inf
  %3401 = vmax.xlane.f32.xlu0 %v3400
  %v3402 = vpop.xlane.xlu0 %3401
  %v3403 = vsub.f32 %v3399, %v3402
  %v3404 = vmul.f32 %v3403, 1.442695
  %v3405 = vpow.pop %v3404
  %v3406 = vsel %vm2565, %v3405, 0.0
  %3407 = vadd.xlane.f32.xlu0 %v3406
  %v3408 = vpop.xlane.xlu0 %3407
  %v3409 = vrcp.pop %v3408
  %v3410 = vmul.f32 %v3405, %v3409
  %v3411 = vpack.c.bf16 %v3410, %v3410
  %v3413 = vshrl.u32 %v3340, 16
  %v3415 = vrot.slane %v3413, 2
  %v3416 = vshll.u32 %v3340, 16
  %v3418 = vrot.slane %v3416, 3
  %v3419 = vor.u32 %v3415, %v3418
  %v3421 = vsel %vm2578, %v3411, 0
  %v3424 = vand.u32 %v3419, %v2585
  %3426 = vmatprep.subr.bf16.mxu0 0
  %3427 = vmatpush1.bf16.msra.mxu0 %v3424
  %3428 = vmatprep.subr.bf16.mxu0 0
  %3429 = vmatpush1.bf16.msra.mxu0 0
  %3430 = vmatprep.subr.bf16.mxu0 0
  %3431 = vmatpush1.bf16.msra.mxu0 0
  %3432 = vmatprep.subr.bf16.mxu0 0
  %3433 = vmatpush1.bf16.msra.mxu0 0
  %3434 = vmatprep.subr.bf16.mxu0 0
  %3435 = vmatpush1.bf16.msra.mxu0 0
  %3436 = vmatprep.subr.bf16.mxu0 0
  %3437 = vmatpush1.bf16.msra.mxu0 0
  %3438 = vmatprep.subr.bf16.mxu0 0
  %3439 = vmatpush1.bf16.msra.mxu0 0
  %3440 = vmatprep.subr.bf16.mxu0 0
  %3441 = vmatpush1.bf16.msra.mxu0 0
  %3442 = vmatprep.subr.bf16.mxu0 0
  %3443 = vmatpush1.bf16.msra.mxu0 0
  %3444 = vmatprep.subr.bf16.mxu0 0
  %3445 = vmatpush1.bf16.msra.mxu0 0
  %3446 = vmatprep.subr.bf16.mxu0 0
  %3447 = vmatpush1.bf16.msra.mxu0 0
  %3448 = vmatprep.subr.bf16.mxu0 0
  %3449 = vmatpush1.bf16.msra.mxu0 0
  %3450 = vmatprep.subr.bf16.mxu0 0
  %3451 = vmatpush1.bf16.msra.mxu0 0
  %3452 = vmatprep.subr.bf16.mxu0 0
  %3453 = vmatpush1.bf16.msra.mxu0 0
  %3454 = vmatprep.subr.bf16.mxu0 0
  %3455 = vmatpush1.bf16.msra.mxu0 0
  %3456 = vmatprep.subr.bf16.mxu0 0
  %3457 = vmatpush1.bf16.msra.mxu0 0
  %3458 = vmatprep.mubr.bf16.mxu0 0
  %3459 = vmatmul.mubr.bf16.gmra.mrb[0].mxu0 %v3421
  %v3460 = vpop.f32.mrb[0].mxu0
  %v3461 = vadd.f32 0.0, %v3460
  %v3462 = vpop.f32.mrb[0].mxu0
  %v3463 = vpop.f32.mrb[0].mxu0
  %v3464 = vpop.f32.mrb[0].mxu0
  %3465 = vdwg.mxu0
  %v3467 = vrot.slane %v3461, 3
  %3469 = vst [vmem:[#allocation2 + $0x18] sm:$0xe0] %v3467
  %3470 = vst [vmem:[#allocation2 + $0x38] sm:$0x3] %v3467
  %v3471 = vld [vmem:[#allocation2] sm:$0xff]
  %v3472 = vld [vmem:[#allocation2 + $0x8] sm:$0xff]
  %v3473 = vld [vmem:[#allocation2 + $0x10] sm:$0xff]
  %v3474 = vld [vmem:[#allocation2 + $0x18] sm:$0xff]
  %v3475 = vld [vmem:[#allocation2 + $0x20] sm:$0x3]
  %v3476 = vld [vmem:[#allocation2 + $0x28] sm:$0x3]
  %v3477 = vld [vmem:[#allocation2 + $0x30] sm:$0x3]
  %v3478 = vld [vmem:[#allocation2 + $0x38] sm:$0x3]
  %v3479 = vpack.c.bf16 %v3475, %v3471
  %v3480 = vpack.c.bf16 %v3476, %v3472
  %v3481 = vpack.c.bf16 %v3477, %v3473
  %v3482 = vpack.c.bf16 %v3478, %v3474
  %v3483 = vld [vmem:[%s7] sm:$0xff]
  %v3484 = vld [vmem:[%s7 + $0x8] sm:$0xff]
  %v3485 = vld [vmem:[%s7 + $0x10] sm:$0xff]
  %v3486 = vld [vmem:[%s7 + $0x18] sm:$0xff]
  %v3487 = vld [vmem:[%s7 + $0x20] sm:$0xff]
  %v3488 = vld [vmem:[%s7 + $0x28] sm:$0xff]
  %v3489 = vld [vmem:[%s7 + $0x30] sm:$0xff]
  %v3490 = vld [vmem:[%s7 + $0x38] sm:$0xff]
  %v3491 = vld [vmem:[%s7 + $0x40] sm:$0xff]
  %v3492 = vld [vmem:[%s7 + $0x48] sm:$0xff]
  %v3493 = vld [vmem:[%s7 + $0x50] sm:$0xff]
  %v3494 = vld [vmem:[%s7 + $0x58] sm:$0xff]
  %v3495 = vld [vmem:[%s7 + $0x60] sm:$0xff]
  %v3496 = vld [vmem:[%s7 + $0x68] sm:$0xff]
  %v3497 = vld [vmem:[%s7 + $0x70] sm:$0xff]
  %v3498 = vld [vmem:[%s7 + $0x78] sm:$0xff]
  %v3499 = vld [vmem:[%s7 + $0x80] sm:$0xff]
  %v3500 = vld [vmem:[%s7 + $0x88] sm:$0xff]
  %v3501 = vld [vmem:[%s7 + $0x90] sm:$0xff]
  %v3502 = vld [vmem:[%s7 + $0x98] sm:$0xff]
  %v3503 = vld [vmem:[%s7 + $0xa0] sm:$0xff]
  %v3504 = vld [vmem:[%s7 + $0xa8] sm:$0xff]
  %v3505 = vld [vmem:[%s7 + $0xb0] sm:$0xff]
  %v3506 = vld [vmem:[%s7 + $0xb8] sm:$0xff]
  %v3507 = vld [vmem:[%s7 + $0xc0] sm:$0xff]
  %v3508 = vld [vmem:[%s7 + $0xc8] sm:$0xff]
  %v3509 = vld [vmem:[%s7 + $0xd0] sm:$0xff]
  %v3510 = vld [vmem:[%s7 + $0xd8] sm:$0xff]
  %v3511 = vld [vmem:[%s7 + $0xe0] sm:$0xff]
  %v3512 = vld [vmem:[%s7 + $0xe8] sm:$0xff]
  %v3513 = vld [vmem:[%s7 + $0xf0] sm:$0xff]
  %v3514 = vld [vmem:[%s7 + $0xf8] sm:$0xff]
  %v3515 = vld [vmem:[%s7 + $0x100] sm:$0xff]
  %v3516 = vld [vmem:[%s7 + $0x108] sm:$0xff]
  %v3517 = vld [vmem:[%s7 + $0x110] sm:$0xff]
  %v3518 = vld [vmem:[%s7 + $0x118] sm:$0xff]
  %v3519 = vld [vmem:[%s7 + $0x120] sm:$0xff]
  %v3520 = vld [vmem:[%s7 + $0x128] sm:$0xff]
  %v3521 = vld [vmem:[%s7 + $0x130] sm:$0xff]
  %v3522 = vld [vmem:[%s7 + $0x138] sm:$0xff]
  %v3523 = vld [vmem:[%s7 + $0x140] sm:$0xff]
  %v3524 = vld [vmem:[%s7 + $0x148] sm:$0xff]
  %v3525 = vld [vmem:[%s7 + $0x150] sm:$0xff]
  %v3526 = vld [vmem:[%s7 + $0x158] sm:$0xff]
  %v3527 = vld [vmem:[%s7 + $0x160] sm:$0xff]
  %v3528 = vld [vmem:[%s7 + $0x168] sm:$0xff]
  %v3529 = vld [vmem:[%s7 + $0x170] sm:$0xff]
  %v3530 = vld [vmem:[%s7 + $0x178] sm:$0xff]
  %v3531 = vld [vmem:[%s7 + $0x180] sm:$0xff]
  %v3532 = vld [vmem:[%s7 + $0x188] sm:$0xff]
  %v3533 = vld [vmem:[%s7 + $0x190] sm:$0xff]
  %v3534 = vld [vmem:[%s7 + $0x198] sm:$0xff]
  %v3535 = vld [vmem:[%s7 + $0x1a0] sm:$0xff]
  %v3536 = vld [vmem:[%s7 + $0x1a8] sm:$0xff]
  %v3537 = vld [vmem:[%s7 + $0x1b0] sm:$0xff]
  %v3538 = vld [vmem:[%s7 + $0x1b8] sm:$0xff]
  %v3539 = vld [vmem:[%s7 + $0x1c0] sm:$0xff]
  %v3540 = vld [vmem:[%s7 + $0x1c8] sm:$0xff]
  %v3541 = vld [vmem:[%s7 + $0x1d0] sm:$0xff]
  %v3542 = vld [vmem:[%s7 + $0x1d8] sm:$0xff]
  %v3543 = vld [vmem:[%s7 + $0x1e0] sm:$0xff]
  %v3544 = vld [vmem:[%s7 + $0x1e8] sm:$0xff]
  %v3545 = vld [vmem:[%s7 + $0x1f0] sm:$0xff]
  %v3546 = vld [vmem:[%s7 + $0x1f8] sm:$0xff]
  %v3547 = vld [vmem:[%s7 + $0x200] sm:$0xff]
  %v3548 = vld [vmem:[%s7 + $0x208] sm:$0xff]
  %v3549 = vld [vmem:[%s7 + $0x210] sm:$0xff]
  %v3550 = vld [vmem:[%s7 + $0x218] sm:$0xff]
  %v3551 = vld [vmem:[%s7 + $0x220] sm:$0xff]
  %v3552 = vld [vmem:[%s7 + $0x228] sm:$0xff]
  %v3553 = vld [vmem:[%s7 + $0x230] sm:$0xff]
  %v3554 = vld [vmem:[%s7 + $0x238] sm:$0xff]
  %v3555 = vld [vmem:[%s7 + $0x240] sm:$0xff]
  %v3556 = vld [vmem:[%s7 + $0x248] sm:$0xff]
  %v3557 = vld [vmem:[%s7 + $0x250] sm:$0xff]
  %v3558 = vld [vmem:[%s7 + $0x258] sm:$0xff]
  %v3559 = vld [vmem:[%s7 + $0x260] sm:$0xff]
  %v3560 = vld [vmem:[%s7 + $0x268] sm:$0xff]
  %v3561 = vld [vmem:[%s7 + $0x270] sm:$0xff]
  %v3562 = vld [vmem:[%s7 + $0x278] sm:$0xff]
  %v3563 = vld [vmem:[%s7 + $0x280] sm:$0xff]
  %v3564 = vld [vmem:[%s7 + $0x288] sm:$0xff]
  %v3565 = vld [vmem:[%s7 + $0x290] sm:$0xff]
  %v3566 = vld [vmem:[%s7 + $0x298] sm:$0xff]
  %v3567 = vld [vmem:[%s7 + $0x2a0] sm:$0xff]
  %v3568 = vld [vmem:[%s7 + $0x2a8] sm:$0xff]
  %v3569 = vld [vmem:[%s7 + $0x2b0] sm:$0xff]
  %v3570 = vld [vmem:[%s7 + $0x2b8] sm:$0xff]
  %v3571 = vld [vmem:[%s7 + $0x2c0] sm:$0xff]
  %v3572 = vld [vmem:[%s7 + $0x2c8] sm:$0xff]
  %v3573 = vld [vmem:[%s7 + $0x2d0] sm:$0xff]
  %v3574 = vld [vmem:[%s7 + $0x2d8] sm:$0xff]
  %v3575 = vld [vmem:[%s7 + $0x2e0] sm:$0xff]
  %v3576 = vld [vmem:[%s7 + $0x2e8] sm:$0xff]
  %v3577 = vld [vmem:[%s7 + $0x2f0] sm:$0xff]
  %v3578 = vld [vmem:[%s7 + $0x2f8] sm:$0xff]
  %v3579 = vld [vmem:[%s7 + $0x300] sm:$0xff]
  %v3580 = vld [vmem:[%s7 + $0x308] sm:$0xff]
  %v3581 = vld [vmem:[%s7 + $0x310] sm:$0xff]
  %v3582 = vld [vmem:[%s7 + $0x318] sm:$0xff]
  %v3583 = vld [vmem:[%s7 + $0x320] sm:$0xff]
  %v3584 = vld [vmem:[%s7 + $0x328] sm:$0xff]
  %v3585 = vld [vmem:[%s7 + $0x330] sm:$0xff]
  %v3586 = vld [vmem:[%s7 + $0x338] sm:$0xff]
  %v3587 = vld [vmem:[%s7 + $0x340] sm:$0xff]
  %v3588 = vld [vmem:[%s7 + $0x348] sm:$0xff]
  %v3589 = vld [vmem:[%s7 + $0x350] sm:$0xff]
  %v3590 = vld [vmem:[%s7 + $0x358] sm:$0xff]
  %v3591 = vld [vmem:[%s7 + $0x360] sm:$0xff]
  %v3592 = vld [vmem:[%s7 + $0x368] sm:$0xff]
  %v3593 = vld [vmem:[%s7 + $0x370] sm:$0xff]
  %v3594 = vld [vmem:[%s7 + $0x378] sm:$0xff]
  %v3595 = vld [vmem:[%s7 + $0x380] sm:$0xff]
  %v3596 = vld [vmem:[%s7 + $0x388] sm:$0xff]
  %v3597 = vld [vmem:[%s7 + $0x390] sm:$0xff]
  %v3598 = vld [vmem:[%s7 + $0x398] sm:$0xff]
  %v3599 = vld [vmem:[%s7 + $0x3a0] sm:$0xff]
  %v3600 = vld [vmem:[%s7 + $0x3a8] sm:$0xff]
  %v3601 = vld [vmem:[%s7 + $0x3b0] sm:$0xff]
  %v3602 = vld [vmem:[%s7 + $0x3b8] sm:$0xff]
  %v3603 = vld [vmem:[%s7 + $0x3c0] sm:$0xff]
  %v3604 = vld [vmem:[%s7 + $0x3c8] sm:$0xff]
  %v3605 = vld [vmem:[%s7 + $0x3d0] sm:$0xff]
  %v3606 = vld [vmem:[%s7 + $0x3d8] sm:$0xff]
  %v3607 = vld [vmem:[%s7 + $0x3e0] sm:$0xff]
  %v3608 = vld [vmem:[%s7 + $0x3e8] sm:$0xff]
  %v3609 = vld [vmem:[%s7 + $0x3f0] sm:$0xff]
  %v3610 = vld [vmem:[%s7 + $0x3f8] sm:$0xff]
  %v3611 = vld [vmem:[%s9] sm:$0xf]
  %v3613 = vlaneseq
  %v3614 = vshrl.u32 %v3613, 7
  %v3615 = vsub.s32 0, %v3614
  %v3616 = vrot.slane %v3611, %v3615
  %v3617 = vlaneseq
  %v3618 = vshrl.u32 %v3617, 7
  %v3619 = vsub.s32 1, %v3618
  %v3620 = vrot.slane %v3611, %v3619
  %v3621 = vlaneseq
  %v3622 = vshrl.u32 %v3621, 7
  %v3623 = vsub.s32 2, %v3622
  %v3624 = vrot.slane %v3611, %v3623
  %v3625 = vlaneseq
  %v3626 = vshrl.u32 %v3625, 7
  %v3627 = vsub.s32 3, %v3626
  %v3628 = vrot.slane %v3611, %v3627
  %v3761 = vunpack.c.l.b16 %v3483
  %v3762 = vunpack.c.h.b16 %v3483
  %v3763 = vunpack.c.l.b16 %v3484
  %v3764 = vunpack.c.h.b16 %v3484
  %v3765 = vunpack.c.l.b16 %v3485
  %v3766 = vunpack.c.h.b16 %v3485
  %v3767 = vunpack.c.l.b16 %v3486
  %v3768 = vunpack.c.h.b16 %v3486
  %v3769 = vunpack.c.l.b16 %v3487
  %v3770 = vunpack.c.h.b16 %v3487
  %v3771 = vunpack.c.l.b16 %v3488
  %v3772 = vunpack.c.h.b16 %v3488
  %v3773 = vunpack.c.l.b16 %v3489
  %v3774 = vunpack.c.h.b16 %v3489
  %v3775 = vunpack.c.l.b16 %v3490
  %v3776 = vunpack.c.h.b16 %v3490
  %v3777 = vunpack.c.l.b16 %v3491
  %v3778 = vunpack.c.h.b16 %v3491
  %v3779 = vunpack.c.l.b16 %v3492
  %v3780 = vunpack.c.h.b16 %v3492
  %v3781 = vunpack.c.l.b16 %v3493
  %v3782 = vunpack.c.h.b16 %v3493
  %v3783 = vunpack.c.l.b16 %v3494
  %v3784 = vunpack.c.h.b16 %v3494
  %v3785 = vunpack.c.l.b16 %v3495
  %v3786 = vunpack.c.h.b16 %v3495
  %v3787 = vunpack.c.l.b16 %v3496
  %v3788 = vunpack.c.h.b16 %v3496
  %v3789 = vunpack.c.l.b16 %v3497
  %v3790 = vunpack.c.h.b16 %v3497
  %v3791 = vunpack.c.l.b16 %v3498
  %v3792 = vunpack.c.h.b16 %v3498
  %v3793 = vunpack.c.l.b16 %v3499
  %v3794 = vunpack.c.h.b16 %v3499
  %v3795 = vunpack.c.l.b16 %v3500
  %v3796 = vunpack.c.h.b16 %v3500
  %v3797 = vunpack.c.l.b16 %v3501
  %v3798 = vunpack.c.h.b16 %v3501
  %v3799 = vunpack.c.l.b16 %v3502
  %v3800 = vunpack.c.h.b16 %v3502
  %v3801 = vunpack.c.l.b16 %v3503
  %v3802 = vunpack.c.h.b16 %v3503
  %v3803 = vunpack.c.l.b16 %v3504
  %v3804 = vunpack.c.h.b16 %v3504
  %v3805 = vunpack.c.l.b16 %v3505
  %v3806 = vunpack.c.h.b16 %v3505
  %v3807 = vunpack.c.l.b16 %v3506
  %v3808 = vunpack.c.h.b16 %v3506
  %v3809 = vunpack.c.l.b16 %v3507
  %v3810 = vunpack.c.h.b16 %v3507
  %v3811 = vunpack.c.l.b16 %v3508
  %v3812 = vunpack.c.h.b16 %v3508
  %v3813 = vunpack.c.l.b16 %v3509
  %v3814 = vunpack.c.h.b16 %v3509
  %v3815 = vunpack.c.l.b16 %v3510
  %v3816 = vunpack.c.h.b16 %v3510
  %v3817 = vunpack.c.l.b16 %v3511
  %v3818 = vunpack.c.h.b16 %v3511
  %v3819 = vunpack.c.l.b16 %v3512
  %v3820 = vunpack.c.h.b16 %v3512
  %v3821 = vunpack.c.l.b16 %v3513
  %v3822 = vunpack.c.h.b16 %v3513
  %v3823 = vunpack.c.l.b16 %v3514
  %v3824 = vunpack.c.h.b16 %v3514
  %v3825 = vunpack.c.l.b16 %v3515
  %v3826 = vunpack.c.h.b16 %v3515
  %v3827 = vunpack.c.l.b16 %v3516
  %v3828 = vunpack.c.h.b16 %v3516
  %v3829 = vunpack.c.l.b16 %v3517
  %v3830 = vunpack.c.h.b16 %v3517
  %v3831 = vunpack.c.l.b16 %v3518
  %v3832 = vunpack.c.h.b16 %v3518
  %v3833 = vunpack.c.l.b16 %v3519
  %v3834 = vunpack.c.h.b16 %v3519
  %v3835 = vunpack.c.l.b16 %v3520
  %v3836 = vunpack.c.h.b16 %v3520
  %v3837 = vunpack.c.l.b16 %v3521
  %v3838 = vunpack.c.h.b16 %v3521
  %v3839 = vunpack.c.l.b16 %v3522
  %v3840 = vunpack.c.h.b16 %v3522
  %v3841 = vunpack.c.l.b16 %v3523
  %v3842 = vunpack.c.h.b16 %v3523
  %v3843 = vunpack.c.l.b16 %v3524
  %v3844 = vunpack.c.h.b16 %v3524
  %v3845 = vunpack.c.l.b16 %v3525
  %v3846 = vunpack.c.h.b16 %v3525
  %v3847 = vunpack.c.l.b16 %v3526
  %v3848 = vunpack.c.h.b16 %v3526
  %v3849 = vunpack.c.l.b16 %v3527
  %v3850 = vunpack.c.h.b16 %v3527
  %v3851 = vunpack.c.l.b16 %v3528
  %v3852 = vunpack.c.h.b16 %v3528
  %v3853 = vunpack.c.l.b16 %v3529
  %v3854 = vunpack.c.h.b16 %v3529
  %v3855 = vunpack.c.l.b16 %v3530
  %v3856 = vunpack.c.h.b16 %v3530
  %v3857 = vunpack.c.l.b16 %v3531
  %v3858 = vunpack.c.h.b16 %v3531
  %v3859 = vunpack.c.l.b16 %v3532
  %v3860 = vunpack.c.h.b16 %v3532
  %v3861 = vunpack.c.l.b16 %v3533
  %v3862 = vunpack.c.h.b16 %v3533
  %v3863 = vunpack.c.l.b16 %v3534
  %v3864 = vunpack.c.h.b16 %v3534
  %v3865 = vunpack.c.l.b16 %v3535
  %v3866 = vunpack.c.h.b16 %v3535
  %v3867 = vunpack.c.l.b16 %v3536
  %v3868 = vunpack.c.h.b16 %v3536
  %v3869 = vunpack.c.l.b16 %v3537
  %v3870 = vunpack.c.h.b16 %v3537
  %v3871 = vunpack.c.l.b16 %v3538
  %v3872 = vunpack.c.h.b16 %v3538
  %v3873 = vunpack.c.l.b16 %v3539
  %v3874 = vunpack.c.h.b16 %v3539
  %v3875 = vunpack.c.l.b16 %v3540
  %v3876 = vunpack.c.h.b16 %v3540
  %v3877 = vunpack.c.l.b16 %v3541
  %v3878 = vunpack.c.h.b16 %v3541
  %v3879 = vunpack.c.l.b16 %v3542
  %v3880 = vunpack.c.h.b16 %v3542
  %v3881 = vunpack.c.l.b16 %v3543
  %v3882 = vunpack.c.h.b16 %v3543
  %v3883 = vunpack.c.l.b16 %v3544
  %v3884 = vunpack.c.h.b16 %v3544
  %v3885 = vunpack.c.l.b16 %v3545
  %v3886 = vunpack.c.h.b16 %v3545
  %v3887 = vunpack.c.l.b16 %v3546
  %v3888 = vunpack.c.h.b16 %v3546
  %v3889 = vunpack.c.l.b16 %v3547
  %v3890 = vunpack.c.h.b16 %v3547
  %v3891 = vunpack.c.l.b16 %v3548
  %v3892 = vunpack.c.h.b16 %v3548
  %v3893 = vunpack.c.l.b16 %v3549
  %v3894 = vunpack.c.h.b16 %v3549
  %v3895 = vunpack.c.l.b16 %v3550
  %v3896 = vunpack.c.h.b16 %v3550
  %v3897 = vunpack.c.l.b16 %v3551
  %v3898 = vunpack.c.h.b16 %v3551
  %v3899 = vunpack.c.l.b16 %v3552
  %v3900 = vunpack.c.h.b16 %v3552
  %v3901 = vunpack.c.l.b16 %v3553
  %v3902 = vunpack.c.h.b16 %v3553
  %v3903 = vunpack.c.l.b16 %v3554
  %v3904 = vunpack.c.h.b16 %v3554
  %v3905 = vunpack.c.l.b16 %v3555
  %v3906 = vunpack.c.h.b16 %v3555
  %v3907 = vunpack.c.l.b16 %v3556
  %v3908 = vunpack.c.h.b16 %v3556
  %v3909 = vunpack.c.l.b16 %v3557
  %v3910 = vunpack.c.h.b16 %v3557
  %v3911 = vunpack.c.l.b16 %v3558
  %v3912 = vunpack.c.h.b16 %v3558
  %v3913 = vunpack.c.l.b16 %v3559
  %v3914 = vunpack.c.h.b16 %v3559
  %v3915 = vunpack.c.l.b16 %v3560
  %v3916 = vunpack.c.h.b16 %v3560
  %v3917 = vunpack.c.l.b16 %v3561
  %v3918 = vunpack.c.h.b16 %v3561
  %v3919 = vunpack.c.l.b16 %v3562
  %v3920 = vunpack.c.h.b16 %v3562
  %v3921 = vunpack.c.l.b16 %v3563
  %v3922 = vunpack.c.h.b16 %v3563
  %v3923 = vunpack.c.l.b16 %v3564
  %v3924 = vunpack.c.h.b16 %v3564
  %v3925 = vunpack.c.l.b16 %v3565
  %v3926 = vunpack.c.h.b16 %v3565
  %v3927 = vunpack.c.l.b16 %v3566
  %v3928 = vunpack.c.h.b16 %v3566
  %v3929 = vunpack.c.l.b16 %v3567
  %v3930 = vunpack.c.h.b16 %v3567
  %v3931 = vunpack.c.l.b16 %v3568
  %v3932 = vunpack.c.h.b16 %v3568
  %v3933 = vunpack.c.l.b16 %v3569
  %v3934 = vunpack.c.h.b16 %v3569
  %v3935 = vunpack.c.l.b16 %v3570
  %v3936 = vunpack.c.h.b16 %v3570
  %v3937 = vunpack.c.l.b16 %v3571
  %v3938 = vunpack.c.h.b16 %v3571
  %v3939 = vunpack.c.l.b16 %v3572
  %v3940 = vunpack.c.h.b16 %v3572
  %v3941 = vunpack.c.l.b16 %v3573
  %v3942 = vunpack.c.h.b16 %v3573
  %v3943 = vunpack.c.l.b16 %v3574
  %v3944 = vunpack.c.h.b16 %v3574
  %v3945 = vunpack.c.l.b16 %v3575
  %v3946 = vunpack.c.h.b16 %v3575
  %v3947 = vunpack.c.l.b16 %v3576
  %v3948 = vunpack.c.h.b16 %v3576
  %v3949 = vunpack.c.l.b16 %v3577
  %v3950 = vunpack.c.h.b16 %v3577
  %v3951 = vunpack.c.l.b16 %v3578
  %v3952 = vunpack.c.h.b16 %v3578
  %v3953 = vunpack.c.l.b16 %v3579
  %v3954 = vunpack.c.h.b16 %v3579
  %v3955 = vunpack.c.l.b16 %v3580
  %v3956 = vunpack.c.h.b16 %v3580
  %v3957 = vunpack.c.l.b16 %v3581
  %v3958 = vunpack.c.h.b16 %v3581
  %v3959 = vunpack.c.l.b16 %v3582
  %v3960 = vunpack.c.h.b16 %v3582
  %v3961 = vunpack.c.l.b16 %v3583
  %v3962 = vunpack.c.h.b16 %v3583
  %v3963 = vunpack.c.l.b16 %v3584
  %v3964 = vunpack.c.h.b16 %v3584
  %v3965 = vunpack.c.l.b16 %v3585
  %v3966 = vunpack.c.h.b16 %v3585
  %v3967 = vunpack.c.l.b16 %v3586
  %v3968 = vunpack.c.h.b16 %v3586
  %v3969 = vunpack.c.l.b16 %v3587
  %v3970 = vunpack.c.h.b16 %v3587
  %v3971 = vunpack.c.l.b16 %v3588
  %v3972 = vunpack.c.h.b16 %v3588
  %v3973 = vunpack.c.l.b16 %v3589
  %v3974 = vunpack.c.h.b16 %v3589
  %v3975 = vunpack.c.l.b16 %v3590
  %v3976 = vunpack.c.h.b16 %v3590
  %v3977 = vunpack.c.l.b16 %v3591
  %v3978 = vunpack.c.h.b16 %v3591
  %v3979 = vunpack.c.l.b16 %v3592
  %v3980 = vunpack.c.h.b16 %v3592
  %v3981 = vunpack.c.l.b16 %v3593
  %v3982 = vunpack.c.h.b16 %v3593
  %v3983 = vunpack.c.l.b16 %v3594
  %v3984 = vunpack.c.h.b16 %v3594
  %v3985 = vunpack.c.l.b16 %v3595
  %v3986 = vunpack.c.h.b16 %v3595
  %v3987 = vunpack.c.l.b16 %v3596
  %v3988 = vunpack.c.h.b16 %v3596
  %v3989 = vunpack.c.l.b16 %v3597
  %v3990 = vunpack.c.h.b16 %v3597
  %v3991 = vunpack.c.l.b16 %v3598
  %v3992 = vunpack.c.h.b16 %v3598
  %v3993 = vunpack.c.l.b16 %v3599
  %v3994 = vunpack.c.h.b16 %v3599
  %v3995 = vunpack.c.l.b16 %v3600
  %v3996 = vunpack.c.h.b16 %v3600
  %v3997 = vunpack.c.l.b16 %v3601
  %v3998 = vunpack.c.h.b16 %v3601
  %v3999 = vunpack.c.l.b16 %v3602
  %v4000 = vunpack.c.h.b16 %v3602
  %v4001 = vunpack.c.l.b16 %v3603
  %v4002 = vunpack.c.h.b16 %v3603
  %v4003 = vunpack.c.l.b16 %v3604
  %v4004 = vunpack.c.h.b16 %v3604
  %v4005 = vunpack.c.l.b16 %v3605
  %v4006 = vunpack.c.h.b16 %v3605
  %v4007 = vunpack.c.l.b16 %v3606
  %v4008 = vunpack.c.h.b16 %v3606
  %v4009 = vunpack.c.l.b16 %v3607
  %v4010 = vunpack.c.h.b16 %v3607
  %v4011 = vunpack.c.l.b16 %v3608
  %v4012 = vunpack.c.h.b16 %v3608
  %v4013 = vunpack.c.l.b16 %v3609
  %v4014 = vunpack.c.h.b16 %v3609
  %v4015 = vunpack.c.l.b16 %v3610
  %v4016 = vunpack.c.h.b16 %v3610
  %v4017 = vpack.c.b16 %v3765, %v3761
  %v4018 = vpack.c.b16 %v3766, %v3762
  %v4019 = vpack.c.b16 %v3767, %v3763
  %v4020 = vpack.c.b16 %v3768, %v3764
  %v4021 = vpack.c.b16 %v3773, %v3769
  %v4022 = vpack.c.b16 %v3774, %v3770
  %v4023 = vpack.c.b16 %v3775, %v3771
  %v4024 = vpack.c.b16 %v3776, %v3772
  %v4025 = vpack.c.b16 %v3781, %v3777
  %v4026 = vpack.c.b16 %v3782, %v3778
  %v4027 = vpack.c.b16 %v3783, %v3779
  %v4028 = vpack.c.b16 %v3784, %v3780
  %v4029 = vpack.c.b16 %v3789, %v3785
  %v4030 = vpack.c.b16 %v3790, %v3786
  %v4031 = vpack.c.b16 %v3791, %v3787
  %v4032 = vpack.c.b16 %v3792, %v3788
  %v4033 = vpack.c.b16 %v3797, %v3793
  %v4034 = vpack.c.b16 %v3798, %v3794
  %v4035 = vpack.c.b16 %v3799, %v3795
  %v4036 = vpack.c.b16 %v3800, %v3796
  %v4037 = vpack.c.b16 %v3805, %v3801
  %v4038 = vpack.c.b16 %v3806, %v3802
  %v4039 = vpack.c.b16 %v3807, %v3803
  %v4040 = vpack.c.b16 %v3808, %v3804
  %v4041 = vpack.c.b16 %v3813, %v3809
  %v4042 = vpack.c.b16 %v3814, %v3810
  %v4043 = vpack.c.b16 %v3815, %v3811
  %v4044 = vpack.c.b16 %v3816, %v3812
  %v4045 = vpack.c.b16 %v3821, %v3817
  %v4046 = vpack.c.b16 %v3822, %v3818
  %v4047 = vpack.c.b16 %v3823, %v3819
  %v4048 = vpack.c.b16 %v3824, %v3820
  %v4049 = vpack.c.b16 %v3829, %v3825
  %v4050 = vpack.c.b16 %v3830, %v3826
  %v4051 = vpack.c.b16 %v3831, %v3827
  %v4052 = vpack.c.b16 %v3832, %v3828
  %v4053 = vpack.c.b16 %v3837, %v3833
  %v4054 = vpack.c.b16 %v3838, %v3834
  %v4055 = vpack.c.b16 %v3839, %v3835
  %v4056 = vpack.c.b16 %v3840, %v3836
  %v4057 = vpack.c.b16 %v3845, %v3841
  %v4058 = vpack.c.b16 %v3846, %v3842
  %v4059 = vpack.c.b16 %v3847, %v3843
  %v4060 = vpack.c.b16 %v3848, %v3844
  %v4061 = vpack.c.b16 %v3853, %v3849
  %v4062 = vpack.c.b16 %v3854, %v3850
  %v4063 = vpack.c.b16 %v3855, %v3851
  %v4064 = vpack.c.b16 %v3856, %v3852
  %v4065 = vpack.c.b16 %v3861, %v3857
  %v4066 = vpack.c.b16 %v3862, %v3858
  %v4067 = vpack.c.b16 %v3863, %v3859
  %v4068 = vpack.c.b16 %v3864, %v3860
  %v4069 = vpack.c.b16 %v3869, %v3865
  %v4070 = vpack.c.b16 %v3870, %v3866
  %v4071 = vpack.c.b16 %v3871, %v3867
  %v4072 = vpack.c.b16 %v3872, %v3868
  %v4073 = vpack.c.b16 %v3877, %v3873
  %v4074 = vpack.c.b16 %v3878, %v3874
  %v4075 = vpack.c.b16 %v3879, %v3875
  %v4076 = vpack.c.b16 %v3880, %v3876
  %v4077 = vpack.c.b16 %v3885, %v3881
  %v4078 = vpack.c.b16 %v3886, %v3882
  %v4079 = vpack.c.b16 %v3887, %v3883
  %v4080 = vpack.c.b16 %v3888, %v3884
  %v4081 = vpack.c.b16 %v3893, %v3889
  %v4082 = vpack.c.b16 %v3894, %v3890
  %v4083 = vpack.c.b16 %v3895, %v3891
  %v4084 = vpack.c.b16 %v3896, %v3892
  %v4085 = vpack.c.b16 %v3901, %v3897
  %v4086 = vpack.c.b16 %v3902, %v3898
  %v4087 = vpack.c.b16 %v3903, %v3899
  %v4088 = vpack.c.b16 %v3904, %v3900
  %v4089 = vpack.c.b16 %v3909, %v3905
  %v4090 = vpack.c.b16 %v3910, %v3906
  %v4091 = vpack.c.b16 %v3911, %v3907
  %v4092 = vpack.c.b16 %v3912, %v3908
  %v4093 = vpack.c.b16 %v3917, %v3913
  %v4094 = vpack.c.b16 %v3918, %v3914
  %v4095 = vpack.c.b16 %v3919, %v3915
  %v4096 = vpack.c.b16 %v3920, %v3916
  %v4097 = vpack.c.b16 %v3925, %v3921
  %v4098 = vpack.c.b16 %v3926, %v3922
  %v4099 = vpack.c.b16 %v3927, %v3923
  %v4100 = vpack.c.b16 %v3928, %v3924
  %v4101 = vpack.c.b16 %v3933, %v3929
  %v4102 = vpack.c.b16 %v3934, %v3930
  %v4103 = vpack.c.b16 %v3935, %v3931
  %v4104 = vpack.c.b16 %v3936, %v3932
  %v4105 = vpack.c.b16 %v3941, %v3937
  %v4106 = vpack.c.b16 %v3942, %v3938
  %v4107 = vpack.c.b16 %v3943, %v3939
  %v4108 = vpack.c.b16 %v3944, %v3940
  %v4109 = vpack.c.b16 %v3949, %v3945
  %v4110 = vpack.c.b16 %v3950, %v3946
  %v4111 = vpack.c.b16 %v3951, %v3947
  %v4112 = vpack.c.b16 %v3952, %v3948
  %v4113 = vpack.c.b16 %v3957, %v3953
  %v4114 = vpack.c.b16 %v3958, %v3954
  %v4115 = vpack.c.b16 %v3959, %v3955
  %v4116 = vpack.c.b16 %v3960, %v3956
  %v4117 = vpack.c.b16 %v3965, %v3961
  %v4118 = vpack.c.b16 %v3966, %v3962
  %v4119 = vpack.c.b16 %v3967, %v3963
  %v4120 = vpack.c.b16 %v3968, %v3964
  %v4121 = vpack.c.b16 %v3973, %v3969
  %v4122 = vpack.c.b16 %v3974, %v3970
  %v4123 = vpack.c.b16 %v3975, %v3971
  %v4124 = vpack.c.b16 %v3976, %v3972
  %v4125 = vpack.c.b16 %v3981, %v3977
  %v4126 = vpack.c.b16 %v3982, %v3978
  %v4127 = vpack.c.b16 %v3983, %v3979
  %v4128 = vpack.c.b16 %v3984, %v3980
  %v4129 = vpack.c.b16 %v3989, %v3985
  %v4130 = vpack.c.b16 %v3990, %v3986
  %v4131 = vpack.c.b16 %v3991, %v3987
  %v4132 = vpack.c.b16 %v3992, %v3988
  %v4133 = vpack.c.b16 %v3997, %v3993
  %v4134 = vpack.c.b16 %v3998, %v3994
  %v4135 = vpack.c.b16 %v3999, %v3995
  %v4136 = vpack.c.b16 %v4000, %v3996
  %v4137 = vpack.c.b16 %v4005, %v4001
  %v4138 = vpack.c.b16 %v4006, %v4002
  %v4139 = vpack.c.b16 %v4007, %v4003
  %v4140 = vpack.c.b16 %v4008, %v4004
  %v4141 = vpack.c.b16 %v4013, %v4009
  %v4142 = vpack.c.b16 %v4014, %v4010
  %v4143 = vpack.c.b16 %v4015, %v4011
  %v4144 = vpack.c.b16 %v4016, %v4012
  %4273 = vmatprep.subr.bf16.mxu0 %v4018
  %4274 = vmatpush1.bf16.msra.mxu0 %v4017
  %4275 = vmatprep.subr.bf16.mxu0 %v4022
  %4276 = vmatpush1.bf16.msra.mxu0 %v4021
  %4277 = vmatprep.subr.bf16.mxu0 %v4026
  %4278 = vmatpush1.bf16.msra.mxu0 %v4025
  %4279 = vmatprep.subr.bf16.mxu0 %v4030
  %4280 = vmatpush1.bf16.msra.mxu0 %v4029
  %4281 = vmatprep.subr.bf16.mxu0 %v4034
  %4282 = vmatpush1.bf16.msra.mxu0 %v4033
  %4283 = vmatprep.subr.bf16.mxu0 %v4038
  %4284 = vmatpush1.bf16.msra.mxu0 %v4037
  %4285 = vmatprep.subr.bf16.mxu0 %v4042
  %4286 = vmatpush1.bf16.msra.mxu0 %v4041
  %4287 = vmatprep.subr.bf16.mxu0 %v4046
  %4288 = vmatpush1.bf16.msra.mxu0 %v4045
  %4289 = vmatprep.subr.bf16.mxu0 %v4050
  %4290 = vmatpush1.bf16.msra.mxu0 %v4049
  %4291 = vmatprep.subr.bf16.mxu0 %v4054
  %4292 = vmatpush1.bf16.msra.mxu0 %v4053
  %4293 = vmatprep.subr.bf16.mxu0 %v4058
  %4294 = vmatpush1.bf16.msra.mxu0 %v4057
  %4295 = vmatprep.subr.bf16.mxu0 %v4062
  %4296 = vmatpush1.bf16.msra.mxu0 %v4061
  %4297 = vmatprep.subr.bf16.mxu0 %v4066
  %4298 = vmatpush1.bf16.msra.mxu0 %v4065
  %4299 = vmatprep.subr.bf16.mxu0 %v4070
  %4300 = vmatpush1.bf16.msra.mxu0 %v4069
  %4301 = vmatprep.subr.bf16.mxu0 %v4074
  %4302 = vmatpush1.bf16.msra.mxu0 %v4073
  %4303 = vmatprep.subr.bf16.mxu0 %v4078
  %4304 = vmatpush1.bf16.msra.mxu0 %v4077
  %4305 = vmatprep.mubr.bf16.mxu0 %v3480
  %4306 = vmatmul.mubr.bf16.gmra.mrb[0].mxu0 %v3479
  %v4307 = vpop.f32.mrb[0].mxu0
  %v4308 = vadd.f32 %v3616, %v4307
  %v4309 = vpop.f32.mrb[0].mxu0
  %v4310 = vadd.f32 %v3620, %v4309
  %v4311 = vpop.f32.mrb[0].mxu0
  %v4312 = vadd.f32 %v3616, %v4311
  %v4313 = vpop.f32.mrb[0].mxu0
  %v4314 = vadd.f32 %v3620, %v4313
  %4315 = vdwg.mxu0
  %4316 = vmatprep.subr.bf16.mxu0 %v4082
  %4317 = vmatpush1.bf16.msra.mxu0 %v4081
  %4318 = vmatprep.subr.bf16.mxu0 %v4086
  %4319 = vmatpush1.bf16.msra.mxu0 %v4085
  %4320 = vmatprep.subr.bf16.mxu0 %v4090
  %4321 = vmatpush1.bf16.msra.mxu0 %v4089
  %4322 = vmatprep.subr.bf16.mxu0 %v4094
  %4323 = vmatpush1.bf16.msra.mxu0 %v4093
  %4324 = vmatprep.subr.bf16.mxu0 %v4098
  %4325 = vmatpush1.bf16.msra.mxu0 %v4097
  %4326 = vmatprep.subr.bf16.mxu0 %v4102
  %4327 = vmatpush1.bf16.msra.mxu0 %v4101
  %4328 = vmatprep.subr.bf16.mxu0 %v4106
  %4329 = vmatpush1.bf16.msra.mxu0 %v4105
  %4330 = vmatprep.subr.bf16.mxu0 %v4110
  %4331 = vmatpush1.bf16.msra.mxu0 %v4109
  %4332 = vmatprep.subr.bf16.mxu0 %v4114
  %4333 = vmatpush1.bf16.msra.mxu0 %v4113
  %4334 = vmatprep.subr.bf16.mxu0 %v4118
  %4335 = vmatpush1.bf16.msra.mxu0 %v4117
  %4336 = vmatprep.subr.bf16.mxu0 %v4122
  %4337 = vmatpush1.bf16.msra.mxu0 %v4121
  %4338 = vmatprep.subr.bf16.mxu0 %v4126
  %4339 = vmatpush1.bf16.msra.mxu0 %v4125
  %4340 = vmatprep.subr.bf16.mxu0 %v4130
  %4341 = vmatpush1.bf16.msra.mxu0 %v4129
  %4342 = vmatprep.subr.bf16.mxu0 %v4134
  %4343 = vmatpush1.bf16.msra.mxu0 %v4133
  %4344 = vmatprep.subr.bf16.mxu0 %v4138
  %4345 = vmatpush1.bf16.msra.mxu0 %v4137
  %4346 = vmatprep.subr.bf16.mxu0 %v4142
  %4347 = vmatpush1.bf16.msra.mxu0 %v4141
  %4348 = vmatprep.mubr.bf16.mxu0 %v3482
  %4349 = vmatmul.mubr.bf16.gmra.mrb[0].mxu0 %v3481
  %v4350 = vpop.f32.mrb[0].mxu0
  %v4351 = vadd.f32 %v4308, %v4350
  %v4352 = vpop.f32.mrb[0].mxu0
  %v4353 = vadd.f32 %v4310, %v4352
  %v4354 = vpop.f32.mrb[0].mxu0
  %v4355 = vadd.f32 %v4312, %v4354
  %v4356 = vpop.f32.mrb[0].mxu0
  %v4357 = vadd.f32 %v4314, %v4356
  %4358 = vdwg.mxu0
  %4359 = vmatprep.subr.bf16.mxu0 %v4020
  %4360 = vmatpush1.bf16.msra.mxu0 %v4019
  %4361 = vmatprep.subr.bf16.mxu0 %v4024
  %4362 = vmatpush1.bf16.msra.mxu0 %v4023
  %4363 = vmatprep.subr.bf16.mxu0 %v4028
  %4364 = vmatpush1.bf16.msra.mxu0 %v4027
  %4365 = vmatprep.subr.bf16.mxu0 %v4032
  %4366 = vmatpush1.bf16.msra.mxu0 %v4031
  %4367 = vmatprep.subr.bf16.mxu0 %v4036
  %4368 = vmatpush1.bf16.msra.mxu0 %v4035
  %4369 = vmatprep.subr.bf16.mxu0 %v4040
  %4370 = vmatpush1.bf16.msra.mxu0 %v4039
  %4371 = vmatprep.subr.bf16.mxu0 %v4044
  %4372 = vmatpush1.bf16.msra.mxu0 %v4043
  %4373 = vmatprep.subr.bf16.mxu0 %v4048
  %4374 = vmatpush1.bf16.msra.mxu0 %v4047
  %4375 = vmatprep.subr.bf16.mxu0 %v4052
  %4376 = vmatpush1.bf16.msra.mxu0 %v4051
  %4377 = vmatprep.subr.bf16.mxu0 %v4056
  %4378 = vmatpush1.bf16.msra.mxu0 %v4055
  %4379 = vmatprep.subr.bf16.mxu0 %v4060
  %4380 = vmatpush1.bf16.msra.mxu0 %v4059
  %4381 = vmatprep.subr.bf16.mxu0 %v4064
  %4382 = vmatpush1.bf16.msra.mxu0 %v4063
  %4383 = vmatprep.subr.bf16.mxu0 %v4068
  %4384 = vmatpush1.bf16.msra.mxu0 %v4067
  %4385 = vmatprep.subr.bf16.mxu0 %v4072
  %4386 = vmatpush1.bf16.msra.mxu0 %v4071
  %4387 = vmatprep.subr.bf16.mxu0 %v4076
  %4388 = vmatpush1.bf16.msra.mxu0 %v4075
  %4389 = vmatprep.subr.bf16.mxu0 %v4080
  %4390 = vmatpush1.bf16.msra.mxu0 %v4079
  %4391 = vmatprep.mubr.bf16.mxu0 %v3480
  %4392 = vmatmul.mubr.bf16.gmra.mrb[0].mxu0 %v3479
  %v4393 = vpop.f32.mrb[0].mxu0
  %v4394 = vadd.f32 %v3624, %v4393
  %v4395 = vpop.f32.mrb[0].mxu0
  %v4396 = vadd.f32 %v3628, %v4395
  %v4397 = vpop.f32.mrb[0].mxu0
  %v4398 = vadd.f32 %v3624, %v4397
  %v4399 = vpop.f32.mrb[0].mxu0
  %v4400 = vadd.f32 %v3628, %v4399
  %4401 = vdwg.mxu0
  %4402 = vmatprep.subr.bf16.mxu0 %v4084
  %4403 = vmatpush1.bf16.msra.mxu0 %v4083
  %4404 = vmatprep.subr.bf16.mxu0 %v4088
  %4405 = vmatpush1.bf16.msra.mxu0 %v4087
  %4406 = vmatprep.subr.bf16.mxu0 %v4092
  %4407 = vmatpush1.bf16.msra.mxu0 %v4091
  %4408 = vmatprep.subr.bf16.mxu0 %v4096
  %4409 = vmatpush1.bf16.msra.mxu0 %v4095
  %4410 = vmatprep.subr.bf16.mxu0 %v4100
  %4411 = vmatpush1.bf16.msra.mxu0 %v4099
  %4412 = vmatprep.subr.bf16.mxu0 %v4104
  %4413 = vmatpush1.bf16.msra.mxu0 %v4103
  %4414 = vmatprep.subr.bf16.mxu0 %v4108
  %4415 = vmatpush1.bf16.msra.mxu0 %v4107
  %4416 = vmatprep.subr.bf16.mxu0 %v4112
  %4417 = vmatpush1.bf16.msra.mxu0 %v4111
  %4418 = vmatprep.subr.bf16.mxu0 %v4116
  %4419 = vmatpush1.bf16.msra.mxu0 %v4115
  %4420 = vmatprep.subr.bf16.mxu0 %v4120
  %4421 = vmatpush1.bf16.msra.mxu0 %v4119
  %4422 = vmatprep.subr.bf16.mxu0 %v4124
  %4423 = vmatpush1.bf16.msra.mxu0 %v4123
  %4424 = vmatprep.subr.bf16.mxu0 %v4128
  %4425 = vmatpush1.bf16.msra.mxu0 %v4127
  %4426 = vmatprep.subr.bf16.mxu0 %v4132
  %4427 = vmatpush1.bf16.msra.mxu0 %v4131
  %4428 = vmatprep.subr.bf16.mxu0 %v4136
  %4429 = vmatpush1.bf16.msra.mxu0 %v4135
  %4430 = vmatprep.subr.bf16.mxu0 %v4140
  %4431 = vmatpush1.bf16.msra.mxu0 %v4139
  %4432 = vmatprep.subr.bf16.mxu0 %v4144
  %4433 = vmatpush1.bf16.msra.mxu0 %v4143
  %4434 = vmatprep.mubr.bf16.mxu0 %v3482
  %4435 = vmatmul.mubr.bf16.gmra.mrb[0].mxu0 %v3481
  %v4436 = vpop.f32.mrb[0].mxu0
  %v4437 = vadd.f32 %v4394, %v4436
  %v4438 = vpop.f32.mrb[0].mxu0
  %v4439 = vadd.f32 %v4396, %v4438
  %v4440 = vpop.f32.mrb[0].mxu0
  %v4441 = vadd.f32 %v4398, %v4440
  %v4442 = vpop.f32.mrb[0].mxu0
  %v4443 = vadd.f32 %v4400, %v4442
  %4444 = vdwg.mxu0
  %v4445 = vadd.f32 %v125, %v4351
  %v4446 = vadd.f32 %v126, %v4353
  %v4447 = vadd.f32 %v127, %v4437
  %v4448 = vadd.f32 %v128, %v4439
  %v4449 = vadd.f32 %v129, %v4355
  %v4450 = vadd.f32 %v130, %v4357
  %v4451 = vadd.f32 %v131, %v4441
  %v4452 = vadd.f32 %v132, %v4443
  %v4453 = vadd.f32 %v4445, %v4446
  %v4454 = vadd.f32 %v4453, %v4447
  %v4455 = vsel %vm2001, %v4448, 0.0
  %v4456 = vadd.f32 %v4454, %v4455
  %4457 = vadd.xlane.f32.xlu0 %v4456
  %v4458 = vpop.xlane.xlu0 %4457
  %v4459 = vsel %vm2582, %v4449, 0.0
  %v4460 = vsel %vm2582, %v4450, 0.0
  %v4461 = vadd.f32 %v4459, %v4460
  %v4462 = vsel %vm2582, %v4451, 0.0
  %v4463 = vadd.f32 %v4461, %v4462
  %vm4464 = vcmask 123904
  %v4465 = vsel %vm4464, %v4452, 0.0
  %v4466 = vadd.f32 %v4463, %v4465
  %4467 = vadd.xlane.f32.xlu0 %v4466
  %v4468 = vpop.xlane.xlu0 %4467
  %v4469 = vrcp.pop 400.0
  %v4470 = vmul.f32 %v4458, %v4469
  %v4471 = vmul.f32 %v4468, %v4469
  %v4472 = vsub.f32 %v4445, %v4470
  %v4473 = vsub.f32 %v4446, %v4470
  %v4474 = vsub.f32 %v4447, %v4470
  %v4475 = vsub.f32 %v4448, %v4470
  %v4476 = vsub.f32 %v4449, %v4471
  %v4477 = vsub.f32 %v4450, %v4471
  %v4478 = vsub.f32 %v4451, %v4471
  %v4479 = vsub.f32 %v4452, %v4471
  %v4480 = vmul.f32 %v4472, %v4472
  %v4481 = vmul.f32 %v4473, %v4473
  %v4482 = vmul.f32 %v4474, %v4474
  %v4483 = vmul.f32 %v4475, %v4475
  %v4484 = vmul.f32 %v4476, %v4476
  %v4485 = vmul.f32 %v4477, %v4477
  %v4486 = vmul.f32 %v4478, %v4478
  %v4487 = vmul.f32 %v4479, %v4479
  %v4488 = vadd.f32 %v4480, %v4481
  %v4489 = vadd.f32 %v4488, %v4482
  %v4490 = vsel %vm2001, %v4483, 0.0
  %v4491 = vadd.f32 %v4489, %v4490
  %4492 = vadd.xlane.f32.xlu0 %v4491
  %v4493 = vpop.xlane.xlu0 %4492
  %v4494 = vsel %vm2582, %v4484, 0.0
  %v4495 = vsel %vm2582, %v4485, 0.0
  %v4496 = vadd.f32 %v4494, %v4495
  %v4497 = vsel %vm2582, %v4486, 0.0
  %v4498 = vadd.f32 %v4496, %v4497
  %v4499 = vsel %vm4464, %v4487, 0.0
  %v4500 = vadd.f32 %v4498, %v4499
  %4501 = vadd.xlane.f32.xlu0 %v4500
  %v4502 = vpop.xlane.xlu0 %4501
  %v4503 = vmul.f32 %v4493, %v4469
  %v4504 = vmul.f32 %v4502, %v4469
  %v4505 = vadd.f32 %v4503, 1e-05
  %v4506 = vadd.f32 %v4504, 1e-05
  %v4507 = vrsqrt.pop %v4505
  %v4508 = vrsqrt.pop %v4506
  %v4509 = vmul.f32 %v4472, %v4507
  %v4510 = vmul.f32 %v4473, %v4507
  %v4511 = vmul.f32 %v4474, %v4507
  %v4512 = vmul.f32 %v4475, %v4507
  %v4513 = vmul.f32 %v4476, %v4508
  %v4514 = vmul.f32 %v4477, %v4508
  %v4515 = vmul.f32 %v4478, %v4508
  %v4516 = vmul.f32 %v4479, %v4508
  %v4517 = vld [vmem:[%s19] sm:$0xf]
  %v4519 = vlaneseq
  %v4520 = vshrl.u32 %v4519, 7
  %v4521 = vsub.s32 0, %v4520
  %v4522 = vrot.slane %v4517, %v4521
  %v4523 = vlaneseq
  %v4524 = vshrl.u32 %v4523, 7
  %v4525 = vsub.s32 1, %v4524
  %v4526 = vrot.slane %v4517, %v4525
  %v4527 = vlaneseq
  %v4528 = vshrl.u32 %v4527, 7
  %v4529 = vsub.s32 2, %v4528
  %v4530 = vrot.slane %v4517, %v4529
  %v4531 = vlaneseq
  %v4532 = vshrl.u32 %v4531, 7
  %v4533 = vsub.s32 3, %v4532
  %v4534 = vrot.slane %v4517, %v4533
  %v4539 = vmul.f32 %v4509, %v4522
  %v4540 = vmul.f32 %v4510, %v4526
  %v4541 = vmul.f32 %v4511, %v4530
  %v4542 = vmul.f32 %v4512, %v4534
  %v4543 = vmul.f32 %v4513, %v4522
  %v4544 = vmul.f32 %v4514, %v4526
  %v4545 = vmul.f32 %v4515, %v4530
  %v4546 = vmul.f32 %v4516, %v4534
  %v4547 = vld [vmem:[%s21] sm:$0xf]
  %v4549 = vlaneseq
  %v4550 = vshrl.u32 %v4549, 7
  %v4551 = vsub.s32 0, %v4550
  %v4552 = vrot.slane %v4547, %v4551
  %v4553 = vlaneseq
  %v4554 = vshrl.u32 %v4553, 7
  %v4555 = vsub.s32 1, %v4554
  %v4556 = vrot.slane %v4547, %v4555
  %v4557 = vlaneseq
  %v4558 = vshrl.u32 %v4557, 7
  %v4559 = vsub.s32 2, %v4558
  %v4560 = vrot.slane %v4547, %v4559
  %v4561 = vlaneseq
  %v4562 = vshrl.u32 %v4561, 7
  %v4563 = vsub.s32 3, %v4562
  %v4564 = vrot.slane %v4547, %v4563
  %v4569 = vadd.f32 %v4539, %v4552
  %v4570 = vadd.f32 %v4540, %v4556
  %v4571 = vadd.f32 %v4541, %v4560
  %v4572 = vadd.f32 %v4542, %v4564
  %v4573 = vadd.f32 %v4543, %v4552
  %v4574 = vadd.f32 %v4544, %v4556
  %v4575 = vadd.f32 %v4545, %v4560
  %v4576 = vadd.f32 %v4546, %v4564
  %v4577 = vpack.c.bf16 %v4573, %v4569
  %v4578 = vpack.c.bf16 %v4574, %v4570
  %v4579 = vpack.c.bf16 %v4575, %v4571
  %v4580 = vpack.c.bf16 %v4576, %v4572
  %v4581 = vld [vmem:[%s11] sm:$0xf]
  %v4582 = vld [vmem:[%s11 + $0x4] sm:$0xf]
  %v4583 = vld [vmem:[%s11 + $0x8] sm:$0xf]
  %v4584 = vld [vmem:[%s11 + $0xc] sm:$0xf]
  %v4585 = vld [vmem:[%s11 + $0x10] sm:$0xf]
  %v4586 = vld [vmem:[%s11 + $0x14] sm:$0xf]
  %v4587 = vld [vmem:[%s11 + $0x18] sm:$0xf]
  %v4588 = vld [vmem:[%s11 + $0x1c] sm:$0xf]
  %v4589 = vld [vmem:[%s11 + $0x20] sm:$0xf]
  %v4590 = vld [vmem:[%s11 + $0x24] sm:$0xf]
  %v4591 = vld [vmem:[%s11 + $0x28] sm:$0xf]
  %v4592 = vld [vmem:[%s11 + $0x2c] sm:$0xf]
  %v4593 = vld [vmem:[%s11 + $0x30] sm:$0xf]
  %v4594 = vld [vmem:[%s11 + $0x34] sm:$0xf]
  %v4595 = vld [vmem:[%s11 + $0x38] sm:$0xf]
  %v4596 = vld [vmem:[%s11 + $0x3c] sm:$0xf]
  %v4597 = vld [vmem:[%s11 + $0x40] sm:$0xf]
  %v4598 = vld [vmem:[%s11 + $0x44] sm:$0xf]
  %v4599 = vld [vmem:[%s11 + $0x48] sm:$0xf]
  %v4600 = vld [vmem:[%s11 + $0x4c] sm:$0xf]
  %v4601 = vld [vmem:[%s11 + $0x50] sm:$0xf]
  %v4602 = vld [vmem:[%s11 + $0x54] sm:$0xf]
  %v4603 = vld [vmem:[%s11 + $0x58] sm:$0xf]
  %v4604 = vld [vmem:[%s11 + $0x5c] sm:$0xf]
  %v4605 = vld [vmem:[%s11 + $0x60] sm:$0xf]
  %v4606 = vld [vmem:[%s11 + $0x64] sm:$0xf]
  %v4607 = vld [vmem:[%s11 + $0x68] sm:$0xf]
  %v4608 = vld [vmem:[%s11 + $0x6c] sm:$0xf]
  %v4609 = vld [vmem:[%s11 + $0x70] sm:$0xf]
  %v4610 = vld [vmem:[%s11 + $0x74] sm:$0xf]
  %v4611 = vld [vmem:[%s11 + $0x78] sm:$0xf]
  %v4612 = vld [vmem:[%s11 + $0x7c] sm:$0xf]
  %v4613 = vld [vmem:[%s11 + $0x80] sm:$0xf]
  %v4614 = vld [vmem:[%s11 + $0x84] sm:$0xf]
  %v4615 = vld [vmem:[%s11 + $0x88] sm:$0xf]
  %v4616 = vld [vmem:[%s11 + $0x8c] sm:$0xf]
  %v4617 = vld [vmem:[%s11 + $0x90] sm:$0xf]
  %v4618 = vld [vmem:[%s11 + $0x94] sm:$0xf]
  %v4619 = vld [vmem:[%s11 + $0x98] sm:$0xf]
  %v4620 = vld [vmem:[%s11 + $0x9c] sm:$0xf]
  %v4621 = vld [vmem:[%s11 + $0xa0] sm:$0xf]
  %v4622 = vld [vmem:[%s11 + $0xa4] sm:$0xf]
  %v4623 = vld [vmem:[%s11 + $0xa8] sm:$0xf]
  %v4624 = vld [vmem:[%s11 + $0xac] sm:$0xf]
  %v4625 = vld [vmem:[%s11 + $0xb0] sm:$0xf]
  %v4626 = vld [vmem:[%s11 + $0xb4] sm:$0xf]
  %v4627 = vld [vmem:[%s11 + $0xb8] sm:$0xf]
  %v4628 = vld [vmem:[%s11 + $0xbc] sm:$0xf]
  %v4629 = vld [vmem:[%s11 + $0xc0] sm:$0xf]
  %v4630 = vld [vmem:[%s11 + $0xc4] sm:$0xf]
  %v4631 = vld [vmem:[%s13] sm:$0x1]
  %v4633 = vlaneseq
  %v4634 = vshrl.u32 %v4633, 7
  %v4635 = vsub.s32 0, %v4634
  %v4636 = vrot.slane %v4631, %v4635
  %v4688 = vunpack.c.l.b16 %v4581
  %v4689 = vunpack.c.l.b16 %v4582
  %v4690 = vunpack.c.l.b16 %v4583
  %v4691 = vunpack.c.l.b16 %v4584
  %v4692 = vunpack.c.l.b16 %v4585
  %v4693 = vunpack.c.l.b16 %v4586
  %v4694 = vunpack.c.l.b16 %v4587
  %v4695 = vunpack.c.l.b16 %v4588
  %v4696 = vunpack.c.l.b16 %v4589
  %v4697 = vunpack.c.l.b16 %v4590
  %v4698 = vunpack.c.l.b16 %v4591
  %v4699 = vunpack.c.l.b16 %v4592
  %v4700 = vunpack.c.l.b16 %v4593
  %v4701 = vunpack.c.l.b16 %v4594
  %v4702 = vunpack.c.l.b16 %v4595
  %v4703 = vunpack.c.l.b16 %v4596
  %v4704 = vunpack.c.l.b16 %v4597
  %v4705 = vunpack.c.l.b16 %v4598
  %v4706 = vunpack.c.l.b16 %v4599
  %v4707 = vunpack.c.l.b16 %v4600
  %v4708 = vunpack.c.l.b16 %v4601
  %v4709 = vunpack.c.l.b16 %v4602
  %v4710 = vunpack.c.l.b16 %v4603
  %v4711 = vunpack.c.l.b16 %v4604
  %v4712 = vunpack.c.l.b16 %v4605
  %v4713 = vunpack.c.l.b16 %v4606
  %v4714 = vunpack.c.l.b16 %v4607
  %v4715 = vunpack.c.l.b16 %v4608
  %v4716 = vunpack.c.l.b16 %v4609
  %v4717 = vunpack.c.l.b16 %v4610
  %v4718 = vunpack.c.l.b16 %v4611
  %v4719 = vunpack.c.l.b16 %v4612
  %v4720 = vunpack.c.l.b16 %v4613
  %v4721 = vunpack.c.l.b16 %v4614
  %v4722 = vunpack.c.l.b16 %v4615
  %v4723 = vunpack.c.l.b16 %v4616
  %v4724 = vunpack.c.l.b16 %v4617
  %v4725 = vunpack.c.l.b16 %v4618
  %v4726 = vunpack.c.l.b16 %v4619
  %v4727 = vunpack.c.l.b16 %v4620
  %v4728 = vunpack.c.l.b16 %v4621
  %v4729 = vunpack.c.l.b16 %v4622
  %v4730 = vunpack.c.l.b16 %v4623
  %v4731 = vunpack.c.l.b16 %v4624
  %v4732 = vunpack.c.l.b16 %v4625
  %v4733 = vunpack.c.l.b16 %v4626
  %v4734 = vunpack.c.l.b16 %v4627
  %v4735 = vunpack.c.l.b16 %v4628
  %v4736 = vunpack.c.l.b16 %v4629
  %v4737 = vunpack.c.l.b16 %v4630
  %v4738 = vpack.c.b16 %v4689, %v4688
  %v4739 = vpack.c.b16 %v4691, %v4690
  %v4740 = vpack.c.b16 %v4693, %v4692
  %v4741 = vpack.c.b16 %v4695, %v4694
  %v4742 = vpack.c.b16 %v4697, %v4696
  %v4743 = vpack.c.b16 %v4699, %v4698
  %v4744 = vpack.c.b16 %v4701, %v4700
  %v4745 = vpack.c.b16 %v4703, %v4702
  %v4746 = vpack.c.b16 %v4705, %v4704
  %v4747 = vpack.c.b16 %v4707, %v4706
  %v4748 = vpack.c.b16 %v4709, %v4708
  %v4749 = vpack.c.b16 %v4711, %v4710
  %v4750 = vpack.c.b16 %v4713, %v4712
  %v4751 = vpack.c.b16 %v4715, %v4714
  %v4752 = vpack.c.b16 %v4717, %v4716
  %v4753 = vpack.c.b16 %v4719, %v4718
  %v4754 = vpack.c.b16 %v4721, %v4720
  %v4755 = vpack.c.b16 %v4723, %v4722
  %v4756 = vpack.c.b16 %v4725, %v4724
  %v4757 = vpack.c.b16 %v4727, %v4726
  %v4758 = vpack.c.b16 %v4729, %v4728
  %v4759 = vpack.c.b16 %v4731, %v4730
  %v4760 = vpack.c.b16 %v4733, %v4732
  %v4761 = vpack.c.b16 %v4735, %v4734
  %v4762 = vpack.c.b16 %v4737, %v4736
  %v4789 = vsel %vm2001, %v4580, 0
  %4791 = vmatprep.subr.bf16.mxu0 0
  %4792 = vmatpush1.bf16.msra.mxu0 %v4738
  %4793 = vmatprep.subr.bf16.mxu0 0
  %4794 = vmatpush1.bf16.msra.mxu0 %v4739
  %4795 = vmatprep.subr.bf16.mxu0 0
  %4796 = vmatpush1.bf16.msra.mxu0 %v4740
  %4797 = vmatprep.subr.bf16.mxu0 0
  %4798 = vmatpush1.bf16.msra.mxu0 %v4741
  %4799 = vmatprep.subr.bf16.mxu0 0
  %4800 = vmatpush1.bf16.msra.mxu0 %v4742
  %4801 = vmatprep.subr.bf16.mxu0 0
  %4802 = vmatpush1.bf16.msra.mxu0 %v4743
  %4803 = vmatprep.subr.bf16.mxu0 0
  %4804 = vmatpush1.bf16.msra.mxu0 %v4744
  %4805 = vmatprep.subr.bf16.mxu0 0
  %4806 = vmatpush1.bf16.msra.mxu0 %v4745
  %4807 = vmatprep.subr.bf16.mxu0 0
  %4808 = vmatpush1.bf16.msra.mxu0 %v4746
  %4809 = vmatprep.subr.bf16.mxu0 0
  %4810 = vmatpush1.bf16.msra.mxu0 %v4747
  %4811 = vmatprep.subr.bf16.mxu0 0
  %4812 = vmatpush1.bf16.msra.mxu0 %v4748
  %4813 = vmatprep.subr.bf16.mxu0 0
  %4814 = vmatpush1.bf16.msra.mxu0 %v4749
  %4815 = vmatprep.subr.bf16.mxu0 0
  %4816 = vmatpush1.bf16.msra.mxu0 %v4750
  %4817 = vmatprep.subr.bf16.mxu0 0
  %4818 = vmatpush1.bf16.msra.mxu0 %v4751
  %4819 = vmatprep.subr.bf16.mxu0 0
  %4820 = vmatpush1.bf16.msra.mxu0 %v4752
  %4821 = vmatprep.subr.bf16.mxu0 0
  %4822 = vmatpush1.bf16.msra.mxu0 %v4753
  %4823 = vmatprep.mubr.bf16.mxu0 %v4578
  %4824 = vmatmul.mubr.bf16.gmra.mrb[0].mxu0 %v4577
  %v4825 = vpop.f32.mrb[0].mxu0
  %v4826 = vadd.f32 %v4636, %v4825
  %v4827 = vpop.f32.mrb[0].mxu0
  %v4828 = vpop.f32.mrb[0].mxu0
  %v4829 = vadd.f32 %v4636, %v4828
  %v4830 = vpop.f32.mrb[0].mxu0
  %4831 = vdwg.mxu0
  %4832 = vmatprep.subr.bf16.mxu0 0
  %4833 = vmatpush1.bf16.msra.mxu0 %v4754
  %4834 = vmatprep.subr.bf16.mxu0 0
  %4835 = vmatpush1.bf16.msra.mxu0 %v4755
  %4836 = vmatprep.subr.bf16.mxu0 0
  %4837 = vmatpush1.bf16.msra.mxu0 %v4756
  %4838 = vmatprep.subr.bf16.mxu0 0
  %4839 = vmatpush1.bf16.msra.mxu0 %v4757
  %4840 = vmatprep.subr.bf16.mxu0 0
  %4841 = vmatpush1.bf16.msra.mxu0 %v4758
  %4842 = vmatprep.subr.bf16.mxu0 0
  %4843 = vmatpush1.bf16.msra.mxu0 %v4759
  %4844 = vmatprep.subr.bf16.mxu0 0
  %4845 = vmatpush1.bf16.msra.mxu0 %v4760
  %4846 = vmatprep.subr.bf16.mxu0 0
  %4847 = vmatpush1.bf16.msra.mxu0 %v4761
  %4848 = vmatprep.subr.bf16.mxu0 0
  %4849 = vmatpush1.bf16.msra.mxu0 %v4762
  %4850 = vmatprep.subr.bf16.mxu0 0
  %4851 = vmatpush1.bf16.msra.mxu0 0
  %4852 = vmatprep.subr.bf16.mxu0 0
  %4853 = vmatpush1.bf16.msra.mxu0 0
  %4854 = vmatprep.subr.bf16.mxu0 0
  %4855 = vmatpush1.bf16.msra.mxu0 0
  %4856 = vmatprep.subr.bf16.mxu0 0
  %4857 = vmatpush1.bf16.msra.mxu0 0
  %4858 = vmatprep.subr.bf16.mxu0 0
  %4859 = vmatpush1.bf16.msra.mxu0 0
  %4860 = vmatprep.subr.bf16.mxu0 0
  %4861 = vmatpush1.bf16.msra.mxu0 0
  %4862 = vmatprep.subr.bf16.mxu0 0
  %4863 = vmatpush1.bf16.msra.mxu0 0
  %4864 = vmatprep.mubr.bf16.mxu0 %v4789
  %4865 = vmatmul.mubr.bf16.gmra.mrb[0].mxu0 %v4579
  %v4866 = vpop.f32.mrb[0].mxu0
  %v4867 = vadd.f32 %v4826, %v4866
  %v4868 = vpop.f32.mrb[0].mxu0
  %v4869 = vpop.f32.mrb[0].mxu0
  %v4870 = vadd.f32 %v4829, %v4869
  %v4871 = vpop.f32.mrb[0].mxu0
  %4872 = vdwg.mxu0
  %v4873 = vmax.f32 %v4867, 0.0
  %v4874 = vmax.f32 %v4870, 0.0
  %v4875 = vpack.c.bf16 %v4874, %v4873
  %v4876 = vld [vmem:[%s15] sm:$0xff]
  %v4877 = vld [vmem:[%s15 + $0x8] sm:$0xff]
  %v4878 = vld [vmem:[%s15 + $0x10] sm:$0xff]
  %v4879 = vld [vmem:[%s15 + $0x18] sm:$0xff]
  %v4880 = vld [vmem:[%s15 + $0x20] sm:$0xff]
  %v4881 = vld [vmem:[%s15 + $0x28] sm:$0xff]
  %v4882 = vld [vmem:[%s15 + $0x30] sm:$0xff]
  %v4883 = vld [vmem:[%s15 + $0x38] sm:$0xff]
  %v4884 = vld [vmem:[%s15 + $0x40] sm:$0xff]
  %v4885 = vld [vmem:[%s15 + $0x48] sm:$0xff]
  %v4886 = vld [vmem:[%s15 + $0x50] sm:$0xff]
  %v4887 = vld [vmem:[%s15 + $0x58] sm:$0xff]
  %v4888 = vld [vmem:[%s15 + $0x60] sm:$0xff]
  %v4889 = vld [vmem:[%s15 + $0x68] sm:$0xff]
  %v4890 = vld [vmem:[%s15 + $0x70] sm:$0xff]
  %v4891 = vld [vmem:[%s15 + $0x78] sm:$0xff]
  %v4892 = vld [vmem:[%s17] sm:$0xf]
  %v4894 = vlaneseq
  %v4895 = vshrl.u32 %v4894, 7
  %v4896 = vsub.s32 0, %v4895
  %v4897 = vrot.slane %v4892, %v4896
  %v4898 = vlaneseq
  %v4899 = vshrl.u32 %v4898, 7
  %v4900 = vsub.s32 1, %v4899
  %v4901 = vrot.slane %v4892, %v4900
  %v4902 = vlaneseq
  %v4903 = vshrl.u32 %v4902, 7
  %v4904 = vsub.s32 2, %v4903
  %v4905 = vrot.slane %v4892, %v4904
  %v4906 = vlaneseq
  %v4907 = vshrl.u32 %v4906, 7
  %v4908 = vsub.s32 3, %v4907
  %v4909 = vrot.slane %v4892, %v4908
  %v4930 = vunpack.c.l.b16 %v4876
  %v4931 = vunpack.c.h.b16 %v4876
  %v4932 = vunpack.c.l.b16 %v4877
  %v4933 = vunpack.c.h.b16 %v4877
  %v4934 = vunpack.c.l.b16 %v4878
  %v4935 = vunpack.c.h.b16 %v4878
  %v4936 = vunpack.c.l.b16 %v4879
  %v4937 = vunpack.c.h.b16 %v4879
  %v4938 = vunpack.c.l.b16 %v4880
  %v4939 = vunpack.c.h.b16 %v4880
  %v4940 = vunpack.c.l.b16 %v4881
  %v4941 = vunpack.c.h.b16 %v4881
  %v4942 = vunpack.c.l.b16 %v4882
  %v4943 = vunpack.c.h.b16 %v4882
  %v4944 = vunpack.c.l.b16 %v4883
  %v4945 = vunpack.c.h.b16 %v4883
  %v4946 = vunpack.c.l.b16 %v4884
  %v4947 = vunpack.c.h.b16 %v4884
  %v4948 = vunpack.c.l.b16 %v4885
  %v4949 = vunpack.c.h.b16 %v4885
  %v4950 = vunpack.c.l.b16 %v4886
  %v4951 = vunpack.c.h.b16 %v4886
  %v4952 = vunpack.c.l.b16 %v4887
  %v4953 = vunpack.c.h.b16 %v4887
  %v4954 = vunpack.c.l.b16 %v4888
  %v4955 = vunpack.c.h.b16 %v4888
  %v4956 = vunpack.c.l.b16 %v4889
  %v4957 = vunpack.c.h.b16 %v4889
  %v4958 = vunpack.c.l.b16 %v4890
  %v4959 = vunpack.c.h.b16 %v4890
  %v4960 = vunpack.c.l.b16 %v4891
  %v4961 = vunpack.c.h.b16 %v4891
  %v4962 = vpack.c.b16 %v4934, %v4930
  %v4963 = vpack.c.b16 %v4935, %v4931
  %v4964 = vpack.c.b16 %v4936, %v4932
  %v4965 = vpack.c.b16 %v4937, %v4933
  %v4966 = vpack.c.b16 %v4942, %v4938
  %v4967 = vpack.c.b16 %v4943, %v4939
  %v4968 = vpack.c.b16 %v4944, %v4940
  %v4969 = vpack.c.b16 %v4945, %v4941
  %v4970 = vpack.c.b16 %v4950, %v4946
  %v4971 = vpack.c.b16 %v4951, %v4947
  %v4972 = vpack.c.b16 %v4952, %v4948
  %v4973 = vpack.c.b16 %v4953, %v4949
  %v4974 = vpack.c.b16 %v4958, %v4954
  %v4975 = vpack.c.b16 %v4959, %v4955
  %v4976 = vpack.c.b16 %v4960, %v4956
  %v4977 = vpack.c.b16 %v4961, %v4957
  %vm4994 = vcmask 523264
  %v4996 = vsel %vm4994, %v4875, 0
  %4998 = vmatprep.subr.bf16.mxu0 %v4963
  %4999 = vmatpush1.bf16.msra.mxu0 %v4962
  %5000 = vmatprep.subr.bf16.mxu0 %v4967
  %5001 = vmatpush1.bf16.msra.mxu0 %v4966
  %5002 = vmatprep.subr.bf16.mxu0 %v4971
  %5003 = vmatpush1.bf16.msra.mxu0 %v4970
  %5004 = vmatprep.subr.bf16.mxu0 %v4975
  %5005 = vmatpush1.bf16.msra.mxu0 %v4974
  %5006 = vmatprep.subr.bf16.mxu0 0
  %5007 = vmatpush1.bf16.msra.mxu0 0
  %5008 = vmatprep.subr.bf16.mxu0 0
  %5009 = vmatpush1.bf16.msra.mxu0 0
  %5010 = vmatprep.subr.bf16.mxu0 0
  %5011 = vmatpush1.bf16.msra.mxu0 0
  %5012 = vmatprep.subr.bf16.mxu0 0
  %5013 = vmatpush1.bf16.msra.mxu0 0
  %5014 = vmatprep.subr.bf16.mxu0 0
  %5015 = vmatpush1.bf16.msra.mxu0 0
  %5016 = vmatprep.subr.bf16.mxu0 0
  %5017 = vmatpush1.bf16.msra.mxu0 0
  %5018 = vmatprep.subr.bf16.mxu0 0
  %5019 = vmatpush1.bf16.msra.mxu0 0
  %5020 = vmatprep.subr.bf16.mxu0 0
  %5021 = vmatpush1.bf16.msra.mxu0 0
  %5022 = vmatprep.subr.bf16.mxu0 0
  %5023 = vmatpush1.bf16.msra.mxu0 0
  %5024 = vmatprep.subr.bf16.mxu0 0
  %5025 = vmatpush1.bf16.msra.mxu0 0
  %5026 = vmatprep.subr.bf16.mxu0 0
  %5027 = vmatpush1.bf16.msra.mxu0 0
  %5028 = vmatprep.subr.bf16.mxu0 0
  %5029 = vmatpush1.bf16.msra.mxu0 0
  %5030 = vmatprep.mubr.bf16.mxu0 0
  %5031 = vmatmul.mubr.bf16.gmra.mrb[0].mxu0 %v4996
  %v5032 = vpop.f32.mrb[0].mxu0
  %v5033 = vadd.f32 %v4897, %v5032
  %v5034 = vpop.f32.mrb[0].mxu0
  %v5035 = vadd.f32 %v4901, %v5034
  %v5036 = vpop.f32.mrb[0].mxu0
  %v5037 = vadd.f32 %v4897, %v5036
  %v5038 = vpop.f32.mrb[0].mxu0
  %v5039 = vadd.f32 %v4901, %v5038
  %5040 = vdwg.mxu0
  %5041 = vmatprep.subr.bf16.mxu0 %v4965
  %5042 = vmatpush1.bf16.msra.mxu0 %v4964
  %5043 = vmatprep.subr.bf16.mxu0 %v4969
  %5044 = vmatpush1.bf16.msra.mxu0 %v4968
  %5045 = vmatprep.subr.bf16.mxu0 %v4973
  %5046 = vmatpush1.bf16.msra.mxu0 %v4972
  %5047 = vmatprep.subr.bf16.mxu0 %v4977
  %5048 = vmatpush1.bf16.msra.mxu0 %v4976
  %5049 = vmatprep.subr.bf16.mxu0 0
  %5050 = vmatpush1.bf16.msra.mxu0 0
  %5051 = vmatprep.subr.bf16.mxu0 0
  %5052 = vmatpush1.bf16.msra.mxu0 0
  %5053 = vmatprep.subr.bf16.mxu0 0
  %5054 = vmatpush1.bf16.msra.mxu0 0
  %5055 = vmatprep.subr.bf16.mxu0 0
  %5056 = vmatpush1.bf16.msra.mxu0 0
  %5057 = vmatprep.subr.bf16.mxu0 0
  %5058 = vmatpush1.bf16.msra.mxu0 0
  %5059 = vmatprep.subr.bf16.mxu0 0
  %5060 = vmatpush1.bf16.msra.mxu0 0
  %5061 = vmatprep.subr.bf16.mxu0 0
  %5062 = vmatpush1.bf16.msra.mxu0 0
  %5063 = vmatprep.subr.bf16.mxu0 0
  %5064 = vmatpush1.bf16.msra.mxu0 0
  %5065 = vmatprep.subr.bf16.mxu0 0
  %5066 = vmatpush1.bf16.msra.mxu0 0
  %5067 = vmatprep.subr.bf16.mxu0 0
  %5068 = vmatpush1.bf16.msra.mxu0 0
  %5069 = vmatprep.subr.bf16.mxu0 0
  %5070 = vmatpush1.bf16.msra.mxu0 0
  %5071 = vmatprep.subr.bf16.mxu0 0
  %5072 = vmatpush1.bf16.msra.mxu0 0
  %5073 = vmatprep.mubr.bf16.mxu0 0
  %5074 = vmatmul.mubr.bf16.gmra.mrb[0].mxu0 %v4996
  %v5075 = vpop.f32.mrb[0].mxu0
  %v5076 = vadd.f32 %v4905, %v5075
  %v5077 = vpop.f32.mrb[0].mxu0
  %v5078 = vadd.f32 %v4909, %v5077
  %v5079 = vpop.f32.mrb[0].mxu0
  %v5080 = vadd.f32 %v4905, %v5079
  %v5081 = vpop.f32.mrb[0].mxu0
  %v5082 = vadd.f32 %v4909, %v5081
  %5083 = vdwg.mxu0
  %v5084 = vadd.f32 %v4569, %v5033
  %v5085 = vadd.f32 %v4570, %v5035
  %v5086 = vadd.f32 %v4571, %v5076
  %v5087 = vadd.f32 %v4572, %v5078
  %v5088 = vadd.f32 %v4573, %v5037
  %v5089 = vadd.f32 %v4574, %v5039
  %v5090 = vadd.f32 %v4575, %v5080
  %v5091 = vadd.f32 %v4576, %v5082
  %v5092 = vadd.f32 %v5084, %v5085
  %v5093 = vadd.f32 %v5092, %v5086
  %v5094 = vsel %vm2001, %v5087, 0.0
  %v5095 = vadd.f32 %v5093, %v5094
  %5096 = vadd.xlane.f32.xlu0 %v5095
  %v5097 = vpop.xlane.xlu0 %5096
  %v5098 = vsel %vm2582, %v5088, 0.0
  %v5099 = vsel %vm2582, %v5089, 0.0
  %v5100 = vadd.f32 %v5098, %v5099
  %v5101 = vsel %vm2582, %v5090, 0.0
  %v5102 = vadd.f32 %v5100, %v5101
  %v5103 = vsel %vm4464, %v5091, 0.0
  %v5104 = vadd.f32 %v5102, %v5103
  %5105 = vadd.xlane.f32.xlu0 %v5104
  %v5106 = vpop.xlane.xlu0 %5105
  %v5107 = vmul.f32 %v5097, %v4469
  %v5108 = vmul.f32 %v5106, %v4469
  %v5109 = vsub.f32 %v5084, %v5107
  %v5110 = vsub.f32 %v5085, %v5107
  %v5111 = vsub.f32 %v5086, %v5107
  %v5112 = vsub.f32 %v5087, %v5107
  %v5113 = vsub.f32 %v5088, %v5108
  %v5114 = vsub.f32 %v5089, %v5108
  %v5115 = vsub.f32 %v5090, %v5108
  %v5116 = vsub.f32 %v5091, %v5108
  %v5117 = vmul.f32 %v5109, %v5109
  %v5118 = vmul.f32 %v5110, %v5110
  %v5119 = vmul.f32 %v5111, %v5111
  %v5120 = vmul.f32 %v5112, %v5112
  %v5121 = vmul.f32 %v5113, %v5113
  %v5122 = vmul.f32 %v5114, %v5114
  %v5123 = vmul.f32 %v5115, %v5115
  %v5124 = vmul.f32 %v5116, %v5116
  %v5125 = vadd.f32 %v5117, %v5118
  %v5126 = vadd.f32 %v5125, %v5119
  %v5127 = vsel %vm2001, %v5120, 0.0
  %v5128 = vadd.f32 %v5126, %v5127
  %5129 = vadd.xlane.f32.xlu0 %v5128
  %v5130 = vpop.xlane.xlu0 %5129
  %v5131 = vsel %vm2582, %v5121, 0.0
  %v5132 = vsel %vm2582, %v5122, 0.0
  %v5133 = vadd.f32 %v5131, %v5132
  %v5134 = vsel %vm2582, %v5123, 0.0
  %v5135 = vadd.f32 %v5133, %v5134
  %v5136 = vsel %vm4464, %v5124, 0.0
  %v5137 = vadd.f32 %v5135, %v5136
  %5138 = vadd.xlane.f32.xlu0 %v5137
  %v5139 = vpop.xlane.xlu0 %5138
  %v5140 = vmul.f32 %v5130, %v4469
  %v5141 = vmul.f32 %v5139, %v4469
  %v5142 = vadd.f32 %v5140, 1e-05
  %v5143 = vadd.f32 %v5141, 1e-05
  %v5144 = vrsqrt.pop %v5142
  %v5145 = vrsqrt.pop %v5143
  %v5146 = vmul.f32 %v5109, %v5144
  %v5147 = vmul.f32 %v5110, %v5144
  %v5148 = vmul.f32 %v5111, %v5144
  %v5149 = vmul.f32 %v5112, %v5144
  %v5150 = vmul.f32 %v5113, %v5145
  %v5151 = vmul.f32 %v5114, %v5145
  %v5152 = vmul.f32 %v5115, %v5145
  %v5153 = vmul.f32 %v5116, %v5145
  %v5154 = vld [vmem:[%s23] sm:$0xf]
  %v5156 = vlaneseq
  %v5157 = vshrl.u32 %v5156, 7
  %v5158 = vsub.s32 0, %v5157
  %v5159 = vrot.slane %v5154, %v5158
  %v5160 = vlaneseq
  %v5161 = vshrl.u32 %v5160, 7
  %v5162 = vsub.s32 1, %v5161
  %v5163 = vrot.slane %v5154, %v5162
  %v5164 = vlaneseq
  %v5165 = vshrl.u32 %v5164, 7
  %v5166 = vsub.s32 2, %v5165
  %v5167 = vrot.slane %v5154, %v5166
  %v5168 = vlaneseq
  %v5169 = vshrl.u32 %v5168, 7
  %v5170 = vsub.s32 3, %v5169
  %v5171 = vrot.slane %v5154, %v5170
  %v5176 = vmul.f32 %v5146, %v5159
  %v5177 = vmul.f32 %v5147, %v5163
  %v5178 = vmul.f32 %v5148, %v5167
  %v5179 = vmul.f32 %v5149, %v5171
  %v5180 = vmul.f32 %v5150, %v5159
  %v5181 = vmul.f32 %v5151, %v5163
  %v5182 = vmul.f32 %v5152, %v5167
  %v5183 = vmul.f32 %v5153, %v5171
  %v5184 = vld [vmem:[%s25] sm:$0xf]
  %v5186 = vlaneseq
  %v5187 = vshrl.u32 %v5186, 7
  %v5188 = vsub.s32 0, %v5187
  %v5189 = vrot.slane %v5184, %v5188
  %v5190 = vlaneseq
  %v5191 = vshrl.u32 %v5190, 7
  %v5192 = vsub.s32 1, %v5191
  %v5193 = vrot.slane %v5184, %v5192
  %v5194 = vlaneseq
  %v5195 = vshrl.u32 %v5194, 7
  %v5196 = vsub.s32 2, %v5195
  %v5197 = vrot.slane %v5184, %v5196
  %v5198 = vlaneseq
  %v5199 = vshrl.u32 %v5198, 7
  %v5200 = vsub.s32 3, %v5199
  %v5201 = vrot.slane %v5184, %v5200
  %v5206 = vadd.f32 %v5176, %v5189
  %v5207 = vadd.f32 %v5177, %v5193
  %v5208 = vadd.f32 %v5178, %v5197
  %v5209 = vadd.f32 %v5179, %v5201
  %v5210 = vadd.f32 %v5180, %v5189
  %v5211 = vadd.f32 %v5181, %v5193
  %v5212 = vadd.f32 %v5182, %v5197
  %v5213 = vadd.f32 %v5183, %v5201
  %v5214 = vpack.c.bf16 %v5210, %v5206
  %v5215 = vpack.c.bf16 %v5211, %v5207
  %v5216 = vpack.c.bf16 %v5212, %v5208
  %v5217 = vpack.c.bf16 %v5213, %v5209
  %v5218 = vld [vmem:[%s27] sm:$0xff]
  %v5219 = vld [vmem:[%s27 + $0x8] sm:$0xff]
  %v5220 = vld [vmem:[%s27 + $0x10] sm:$0xff]
  %v5221 = vld [vmem:[%s27 + $0x18] sm:$0xff]
  %v5222 = vld [vmem:[%s27 + $0x20] sm:$0xff]
  %v5223 = vld [vmem:[%s27 + $0x28] sm:$0xff]
  %v5224 = vld [vmem:[%s27 + $0x30] sm:$0xff]
  %v5225 = vld [vmem:[%s27 + $0x38] sm:$0xff]
  %v5226 = vld [vmem:[%s27 + $0x40] sm:$0xff]
  %v5227 = vld [vmem:[%s27 + $0x48] sm:$0xff]
  %v5228 = vld [vmem:[%s27 + $0x50] sm:$0xff]
  %v5229 = vld [vmem:[%s27 + $0x58] sm:$0xff]
  %v5230 = vld [vmem:[%s27 + $0x60] sm:$0xff]
  %v5231 = vld [vmem:[%s27 + $0x68] sm:$0xff]
  %v5232 = vld [vmem:[%s27 + $0x70] sm:$0xff]
  %v5233 = vld [vmem:[%s27 + $0x78] sm:$0xff]
  %v5234 = vld [vmem:[%s27 + $0x80] sm:$0xff]
  %v5235 = vld [vmem:[%s27 + $0x88] sm:$0xff]
  %v5236 = vld [vmem:[%s27 + $0x90] sm:$0xff]
  %v5237 = vld [vmem:[%s27 + $0x98] sm:$0xff]
  %v5238 = vld [vmem:[%s27 + $0xa0] sm:$0xff]
  %v5239 = vld [vmem:[%s27 + $0xa8] sm:$0xff]
  %v5240 = vld [vmem:[%s27 + $0xb0] sm:$0xff]
  %v5241 = vld [vmem:[%s27 + $0xb8] sm:$0xff]
  %v5242 = vld [vmem:[%s27 + $0xc0] sm:$0xff]
  %v5243 = vld [vmem:[%s27 + $0xc8] sm:$0xff]
  %v5244 = vld [vmem:[%s27 + $0xd0] sm:$0xff]
  %v5245 = vld [vmem:[%s27 + $0xd8] sm:$0xff]
  %v5246 = vld [vmem:[%s27 + $0xe0] sm:$0xff]
  %v5247 = vld [vmem:[%s27 + $0xe8] sm:$0xff]
  %v5248 = vld [vmem:[%s27 + $0xf0] sm:$0xff]
  %v5249 = vld [vmem:[%s27 + $0xf8] sm:$0xff]
  %v5250 = vld [vmem:[%s27 + $0x100] sm:$0xff]
  %v5251 = vld [vmem:[%s27 + $0x108] sm:$0xff]
  %v5252 = vld [vmem:[%s27 + $0x110] sm:$0xff]
  %v5253 = vld [vmem:[%s27 + $0x118] sm:$0xff]
  %v5254 = vld [vmem:[%s27 + $0x120] sm:$0xff]
  %v5255 = vld [vmem:[%s27 + $0x128] sm:$0xff]
  %v5256 = vld [vmem:[%s27 + $0x130] sm:$0xff]
  %v5257 = vld [vmem:[%s27 + $0x138] sm:$0xff]
  %v5258 = vld [vmem:[%s27 + $0x140] sm:$0xff]
  %v5259 = vld [vmem:[%s27 + $0x148] sm:$0xff]
  %v5260 = vld [vmem:[%s27 + $0x150] sm:$0xff]
  %v5261 = vld [vmem:[%s27 + $0x158] sm:$0xff]
  %v5262 = vld [vmem:[%s27 + $0x160] sm:$0xff]
  %v5263 = vld [vmem:[%s27 + $0x168] sm:$0xff]
  %v5264 = vld [vmem:[%s27 + $0x170] sm:$0xff]
  %v5265 = vld [vmem:[%s27 + $0x178] sm:$0xff]
  %v5266 = vld [vmem:[%s27 + $0x180] sm:$0xff]
  %v5267 = vld [vmem:[%s27 + $0x188] sm:$0xff]
  %v5268 = vld [vmem:[%s27 + $0x190] sm:$0xff]
  %v5269 = vld [vmem:[%s27 + $0x198] sm:$0xff]
  %v5270 = vld [vmem:[%s27 + $0x1a0] sm:$0xff]
  %v5271 = vld [vmem:[%s27 + $0x1a8] sm:$0xff]
  %v5272 = vld [vmem:[%s27 + $0x1b0] sm:$0xff]
  %v5273 = vld [vmem:[%s27 + $0x1b8] sm:$0xff]
  %v5274 = vld [vmem:[%s27 + $0x1c0] sm:$0xff]
  %v5275 = vld [vmem:[%s27 + $0x1c8] sm:$0xff]
  %v5276 = vld [vmem:[%s27 + $0x1d0] sm:$0xff]
  %v5277 = vld [vmem:[%s27 + $0x1d8] sm:$0xff]
  %v5278 = vld [vmem:[%s27 + $0x1e0] sm:$0xff]
  %v5279 = vld [vmem:[%s27 + $0x1e8] sm:$0xff]
  %v5280 = vld [vmem:[%s27 + $0x1f0] sm:$0xff]
  %v5281 = vld [vmem:[%s27 + $0x1f8] sm:$0xff]
  %v5282 = vld [vmem:[%s27 + $0x200] sm:$0xff]
  %v5283 = vld [vmem:[%s27 + $0x208] sm:$0xff]
  %v5284 = vld [vmem:[%s27 + $0x210] sm:$0xff]
  %v5285 = vld [vmem:[%s27 + $0x218] sm:$0xff]
  %v5286 = vld [vmem:[%s27 + $0x220] sm:$0xff]
  %v5287 = vld [vmem:[%s27 + $0x228] sm:$0xff]
  %v5288 = vld [vmem:[%s27 + $0x230] sm:$0xff]
  %v5289 = vld [vmem:[%s27 + $0x238] sm:$0xff]
  %v5290 = vld [vmem:[%s27 + $0x240] sm:$0xff]
  %v5291 = vld [vmem:[%s27 + $0x248] sm:$0xff]
  %v5292 = vld [vmem:[%s27 + $0x250] sm:$0xff]
  %v5293 = vld [vmem:[%s27 + $0x258] sm:$0xff]
  %v5294 = vld [vmem:[%s27 + $0x260] sm:$0xff]
  %v5295 = vld [vmem:[%s27 + $0x268] sm:$0xff]
  %v5296 = vld [vmem:[%s27 + $0x270] sm:$0xff]
  %v5297 = vld [vmem:[%s27 + $0x278] sm:$0xff]
  %v5298 = vld [vmem:[%s27 + $0x280] sm:$0xff]
  %v5299 = vld [vmem:[%s27 + $0x288] sm:$0xff]
  %v5300 = vld [vmem:[%s27 + $0x290] sm:$0xff]
  %v5301 = vld [vmem:[%s27 + $0x298] sm:$0xff]
  %v5302 = vld [vmem:[%s27 + $0x2a0] sm:$0xff]
  %v5303 = vld [vmem:[%s27 + $0x2a8] sm:$0xff]
  %v5304 = vld [vmem:[%s27 + $0x2b0] sm:$0xff]
  %v5305 = vld [vmem:[%s27 + $0x2b8] sm:$0xff]
  %v5306 = vld [vmem:[%s27 + $0x2c0] sm:$0xff]
  %v5307 = vld [vmem:[%s27 + $0x2c8] sm:$0xff]
  %v5308 = vld [vmem:[%s27 + $0x2d0] sm:$0xff]
  %v5309 = vld [vmem:[%s27 + $0x2d8] sm:$0xff]
  %v5310 = vld [vmem:[%s27 + $0x2e0] sm:$0xff]
  %v5311 = vld [vmem:[%s27 + $0x2e8] sm:$0xff]
  %v5312 = vld [vmem:[%s27 + $0x2f0] sm:$0xff]
  %v5313 = vld [vmem:[%s27 + $0x2f8] sm:$0xff]
  %v5314 = vld [vmem:[%s27 + $0x300] sm:$0xff]
  %v5315 = vld [vmem:[%s27 + $0x308] sm:$0xff]
  %v5316 = vld [vmem:[%s27 + $0x310] sm:$0xff]
  %v5317 = vld [vmem:[%s27 + $0x318] sm:$0xff]
  %v5318 = vld [vmem:[%s27 + $0x320] sm:$0xff]
  %v5319 = vld [vmem:[%s27 + $0x328] sm:$0xff]
  %v5320 = vld [vmem:[%s27 + $0x330] sm:$0xff]
  %v5321 = vld [vmem:[%s27 + $0x338] sm:$0xff]
  %v5322 = vld [vmem:[%s27 + $0x340] sm:$0xff]
  %v5323 = vld [vmem:[%s27 + $0x348] sm:$0xff]
  %v5324 = vld [vmem:[%s27 + $0x350] sm:$0xff]
  %v5325 = vld [vmem:[%s27 + $0x358] sm:$0xff]
  %v5326 = vld [vmem:[%s27 + $0x360] sm:$0xff]
  %v5327 = vld [vmem:[%s27 + $0x368] sm:$0xff]
  %v5328 = vld [vmem:[%s27 + $0x370] sm:$0xff]
  %v5329 = vld [vmem:[%s27 + $0x378] sm:$0xff]
  %v5330 = vld [vmem:[%s27 + $0x380] sm:$0xff]
  %v5331 = vld [vmem:[%s27 + $0x388] sm:$0xff]
  %v5332 = vld [vmem:[%s27 + $0x390] sm:$0xff]
  %v5333 = vld [vmem:[%s27 + $0x398] sm:$0xff]
  %v5334 = vld [vmem:[%s27 + $0x3a0] sm:$0xff]
  %v5335 = vld [vmem:[%s27 + $0x3a8] sm:$0xff]
  %v5336 = vld [vmem:[%s27 + $0x3b0] sm:$0xff]
  %v5337 = vld [vmem:[%s27 + $0x3b8] sm:$0xff]
  %v5338 = vld [vmem:[%s27 + $0x3c0] sm:$0xff]
  %v5339 = vld [vmem:[%s27 + $0x3c8] sm:$0xff]
  %v5340 = vld [vmem:[%s27 + $0x3d0] sm:$0xff]
  %v5341 = vld [vmem:[%s27 + $0x3d8] sm:$0xff]
  %v5342 = vld [vmem:[%s27 + $0x3e0] sm:$0xff]
  %v5343 = vld [vmem:[%s27 + $0x3e8] sm:$0xff]
  %v5344 = vld [vmem:[%s27 + $0x3f0] sm:$0xff]
  %v5345 = vld [vmem:[%s27 + $0x3f8] sm:$0xff]
  %v5346 = vld [vmem:[%s27 + $0x400] sm:$0xff]
  %v5347 = vld [vmem:[%s27 + $0x408] sm:$0xff]
  %v5348 = vld [vmem:[%s27 + $0x410] sm:$0xff]
  %v5349 = vld [vmem:[%s27 + $0x418] sm:$0xff]
  %v5350 = vld [vmem:[%s27 + $0x420] sm:$0xff]
  %v5351 = vld [vmem:[%s27 + $0x428] sm:$0xff]
  %v5352 = vld [vmem:[%s27 + $0x430] sm:$0xff]
  %v5353 = vld [vmem:[%s27 + $0x438] sm:$0xff]
  %v5354 = vld [vmem:[%s27 + $0x440] sm:$0xff]
  %v5355 = vld [vmem:[%s27 + $0x448] sm:$0xff]
  %v5356 = vld [vmem:[%s27 + $0x450] sm:$0xff]
  %v5357 = vld [vmem:[%s27 + $0x458] sm:$0xff]
  %v5358 = vld [vmem:[%s27 + $0x460] sm:$0xff]
  %v5359 = vld [vmem:[%s27 + $0x468] sm:$0xff]
  %v5360 = vld [vmem:[%s27 + $0x470] sm:$0xff]
  %v5361 = vld [vmem:[%s27 + $0x478] sm:$0xff]
  %v5362 = vld [vmem:[%s27 + $0x480] sm:$0xff]
  %v5363 = vld [vmem:[%s27 + $0x488] sm:$0xff]
  %v5364 = vld [vmem:[%s27 + $0x490] sm:$0xff]
  %v5365 = vld [vmem:[%s27 + $0x498] sm:$0xff]
  %v5366 = vld [vmem:[%s27 + $0x4a0] sm:$0xff]
  %v5367 = vld [vmem:[%s27 + $0x4a8] sm:$0xff]
  %v5368 = vld [vmem:[%s27 + $0x4b0] sm:$0xff]
  %v5369 = vld [vmem:[%s27 + $0x4b8] sm:$0xff]
  %v5370 = vld [vmem:[%s27 + $0x4c0] sm:$0xff]
  %v5371 = vld [vmem:[%s27 + $0x4c8] sm:$0xff]
  %v5372 = vld [vmem:[%s27 + $0x4d0] sm:$0xff]
  %v5373 = vld [vmem:[%s27 + $0x4d8] sm:$0xff]
  %v5374 = vld [vmem:[%s27 + $0x4e0] sm:$0xff]
  %v5375 = vld [vmem:[%s27 + $0x4e8] sm:$0xff]
  %v5376 = vld [vmem:[%s27 + $0x4f0] sm:$0xff]
  %v5377 = vld [vmem:[%s27 + $0x4f8] sm:$0xff]
  %v5378 = vld [vmem:[%s27 + $0x500] sm:$0xff]
  %v5379 = vld [vmem:[%s27 + $0x508] sm:$0xff]
  %v5380 = vld [vmem:[%s27 + $0x510] sm:$0xff]
  %v5381 = vld [vmem:[%s27 + $0x518] sm:$0xff]
  %v5382 = vld [vmem:[%s27 + $0x520] sm:$0xff]
  %v5383 = vld [vmem:[%s27 + $0x528] sm:$0xff]
  %v5384 = vld [vmem:[%s27 + $0x530] sm:$0xff]
  %v5385 = vld [vmem:[%s27 + $0x538] sm:$0xff]
  %v5386 = vld [vmem:[%s27 + $0x540] sm:$0xff]
  %v5387 = vld [vmem:[%s27 + $0x548] sm:$0xff]
  %v5388 = vld [vmem:[%s27 + $0x550] sm:$0xff]
  %v5389 = vld [vmem:[%s27 + $0x558] sm:$0xff]
  %v5390 = vld [vmem:[%s27 + $0x560] sm:$0xff]
  %v5391 = vld [vmem:[%s27 + $0x568] sm:$0xff]
  %v5392 = vld [vmem:[%s27 + $0x570] sm:$0xff]
  %v5393 = vld [vmem:[%s27 + $0x578] sm:$0xff]
  %v5394 = vld [vmem:[%s27 + $0x580] sm:$0xff]
  %v5395 = vld [vmem:[%s27 + $0x588] sm:$0xff]
  %v5396 = vld [vmem:[%s27 + $0x590] sm:$0xff]
  %v5397 = vld [vmem:[%s27 + $0x598] sm:$0xff]
  %v5398 = vld [vmem:[%s27 + $0x5a0] sm:$0xff]
  %v5399 = vld [vmem:[%s27 + $0x5a8] sm:$0xff]
  %v5400 = vld [vmem:[%s27 + $0x5b0] sm:$0xff]
  %v5401 = vld [vmem:[%s27 + $0x5b8] sm:$0xff]
  %v5402 = vld [vmem:[%s27 + $0x5c0] sm:$0xff]
  %v5403 = vld [vmem:[%s27 + $0x5c8] sm:$0xff]
  %v5404 = vld [vmem:[%s27 + $0x5d0] sm:$0xff]
  %v5405 = vld [vmem:[%s27 + $0x5d8] sm:$0xff]
  %v5406 = vld [vmem:[%s27 + $0x5e0] sm:$0xff]
  %v5407 = vld [vmem:[%s27 + $0x5e8] sm:$0xff]
  %v5408 = vld [vmem:[%s27 + $0x5f0] sm:$0xff]
  %v5409 = vld [vmem:[%s27 + $0x5f8] sm:$0xff]
  %v5410 = vld [vmem:[%s27 + $0x600] sm:$0xff]
  %v5411 = vld [vmem:[%s27 + $0x608] sm:$0xff]
  %v5412 = vld [vmem:[%s27 + $0x610] sm:$0xff]
  %v5413 = vld [vmem:[%s27 + $0x618] sm:$0xff]
  %v5414 = vld [vmem:[%s27 + $0x620] sm:$0xff]
  %v5415 = vld [vmem:[%s27 + $0x628] sm:$0xff]
  %v5416 = vld [vmem:[%s27 + $0x630] sm:$0xff]
  %v5417 = vld [vmem:[%s27 + $0x638] sm:$0xff]
  %v5418 = vld [vmem:[%s27 + $0x640] sm:$0xff]
  %v5419 = vld [vmem:[%s27 + $0x648] sm:$0xff]
  %v5420 = vld [vmem:[%s27 + $0x650] sm:$0xff]
  %v5421 = vld [vmem:[%s27 + $0x658] sm:$0xff]
  %v5422 = vld [vmem:[%s27 + $0x660] sm:$0xff]
  %v5423 = vld [vmem:[%s27 + $0x668] sm:$0xff]
  %v5424 = vld [vmem:[%s27 + $0x670] sm:$0xff]
  %v5425 = vld [vmem:[%s27 + $0x678] sm:$0xff]
  %v5426 = vld [vmem:[%s27 + $0x680] sm:$0xff]
  %v5427 = vld [vmem:[%s27 + $0x688] sm:$0xff]
  %v5428 = vld [vmem:[%s27 + $0x690] sm:$0xff]
  %v5429 = vld [vmem:[%s27 + $0x698] sm:$0xff]
  %v5430 = vld [vmem:[%s27 + $0x6a0] sm:$0xff]
  %v5431 = vld [vmem:[%s27 + $0x6a8] sm:$0xff]
  %v5432 = vld [vmem:[%s27 + $0x6b0] sm:$0xff]
  %v5433 = vld [vmem:[%s27 + $0x6b8] sm:$0xff]
  %v5434 = vld [vmem:[%s27 + $0x6c0] sm:$0xff]
  %v5435 = vld [vmem:[%s27 + $0x6c8] sm:$0xff]
  %v5436 = vld [vmem:[%s27 + $0x6d0] sm:$0xff]
  %v5437 = vld [vmem:[%s27 + $0x6d8] sm:$0xff]
  %v5438 = vld [vmem:[%s27 + $0x6e0] sm:$0xff]
  %v5439 = vld [vmem:[%s27 + $0x6e8] sm:$0xff]
  %v5440 = vld [vmem:[%s27 + $0x6f0] sm:$0xff]
  %v5441 = vld [vmem:[%s27 + $0x6f8] sm:$0xff]
  %v5442 = vld [vmem:[%s27 + $0x700] sm:$0xff]
  %v5443 = vld [vmem:[%s27 + $0x708] sm:$0xff]
  %v5444 = vld [vmem:[%s27 + $0x710] sm:$0xff]
  %v5445 = vld [vmem:[%s27 + $0x718] sm:$0xff]
  %v5446 = vld [vmem:[%s27 + $0x720] sm:$0xff]
  %v5447 = vld [vmem:[%s27 + $0x728] sm:$0xff]
  %v5448 = vld [vmem:[%s27 + $0x730] sm:$0xff]
  %v5449 = vld [vmem:[%s27 + $0x738] sm:$0xff]
  %v5450 = vld [vmem:[%s27 + $0x740] sm:$0xff]
  %v5451 = vld [vmem:[%s27 + $0x748] sm:$0xff]
  %v5452 = vld [vmem:[%s27 + $0x750] sm:$0xff]
  %v5453 = vld [vmem:[%s27 + $0x758] sm:$0xff]
  %v5454 = vld [vmem:[%s27 + $0x760] sm:$0xff]
  %v5455 = vld [vmem:[%s27 + $0x768] sm:$0xff]
  %v5456 = vld [vmem:[%s27 + $0x770] sm:$0xff]
  %v5457 = vld [vmem:[%s27 + $0x778] sm:$0xff]
  %v5458 = vld [vmem:[%s27 + $0x780] sm:$0xff]
  %v5459 = vld [vmem:[%s27 + $0x788] sm:$0xff]
  %v5460 = vld [vmem:[%s27 + $0x790] sm:$0xff]
  %v5461 = vld [vmem:[%s27 + $0x798] sm:$0xff]
  %v5462 = vld [vmem:[%s27 + $0x7a0] sm:$0xff]
  %v5463 = vld [vmem:[%s27 + $0x7a8] sm:$0xff]
  %v5464 = vld [vmem:[%s27 + $0x7b0] sm:$0xff]
  %v5465 = vld [vmem:[%s27 + $0x7b8] sm:$0xff]
  %v5466 = vld [vmem:[%s27 + $0x7c0] sm:$0xff]
  %v5467 = vld [vmem:[%s27 + $0x7c8] sm:$0xff]
  %v5468 = vld [vmem:[%s27 + $0x7d0] sm:$0xff]
  %v5469 = vld [vmem:[%s27 + $0x7d8] sm:$0xff]
  %v5470 = vld [vmem:[%s27 + $0x7e0] sm:$0xff]
  %v5471 = vld [vmem:[%s27 + $0x7e8] sm:$0xff]
  %v5472 = vld [vmem:[%s27 + $0x7f0] sm:$0xff]
  %v5473 = vld [vmem:[%s27 + $0x7f8] sm:$0xff]
  %v5474 = vld [vmem:[%s27 + $0x800] sm:$0xff]
  %v5475 = vld [vmem:[%s27 + $0x808] sm:$0xff]
  %v5476 = vld [vmem:[%s27 + $0x810] sm:$0xff]
  %v5477 = vld [vmem:[%s27 + $0x818] sm:$0xff]
  %v5478 = vld [vmem:[%s27 + $0x820] sm:$0xff]
  %v5479 = vld [vmem:[%s27 + $0x828] sm:$0xff]
  %v5480 = vld [vmem:[%s27 + $0x830] sm:$0xff]
  %v5481 = vld [vmem:[%s27 + $0x838] sm:$0xff]
  %v5482 = vld [vmem:[%s27 + $0x840] sm:$0xff]
  %v5483 = vld [vmem:[%s27 + $0x848] sm:$0xff]
  %v5484 = vld [vmem:[%s27 + $0x850] sm:$0xff]
  %v5485 = vld [vmem:[%s27 + $0x858] sm:$0xff]
  %v5486 = vld [vmem:[%s27 + $0x860] sm:$0xff]
  %v5487 = vld [vmem:[%s27 + $0x868] sm:$0xff]
  %v5488 = vld [vmem:[%s27 + $0x870] sm:$0xff]
  %v5489 = vld [vmem:[%s27 + $0x878] sm:$0xff]
  %v5490 = vld [vmem:[%s27 + $0x880] sm:$0xff]
  %v5491 = vld [vmem:[%s27 + $0x888] sm:$0xff]
  %v5492 = vld [vmem:[%s27 + $0x890] sm:$0xff]
  %v5493 = vld [vmem:[%s27 + $0x898] sm:$0xff]
  %v5494 = vld [vmem:[%s27 + $0x8a0] sm:$0xff]
  %v5495 = vld [vmem:[%s27 + $0x8a8] sm:$0xff]
  %v5496 = vld [vmem:[%s27 + $0x8b0] sm:$0xff]
  %v5497 = vld [vmem:[%s27 + $0x8b8] sm:$0xff]
  %v5498 = vld [vmem:[%s27 + $0x8c0] sm:$0xff]
  %v5499 = vld [vmem:[%s27 + $0x8c8] sm:$0xff]
  %v5500 = vld [vmem:[%s27 + $0x8d0] sm:$0xff]
  %v5501 = vld [vmem:[%s27 + $0x8d8] sm:$0xff]
  %v5502 = vld [vmem:[%s27 + $0x8e0] sm:$0xff]
  %v5503 = vld [vmem:[%s27 + $0x8e8] sm:$0xff]
  %v5504 = vld [vmem:[%s27 + $0x8f0] sm:$0xff]
  %v5505 = vld [vmem:[%s27 + $0x8f8] sm:$0xff]
  %v5506 = vld [vmem:[%s27 + $0x900] sm:$0xff]
  %v5507 = vld [vmem:[%s27 + $0x908] sm:$0xff]
  %v5508 = vld [vmem:[%s27 + $0x910] sm:$0xff]
  %v5509 = vld [vmem:[%s27 + $0x918] sm:$0xff]
  %v5510 = vld [vmem:[%s27 + $0x920] sm:$0xff]
  %v5511 = vld [vmem:[%s27 + $0x928] sm:$0xff]
  %v5512 = vld [vmem:[%s27 + $0x930] sm:$0xff]
  %v5513 = vld [vmem:[%s27 + $0x938] sm:$0xff]
  %v5514 = vld [vmem:[%s27 + $0x940] sm:$0xff]
  %v5515 = vld [vmem:[%s27 + $0x948] sm:$0xff]
  %v5516 = vld [vmem:[%s27 + $0x950] sm:$0xff]
  %v5517 = vld [vmem:[%s27 + $0x958] sm:$0xff]
  %v5518 = vld [vmem:[%s29] sm:$0xff]
  %v5519 = vld [vmem:[%s29 + $0x8] sm:$0xf]
  %v5522 = vlaneseq
  %v5523 = vshrl.u32 %v5522, 7
  %v5524 = vsub.s32 0, %v5523
  %v5525 = vrot.slane %v5518, %v5524
  %v5526 = vlaneseq
  %v5527 = vshrl.u32 %v5526, 7
  %v5528 = vsub.s32 1, %v5527
  %v5529 = vrot.slane %v5518, %v5528
  %v5530 = vlaneseq
  %v5531 = vshrl.u32 %v5530, 7
  %v5532 = vsub.s32 2, %v5531
  %v5533 = vrot.slane %v5518, %v5532
  %v5534 = vlaneseq
  %v5535 = vshrl.u32 %v5534, 7
  %v5536 = vsub.s32 3, %v5535
  %v5537 = vrot.slane %v5518, %v5536
  %v5538 = vlaneseq
  %v5539 = vshrl.u32 %v5538, 7
  %v5540 = vsub.s32 4, %v5539
  %v5541 = vrot.slane %v5518, %v5540
  %v5542 = vlaneseq
  %v5543 = vshrl.u32 %v5542, 7
  %v5544 = vsub.s32 5, %v5543
  %v5545 = vrot.slane %v5518, %v5544
  %v5546 = vlaneseq
  %v5547 = vshrl.u32 %v5546, 7
  %v5548 = vsub.s32 6, %v5547
  %v5549 = vrot.slane %v5518, %v5548
  %v5550 = vlaneseq
  %v5551 = vshrl.u32 %v5550, 7
  %v5552 = vsub.s32 7, %v5551
  %v5553 = vrot.slane %v5518, %v5552
  %v5554 = vlaneseq
  %v5555 = vshrl.u32 %v5554, 7
  %v5556 = vsub.s32 0, %v5555
  %v5557 = vrot.slane %v5519, %v5556
  %v5558 = vlaneseq
  %v5559 = vshrl.u32 %v5558, 7
  %v5560 = vsub.s32 1, %v5559
  %v5561 = vrot.slane %v5519, %v5560
  %v5562 = vlaneseq
  %v5563 = vshrl.u32 %v5562, 7
  %v5564 = vsub.s32 2, %v5563
  %v5565 = vrot.slane %v5519, %v5564
  %v5566 = vlaneseq
  %v5567 = vshrl.u32 %v5566, 7
  %v5568 = vsub.s32 3, %v5567
  %v5569 = vrot.slane %v5519, %v5568
  %v5882 = vunpack.c.l.b16 %v5218
  %v5883 = vunpack.c.h.b16 %v5218
  %v5884 = vunpack.c.l.b16 %v5219
  %v5885 = vunpack.c.h.b16 %v5219
  %v5886 = vunpack.c.l.b16 %v5220
  %v5887 = vunpack.c.h.b16 %v5220
  %v5888 = vunpack.c.l.b16 %v5221
  %v5889 = vunpack.c.h.b16 %v5221
  %v5890 = vunpack.c.l.b16 %v5222
  %v5891 = vunpack.c.h.b16 %v5222
  %v5892 = vunpack.c.l.b16 %v5223
  %v5893 = vunpack.c.h.b16 %v5223
  %v5894 = vunpack.c.l.b16 %v5224
  %v5895 = vunpack.c.h.b16 %v5224
  %v5896 = vunpack.c.l.b16 %v5225
  %v5897 = vunpack.c.h.b16 %v5225
  %v5898 = vunpack.c.l.b16 %v5226
  %v5899 = vunpack.c.h.b16 %v5226
  %v5900 = vunpack.c.l.b16 %v5227
  %v5901 = vunpack.c.h.b16 %v5227
  %v5902 = vunpack.c.l.b16 %v5228
  %v5903 = vunpack.c.h.b16 %v5228
  %v5904 = vunpack.c.l.b16 %v5229
  %v5905 = vunpack.c.h.b16 %v5229
  %v5906 = vunpack.c.l.b16 %v5230
  %v5907 = vunpack.c.h.b16 %v5230
  %v5908 = vunpack.c.l.b16 %v5231
  %v5909 = vunpack.c.h.b16 %v5231
  %v5910 = vunpack.c.l.b16 %v5232
  %v5911 = vunpack.c.h.b16 %v5232
  %v5912 = vunpack.c.l.b16 %v5233
  %v5913 = vunpack.c.h.b16 %v5233
  %v5914 = vunpack.c.l.b16 %v5234
  %v5915 = vunpack.c.h.b16 %v5234
  %v5916 = vunpack.c.l.b16 %v5235
  %v5917 = vunpack.c.h.b16 %v5235
  %v5918 = vunpack.c.l.b16 %v5236
  %v5919 = vunpack.c.h.b16 %v5236
  %v5920 = vunpack.c.l.b16 %v5237
  %v5921 = vunpack.c.h.b16 %v5237
  %v5922 = vunpack.c.l.b16 %v5238
  %v5923 = vunpack.c.h.b16 %v5238
  %v5924 = vunpack.c.l.b16 %v5239
  %v5925 = vunpack.c.h.b16 %v5239
  %v5926 = vunpack.c.l.b16 %v5240
  %v5927 = vunpack.c.h.b16 %v5240
  %v5928 = vunpack.c.l.b16 %v5241
  %v5929 = vunpack.c.h.b16 %v5241
  %v5930 = vunpack.c.l.b16 %v5242
  %v5931 = vunpack.c.h.b16 %v5242
  %v5932 = vunpack.c.l.b16 %v5243
  %v5933 = vunpack.c.h.b16 %v5243
  %v5934 = vunpack.c.l.b16 %v5244
  %v5935 = vunpack.c.h.b16 %v5244
  %v5936 = vunpack.c.l.b16 %v5245
  %v5937 = vunpack.c.h.b16 %v5245
  %v5938 = vunpack.c.l.b16 %v5246
  %v5939 = vunpack.c.h.b16 %v5246
  %v5940 = vunpack.c.l.b16 %v5247
  %v5941 = vunpack.c.h.b16 %v5247
  %v5942 = vunpack.c.l.b16 %v5248
  %v5943 = vunpack.c.h.b16 %v5248
  %v5944 = vunpack.c.l.b16 %v5249
  %v5945 = vunpack.c.h.b16 %v5249
  %v5946 = vunpack.c.l.b16 %v5250
  %v5947 = vunpack.c.h.b16 %v5250
  %v5948 = vunpack.c.l.b16 %v5251
  %v5949 = vunpack.c.h.b16 %v5251
  %v5950 = vunpack.c.l.b16 %v5252
  %v5951 = vunpack.c.h.b16 %v5252
  %v5952 = vunpack.c.l.b16 %v5253
  %v5953 = vunpack.c.h.b16 %v5253
  %v5954 = vunpack.c.l.b16 %v5254
  %v5955 = vunpack.c.h.b16 %v5254
  %v5956 = vunpack.c.l.b16 %v5255
  %v5957 = vunpack.c.h.b16 %v5255
  %v5958 = vunpack.c.l.b16 %v5256
  %v5959 = vunpack.c.h.b16 %v5256
  %v5960 = vunpack.c.l.b16 %v5257
  %v5961 = vunpack.c.h.b16 %v5257
  %v5962 = vunpack.c.l.b16 %v5258
  %v5963 = vunpack.c.h.b16 %v5258
  %v5964 = vunpack.c.l.b16 %v5259
  %v5965 = vunpack.c.h.b16 %v5259
  %v5966 = vunpack.c.l.b16 %v5260
  %v5967 = vunpack.c.h.b16 %v5260
  %v5968 = vunpack.c.l.b16 %v5261
  %v5969 = vunpack.c.h.b16 %v5261
  %v5970 = vunpack.c.l.b16 %v5262
  %v5971 = vunpack.c.h.b16 %v5262
  %v5972 = vunpack.c.l.b16 %v5263
  %v5973 = vunpack.c.h.b16 %v5263
  %v5974 = vunpack.c.l.b16 %v5264
  %v5975 = vunpack.c.h.b16 %v5264
  %v5976 = vunpack.c.l.b16 %v5265
  %v5977 = vunpack.c.h.b16 %v5265
  %v5978 = vunpack.c.l.b16 %v5266
  %v5979 = vunpack.c.h.b16 %v5266
  %v5980 = vunpack.c.l.b16 %v5267
  %v5981 = vunpack.c.h.b16 %v5267
  %v5982 = vunpack.c.l.b16 %v5268
  %v5983 = vunpack.c.h.b16 %v5268
  %v5984 = vunpack.c.l.b16 %v5269
  %v5985 = vunpack.c.h.b16 %v5269
  %v5986 = vunpack.c.l.b16 %v5270
  %v5987 = vunpack.c.h.b16 %v5270
  %v5988 = vunpack.c.l.b16 %v5271
  %v5989 = vunpack.c.h.b16 %v5271
  %v5990 = vunpack.c.l.b16 %v5272
  %v5991 = vunpack.c.h.b16 %v5272
  %v5992 = vunpack.c.l.b16 %v5273
  %v5993 = vunpack.c.h.b16 %v5273
  %v5994 = vunpack.c.l.b16 %v5274
  %v5995 = vunpack.c.h.b16 %v5274
  %v5996 = vunpack.c.l.b16 %v5275
  %v5997 = vunpack.c.h.b16 %v5275
  %v5998 = vunpack.c.l.b16 %v5276
  %v5999 = vunpack.c.h.b16 %v5276
  %v6000 = vunpack.c.l.b16 %v5277
  %v6001 = vunpack.c.h.b16 %v5277
  %v6002 = vunpack.c.l.b16 %v5278
  %v6003 = vunpack.c.h.b16 %v5278
  %v6004 = vunpack.c.l.b16 %v5279
  %v6005 = vunpack.c.h.b16 %v5279
  %v6006 = vunpack.c.l.b16 %v5280
  %v6007 = vunpack.c.h.b16 %v5280
  %v6008 = vunpack.c.l.b16 %v5281
  %v6009 = vunpack.c.h.b16 %v5281
  %v6010 = vunpack.c.l.b16 %v5282
  %v6011 = vunpack.c.h.b16 %v5282
  %v6012 = vunpack.c.l.b16 %v5283
  %v6013 = vunpack.c.h.b16 %v5283
  %v6014 = vunpack.c.l.b16 %v5284
  %v6015 = vunpack.c.h.b16 %v5284
  %v6016 = vunpack.c.l.b16 %v5285
  %v6017 = vunpack.c.h.b16 %v5285
  %v6018 = vunpack.c.l.b16 %v5286
  %v6019 = vunpack.c.h.b16 %v5286
  %v6020 = vunpack.c.l.b16 %v5287
  %v6021 = vunpack.c.h.b16 %v5287
  %v6022 = vunpack.c.l.b16 %v5288
  %v6023 = vunpack.c.h.b16 %v5288
  %v6024 = vunpack.c.l.b16 %v5289
  %v6025 = vunpack.c.h.b16 %v5289
  %v6026 = vunpack.c.l.b16 %v5290
  %v6027 = vunpack.c.h.b16 %v5290
  %v6028 = vunpack.c.l.b16 %v5291
  %v6029 = vunpack.c.h.b16 %v5291
  %v6030 = vunpack.c.l.b16 %v5292
  %v6031 = vunpack.c.h.b16 %v5292
  %v6032 = vunpack.c.l.b16 %v5293
  %v6033 = vunpack.c.h.b16 %v5293
  %v6034 = vunpack.c.l.b16 %v5294
  %v6035 = vunpack.c.h.b16 %v5294
  %v6036 = vunpack.c.l.b16 %v5295
  %v6037 = vunpack.c.h.b16 %v5295
  %v6038 = vunpack.c.l.b16 %v5296
  %v6039 = vunpack.c.h.b16 %v5296
  %v6040 = vunpack.c.l.b16 %v5297
  %v6041 = vunpack.c.h.b16 %v5297
  %v6042 = vunpack.c.l.b16 %v5298
  %v6043 = vunpack.c.h.b16 %v5298
  %v6044 = vunpack.c.l.b16 %v5299
  %v6045 = vunpack.c.h.b16 %v5299
  %v6046 = vunpack.c.l.b16 %v5300
  %v6047 = vunpack.c.h.b16 %v5300
  %v6048 = vunpack.c.l.b16 %v5301
  %v6049 = vunpack.c.h.b16 %v5301
  %v6050 = vunpack.c.l.b16 %v5302
  %v6051 = vunpack.c.h.b16 %v5302
  %v6052 = vunpack.c.l.b16 %v5303
  %v6053 = vunpack.c.h.b16 %v5303
  %v6054 = vunpack.c.l.b16 %v5304
  %v6055 = vunpack.c.h.b16 %v5304
  %v6056 = vunpack.c.l.b16 %v5305
  %v6057 = vunpack.c.h.b16 %v5305
  %v6058 = vunpack.c.l.b16 %v5306
  %v6059 = vunpack.c.h.b16 %v5306
  %v6060 = vunpack.c.l.b16 %v5307
  %v6061 = vunpack.c.h.b16 %v5307
  %v6062 = vunpack.c.l.b16 %v5308
  %v6063 = vunpack.c.h.b16 %v5308
  %v6064 = vunpack.c.l.b16 %v5309
  %v6065 = vunpack.c.h.b16 %v5309
  %v6066 = vunpack.c.l.b16 %v5310
  %v6067 = vunpack.c.h.b16 %v5310
  %v6068 = vunpack.c.l.b16 %v5311
  %v6069 = vunpack.c.h.b16 %v5311
  %v6070 = vunpack.c.l.b16 %v5312
  %v6071 = vunpack.c.h.b16 %v5312
  %v6072 = vunpack.c.l.b16 %v5313
  %v6073 = vunpack.c.h.b16 %v5313
  %v6074 = vunpack.c.l.b16 %v5314
  %v6075 = vunpack.c.h.b16 %v5314
  %v6076 = vunpack.c.l.b16 %v5315
  %v6077 = vunpack.c.h.b16 %v5315
  %v6078 = vunpack.c.l.b16 %v5316
  %v6079 = vunpack.c.h.b16 %v5316
  %v6080 = vunpack.c.l.b16 %v5317
  %v6081 = vunpack.c.h.b16 %v5317
  %v6082 = vunpack.c.l.b16 %v5318
  %v6083 = vunpack.c.h.b16 %v5318
  %v6084 = vunpack.c.l.b16 %v5319
  %v6085 = vunpack.c.h.b16 %v5319
  %v6086 = vunpack.c.l.b16 %v5320
  %v6087 = vunpack.c.h.b16 %v5320
  %v6088 = vunpack.c.l.b16 %v5321
  %v6089 = vunpack.c.h.b16 %v5321
  %v6090 = vunpack.c.l.b16 %v5322
  %v6091 = vunpack.c.h.b16 %v5322
  %v6092 = vunpack.c.l.b16 %v5323
  %v6093 = vunpack.c.h.b16 %v5323
  %v6094 = vunpack.c.l.b16 %v5324
  %v6095 = vunpack.c.h.b16 %v5324
  %v6096 = vunpack.c.l.b16 %v5325
  %v6097 = vunpack.c.h.b16 %v5325
  %v6098 = vunpack.c.l.b16 %v5326
  %v6099 = vunpack.c.h.b16 %v5326
  %v6100 = vunpack.c.l.b16 %v5327
  %v6101 = vunpack.c.h.b16 %v5327
  %v6102 = vunpack.c.l.b16 %v5328
  %v6103 = vunpack.c.h.b16 %v5328
  %v6104 = vunpack.c.l.b16 %v5329
  %v6105 = vunpack.c.h.b16 %v5329
  %v6106 = vunpack.c.l.b16 %v5330
  %v6107 = vunpack.c.h.b16 %v5330
  %v6108 = vunpack.c.l.b16 %v5331
  %v6109 = vunpack.c.h.b16 %v5331
  %v6110 = vunpack.c.l.b16 %v5332
  %v6111 = vunpack.c.h.b16 %v5332
  %v6112 = vunpack.c.l.b16 %v5333
  %v6113 = vunpack.c.h.b16 %v5333
  %v6114 = vunpack.c.l.b16 %v5334
  %v6115 = vunpack.c.h.b16 %v5334
  %v6116 = vunpack.c.l.b16 %v5335
  %v6117 = vunpack.c.h.b16 %v5335
  %v6118 = vunpack.c.l.b16 %v5336
  %v6119 = vunpack.c.h.b16 %v5336
  %v6120 = vunpack.c.l.b16 %v5337
  %v6121 = vunpack.c.h.b16 %v5337
  %v6122 = vunpack.c.l.b16 %v5338
  %v6123 = vunpack.c.h.b16 %v5338
  %v6124 = vunpack.c.l.b16 %v5339
  %v6125 = vunpack.c.h.b16 %v5339
  %v6126 = vunpack.c.l.b16 %v5340
  %v6127 = vunpack.c.h.b16 %v5340
  %v6128 = vunpack.c.l.b16 %v5341
  %v6129 = vunpack.c.h.b16 %v5341
  %v6130 = vunpack.c.l.b16 %v5342
  %v6131 = vunpack.c.h.b16 %v5342
  %v6132 = vunpack.c.l.b16 %v5343
  %v6133 = vunpack.c.h.b16 %v5343
  %v6134 = vunpack.c.l.b16 %v5344
  %v6135 = vunpack.c.h.b16 %v5344
  %v6136 = vunpack.c.l.b16 %v5345
  %v6137 = vunpack.c.h.b16 %v5345
  %v6138 = vunpack.c.l.b16 %v5346
  %v6139 = vunpack.c.h.b16 %v5346
  %v6140 = vunpack.c.l.b16 %v5347
  %v6141 = vunpack.c.h.b16 %v5347
  %v6142 = vunpack.c.l.b16 %v5348
  %v6143 = vunpack.c.h.b16 %v5348
  %v6144 = vunpack.c.l.b16 %v5349
  %v6145 = vunpack.c.h.b16 %v5349
  %v6146 = vunpack.c.l.b16 %v5350
  %v6147 = vunpack.c.h.b16 %v5350
  %v6148 = vunpack.c.l.b16 %v5351
  %v6149 = vunpack.c.h.b16 %v5351
  %v6150 = vunpack.c.l.b16 %v5352
  %v6151 = vunpack.c.h.b16 %v5352
  %v6152 = vunpack.c.l.b16 %v5353
  %v6153 = vunpack.c.h.b16 %v5353
  %v6154 = vunpack.c.l.b16 %v5354
  %v6155 = vunpack.c.h.b16 %v5354
  %v6156 = vunpack.c.l.b16 %v5355
  %v6157 = vunpack.c.h.b16 %v5355
  %v6158 = vunpack.c.l.b16 %v5356
  %v6159 = vunpack.c.h.b16 %v5356
  %v6160 = vunpack.c.l.b16 %v5357
  %v6161 = vunpack.c.h.b16 %v5357
  %v6162 = vunpack.c.l.b16 %v5358
  %v6163 = vunpack.c.h.b16 %v5358
  %v6164 = vunpack.c.l.b16 %v5359
  %v6165 = vunpack.c.h.b16 %v5359
  %v6166 = vunpack.c.l.b16 %v5360
  %v6167 = vunpack.c.h.b16 %v5360
  %v6168 = vunpack.c.l.b16 %v5361
  %v6169 = vunpack.c.h.b16 %v5361
  %v6170 = vunpack.c.l.b16 %v5362
  %v6171 = vunpack.c.h.b16 %v5362
  %v6172 = vunpack.c.l.b16 %v5363
  %v6173 = vunpack.c.h.b16 %v5363
  %v6174 = vunpack.c.l.b16 %v5364
  %v6175 = vunpack.c.h.b16 %v5364
  %v6176 = vunpack.c.l.b16 %v5365
  %v6177 = vunpack.c.h.b16 %v5365
  %v6178 = vunpack.c.l.b16 %v5366
  %v6179 = vunpack.c.h.b16 %v5366
  %v6180 = vunpack.c.l.b16 %v5367
  %v6181 = vunpack.c.h.b16 %v5367
  %v6182 = vunpack.c.l.b16 %v5368
  %v6183 = vunpack.c.h.b16 %v5368
  %v6184 = vunpack.c.l.b16 %v5369
  %v6185 = vunpack.c.h.b16 %v5369
  %v6186 = vunpack.c.l.b16 %v5370
  %v6187 = vunpack.c.h.b16 %v5370
  %v6188 = vunpack.c.l.b16 %v5371
  %v6189 = vunpack.c.h.b16 %v5371
  %v6190 = vunpack.c.l.b16 %v5372
  %v6191 = vunpack.c.h.b16 %v5372
  %v6192 = vunpack.c.l.b16 %v5373
  %v6193 = vunpack.c.h.b16 %v5373
  %v6194 = vunpack.c.l.b16 %v5374
  %v6195 = vunpack.c.h.b16 %v5374
  %v6196 = vunpack.c.l.b16 %v5375
  %v6197 = vunpack.c.h.b16 %v5375
  %v6198 = vunpack.c.l.b16 %v5376
  %v6199 = vunpack.c.h.b16 %v5376
  %v6200 = vunpack.c.l.b16 %v5377
  %v6201 = vunpack.c.h.b16 %v5377
  %v6202 = vunpack.c.l.b16 %v5378
  %v6203 = vunpack.c.h.b16 %v5378
  %v6204 = vunpack.c.l.b16 %v5379
  %v6205 = vunpack.c.h.b16 %v5379
  %v6206 = vunpack.c.l.b16 %v5380
  %v6207 = vunpack.c.h.b16 %v5380
  %v6208 = vunpack.c.l.b16 %v5381
  %v6209 = vunpack.c.h.b16 %v5381
  %v6210 = vunpack.c.l.b16 %v5382
  %v6211 = vunpack.c.h.b16 %v5382
  %v6212 = vunpack.c.l.b16 %v5383
  %v6213 = vunpack.c.h.b16 %v5383
  %v6214 = vunpack.c.l.b16 %v5384
  %v6215 = vunpack.c.h.b16 %v5384
  %v6216 = vunpack.c.l.b16 %v5385
  %v6217 = vunpack.c.h.b16 %v5385
  %v6218 = vunpack.c.l.b16 %v5386
  %v6219 = vunpack.c.h.b16 %v5386
  %v6220 = vunpack.c.l.b16 %v5387
  %v6221 = vunpack.c.h.b16 %v5387
  %v6222 = vunpack.c.l.b16 %v5388
  %v6223 = vunpack.c.h.b16 %v5388
  %v6224 = vunpack.c.l.b16 %v5389
  %v6225 = vunpack.c.h.b16 %v5389
  %v6226 = vunpack.c.l.b16 %v5390
  %v6227 = vunpack.c.h.b16 %v5390
  %v6228 = vunpack.c.l.b16 %v5391
  %v6229 = vunpack.c.h.b16 %v5391
  %v6230 = vunpack.c.l.b16 %v5392
  %v6231 = vunpack.c.h.b16 %v5392
  %v6232 = vunpack.c.l.b16 %v5393
  %v6233 = vunpack.c.h.b16 %v5393
  %v6234 = vunpack.c.l.b16 %v5394
  %v6235 = vunpack.c.h.b16 %v5394
  %v6236 = vunpack.c.l.b16 %v5395
  %v6237 = vunpack.c.h.b16 %v5395
  %v6238 = vunpack.c.l.b16 %v5396
  %v6239 = vunpack.c.h.b16 %v5396
  %v6240 = vunpack.c.l.b16 %v5397
  %v6241 = vunpack.c.h.b16 %v5397
  %v6242 = vunpack.c.l.b16 %v5398
  %v6243 = vunpack.c.h.b16 %v5398
  %v6244 = vunpack.c.l.b16 %v5399
  %v6245 = vunpack.c.h.b16 %v5399
  %v6246 = vunpack.c.l.b16 %v5400
  %v6247 = vunpack.c.h.b16 %v5400
  %v6248 = vunpack.c.l.b16 %v5401
  %v6249 = vunpack.c.h.b16 %v5401
  %v6250 = vunpack.c.l.b16 %v5402
  %v6251 = vunpack.c.h.b16 %v5402
  %v6252 = vunpack.c.l.b16 %v5403
  %v6253 = vunpack.c.h.b16 %v5403
  %v6254 = vunpack.c.l.b16 %v5404
  %v6255 = vunpack.c.h.b16 %v5404
  %v6256 = vunpack.c.l.b16 %v5405
  %v6257 = vunpack.c.h.b16 %v5405
  %v6258 = vunpack.c.l.b16 %v5406
  %v6259 = vunpack.c.h.b16 %v5406
  %v6260 = vunpack.c.l.b16 %v5407
  %v6261 = vunpack.c.h.b16 %v5407
  %v6262 = vunpack.c.l.b16 %v5408
  %v6263 = vunpack.c.h.b16 %v5408
  %v6264 = vunpack.c.l.b16 %v5409
  %v6265 = vunpack.c.h.b16 %v5409
  %v6266 = vunpack.c.l.b16 %v5410
  %v6267 = vunpack.c.h.b16 %v5410
  %v6268 = vunpack.c.l.b16 %v5411
  %v6269 = vunpack.c.h.b16 %v5411
  %v6270 = vunpack.c.l.b16 %v5412
  %v6271 = vunpack.c.h.b16 %v5412
  %v6272 = vunpack.c.l.b16 %v5413
  %v6273 = vunpack.c.h.b16 %v5413
  %v6274 = vunpack.c.l.b16 %v5414
  %v6275 = vunpack.c.h.b16 %v5414
  %v6276 = vunpack.c.l.b16 %v5415
  %v6277 = vunpack.c.h.b16 %v5415
  %v6278 = vunpack.c.l.b16 %v5416
  %v6279 = vunpack.c.h.b16 %v5416
  %v6280 = vunpack.c.l.b16 %v5417
  %v6281 = vunpack.c.h.b16 %v5417
  %v6282 = vunpack.c.l.b16 %v5418
  %v6283 = vunpack.c.h.b16 %v5418
  %v6284 = vunpack.c.l.b16 %v5419
  %v6285 = vunpack.c.h.b16 %v5419
  %v6286 = vunpack.c.l.b16 %v5420
  %v6287 = vunpack.c.h.b16 %v5420
  %v6288 = vunpack.c.l.b16 %v5421
  %v6289 = vunpack.c.h.b16 %v5421
  %v6290 = vunpack.c.l.b16 %v5422
  %v6291 = vunpack.c.h.b16 %v5422
  %v6292 = vunpack.c.l.b16 %v5423
  %v6293 = vunpack.c.h.b16 %v5423
  %v6294 = vunpack.c.l.b16 %v5424
  %v6295 = vunpack.c.h.b16 %v5424
  %v6296 = vunpack.c.l.b16 %v5425
  %v6297 = vunpack.c.h.b16 %v5425
  %v6298 = vunpack.c.l.b16 %v5426
  %v6299 = vunpack.c.h.b16 %v5426
  %v6300 = vunpack.c.l.b16 %v5427
  %v6301 = vunpack.c.h.b16 %v5427
  %v6302 = vunpack.c.l.b16 %v5428
  %v6303 = vunpack.c.h.b16 %v5428
  %v6304 = vunpack.c.l.b16 %v5429
  %v6305 = vunpack.c.h.b16 %v5429
  %v6306 = vunpack.c.l.b16 %v5430
  %v6307 = vunpack.c.h.b16 %v5430
  %v6308 = vunpack.c.l.b16 %v5431
  %v6309 = vunpack.c.h.b16 %v5431
  %v6310 = vunpack.c.l.b16 %v5432
  %v6311 = vunpack.c.h.b16 %v5432
  %v6312 = vunpack.c.l.b16 %v5433
  %v6313 = vunpack.c.h.b16 %v5433
  %v6314 = vunpack.c.l.b16 %v5434
  %v6315 = vunpack.c.h.b16 %v5434
  %v6316 = vunpack.c.l.b16 %v5435
  %v6317 = vunpack.c.h.b16 %v5435
  %v6318 = vunpack.c.l.b16 %v5436
  %v6319 = vunpack.c.h.b16 %v5436
  %v6320 = vunpack.c.l.b16 %v5437
  %v6321 = vunpack.c.h.b16 %v5437
  %v6322 = vunpack.c.l.b16 %v5438
  %v6323 = vunpack.c.h.b16 %v5438
  %v6324 = vunpack.c.l.b16 %v5439
  %v6325 = vunpack.c.h.b16 %v5439
  %v6326 = vunpack.c.l.b16 %v5440
  %v6327 = vunpack.c.h.b16 %v5440
  %v6328 = vunpack.c.l.b16 %v5441
  %v6329 = vunpack.c.h.b16 %v5441
  %v6330 = vunpack.c.l.b16 %v5442
  %v6331 = vunpack.c.h.b16 %v5442
  %v6332 = vunpack.c.l.b16 %v5443
  %v6333 = vunpack.c.h.b16 %v5443
  %v6334 = vunpack.c.l.b16 %v5444
  %v6335 = vunpack.c.h.b16 %v5444
  %v6336 = vunpack.c.l.b16 %v5445
  %v6337 = vunpack.c.h.b16 %v5445
  %v6338 = vunpack.c.l.b16 %v5446
  %v6339 = vunpack.c.h.b16 %v5446
  %v6340 = vunpack.c.l.b16 %v5447
  %v6341 = vunpack.c.h.b16 %v5447
  %v6342 = vunpack.c.l.b16 %v5448
  %v6343 = vunpack.c.h.b16 %v5448
  %v6344 = vunpack.c.l.b16 %v5449
  %v6345 = vunpack.c.h.b16 %v5449
  %v6346 = vunpack.c.l.b16 %v5450
  %v6347 = vunpack.c.h.b16 %v5450
  %v6348 = vunpack.c.l.b16 %v5451
  %v6349 = vunpack.c.h.b16 %v5451
  %v6350 = vunpack.c.l.b16 %v5452
  %v6351 = vunpack.c.h.b16 %v5452
  %v6352 = vunpack.c.l.b16 %v5453
  %v6353 = vunpack.c.h.b16 %v5453
  %v6354 = vunpack.c.l.b16 %v5454
  %v6355 = vunpack.c.h.b16 %v5454
  %v6356 = vunpack.c.l.b16 %v5455
  %v6357 = vunpack.c.h.b16 %v5455
  %v6358 = vunpack.c.l.b16 %v5456
  %v6359 = vunpack.c.h.b16 %v5456
  %v6360 = vunpack.c.l.b16 %v5457
  %v6361 = vunpack.c.h.b16 %v5457
  %v6362 = vunpack.c.l.b16 %v5458
  %v6363 = vunpack.c.h.b16 %v5458
  %v6364 = vunpack.c.l.b16 %v5459
  %v6365 = vunpack.c.h.b16 %v5459
  %v6366 = vunpack.c.l.b16 %v5460
  %v6367 = vunpack.c.h.b16 %v5460
  %v6368 = vunpack.c.l.b16 %v5461
  %v6369 = vunpack.c.h.b16 %v5461
  %v6370 = vunpack.c.l.b16 %v5462
  %v6371 = vunpack.c.h.b16 %v5462
  %v6372 = vunpack.c.l.b16 %v5463
  %v6373 = vunpack.c.h.b16 %v5463
  %v6374 = vunpack.c.l.b16 %v5464
  %v6375 = vunpack.c.h.b16 %v5464
  %v6376 = vunpack.c.l.b16 %v5465
  %v6377 = vunpack.c.h.b16 %v5465
  %v6378 = vunpack.c.l.b16 %v5466
  %v6379 = vunpack.c.h.b16 %v5466
  %v6380 = vunpack.c.l.b16 %v5467
  %v6381 = vunpack.c.h.b16 %v5467
  %v6382 = vunpack.c.l.b16 %v5468
  %v6383 = vunpack.c.h.b16 %v5468
  %v6384 = vunpack.c.l.b16 %v5469
  %v6385 = vunpack.c.h.b16 %v5469
  %v6386 = vunpack.c.l.b16 %v5470
  %v6387 = vunpack.c.h.b16 %v5470
  %v6388 = vunpack.c.l.b16 %v5471
  %v6389 = vunpack.c.h.b16 %v5471
  %v6390 = vunpack.c.l.b16 %v5472
  %v6391 = vunpack.c.h.b16 %v5472
  %v6392 = vunpack.c.l.b16 %v5473
  %v6393 = vunpack.c.h.b16 %v5473
  %v6394 = vunpack.c.l.b16 %v5474
  %v6395 = vunpack.c.h.b16 %v5474
  %v6396 = vunpack.c.l.b16 %v5475
  %v6397 = vunpack.c.h.b16 %v5475
  %v6398 = vunpack.c.l.b16 %v5476
  %v6399 = vunpack.c.h.b16 %v5476
  %v6400 = vunpack.c.l.b16 %v5477
  %v6401 = vunpack.c.h.b16 %v5477
  %v6402 = vunpack.c.l.b16 %v5478
  %v6403 = vunpack.c.h.b16 %v5478
  %v6404 = vunpack.c.l.b16 %v5479
  %v6405 = vunpack.c.h.b16 %v5479
  %v6406 = vunpack.c.l.b16 %v5480
  %v6407 = vunpack.c.h.b16 %v5480
  %v6408 = vunpack.c.l.b16 %v5481
  %v6409 = vunpack.c.h.b16 %v5481
  %v6410 = vunpack.c.l.b16 %v5482
  %v6411 = vunpack.c.h.b16 %v5482
  %v6412 = vunpack.c.l.b16 %v5483
  %v6413 = vunpack.c.h.b16 %v5483
  %v6414 = vunpack.c.l.b16 %v5484
  %v6415 = vunpack.c.h.b16 %v5484
  %v6416 = vunpack.c.l.b16 %v5485
  %v6417 = vunpack.c.h.b16 %v5485
  %v6418 = vunpack.c.l.b16 %v5486
  %v6419 = vunpack.c.h.b16 %v5486
  %v6420 = vunpack.c.l.b16 %v5487
  %v6421 = vunpack.c.h.b16 %v5487
  %v6422 = vunpack.c.l.b16 %v5488
  %v6423 = vunpack.c.h.b16 %v5488
  %v6424 = vunpack.c.l.b16 %v5489
  %v6425 = vunpack.c.h.b16 %v5489
  %v6426 = vunpack.c.l.b16 %v5490
  %v6427 = vunpack.c.h.b16 %v5490
  %v6428 = vunpack.c.l.b16 %v5491
  %v6429 = vunpack.c.h.b16 %v5491
  %v6430 = vunpack.c.l.b16 %v5492
  %v6431 = vunpack.c.h.b16 %v5492
  %v6432 = vunpack.c.l.b16 %v5493
  %v6433 = vunpack.c.h.b16 %v5493
  %v6434 = vunpack.c.l.b16 %v5494
  %v6435 = vunpack.c.h.b16 %v5494
  %v6436 = vunpack.c.l.b16 %v5495
  %v6437 = vunpack.c.h.b16 %v5495
  %v6438 = vunpack.c.l.b16 %v5496
  %v6439 = vunpack.c.h.b16 %v5496
  %v6440 = vunpack.c.l.b16 %v5497
  %v6441 = vunpack.c.h.b16 %v5497
  %v6442 = vunpack.c.l.b16 %v5498
  %v6443 = vunpack.c.h.b16 %v5498
  %v6444 = vunpack.c.l.b16 %v5499
  %v6445 = vunpack.c.h.b16 %v5499
  %v6446 = vunpack.c.l.b16 %v5500
  %v6447 = vunpack.c.h.b16 %v5500
  %v6448 = vunpack.c.l.b16 %v5501
  %v6449 = vunpack.c.h.b16 %v5501
  %v6450 = vunpack.c.l.b16 %v5502
  %v6451 = vunpack.c.h.b16 %v5502
  %v6452 = vunpack.c.l.b16 %v5503
  %v6453 = vunpack.c.h.b16 %v5503
  %v6454 = vunpack.c.l.b16 %v5504
  %v6455 = vunpack.c.h.b16 %v5504
  %v6456 = vunpack.c.l.b16 %v5505
  %v6457 = vunpack.c.h.b16 %v5505
  %v6458 = vunpack.c.l.b16 %v5506
  %v6459 = vunpack.c.h.b16 %v5506
  %v6460 = vunpack.c.l.b16 %v5507
  %v6461 = vunpack.c.h.b16 %v5507
  %v6462 = vunpack.c.l.b16 %v5508
  %v6463 = vunpack.c.h.b16 %v5508
  %v6464 = vunpack.c.l.b16 %v5509
  %v6465 = vunpack.c.h.b16 %v5509
  %v6466 = vunpack.c.l.b16 %v5510
  %v6467 = vunpack.c.h.b16 %v5510
  %v6468 = vunpack.c.l.b16 %v5511
  %v6469 = vunpack.c.h.b16 %v5511
  %v6470 = vunpack.c.l.b16 %v5512
  %v6471 = vunpack.c.h.b16 %v5512
  %v6472 = vunpack.c.l.b16 %v5513
  %v6473 = vunpack.c.h.b16 %v5513
  %v6474 = vunpack.c.l.b16 %v5514
  %v6475 = vunpack.c.h.b16 %v5514
  %v6476 = vunpack.c.l.b16 %v5515
  %v6477 = vunpack.c.h.b16 %v5515
  %v6478 = vunpack.c.l.b16 %v5516
  %v6479 = vunpack.c.h.b16 %v5516
  %v6480 = vunpack.c.l.b16 %v5517
  %v6481 = vunpack.c.h.b16 %v5517
  %v6482 = vpack.c.b16 %v5894, %v5882
  %v6483 = vpack.c.b16 %v5895, %v5883
  %v6484 = vpack.c.b16 %v5896, %v5884
  %v6485 = vpack.c.b16 %v5897, %v5885
  %v6486 = vpack.c.b16 %v5898, %v5886
  %v6487 = vpack.c.b16 %v5899, %v5887
  %v6488 = vpack.c.b16 %v5900, %v5888
  %v6489 = vpack.c.b16 %v5901, %v5889
  %v6490 = vpack.c.b16 %v5902, %v5890
  %v6491 = vpack.c.b16 %v5903, %v5891
  %v6492 = vpack.c.b16 %v5904, %v5892
  %v6493 = vpack.c.b16 %v5905, %v5893
  %v6494 = vpack.c.b16 %v5918, %v5906
  %v6495 = vpack.c.b16 %v5919, %v5907
  %v6496 = vpack.c.b16 %v5920, %v5908
  %v6497 = vpack.c.b16 %v5921, %v5909
  %v6498 = vpack.c.b16 %v5922, %v5910
  %v6499 = vpack.c.b16 %v5923, %v5911
  %v6500 = vpack.c.b16 %v5924, %v5912
  %v6501 = vpack.c.b16 %v5925, %v5913
  %v6502 = vpack.c.b16 %v5926, %v5914
  %v6503 = vpack.c.b16 %v5927, %v5915
  %v6504 = vpack.c.b16 %v5928, %v5916
  %v6505 = vpack.c.b16 %v5929, %v5917
  %v6506 = vpack.c.b16 %v5942, %v5930
  %v6507 = vpack.c.b16 %v5943, %v5931
  %v6508 = vpack.c.b16 %v5944, %v5932
  %v6509 = vpack.c.b16 %v5945, %v5933
  %v6510 = vpack.c.b16 %v5946, %v5934
  %v6511 = vpack.c.b16 %v5947, %v5935
  %v6512 = vpack.c.b16 %v5948, %v5936
  %v6513 = vpack.c.b16 %v5949, %v5937
  %v6514 = vpack.c.b16 %v5950, %v5938
  %v6515 = vpack.c.b16 %v5951, %v5939
  %v6516 = vpack.c.b16 %v5952, %v5940
  %v6517 = vpack.c.b16 %v5953, %v5941
  %v6518 = vpack.c.b16 %v5966, %v5954
  %v6519 = vpack.c.b16 %v5967, %v5955
  %v6520 = vpack.c.b16 %v5968, %v5956
  %v6521 = vpack.c.b16 %v5969, %v5957
  %v6522 = vpack.c.b16 %v5970, %v5958
  %v6523 = vpack.c.b16 %v5971, %v5959
  %v6524 = vpack.c.b16 %v5972, %v5960
  %v6525 = vpack.c.b16 %v5973, %v5961
  %v6526 = vpack.c.b16 %v5974, %v5962
  %v6527 = vpack.c.b16 %v5975, %v5963
  %v6528 = vpack.c.b16 %v5976, %v5964
  %v6529 = vpack.c.b16 %v5977, %v5965
  %v6530 = vpack.c.b16 %v5990, %v5978
  %v6531 = vpack.c.b16 %v5991, %v5979
  %v6532 = vpack.c.b16 %v5992, %v5980
  %v6533 = vpack.c.b16 %v5993, %v5981
  %v6534 = vpack.c.b16 %v5994, %v5982
  %v6535 = vpack.c.b16 %v5995, %v5983
  %v6536 = vpack.c.b16 %v5996, %v5984
  %v6537 = vpack.c.b16 %v5997, %v5985
  %v6538 = vpack.c.b16 %v5998, %v5986
  %v6539 = vpack.c.b16 %v5999, %v5987
  %v6540 = vpack.c.b16 %v6000, %v5988
  %v6541 = vpack.c.b16 %v6001, %v5989
  %v6542 = vpack.c.b16 %v6014, %v6002
  %v6543 = vpack.c.b16 %v6015, %v6003
  %v6544 = vpack.c.b16 %v6016, %v6004
  %v6545 = vpack.c.b16 %v6017, %v6005
  %v6546 = vpack.c.b16 %v6018, %v6006
  %v6547 = vpack.c.b16 %v6019, %v6007
  %v6548 = vpack.c.b16 %v6020, %v6008
  %v6549 = vpack.c.b16 %v6021, %v6009
  %v6550 = vpack.c.b16 %v6022, %v6010
  %v6551 = vpack.c.b16 %v6023, %v6011
  %v6552 = vpack.c.b16 %v6024, %v6012
  %v6553 = vpack.c.b16 %v6025, %v6013
  %v6554 = vpack.c.b16 %v6038, %v6026
  %v6555 = vpack.c.b16 %v6039, %v6027
  %v6556 = vpack.c.b16 %v6040, %v6028
  %v6557 = vpack.c.b16 %v6041, %v6029
  %v6558 = vpack.c.b16 %v6042, %v6030
  %v6559 = vpack.c.b16 %v6043, %v6031
  %v6560 = vpack.c.b16 %v6044, %v6032
  %v6561 = vpack.c.b16 %v6045, %v6033
  %v6562 = vpack.c.b16 %v6046, %v6034
  %v6563 = vpack.c.b16 %v6047, %v6035
  %v6564 = vpack.c.b16 %v6048, %v6036
  %v6565 = vpack.c.b16 %v6049, %v6037
  %v6566 = vpack.c.b16 %v6062, %v6050
  %v6567 = vpack.c.b16 %v6063, %v6051
  %v6568 = vpack.c.b16 %v6064, %v6052
  %v6569 = vpack.c.b16 %v6065, %v6053
  %v6570 = vpack.c.b16 %v6066, %v6054
  %v6571 = vpack.c.b16 %v6067, %v6055
  %v6572 = vpack.c.b16 %v6068, %v6056
  %v6573 = vpack.c.b16 %v6069, %v6057
  %v6574 = vpack.c.b16 %v6070, %v6058
  %v6575 = vpack.c.b16 %v6071, %v6059
  %v6576 = vpack.c.b16 %v6072, %v6060
  %v6577 = vpack.c.b16 %v6073, %v6061
  %v6578 = vpack.c.b16 %v6086, %v6074
  %v6579 = vpack.c.b16 %v6087, %v6075
  %v6580 = vpack.c.b16 %v6088, %v6076
  %v6581 = vpack.c.b16 %v6089, %v6077
  %v6582 = vpack.c.b16 %v6090, %v6078
  %v6583 = vpack.c.b16 %v6091, %v6079
  %v6584 = vpack.c.b16 %v6092, %v6080
  %v6585 = vpack.c.b16 %v6093, %v6081
  %v6586 = vpack.c.b16 %v6094, %v6082
  %v6587 = vpack.c.b16 %v6095, %v6083
  %v6588 = vpack.c.b16 %v6096, %v6084
  %v6589 = vpack.c.b16 %v6097, %v6085
  %v6590 = vpack.c.b16 %v6110, %v6098
  %v6591 = vpack.c.b16 %v6111, %v6099
  %v6592 = vpack.c.b16 %v6112, %v6100
  %v6593 = vpack.c.b16 %v6113, %v6101
  %v6594 = vpack.c.b16 %v6114, %v6102
  %v6595 = vpack.c.b16 %v6115, %v6103
  %v6596 = vpack.c.b16 %v6116, %v6104
  %v6597 = vpack.c.b16 %v6117, %v6105
  %v6598 = vpack.c.b16 %v6118, %v6106
  %v6599 = vpack.c.b16 %v6119, %v6107
  %v6600 = vpack.c.b16 %v6120, %v6108
  %v6601 = vpack.c.b16 %v6121, %v6109
  %v6602 = vpack.c.b16 %v6134, %v6122
  %v6603 = vpack.c.b16 %v6135, %v6123
  %v6604 = vpack.c.b16 %v6136, %v6124
  %v6605 = vpack.c.b16 %v6137, %v6125
  %v6606 = vpack.c.b16 %v6138, %v6126
  %v6607 = vpack.c.b16 %v6139, %v6127
  %v6608 = vpack.c.b16 %v6140, %v6128
  %v6609 = vpack.c.b16 %v6141, %v6129
  %v6610 = vpack.c.b16 %v6142, %v6130
  %v6611 = vpack.c.b16 %v6143, %v6131
  %v6612 = vpack.c.b16 %v6144, %v6132
  %v6613 = vpack.c.b16 %v6145, %v6133
  %v6614 = vpack.c.b16 %v6158, %v6146
  %v6615 = vpack.c.b16 %v6159, %v6147
  %v6616 = vpack.c.b16 %v6160, %v6148
  %v6617 = vpack.c.b16 %v6161, %v6149
  %v6618 = vpack.c.b16 %v6162, %v6150
  %v6619 = vpack.c.b16 %v6163, %v6151
  %v6620 = vpack.c.b16 %v6164, %v6152
  %v6621 = vpack.c.b16 %v6165, %v6153
  %v6622 = vpack.c.b16 %v6166, %v6154
  %v6623 = vpack.c.b16 %v6167, %v6155
  %v6624 = vpack.c.b16 %v6168, %v6156
  %v6625 = vpack.c.b16 %v6169, %v6157
  %v6626 = vpack.c.b16 %v6182, %v6170
  %v6627 = vpack.c.b16 %v6183, %v6171
  %v6628 = vpack.c.b16 %v6184, %v6172
  %v6629 = vpack.c.b16 %v6185, %v6173
  %v6630 = vpack.c.b16 %v6186, %v6174
  %v6631 = vpack.c.b16 %v6187, %v6175
  %v6632 = vpack.c.b16 %v6188, %v6176
  %v6633 = vpack.c.b16 %v6189, %v6177
  %v6634 = vpack.c.b16 %v6190, %v6178
  %v6635 = vpack.c.b16 %v6191, %v6179
  %v6636 = vpack.c.b16 %v6192, %v6180
  %v6637 = vpack.c.b16 %v6193, %v6181
  %v6638 = vpack.c.b16 %v6206, %v6194
  %v6639 = vpack.c.b16 %v6207, %v6195
  %v6640 = vpack.c.b16 %v6208, %v6196
  %v6641 = vpack.c.b16 %v6209, %v6197
  %v6642 = vpack.c.b16 %v6210, %v6198
  %v6643 = vpack.c.b16 %v6211, %v6199
  %v6644 = vpack.c.b16 %v6212, %v6200
  %v6645 = vpack.c.b16 %v6213, %v6201
  %v6646 = vpack.c.b16 %v6214, %v6202
  %v6647 = vpack.c.b16 %v6215, %v6203
  %v6648 = vpack.c.b16 %v6216, %v6204
  %v6649 = vpack.c.b16 %v6217, %v6205
  %v6650 = vpack.c.b16 %v6230, %v6218
  %v6651 = vpack.c.b16 %v6231, %v6219
  %v6652 = vpack.c.b16 %v6232, %v6220
  %v6653 = vpack.c.b16 %v6233, %v6221
  %v6654 = vpack.c.b16 %v6234, %v6222
  %v6655 = vpack.c.b16 %v6235, %v6223
  %v6656 = vpack.c.b16 %v6236, %v6224
  %v6657 = vpack.c.b16 %v6237, %v6225
  %v6658 = vpack.c.b16 %v6238, %v6226
  %v6659 = vpack.c.b16 %v6239, %v6227
  %v6660 = vpack.c.b16 %v6240, %v6228
  %v6661 = vpack.c.b16 %v6241, %v6229
  %v6662 = vpack.c.b16 %v6254, %v6242
  %v6663 = vpack.c.b16 %v6255, %v6243
  %v6664 = vpack.c.b16 %v6256, %v6244
  %v6665 = vpack.c.b16 %v6257, %v6245
  %v6666 = vpack.c.b16 %v6258, %v6246
  %v6667 = vpack.c.b16 %v6259, %v6247
  %v6668 = vpack.c.b16 %v6260, %v6248
  %v6669 = vpack.c.b16 %v6261, %v6249
  %v6670 = vpack.c.b16 %v6262, %v6250
  %v6671 = vpack.c.b16 %v6263, %v6251
  %v6672 = vpack.c.b16 %v6264, %v6252
  %v6673 = vpack.c.b16 %v6265, %v6253
  %v6674 = vpack.c.b16 %v6278, %v6266
  %v6675 = vpack.c.b16 %v6279, %v6267
  %v6676 = vpack.c.b16 %v6280, %v6268
  %v6677 = vpack.c.b16 %v6281, %v6269
  %v6678 = vpack.c.b16 %v6282, %v6270
  %v6679 = vpack.c.b16 %v6283, %v6271
  %v6680 = vpack.c.b16 %v6284, %v6272
  %v6681 = vpack.c.b16 %v6285, %v6273
  %v6682 = vpack.c.b16 %v6286, %v6274
  %v6683 = vpack.c.b16 %v6287, %v6275
  %v6684 = vpack.c.b16 %v6288, %v6276
  %v6685 = vpack.c.b16 %v6289, %v6277
  %v6686 = vpack.c.b16 %v6302, %v6290
  %v6687 = vpack.c.b16 %v6303, %v6291
  %v6688 = vpack.c.b16 %v6304, %v6292
  %v6689 = vpack.c.b16 %v6305, %v6293
  %v6690 = vpack.c.b16 %v6306, %v6294
  %v6691 = vpack.c.b16 %v6307, %v6295
  %v6692 = vpack.c.b16 %v6308, %v6296
  %v6693 = vpack.c.b16 %v6309, %v6297
  %v6694 = vpack.c.b16 %v6310, %v6298
  %v6695 = vpack.c.b16 %v6311, %v6299
  %v6696 = vpack.c.b16 %v6312, %v6300
  %v6697 = vpack.c.b16 %v6313, %v6301
  %v6698 = vpack.c.b16 %v6326, %v6314
  %v6699 = vpack.c.b16 %v6327, %v6315
  %v6700 = vpack.c.b16 %v6328, %v6316
  %v6701 = vpack.c.b16 %v6329, %v6317
  %v6702 = vpack.c.b16 %v6330, %v6318
  %v6703 = vpack.c.b16 %v6331, %v6319
  %v6704 = vpack.c.b16 %v6332, %v6320
  %v6705 = vpack.c.b16 %v6333, %v6321
  %v6706 = vpack.c.b16 %v6334, %v6322
  %v6707 = vpack.c.b16 %v6335, %v6323
  %v6708 = vpack.c.b16 %v6336, %v6324
  %v6709 = vpack.c.b16 %v6337, %v6325
  %v6710 = vpack.c.b16 %v6350, %v6338
  %v6711 = vpack.c.b16 %v6351, %v6339
  %v6712 = vpack.c.b16 %v6352, %v6340
  %v6713 = vpack.c.b16 %v6353, %v6341
  %v6714 = vpack.c.b16 %v6354, %v6342
  %v6715 = vpack.c.b16 %v6355, %v6343
  %v6716 = vpack.c.b16 %v6356, %v6344
  %v6717 = vpack.c.b16 %v6357, %v6345
  %v6718 = vpack.c.b16 %v6358, %v6346
  %v6719 = vpack.c.b16 %v6359, %v6347
  %v6720 = vpack.c.b16 %v6360, %v6348
  %v6721 = vpack.c.b16 %v6361, %v6349
  %v6722 = vpack.c.b16 %v6374, %v6362
  %v6723 = vpack.c.b16 %v6375, %v6363
  %v6724 = vpack.c.b16 %v6376, %v6364
  %v6725 = vpack.c.b16 %v6377, %v6365
  %v6726 = vpack.c.b16 %v6378, %v6366
  %v6727 = vpack.c.b16 %v6379, %v6367
  %v6728 = vpack.c.b16 %v6380, %v6368
  %v6729 = vpack.c.b16 %v6381, %v6369
  %v6730 = vpack.c.b16 %v6382, %v6370
  %v6731 = vpack.c.b16 %v6383, %v6371
  %v6732 = vpack.c.b16 %v6384, %v6372
  %v6733 = vpack.c.b16 %v6385, %v6373
  %v6734 = vpack.c.b16 %v6398, %v6386
  %v6735 = vpack.c.b16 %v6399, %v6387
  %v6736 = vpack.c.b16 %v6400, %v6388
  %v6737 = vpack.c.b16 %v6401, %v6389
  %v6738 = vpack.c.b16 %v6402, %v6390
  %v6739 = vpack.c.b16 %v6403, %v6391
  %v6740 = vpack.c.b16 %v6404, %v6392
  %v6741 = vpack.c.b16 %v6405, %v6393
  %v6742 = vpack.c.b16 %v6406, %v6394
  %v6743 = vpack.c.b16 %v6407, %v6395
  %v6744 = vpack.c.b16 %v6408, %v6396
  %v6745 = vpack.c.b16 %v6409, %v6397
  %v6746 = vpack.c.b16 %v6422, %v6410
  %v6747 = vpack.c.b16 %v6423, %v6411
  %v6748 = vpack.c.b16 %v6424, %v6412
  %v6749 = vpack.c.b16 %v6425, %v6413
  %v6750 = vpack.c.b16 %v6426, %v6414
  %v6751 = vpack.c.b16 %v6427, %v6415
  %v6752 = vpack.c.b16 %v6428, %v6416
  %v6753 = vpack.c.b16 %v6429, %v6417
  %v6754 = vpack.c.b16 %v6430, %v6418
  %v6755 = vpack.c.b16 %v6431, %v6419
  %v6756 = vpack.c.b16 %v6432, %v6420
  %v6757 = vpack.c.b16 %v6433, %v6421
  %v6758 = vpack.c.b16 %v6446, %v6434
  %v6759 = vpack.c.b16 %v6447, %v6435
  %v6760 = vpack.c.b16 %v6448, %v6436
  %v6761 = vpack.c.b16 %v6449, %v6437
  %v6762 = vpack.c.b16 %v6450, %v6438
  %v6763 = vpack.c.b16 %v6451, %v6439
  %v6764 = vpack.c.b16 %v6452, %v6440
  %v6765 = vpack.c.b16 %v6453, %v6441
  %v6766 = vpack.c.b16 %v6454, %v6442
  %v6767 = vpack.c.b16 %v6455, %v6443
  %v6768 = vpack.c.b16 %v6456, %v6444
  %v6769 = vpack.c.b16 %v6457, %v6445
  %v6770 = vpack.c.b16 %v6470, %v6458
  %v6771 = vpack.c.b16 %v6471, %v6459
  %v6772 = vpack.c.b16 %v6472, %v6460
  %v6773 = vpack.c.b16 %v6473, %v6461
  %v6774 = vpack.c.b16 %v6474, %v6462
  %v6775 = vpack.c.b16 %v6475, %v6463
  %v6776 = vpack.c.b16 %v6476, %v6464
  %v6777 = vpack.c.b16 %v6477, %v6465
  %v6778 = vpack.c.b16 %v6478, %v6466
  %v6779 = vpack.c.b16 %v6479, %v6467
  %v6780 = vpack.c.b16 %v6480, %v6468
  %v6781 = vpack.c.b16 %v6481, %v6469
  %v7083 = vsel %vm2001, %v5217, 0
  %7085 = vmatprep.subr.bf16.mxu0 %v6483
  %7086 = vmatpush1.bf16.msra.mxu0 %v6482
  %7087 = vmatprep.subr.bf16.mxu0 %v6495
  %7088 = vmatpush1.bf16.msra.mxu0 %v6494
  %7089 = vmatprep.subr.bf16.mxu0 %v6507
  %7090 = vmatpush1.bf16.msra.mxu0 %v6506
  %7091 = vmatprep.subr.bf16.mxu0 %v6519
  %7092 = vmatpush1.bf16.msra.mxu0 %v6518
  %7093 = vmatprep.subr.bf16.mxu0 %v6531
  %7094 = vmatpush1.bf16.msra.mxu0 %v6530
  %7095 = vmatprep.subr.bf16.mxu0 %v6543
  %7096 = vmatpush1.bf16.msra.mxu0 %v6542
  %7097 = vmatprep.subr.bf16.mxu0 %v6555
  %7098 = vmatpush1.bf16.msra.mxu0 %v6554
  %7099 = vmatprep.subr.bf16.mxu0 %v6567
  %7100 = vmatpush1.bf16.msra.mxu0 %v6566
  %7101 = vmatprep.subr.bf16.mxu0 %v6579
  %7102 = vmatpush1.bf16.msra.mxu0 %v6578
  %7103 = vmatprep.subr.bf16.mxu0 %v6591
  %7104 = vmatpush1.bf16.msra.mxu0 %v6590
  %7105 = vmatprep.subr.bf16.mxu0 %v6603
  %7106 = vmatpush1.bf16.msra.mxu0 %v6602
  %7107 = vmatprep.subr.bf16.mxu0 %v6615
  %7108 = vmatpush1.bf16.msra.mxu0 %v6614
  %7109 = vmatprep.subr.bf16.mxu0 %v6627
  %7110 = vmatpush1.bf16.msra.mxu0 %v6626
  %7111 = vmatprep.subr.bf16.mxu0 %v6639
  %7112 = vmatpush1.bf16.msra.mxu0 %v6638
  %7113 = vmatprep.subr.bf16.mxu0 %v6651
  %7114 = vmatpush1.bf16.msra.mxu0 %v6650
  %7115 = vmatprep.subr.bf16.mxu0 %v6663
  %7116 = vmatpush1.bf16.msra.mxu0 %v6662
  %7117 = vmatprep.mubr.bf16.mxu0 %v5215
  %7118 = vmatmul.mubr.bf16.gmra.mrb[0].mxu0 %v5214
  %v7119 = vpop.f32.mrb[0].mxu0
  %v7120 = vadd.f32 %v5525, %v7119
  %v7121 = vpop.f32.mrb[0].mxu0
  %v7122 = vadd.f32 %v5529, %v7121
  %v7123 = vpop.f32.mrb[0].mxu0
  %v7124 = vadd.f32 %v5525, %v7123
  %v7125 = vpop.f32.mrb[0].mxu0
  %v7126 = vadd.f32 %v5529, %v7125
  %7127 = vdwg.mxu0
  %7128 = vmatprep.subr.bf16.mxu0 %v6675
  %7129 = vmatpush1.bf16.msra.mxu0 %v6674
  %7130 = vmatprep.subr.bf16.mxu0 %v6687
  %7131 = vmatpush1.bf16.msra.mxu0 %v6686
  %7132 = vmatprep.subr.bf16.mxu0 %v6699
  %7133 = vmatpush1.bf16.msra.mxu0 %v6698
  %7134 = vmatprep.subr.bf16.mxu0 %v6711
  %7135 = vmatpush1.bf16.msra.mxu0 %v6710
  %7136 = vmatprep.subr.bf16.mxu0 %v6723
  %7137 = vmatpush1.bf16.msra.mxu0 %v6722
  %7138 = vmatprep.subr.bf16.mxu0 %v6735
  %7139 = vmatpush1.bf16.msra.mxu0 %v6734
  %7140 = vmatprep.subr.bf16.mxu0 %v6747
  %7141 = vmatpush1.bf16.msra.mxu0 %v6746
  %7142 = vmatprep.subr.bf16.mxu0 %v6759
  %7143 = vmatpush1.bf16.msra.mxu0 %v6758
  %7144 = vmatprep.subr.bf16.mxu0 %v6771
  %7145 = vmatpush1.bf16.msra.mxu0 %v6770
  %7146 = vmatprep.subr.bf16.mxu0 0
  %7147 = vmatpush1.bf16.msra.mxu0 0
  %7148 = vmatprep.subr.bf16.mxu0 0
  %7149 = vmatpush1.bf16.msra.mxu0 0
  %7150 = vmatprep.subr.bf16.mxu0 0
  %7151 = vmatpush1.bf16.msra.mxu0 0
  %7152 = vmatprep.subr.bf16.mxu0 0
  %7153 = vmatpush1.bf16.msra.mxu0 0
  %7154 = vmatprep.subr.bf16.mxu0 0
  %7155 = vmatpush1.bf16.msra.mxu0 0
  %7156 = vmatprep.subr.bf16.mxu0 0
  %7157 = vmatpush1.bf16.msra.mxu0 0
  %7158 = vmatprep.subr.bf16.mxu0 0
  %7159 = vmatpush1.bf16.msra.mxu0 0
  %7160 = vmatprep.mubr.bf16.mxu0 %v7083
  %7161 = vmatmul.mubr.bf16.gmra.mrb[0].mxu0 %v5216
  %v7162 = vpop.f32.mrb[0].mxu0
  %v7163 = vadd.f32 %v7120, %v7162
  %v7164 = vpop.f32.mrb[0].mxu0
  %v7165 = vadd.f32 %v7122, %v7164
  %v7166 = vpop.f32.mrb[0].mxu0
  %v7167 = vadd.f32 %v7124, %v7166
  %v7168 = vpop.f32.mrb[0].mxu0
  %v7169 = vadd.f32 %v7126, %v7168
  %7170 = vdwg.mxu0
  %7171 = vmatprep.subr.bf16.mxu0 %v6485
  %7172 = vmatpush1.bf16.msra.mxu0 %v6484
  %7173 = vmatprep.subr.bf16.mxu0 %v6497
  %7174 = vmatpush1.bf16.msra.mxu0 %v6496
  %7175 = vmatprep.subr.bf16.mxu0 %v6509
  %7176 = vmatpush1.bf16.msra.mxu0 %v6508
  %7177 = vmatprep.subr.bf16.mxu0 %v6521
  %7178 = vmatpush1.bf16.msra.mxu0 %v6520
  %7179 = vmatprep.subr.bf16.mxu0 %v6533
  %7180 = vmatpush1.bf16.msra.mxu0 %v6532
  %7181 = vmatprep.subr.bf16.mxu0 %v6545
  %7182 = vmatpush1.bf16.msra.mxu0 %v6544
  %7183 = vmatprep.subr.bf16.mxu0 %v6557
  %7184 = vmatpush1.bf16.msra.mxu0 %v6556
  %7185 = vmatprep.subr.bf16.mxu0 %v6569
  %7186 = vmatpush1.bf16.msra.mxu0 %v6568
  %7187 = vmatprep.subr.bf16.mxu0 %v6581
  %7188 = vmatpush1.bf16.msra.mxu0 %v6580
  %7189 = vmatprep.subr.bf16.mxu0 %v6593
  %7190 = vmatpush1.bf16.msra.mxu0 %v6592
  %7191 = vmatprep.subr.bf16.mxu0 %v6605
  %7192 = vmatpush1.bf16.msra.mxu0 %v6604
  %7193 = vmatprep.subr.bf16.mxu0 %v6617
  %7194 = vmatpush1.bf16.msra.mxu0 %v6616
  %7195 = vmatprep.subr.bf16.mxu0 %v6629
  %7196 = vmatpush1.bf16.msra.mxu0 %v6628
  %7197 = vmatprep.subr.bf16.mxu0 %v6641
  %7198 = vmatpush1.bf16.msra.mxu0 %v6640
  %7199 = vmatprep.subr.bf16.mxu0 %v6653
  %7200 = vmatpush1.bf16.msra.mxu0 %v6652
  %7201 = vmatprep.subr.bf16.mxu0 %v6665
  %7202 = vmatpush1.bf16.msra.mxu0 %v6664
  %7203 = vmatprep.mubr.bf16.mxu0 %v5215
  %7204 = vmatmul.mubr.bf16.gmra.mrb[0].mxu0 %v5214
  %v7205 = vpop.f32.mrb[0].mxu0
  %v7206 = vadd.f32 %v5533, %v7205
  %v7207 = vpop.f32.mrb[0].mxu0
  %v7208 = vadd.f32 %v5537, %v7207
  %v7209 = vpop.f32.mrb[0].mxu0
  %v7210 = vadd.f32 %v5533, %v7209
  %v7211 = vpop.f32.mrb[0].mxu0
  %v7212 = vadd.f32 %v5537, %v7211
  %7213 = vdwg.mxu0
  %7214 = vmatprep.subr.bf16.mxu0 %v6677
  %7215 = vmatpush1.bf16.msra.mxu0 %v6676
  %7216 = vmatprep.subr.bf16.mxu0 %v6689
  %7217 = vmatpush1.bf16.msra.mxu0 %v6688
  %7218 = vmatprep.subr.bf16.mxu0 %v6701
  %7219 = vmatpush1.bf16.msra.mxu0 %v6700
  %7220 = vmatprep.subr.bf16.mxu0 %v6713
  %7221 = vmatpush1.bf16.msra.mxu0 %v6712
  %7222 = vmatprep.subr.bf16.mxu0 %v6725
  %7223 = vmatpush1.bf16.msra.mxu0 %v6724
  %7224 = vmatprep.subr.bf16.mxu0 %v6737
  %7225 = vmatpush1.bf16.msra.mxu0 %v6736
  %7226 = vmatprep.subr.bf16.mxu0 %v6749
  %7227 = vmatpush1.bf16.msra.mxu0 %v6748
  %7228 = vmatprep.subr.bf16.mxu0 %v6761
  %7229 = vmatpush1.bf16.msra.mxu0 %v6760
  %7230 = vmatprep.subr.bf16.mxu0 %v6773
  %7231 = vmatpush1.bf16.msra.mxu0 %v6772
  %7232 = vmatprep.subr.bf16.mxu0 0
  %7233 = vmatpush1.bf16.msra.mxu0 0
  %7234 = vmatprep.subr.bf16.mxu0 0
  %7235 = vmatpush1.bf16.msra.mxu0 0
  %7236 = vmatprep.subr.bf16.mxu0 0
  %7237 = vmatpush1.bf16.msra.mxu0 0
  %7238 = vmatprep.subr.bf16.mxu0 0
  %7239 = vmatpush1.bf16.msra.mxu0 0
  %7240 = vmatprep.subr.bf16.mxu0 0
  %7241 = vmatpush1.bf16.msra.mxu0 0
  %7242 = vmatprep.subr.bf16.mxu0 0
  %7243 = vmatpush1.bf16.msra.mxu0 0
  %7244 = vmatprep.subr.bf16.mxu0 0
  %7245 = vmatpush1.bf16.msra.mxu0 0
  %7246 = vmatprep.mubr.bf16.mxu0 %v7083
  %7247 = vmatmul.mubr.bf16.gmra.mrb[0].mxu0 %v5216
  %v7248 = vpop.f32.mrb[0].mxu0
  %v7249 = vadd.f32 %v7206, %v7248
  %v7250 = vpop.f32.mrb[0].mxu0
  %v7251 = vadd.f32 %v7208, %v7250
  %v7252 = vpop.f32.mrb[0].mxu0
  %v7253 = vadd.f32 %v7210, %v7252
  %v7254 = vpop.f32.mrb[0].mxu0
  %v7255 = vadd.f32 %v7212, %v7254
  %7256 = vdwg.mxu0
  %7257 = vmatprep.subr.bf16.mxu0 %v6487
  %7258 = vmatpush1.bf16.msra.mxu0 %v6486
  %7259 = vmatprep.subr.bf16.mxu0 %v6499
  %7260 = vmatpush1.bf16.msra.mxu0 %v6498
  %7261 = vmatprep.subr.bf16.mxu0 %v6511
  %7262 = vmatpush1.bf16.msra.mxu0 %v6510
  %7263 = vmatprep.subr.bf16.mxu0 %v6523
  %7264 = vmatpush1.bf16.msra.mxu0 %v6522
  %7265 = vmatprep.subr.bf16.mxu0 %v6535
  %7266 = vmatpush1.bf16.msra.mxu0 %v6534
  %7267 = vmatprep.subr.bf16.mxu0 %v6547
  %7268 = vmatpush1.bf16.msra.mxu0 %v6546
  %7269 = vmatprep.subr.bf16.mxu0 %v6559
  %7270 = vmatpush1.bf16.msra.mxu0 %v6558
  %7271 = vmatprep.subr.bf16.mxu0 %v6571
  %7272 = vmatpush1.bf16.msra.mxu0 %v6570
  %7273 = vmatprep.subr.bf16.mxu0 %v6583
  %7274 = vmatpush1.bf16.msra.mxu0 %v6582
  %7275 = vmatprep.subr.bf16.mxu0 %v6595
  %7276 = vmatpush1.bf16.msra.mxu0 %v6594
  %7277 = vmatprep.subr.bf16.mxu0 %v6607
  %7278 = vmatpush1.bf16.msra.mxu0 %v6606
  %7279 = vmatprep.subr.bf16.mxu0 %v6619
  %7280 = vmatpush1.bf16.msra.mxu0 %v6618
  %7281 = vmatprep.subr.bf16.mxu0 %v6631
  %7282 = vmatpush1.bf16.msra.mxu0 %v6630
  %7283 = vmatprep.subr.bf16.mxu0 %v6643
  %7284 = vmatpush1.bf16.msra.mxu0 %v6642
  %7285 = vmatprep.subr.bf16.mxu0 %v6655
  %7286 = vmatpush1.bf16.msra.mxu0 %v6654
  %7287 = vmatprep.subr.bf16.mxu0 %v6667
  %7288 = vmatpush1.bf16.msra.mxu0 %v6666
  %7289 = vmatprep.mubr.bf16.mxu0 %v5215
  %7290 = vmatmul.mubr.bf16.gmra.mrb[0].mxu0 %v5214
  %v7291 = vpop.f32.mrb[0].mxu0
  %v7292 = vadd.f32 %v5541, %v7291
  %v7293 = vpop.f32.mrb[0].mxu0
  %v7294 = vadd.f32 %v5545, %v7293
  %v7295 = vpop.f32.mrb[0].mxu0
  %v7296 = vadd.f32 %v5541, %v7295
  %v7297 = vpop.f32.mrb[0].mxu0
  %v7298 = vadd.f32 %v5545, %v7297
  %7299 = vdwg.mxu0
  %7300 = vmatprep.subr.bf16.mxu0 %v6679
  %7301 = vmatpush1.bf16.msra.mxu0 %v6678
  %7302 = vmatprep.subr.bf16.mxu0 %v6691
  %7303 = vmatpush1.bf16.msra.mxu0 %v6690
  %7304 = vmatprep.subr.bf16.mxu0 %v6703
  %7305 = vmatpush1.bf16.msra.mxu0 %v6702
  %7306 = vmatprep.subr.bf16.mxu0 %v6715
  %7307 = vmatpush1.bf16.msra.mxu0 %v6714
  %7308 = vmatprep.subr.bf16.mxu0 %v6727
  %7309 = vmatpush1.bf16.msra.mxu0 %v6726
  %7310 = vmatprep.subr.bf16.mxu0 %v6739
  %7311 = vmatpush1.bf16.msra.mxu0 %v6738
  %7312 = vmatprep.subr.bf16.mxu0 %v6751
  %7313 = vmatpush1.bf16.msra.mxu0 %v6750
  %7314 = vmatprep.subr.bf16.mxu0 %v6763
  %7315 = vmatpush1.bf16.msra.mxu0 %v6762
  %7316 = vmatprep.subr.bf16.mxu0 %v6775
  %7317 = vmatpush1.bf16.msra.mxu0 %v6774
  %7318 = vmatprep.subr.bf16.mxu0 0
  %7319 = vmatpush1.bf16.msra.mxu0 0
  %7320 = vmatprep.subr.bf16.mxu0 0
  %7321 = vmatpush1.bf16.msra.mxu0 0
  %7322 = vmatprep.subr.bf16.mxu0 0
  %7323 = vmatpush1.bf16.msra.mxu0 0
  %7324 = vmatprep.subr.bf16.mxu0 0
  %7325 = vmatpush1.bf16.msra.mxu0 0
  %7326 = vmatprep.subr.bf16.mxu0 0
  %7327 = vmatpush1.bf16.msra.mxu0 0
  %7328 = vmatprep.subr.bf16.mxu0 0
  %7329 = vmatpush1.bf16.msra.mxu0 0
  %7330 = vmatprep.subr.bf16.mxu0 0
  %7331 = vmatpush1.bf16.msra.mxu0 0
  %7332 = vmatprep.mubr.bf16.mxu0 %v7083
  %7333 = vmatmul.mubr.bf16.gmra.mrb[0].mxu0 %v5216
  %v7334 = vpop.f32.mrb[0].mxu0
  %v7335 = vadd.f32 %v7292, %v7334
  %v7336 = vpop.f32.mrb[0].mxu0
  %v7337 = vadd.f32 %v7294, %v7336
  %v7338 = vpop.f32.mrb[0].mxu0
  %v7339 = vadd.f32 %v7296, %v7338
  %v7340 = vpop.f32.mrb[0].mxu0
  %v7341 = vadd.f32 %v7298, %v7340
  %7342 = vdwg.mxu0
  %7343 = vmatprep.subr.bf16.mxu0 %v6489
  %7344 = vmatpush1.bf16.msra.mxu0 %v6488
  %7345 = vmatprep.subr.bf16.mxu0 %v6501
  %7346 = vmatpush1.bf16.msra.mxu0 %v6500
  %7347 = vmatprep.subr.bf16.mxu0 %v6513
  %7348 = vmatpush1.bf16.msra.mxu0 %v6512
  %7349 = vmatprep.subr.bf16.mxu0 %v6525
  %7350 = vmatpush1.bf16.msra.mxu0 %v6524
  %7351 = vmatprep.subr.bf16.mxu0 %v6537
  %7352 = vmatpush1.bf16.msra.mxu0 %v6536
  %7353 = vmatprep.subr.bf16.mxu0 %v6549
  %7354 = vmatpush1.bf16.msra.mxu0 %v6548
  %7355 = vmatprep.subr.bf16.mxu0 %v6561
  %7356 = vmatpush1.bf16.msra.mxu0 %v6560
  %7357 = vmatprep.subr.bf16.mxu0 %v6573
  %7358 = vmatpush1.bf16.msra.mxu0 %v6572
  %7359 = vmatprep.subr.bf16.mxu0 %v6585
  %7360 = vmatpush1.bf16.msra.mxu0 %v6584
  %7361 = vmatprep.subr.bf16.mxu0 %v6597
  %7362 = vmatpush1.bf16.msra.mxu0 %v6596
  %7363 = vmatprep.subr.bf16.mxu0 %v6609
  %7364 = vmatpush1.bf16.msra.mxu0 %v6608
  %7365 = vmatprep.subr.bf16.mxu0 %v6621
  %7366 = vmatpush1.bf16.msra.mxu0 %v6620
  %7367 = vmatprep.subr.bf16.mxu0 %v6633
  %7368 = vmatpush1.bf16.msra.mxu0 %v6632
  %7369 = vmatprep.subr.bf16.mxu0 %v6645
  %7370 = vmatpush1.bf16.msra.mxu0 %v6644
  %7371 = vmatprep.subr.bf16.mxu0 %v6657
  %7372 = vmatpush1.bf16.msra.mxu0 %v6656
  %7373 = vmatprep.subr.bf16.mxu0 %v6669
  %7374 = vmatpush1.bf16.msra.mxu0 %v6668
  %7375 = vmatprep.mubr.bf16.mxu0 %v5215
  %7376 = vmatmul.mubr.bf16.gmra.mrb[0].mxu0 %v5214
  %v7377 = vpop.f32.mrb[0].mxu0
  %v7378 = vadd.f32 %v5549, %v7377
  %v7379 = vpop.f32.mrb[0].mxu0
  %v7380 = vadd.f32 %v5553, %v7379
  %v7381 = vpop.f32.mrb[0].mxu0
  %v7382 = vadd.f32 %v5549, %v7381
  %v7383 = vpop.f32.mrb[0].mxu0
  %v7384 = vadd.f32 %v5553, %v7383
  %7385 = vdwg.mxu0
  %7386 = vmatprep.subr.bf16.mxu0 %v6681
  %7387 = vmatpush1.bf16.msra.mxu0 %v6680
  %7388 = vmatprep.subr.bf16.mxu0 %v6693
  %7389 = vmatpush1.bf16.msra.mxu0 %v6692
  %7390 = vmatprep.subr.bf16.mxu0 %v6705
  %7391 = vmatpush1.bf16.msra.mxu0 %v6704
  %7392 = vmatprep.subr.bf16.mxu0 %v6717
  %7393 = vmatpush1.bf16.msra.mxu0 %v6716
  %7394 = vmatprep.subr.bf16.mxu0 %v6729
  %7395 = vmatpush1.bf16.msra.mxu0 %v6728
  %7396 = vmatprep.subr.bf16.mxu0 %v6741
  %7397 = vmatpush1.bf16.msra.mxu0 %v6740
  %7398 = vmatprep.subr.bf16.mxu0 %v6753
  %7399 = vmatpush1.bf16.msra.mxu0 %v6752
  %7400 = vmatprep.subr.bf16.mxu0 %v6765
  %7401 = vmatpush1.bf16.msra.mxu0 %v6764
  %7402 = vmatprep.subr.bf16.mxu0 %v6777
  %7403 = vmatpush1.bf16.msra.mxu0 %v6776
  %7404 = vmatprep.subr.bf16.mxu0 0
  %7405 = vmatpush1.bf16.msra.mxu0 0
  %7406 = vmatprep.subr.bf16.mxu0 0
  %7407 = vmatpush1.bf16.msra.mxu0 0
  %7408 = vmatprep.subr.bf16.mxu0 0
  %7409 = vmatpush1.bf16.msra.mxu0 0
  %7410 = vmatprep.subr.bf16.mxu0 0
  %7411 = vmatpush1.bf16.msra.mxu0 0
  %7412 = vmatprep.subr.bf16.mxu0 0
  %7413 = vmatpush1.bf16.msra.mxu0 0
  %7414 = vmatprep.subr.bf16.mxu0 0
  %7415 = vmatpush1.bf16.msra.mxu0 0
  %7416 = vmatprep.subr.bf16.mxu0 0
  %7417 = vmatpush1.bf16.msra.mxu0 0
  %7418 = vmatprep.mubr.bf16.mxu0 %v7083
  %7419 = vmatmul.mubr.bf16.gmra.mrb[0].mxu0 %v5216
  %v7420 = vpop.f32.mrb[0].mxu0
  %v7421 = vadd.f32 %v7378, %v7420
  %v7422 = vpop.f32.mrb[0].mxu0
  %v7423 = vadd.f32 %v7380, %v7422
  %v7424 = vpop.f32.mrb[0].mxu0
  %v7425 = vadd.f32 %v7382, %v7424
  %v7426 = vpop.f32.mrb[0].mxu0
  %v7427 = vadd.f32 %v7384, %v7426
  %7428 = vdwg.mxu0
  %7429 = vmatprep.subr.bf16.mxu0 %v6491
  %7430 = vmatpush1.bf16.msra.mxu0 %v6490
  %7431 = vmatprep.subr.bf16.mxu0 %v6503
  %7432 = vmatpush1.bf16.msra.mxu0 %v6502
  %7433 = vmatprep.subr.bf16.mxu0 %v6515
  %7434 = vmatpush1.bf16.msra.mxu0 %v6514
  %7435 = vmatprep.subr.bf16.mxu0 %v6527
  %7436 = vmatpush1.bf16.msra.mxu0 %v6526
  %7437 = vmatprep.subr.bf16.mxu0 %v6539
  %7438 = vmatpush1.bf16.msra.mxu0 %v6538
  %7439 = vmatprep.subr.bf16.mxu0 %v6551
  %7440 = vmatpush1.bf16.msra.mxu0 %v6550
  %7441 = vmatprep.subr.bf16.mxu0 %v6563
  %7442 = vmatpush1.bf16.msra.mxu0 %v6562
  %7443 = vmatprep.subr.bf16.mxu0 %v6575
  %7444 = vmatpush1.bf16.msra.mxu0 %v6574
  %7445 = vmatprep.subr.bf16.mxu0 %v6587
  %7446 = vmatpush1.bf16.msra.mxu0 %v6586
  %7447 = vmatprep.subr.bf16.mxu0 %v6599
  %7448 = vmatpush1.bf16.msra.mxu0 %v6598
  %7449 = vmatprep.subr.bf16.mxu0 %v6611
  %7450 = vmatpush1.bf16.msra.mxu0 %v6610
  %7451 = vmatprep.subr.bf16.mxu0 %v6623
  %7452 = vmatpush1.bf16.msra.mxu0 %v6622
  %7453 = vmatprep.subr.bf16.mxu0 %v6635
  %7454 = vmatpush1.bf16.msra.mxu0 %v6634
  %7455 = vmatprep.subr.bf16.mxu0 %v6647
  %7456 = vmatpush1.bf16.msra.mxu0 %v6646
  %7457 = vmatprep.subr.bf16.mxu0 %v6659
  %7458 = vmatpush1.bf16.msra.mxu0 %v6658
  %7459 = vmatprep.subr.bf16.mxu0 %v6671
  %7460 = vmatpush1.bf16.msra.mxu0 %v6670
  %7461 = vmatprep.mubr.bf16.mxu0 %v5215
  %7462 = vmatmul.mubr.bf16.gmra.mrb[0].mxu0 %v5214
  %v7463 = vpop.f32.mrb[0].mxu0
  %v7464 = vadd.f32 %v5557, %v7463
  %v7465 = vpop.f32.mrb[0].mxu0
  %v7466 = vadd.f32 %v5561, %v7465
  %v7467 = vpop.f32.mrb[0].mxu0
  %v7468 = vadd.f32 %v5557, %v7467
  %v7469 = vpop.f32.mrb[0].mxu0
  %v7470 = vadd.f32 %v5561, %v7469
  %7471 = vdwg.mxu0
  %7472 = vmatprep.subr.bf16.mxu0 %v6683
  %7473 = vmatpush1.bf16.msra.mxu0 %v6682
  %7474 = vmatprep.subr.bf16.mxu0 %v6695
  %7475 = vmatpush1.bf16.msra.mxu0 %v6694
  %7476 = vmatprep.subr.bf16.mxu0 %v6707
  %7477 = vmatpush1.bf16.msra.mxu0 %v6706
  %7478 = vmatprep.subr.bf16.mxu0 %v6719
  %7479 = vmatpush1.bf16.msra.mxu0 %v6718
  %7480 = vmatprep.subr.bf16.mxu0 %v6731
  %7481 = vmatpush1.bf16.msra.mxu0 %v6730
  %7482 = vmatprep.subr.bf16.mxu0 %v6743
  %7483 = vmatpush1.bf16.msra.mxu0 %v6742
  %7484 = vmatprep.subr.bf16.mxu0 %v6755
  %7485 = vmatpush1.bf16.msra.mxu0 %v6754
  %7486 = vmatprep.subr.bf16.mxu0 %v6767
  %7487 = vmatpush1.bf16.msra.mxu0 %v6766
  %7488 = vmatprep.subr.bf16.mxu0 %v6779
  %7489 = vmatpush1.bf16.msra.mxu0 %v6778
  %7490 = vmatprep.subr.bf16.mxu0 0
  %7491 = vmatpush1.bf16.msra.mxu0 0
  %7492 = vmatprep.subr.bf16.mxu0 0
  %7493 = vmatpush1.bf16.msra.mxu0 0
  %7494 = vmatprep.subr.bf16.mxu0 0
  %7495 = vmatpush1.bf16.msra.mxu0 0
  %7496 = vmatprep.subr.bf16.mxu0 0
  %7497 = vmatpush1.bf16.msra.mxu0 0
  %7498 = vmatprep.subr.bf16.mxu0 0
  %7499 = vmatpush1.bf16.msra.mxu0 0
  %7500 = vmatprep.subr.bf16.mxu0 0
  %7501 = vmatpush1.bf16.msra.mxu0 0
  %7502 = vmatprep.subr.bf16.mxu0 0
  %7503 = vmatpush1.bf16.msra.mxu0 0
  %7504 = vmatprep.mubr.bf16.mxu0 %v7083
  %7505 = vmatmul.mubr.bf16.gmra.mrb[0].mxu0 %v5216
  %v7506 = vpop.f32.mrb[0].mxu0
  %v7507 = vadd.f32 %v7464, %v7506
  %v7508 = vpop.f32.mrb[0].mxu0
  %v7509 = vadd.f32 %v7466, %v7508
  %v7510 = vpop.f32.mrb[0].mxu0
  %v7511 = vadd.f32 %v7468, %v7510
  %v7512 = vpop.f32.mrb[0].mxu0
  %v7513 = vadd.f32 %v7470, %v7512
  %7514 = vdwg.mxu0
  %7515 = vmatprep.subr.bf16.mxu0 %v6493
  %7516 = vmatpush1.bf16.msra.mxu0 %v6492
  %7517 = vmatprep.subr.bf16.mxu0 %v6505
  %7518 = vmatpush1.bf16.msra.mxu0 %v6504
  %7519 = vmatprep.subr.bf16.mxu0 %v6517
  %7520 = vmatpush1.bf16.msra.mxu0 %v6516
  %7521 = vmatprep.subr.bf16.mxu0 %v6529
  %7522 = vmatpush1.bf16.msra.mxu0 %v6528
  %7523 = vmatprep.subr.bf16.mxu0 %v6541
  %7524 = vmatpush1.bf16.msra.mxu0 %v6540
  %7525 = vmatprep.subr.bf16.mxu0 %v6553
  %7526 = vmatpush1.bf16.msra.mxu0 %v6552
  %7527 = vmatprep.subr.bf16.mxu0 %v6565
  %7528 = vmatpush1.bf16.msra.mxu0 %v6564
  %7529 = vmatprep.subr.bf16.mxu0 %v6577
  %7530 = vmatpush1.bf16.msra.mxu0 %v6576
  %7531 = vmatprep.subr.bf16.mxu0 %v6589
  %7532 = vmatpush1.bf16.msra.mxu0 %v6588
  %7533 = vmatprep.subr.bf16.mxu0 %v6601
  %7534 = vmatpush1.bf16.msra.mxu0 %v6600
  %7535 = vmatprep.subr.bf16.mxu0 %v6613
  %7536 = vmatpush1.bf16.msra.mxu0 %v6612
  %7537 = vmatprep.subr.bf16.mxu0 %v6625
  %7538 = vmatpush1.bf16.msra.mxu0 %v6624
  %7539 = vmatprep.subr.bf16.mxu0 %v6637
  %7540 = vmatpush1.bf16.msra.mxu0 %v6636
  %7541 = vmatprep.subr.bf16.mxu0 %v6649
  %7542 = vmatpush1.bf16.msra.mxu0 %v6648
  %7543 = vmatprep.subr.bf16.mxu0 %v6661
  %7544 = vmatpush1.bf16.msra.mxu0 %v6660
  %7545 = vmatprep.subr.bf16.mxu0 %v6673
  %7546 = vmatpush1.bf16.msra.mxu0 %v6672
  %7547 = vmatprep.mubr.bf16.mxu0 %v5215
  %7548 = vmatmul.mubr.bf16.gmra.mrb[0].mxu0 %v5214
  %v7549 = vpop.f32.mrb[0].mxu0
  %v7550 = vadd.f32 %v5565, %v7549
  %v7551 = vpop.f32.mrb[0].mxu0
  %v7552 = vadd.f32 %v5569, %v7551
  %v7553 = vpop.f32.mrb[0].mxu0
  %v7554 = vadd.f32 %v5565, %v7553
  %v7555 = vpop.f32.mrb[0].mxu0
  %v7556 = vadd.f32 %v5569, %v7555
  %7557 = vdwg.mxu0
  %7558 = vmatprep.subr.bf16.mxu0 %v6685
  %7559 = vmatpush1.bf16.msra.mxu0 %v6684
  %7560 = vmatprep.subr.bf16.mxu0 %v6697
  %7561 = vmatpush1.bf16.msra.mxu0 %v6696
  %7562 = vmatprep.subr.bf16.mxu0 %v6709
  %7563 = vmatpush1.bf16.msra.mxu0 %v6708
  %7564 = vmatprep.subr.bf16.mxu0 %v6721
  %7565 = vmatpush1.bf16.msra.mxu0 %v6720
  %7566 = vmatprep.subr.bf16.mxu0 %v6733
  %7567 = vmatpush1.bf16.msra.mxu0 %v6732
  %7568 = vmatprep.subr.bf16.mxu0 %v6745
  %7569 = vmatpush1.bf16.msra.mxu0 %v6744
  %7570 = vmatprep.subr.bf16.mxu0 %v6757
  %7571 = vmatpush1.bf16.msra.mxu0 %v6756
  %7572 = vmatprep.subr.bf16.mxu0 %v6769
  %7573 = vmatpush1.bf16.msra.mxu0 %v6768
  %7574 = vmatprep.subr.bf16.mxu0 %v6781
  %7575 = vmatpush1.bf16.msra.mxu0 %v6780
  %7576 = vmatprep.subr.bf16.mxu0 0
  %7577 = vmatpush1.bf16.msra.mxu0 0
  %7578 = vmatprep.subr.bf16.mxu0 0
  %7579 = vmatpush1.bf16.msra.mxu0 0
  %7580 = vmatprep.subr.bf16.mxu0 0
  %7581 = vmatpush1.bf16.msra.mxu0 0
  %7582 = vmatprep.subr.bf16.mxu0 0
  %7583 = vmatpush1.bf16.msra.mxu0 0
  %7584 = vmatprep.subr.bf16.mxu0 0
  %7585 = vmatpush1.bf16.msra.mxu0 0
  %7586 = vmatprep.subr.bf16.mxu0 0
  %7587 = vmatpush1.bf16.msra.mxu0 0
  %7588 = vmatprep.subr.bf16.mxu0 0
  %7589 = vmatpush1.bf16.msra.mxu0 0
  %7590 = vmatprep.mubr.bf16.mxu0 %v7083
  %7591 = vmatmul.mubr.bf16.gmra.mrb[0].mxu0 %v5216
  %v7592 = vpop.f32.mrb[0].mxu0
  %v7593 = vadd.f32 %v7550, %v7592
  %v7594 = vpop.f32.mrb[0].mxu0
  %v7595 = vadd.f32 %v7552, %v7594
  %v7596 = vpop.f32.mrb[0].mxu0
  %v7597 = vadd.f32 %v7554, %v7596
  %v7598 = vpop.f32.mrb[0].mxu0
  %v7599 = vadd.f32 %v7556, %v7598
  %7600 = vdwg.mxu0
  %v7601 = vpack.c.bf16 %v7163, %v7163
  %v7602 = vpack.c.bf16 %v7335, %v7335
  %v7603 = vpack.c.bf16 %v7507, %v7507
  %7604 = vmatprep.subr.bf16.mxu0 0
  %7605 = vmatpush1.bf16.xpose.msra.mxu0 %v7602
  %7606 = vmatprep.subr.bf16.mxu0 0
  %7607 = vmatpush1.bf16.xpose.msra.mxu0 0
  %7608 = vmatprep.subr.bf16.mxu0 0
  %7609 = vmatpush1.bf16.xpose.msra.mxu0 0
  %7610 = vmatprep.subr.bf16.mxu0 0
  %7611 = vmatpush1.bf16.xpose.msra.mxu0 0
  %7612 = vmatprep.subr.bf16.mxu0 0
  %7613 = vmatpush1.bf16.xpose.msra.mxu0 0
  %7614 = vmatprep.subr.bf16.mxu0 0
  %7615 = vmatpush1.bf16.xpose.msra.mxu0 0
  %7616 = vmatprep.subr.bf16.mxu0 0
  %7617 = vmatpush1.bf16.xpose.msra.mxu0 0
  %7618 = vmatprep.subr.bf16.mxu0 0
  %7619 = vmatpush1.bf16.xpose.msra.mxu0 0
  %7620 = vmatprep.subr.bf16.mxu0 0
  %7621 = vmatpush1.bf16.xpose.msra.mxu0 0
  %7622 = vmatprep.subr.bf16.mxu0 0
  %7623 = vmatpush1.bf16.xpose.msra.mxu0 0
  %7624 = vmatprep.subr.bf16.mxu0 0
  %7625 = vmatpush1.bf16.xpose.msra.mxu0 0
  %7626 = vmatprep.subr.bf16.mxu0 0
  %7627 = vmatpush1.bf16.xpose.msra.mxu0 0
  %7628 = vmatprep.subr.bf16.mxu0 0
  %7629 = vmatpush1.bf16.xpose.msra.mxu0 0
  %7630 = vmatprep.subr.bf16.mxu0 0
  %7631 = vmatpush1.bf16.xpose.msra.mxu0 0
  %7632 = vmatprep.subr.bf16.mxu0 0
  %7633 = vmatpush1.bf16.xpose.msra.mxu0 0
  %7634 = vmatprep.subr.bf16.mxu0 0
  %7635 = vmatpush1.bf16.xpose.msra.mxu0 0
  %7636 = vmatprep.mubr.bf16.mxu0 0
  %7637 = vmatmul.mubr.bf16.gmra.mrb[0].mxu0 %v7601
  %v7638 = vpop.f32.mrb[0].mxu0
  %v7639 = vadd.f32 0.0, %v7638
  %v7640 = vpop.f32.mrb[0].mxu0
  %v7641 = vpop.f32.mrb[0].mxu0
  %v7642 = vpop.f32.mrb[0].mxu0
  %7643 = vdwg.mxu0
  %v7644 = vmul.f32 %v7639, 0.1
  %v7645 = vsel %vm2565, %v7644, -inf
  %7646 = vmax.xlane.f32.xlu0 %v7645
  %v7647 = vpop.xlane.xlu0 %7646
  %v7648 = vsub.f32 %v7644, %v7647
  %v7649 = vmul.f32 %v7648, 1.442695
  %v7650 = vpow.pop %v7649
  %v7651 = vsel %vm2565, %v7650, 0.0
  %7652 = vadd.xlane.f32.xlu0 %v7651
  %v7653 = vpop.xlane.xlu0 %7652
  %v7654 = vrcp.pop %v7653
  %v7655 = vmul.f32 %v7650, %v7654
  %v7656 = vpack.c.bf16 %v7655, %v7655
  %v7658 = vsel %vm2578, %v7656, 0
  %v7661 = vand.u32 %v7603, %v2585
  %7663 = vmatprep.subr.bf16.mxu0 0
  %7664 = vmatpush1.bf16.msra.mxu0 %v7661
  %7665 = vmatprep.subr.bf16.mxu0 0
  %7666 = vmatpush1.bf16.msra.mxu0 0
  %7667 = vmatprep.subr.bf16.mxu0 0
  %7668 = vmatpush1.bf16.msra.mxu0 0
  %7669 = vmatprep.subr.bf16.mxu0 0
  %7670 = vmatpush1.bf16.msra.mxu0 0
  %7671 = vmatprep.subr.bf16.mxu0 0
  %7672 = vmatpush1.bf16.msra.mxu0 0
  %7673 = vmatprep.subr.bf16.mxu0 0
  %7674 = vmatpush1.bf16.msra.mxu0 0
  %7675 = vmatprep.subr.bf16.mxu0 0
  %7676 = vmatpush1.bf16.msra.mxu0 0
  %7677 = vmatprep.subr.bf16.mxu0 0
  %7678 = vmatpush1.bf16.msra.mxu0 0
  %7679 = vmatprep.subr.bf16.mxu0 0
  %7680 = vmatpush1.bf16.msra.mxu0 0
  %7681 = vmatprep.subr.bf16.mxu0 0
  %7682 = vmatpush1.bf16.msra.mxu0 0
  %7683 = vmatprep.subr.bf16.mxu0 0
  %7684 = vmatpush1.bf16.msra.mxu0 0
  %7685 = vmatprep.subr.bf16.mxu0 0
  %7686 = vmatpush1.bf16.msra.mxu0 0
  %7687 = vmatprep.subr.bf16.mxu0 0
  %7688 = vmatpush1.bf16.msra.mxu0 0
  %7689 = vmatprep.subr.bf16.mxu0 0
  %7690 = vmatpush1.bf16.msra.mxu0 0
  %7691 = vmatprep.subr.bf16.mxu0 0
  %7692 = vmatpush1.bf16.msra.mxu0 0
  %7693 = vmatprep.subr.bf16.mxu0 0
  %7694 = vmatpush1.bf16.msra.mxu0 0
  %7695 = vmatprep.mubr.bf16.mxu0 0
  %7696 = vmatmul.mubr.bf16.gmra.mrb[0].mxu0 %v7658
  %v7697 = vpop.f32.mrb[0].mxu0
  %v7698 = vadd.f32 0.0, %v7697
  %v7699 = vpop.f32.mrb[0].mxu0
  %v7700 = vpop.f32.mrb[0].mxu0
  %v7701 = vpop.f32.mrb[0].mxu0
  %7702 = vdwg.mxu0
  %7703 = vst [vmem:[#allocation2] sm:$0x1f] %v7698
  %v7704 = vpack.c.bf16 %v7165, %v7165
  %v7705 = vpack.c.bf16 %v7337, %v7337
  %v7706 = vpack.c.bf16 %v7509, %v7509
  %7707 = vmatprep.subr.bf16.mxu0 0
  %7708 = vmatpush1.bf16.xpose.msra.mxu0 %v7705
  %7709 = vmatprep.subr.bf16.mxu0 0
  %7710 = vmatpush1.bf16.xpose.msra.mxu0 0
  %7711 = vmatprep.subr.bf16.mxu0 0
  %7712 = vmatpush1.bf16.xpose.msra.mxu0 0
  %7713 = vmatprep.subr.bf16.mxu0 0
  %7714 = vmatpush1.bf16.xpose.msra.mxu0 0
  %7715 = vmatprep.subr.bf16.mxu0 0
  %7716 = vmatpush1.bf16.xpose.msra.mxu0 0
  %7717 = vmatprep.subr.bf16.mxu0 0
  %7718 = vmatpush1.bf16.xpose.msra.mxu0 0
  %7719 = vmatprep.subr.bf16.mxu0 0
  %7720 = vmatpush1.bf16.xpose.msra.mxu0 0
  %7721 = vmatprep.subr.bf16.mxu0 0
  %7722 = vmatpush1.bf16.xpose.msra.mxu0 0
  %7723 = vmatprep.subr.bf16.mxu0 0
  %7724 = vmatpush1.bf16.xpose.msra.mxu0 0
  %7725 = vmatprep.subr.bf16.mxu0 0
  %7726 = vmatpush1.bf16.xpose.msra.mxu0 0
  %7727 = vmatprep.subr.bf16.mxu0 0
  %7728 = vmatpush1.bf16.xpose.msra.mxu0 0
  %7729 = vmatprep.subr.bf16.mxu0 0
  %7730 = vmatpush1.bf16.xpose.msra.mxu0 0
  %7731 = vmatprep.subr.bf16.mxu0 0
  %7732 = vmatpush1.bf16.xpose.msra.mxu0 0
  %7733 = vmatprep.subr.bf16.mxu0 0
  %7734 = vmatpush1.bf16.xpose.msra.mxu0 0
  %7735 = vmatprep.subr.bf16.mxu0 0
  %7736 = vmatpush1.bf16.xpose.msra.mxu0 0
  %7737 = vmatprep.subr.bf16.mxu0 0
  %7738 = vmatpush1.bf16.xpose.msra.mxu0 0
  %7739 = vmatprep.mubr.bf16.mxu0 0
  %7740 = vmatmul.mubr.bf16.gmra.mrb[0].mxu0 %v7704
  %v7741 = vpop.f32.mrb[0].mxu0
  %v7742 = vadd.f32 0.0, %v7741
  %v7743 = vpop.f32.mrb[0].mxu0
  %v7744 = vpop.f32.mrb[0].mxu0
  %v7745 = vpop.f32.mrb[0].mxu0
  %7746 = vdwg.mxu0
  %v7747 = vmul.f32 %v7742, 0.1
  %v7748 = vsel %vm2565, %v7747, -inf
  %7749 = vmax.xlane.f32.xlu0 %v7748
  %v7750 = vpop.xlane.xlu0 %7749
  %v7751 = vsub.f32 %v7747, %v7750
  %v7752 = vmul.f32 %v7751, 1.442695
  %v7753 = vpow.pop %v7752
  %v7754 = vsel %vm2565, %v7753, 0.0
  %7755 = vadd.xlane.f32.xlu0 %v7754
  %v7756 = vpop.xlane.xlu0 %7755
  %v7757 = vrcp.pop %v7756
  %v7758 = vmul.f32 %v7753, %v7757
  %v7759 = vpack.c.bf16 %v7758, %v7758
  %v7761 = vsel %vm2578, %v7759, 0
  %v7764 = vand.u32 %v7706, %v2585
  %7766 = vmatprep.subr.bf16.mxu0 0
  %7767 = vmatpush1.bf16.msra.mxu0 %v7764
  %7768 = vmatprep.subr.bf16.mxu0 0
  %7769 = vmatpush1.bf16.msra.mxu0 0
  %7770 = vmatprep.subr.bf16.mxu0 0
  %7771 = vmatpush1.bf16.msra.mxu0 0
  %7772 = vmatprep.subr.bf16.mxu0 0
  %7773 = vmatpush1.bf16.msra.mxu0 0
  %7774 = vmatprep.subr.bf16.mxu0 0
  %7775 = vmatpush1.bf16.msra.mxu0 0
  %7776 = vmatprep.subr.bf16.mxu0 0
  %7777 = vmatpush1.bf16.msra.mxu0 0
  %7778 = vmatprep.subr.bf16.mxu0 0
  %7779 = vmatpush1.bf16.msra.mxu0 0
  %7780 = vmatprep.subr.bf16.mxu0 0
  %7781 = vmatpush1.bf16.msra.mxu0 0
  %7782 = vmatprep.subr.bf16.mxu0 0
  %7783 = vmatpush1.bf16.msra.mxu0 0
  %7784 = vmatprep.subr.bf16.mxu0 0
  %7785 = vmatpush1.bf16.msra.mxu0 0
  %7786 = vmatprep.subr.bf16.mxu0 0
  %7787 = vmatpush1.bf16.msra.mxu0 0
  %7788 = vmatprep.subr.bf16.mxu0 0
  %7789 = vmatpush1.bf16.msra.mxu0 0
  %7790 = vmatprep.subr.bf16.mxu0 0
  %7791 = vmatpush1.bf16.msra.mxu0 0
  %7792 = vmatprep.subr.bf16.mxu0 0
  %7793 = vmatpush1.bf16.msra.mxu0 0
  %7794 = vmatprep.subr.bf16.mxu0 0
  %7795 = vmatpush1.bf16.msra.mxu0 0
  %7796 = vmatprep.subr.bf16.mxu0 0
  %7797 = vmatpush1.bf16.msra.mxu0 0
  %7798 = vmatprep.mubr.bf16.mxu0 0
  %7799 = vmatmul.mubr.bf16.gmra.mrb[0].mxu0 %v7761
  %v7800 = vpop.f32.mrb[0].mxu0
  %v7801 = vadd.f32 0.0, %v7800
  %v7802 = vpop.f32.mrb[0].mxu0
  %v7803 = vpop.f32.mrb[0].mxu0
  %v7804 = vpop.f32.mrb[0].mxu0
  %7805 = vdwg.mxu0
  %7806 = vst [vmem:[#allocation2 + $0x8] sm:$0x1f] %v7801
  %v7807 = vpack.c.bf16 %v7249, %v7249
  %v7808 = vpack.c.bf16 %v7421, %v7421
  %v7809 = vpack.c.bf16 %v7593, %v7593
  %7810 = vmatprep.subr.bf16.mxu0 0
  %7811 = vmatpush1.bf16.xpose.msra.mxu0 %v7808
  %7812 = vmatprep.subr.bf16.mxu0 0
  %7813 = vmatpush1.bf16.xpose.msra.mxu0 0
  %7814 = vmatprep.subr.bf16.mxu0 0
  %7815 = vmatpush1.bf16.xpose.msra.mxu0 0
  %7816 = vmatprep.subr.bf16.mxu0 0
  %7817 = vmatpush1.bf16.xpose.msra.mxu0 0
  %7818 = vmatprep.subr.bf16.mxu0 0
  %7819 = vmatpush1.bf16.xpose.msra.mxu0 0
  %7820 = vmatprep.subr.bf16.mxu0 0
  %7821 = vmatpush1.bf16.xpose.msra.mxu0 0
  %7822 = vmatprep.subr.bf16.mxu0 0
  %7823 = vmatpush1.bf16.xpose.msra.mxu0 0
  %7824 = vmatprep.subr.bf16.mxu0 0
  %7825 = vmatpush1.bf16.xpose.msra.mxu0 0
  %7826 = vmatprep.subr.bf16.mxu0 0
  %7827 = vmatpush1.bf16.xpose.msra.mxu0 0
  %7828 = vmatprep.subr.bf16.mxu0 0
  %7829 = vmatpush1.bf16.xpose.msra.mxu0 0
  %7830 = vmatprep.subr.bf16.mxu0 0
  %7831 = vmatpush1.bf16.xpose.msra.mxu0 0
  %7832 = vmatprep.subr.bf16.mxu0 0
  %7833 = vmatpush1.bf16.xpose.msra.mxu0 0
  %7834 = vmatprep.subr.bf16.mxu0 0
  %7835 = vmatpush1.bf16.xpose.msra.mxu0 0
  %7836 = vmatprep.subr.bf16.mxu0 0
  %7837 = vmatpush1.bf16.xpose.msra.mxu0 0
  %7838 = vmatprep.subr.bf16.mxu0 0
  %7839 = vmatpush1.bf16.xpose.msra.mxu0 0
  %7840 = vmatprep.subr.bf16.mxu0 0
  %7841 = vmatpush1.bf16.xpose.msra.mxu0 0
  %7842 = vmatprep.mubr.bf16.mxu0 0
  %7843 = vmatmul.mubr.bf16.gmra.mrb[0].mxu0 %v7807
  %v7844 = vpop.f32.mrb[0].mxu0
  %v7845 = vadd.f32 0.0, %v7844
  %v7846 = vpop.f32.mrb[0].mxu0
  %v7847 = vpop.f32.mrb[0].mxu0
  %v7848 = vpop.f32.mrb[0].mxu0
  %7849 = vdwg.mxu0
  %v7850 = vmul.f32 %v7845, 0.1
  %v7851 = vsel %vm2565, %v7850, -inf
  %7852 = vmax.xlane.f32.xlu0 %v7851
  %v7853 = vpop.xlane.xlu0 %7852
  %v7854 = vsub.f32 %v7850, %v7853
  %v7855 = vmul.f32 %v7854, 1.442695
  %v7856 = vpow.pop %v7855
  %v7857 = vsel %vm2565, %v7856, 0.0
  %7858 = vadd.xlane.f32.xlu0 %v7857
  %v7859 = vpop.xlane.xlu0 %7858
  %v7860 = vrcp.pop %v7859
  %v7861 = vmul.f32 %v7856, %v7860
  %v7862 = vpack.c.bf16 %v7861, %v7861
  %v7864 = vsel %vm2578, %v7862, 0
  %v7867 = vand.u32 %v7809, %v2585
  %7869 = vmatprep.subr.bf16.mxu0 0
  %7870 = vmatpush1.bf16.msra.mxu0 %v7867
  %7871 = vmatprep.subr.bf16.mxu0 0
  %7872 = vmatpush1.bf16.msra.mxu0 0
  %7873 = vmatprep.subr.bf16.mxu0 0
  %7874 = vmatpush1.bf16.msra.mxu0 0
  %7875 = vmatprep.subr.bf16.mxu0 0
  %7876 = vmatpush1.bf16.msra.mxu0 0
  %7877 = vmatprep.subr.bf16.mxu0 0
  %7878 = vmatpush1.bf16.msra.mxu0 0
  %7879 = vmatprep.subr.bf16.mxu0 0
  %7880 = vmatpush1.bf16.msra.mxu0 0
  %7881 = vmatprep.subr.bf16.mxu0 0
  %7882 = vmatpush1.bf16.msra.mxu0 0
  %7883 = vmatprep.subr.bf16.mxu0 0
  %7884 = vmatpush1.bf16.msra.mxu0 0
  %7885 = vmatprep.subr.bf16.mxu0 0
  %7886 = vmatpush1.bf16.msra.mxu0 0
  %7887 = vmatprep.subr.bf16.mxu0 0
  %7888 = vmatpush1.bf16.msra.mxu0 0
  %7889 = vmatprep.subr.bf16.mxu0 0
  %7890 = vmatpush1.bf16.msra.mxu0 0
  %7891 = vmatprep.subr.bf16.mxu0 0
  %7892 = vmatpush1.bf16.msra.mxu0 0
  %7893 = vmatprep.subr.bf16.mxu0 0
  %7894 = vmatpush1.bf16.msra.mxu0 0
  %7895 = vmatprep.subr.bf16.mxu0 0
  %7896 = vmatpush1.bf16.msra.mxu0 0
  %7897 = vmatprep.subr.bf16.mxu0 0
  %7898 = vmatpush1.bf16.msra.mxu0 0
  %7899 = vmatprep.subr.bf16.mxu0 0
  %7900 = vmatpush1.bf16.msra.mxu0 0
  %7901 = vmatprep.mubr.bf16.mxu0 0
  %7902 = vmatmul.mubr.bf16.gmra.mrb[0].mxu0 %v7864
  %v7903 = vpop.f32.mrb[0].mxu0
  %v7904 = vadd.f32 0.0, %v7903
  %v7905 = vpop.f32.mrb[0].mxu0
  %v7906 = vpop.f32.mrb[0].mxu0
  %v7907 = vpop.f32.mrb[0].mxu0
  %7908 = vdwg.mxu0
  %7909 = vst [vmem:[#allocation2 + $0x10] sm:$0x1f] %v7904
  %v7910 = vpack.c.bf16 %v7251, %v7251
  %v7911 = vpack.c.bf16 %v7423, %v7423
  %v7912 = vpack.c.bf16 %v7595, %v7595
  %7913 = vmatprep.subr.bf16.mxu0 0
  %7914 = vmatpush1.bf16.xpose.msra.mxu0 %v7911
  %7915 = vmatprep.subr.bf16.mxu0 0
  %7916 = vmatpush1.bf16.xpose.msra.mxu0 0
  %7917 = vmatprep.subr.bf16.mxu0 0
  %7918 = vmatpush1.bf16.xpose.msra.mxu0 0
  %7919 = vmatprep.subr.bf16.mxu0 0
  %7920 = vmatpush1.bf16.xpose.msra.mxu0 0
  %7921 = vmatprep.subr.bf16.mxu0 0
  %7922 = vmatpush1.bf16.xpose.msra.mxu0 0
  %7923 = vmatprep.subr.bf16.mxu0 0
  %7924 = vmatpush1.bf16.xpose.msra.mxu0 0
  %7925 = vmatprep.subr.bf16.mxu0 0
  %7926 = vmatpush1.bf16.xpose.msra.mxu0 0
  %7927 = vmatprep.subr.bf16.mxu0 0
  %7928 = vmatpush1.bf16.xpose.msra.mxu0 0
  %7929 = vmatprep.subr.bf16.mxu0 0
  %7930 = vmatpush1.bf16.xpose.msra.mxu0 0
  %7931 = vmatprep.subr.bf16.mxu0 0
  %7932 = vmatpush1.bf16.xpose.msra.mxu0 0
  %7933 = vmatprep.subr.bf16.mxu0 0
  %7934 = vmatpush1.bf16.xpose.msra.mxu0 0
  %7935 = vmatprep.subr.bf16.mxu0 0
  %7936 = vmatpush1.bf16.xpose.msra.mxu0 0
  %7937 = vmatprep.subr.bf16.mxu0 0
  %7938 = vmatpush1.bf16.xpose.msra.mxu0 0
  %7939 = vmatprep.subr.bf16.mxu0 0
  %7940 = vmatpush1.bf16.xpose.msra.mxu0 0
  %7941 = vmatprep.subr.bf16.mxu0 0
  %7942 = vmatpush1.bf16.xpose.msra.mxu0 0
  %7943 = vmatprep.subr.bf16.mxu0 0
  %7944 = vmatpush1.bf16.xpose.msra.mxu0 0
  %7945 = vmatprep.mubr.bf16.mxu0 0
  %7946 = vmatmul.mubr.bf16.gmra.mrb[0].mxu0 %v7910
  %v7947 = vpop.f32.mrb[0].mxu0
  %v7948 = vadd.f32 0.0, %v7947
  %v7949 = vpop.f32.mrb[0].mxu0
  %v7950 = vpop.f32.mrb[0].mxu0
  %v7951 = vpop.f32.mrb[0].mxu0
  %7952 = vdwg.mxu0
  %v7953 = vmul.f32 %v7948, 0.1
  %v7954 = vsel %vm2565, %v7953, -inf
  %7955 = vmax.xlane.f32.xlu0 %v7954
  %v7956 = vpop.xlane.xlu0 %7955
  %v7957 = vsub.f32 %v7953, %v7956
  %v7958 = vmul.f32 %v7957, 1.442695
  %v7959 = vpow.pop %v7958
  %v7960 = vsel %vm2565, %v7959, 0.0
  %7961 = vadd.xlane.f32.xlu0 %v7960
  %v7962 = vpop.xlane.xlu0 %7961
  %v7963 = vrcp.pop %v7962
  %v7964 = vmul.f32 %v7959, %v7963
  %v7965 = vpack.c.bf16 %v7964, %v7964
  %v7967 = vsel %vm2578, %v7965, 0
  %v7970 = vand.u32 %v7912, %v2585
  %7972 = vmatprep.subr.bf16.mxu0 0
  %7973 = vmatpush1.bf16.msra.mxu0 %v7970
  %7974 = vmatprep.subr.bf16.mxu0 0
  %7975 = vmatpush1.bf16.msra.mxu0 0
  %7976 = vmatprep.subr.bf16.mxu0 0
  %7977 = vmatpush1.bf16.msra.mxu0 0
  %7978 = vmatprep.subr.bf16.mxu0 0
  %7979 = vmatpush1.bf16.msra.mxu0 0
  %7980 = vmatprep.subr.bf16.mxu0 0
  %7981 = vmatpush1.bf16.msra.mxu0 0
  %7982 = vmatprep.subr.bf16.mxu0 0
  %7983 = vmatpush1.bf16.msra.mxu0 0
  %7984 = vmatprep.subr.bf16.mxu0 0
  %7985 = vmatpush1.bf16.msra.mxu0 0
  %7986 = vmatprep.subr.bf16.mxu0 0
  %7987 = vmatpush1.bf16.msra.mxu0 0
  %7988 = vmatprep.subr.bf16.mxu0 0
  %7989 = vmatpush1.bf16.msra.mxu0 0
  %7990 = vmatprep.subr.bf16.mxu0 0
  %7991 = vmatpush1.bf16.msra.mxu0 0
  %7992 = vmatprep.subr.bf16.mxu0 0
  %7993 = vmatpush1.bf16.msra.mxu0 0
  %7994 = vmatprep.subr.bf16.mxu0 0
  %7995 = vmatpush1.bf16.msra.mxu0 0
  %7996 = vmatprep.subr.bf16.mxu0 0
  %7997 = vmatpush1.bf16.msra.mxu0 0
  %7998 = vmatprep.subr.bf16.mxu0 0
  %7999 = vmatpush1.bf16.msra.mxu0 0
  %8000 = vmatprep.subr.bf16.mxu0 0
  %8001 = vmatpush1.bf16.msra.mxu0 0
  %8002 = vmatprep.subr.bf16.mxu0 0
  %8003 = vmatpush1.bf16.msra.mxu0 0
  %8004 = vmatprep.mubr.bf16.mxu0 0
  %8005 = vmatmul.mubr.bf16.gmra.mrb[0].mxu0 %v7967
  %v8006 = vpop.f32.mrb[0].mxu0
  %v8007 = vadd.f32 0.0, %v8006
  %v8008 = vpop.f32.mrb[0].mxu0
  %v8009 = vpop.f32.mrb[0].mxu0
  %v8010 = vpop.f32.mrb[0].mxu0
  %8011 = vdwg.mxu0
  %8012 = vst [vmem:[#allocation2 + $0x18] sm:$0x1f] %v8007
  %v8013 = vpack.c.bf16 %v7167, %v7163
  %v8014 = vpack.c.bf16 %v7339, %v7335
  %v8015 = vpack.c.bf16 %v7511, %v7507
  %v8017 = vshrl.u32 %v8013, 16
  %v8019 = vrot.slane %v8017, 2
  %v8020 = vshll.u32 %v8013, 16
  %v8022 = vrot.slane %v8020, 3
  %v8023 = vor.u32 %v8019, %v8022
  %v8026 = vshrl.u32 %v8014, 16
  %v8028 = vrot.slane %v8026, 2
  %v8029 = vshll.u32 %v8014, 16
  %v8031 = vrot.slane %v8029, 3
  %v8032 = vor.u32 %v8028, %v8031
  %8034 = vmatprep.subr.bf16.mxu0 0
  %8035 = vmatpush1.bf16.xpose.msra.mxu0 %v8032
  %8036 = vmatprep.subr.bf16.mxu0 0
  %8037 = vmatpush1.bf16.xpose.msra.mxu0 0
  %8038 = vmatprep.subr.bf16.mxu0 0
  %8039 = vmatpush1.bf16.xpose.msra.mxu0 0
  %8040 = vmatprep.subr.bf16.mxu0 0
  %8041 = vmatpush1.bf16.xpose.msra.mxu0 0
  %8042 = vmatprep.subr.bf16.mxu0 0
  %8043 = vmatpush1.bf16.xpose.msra.mxu0 0
  %8044 = vmatprep.subr.bf16.mxu0 0
  %8045 = vmatpush1.bf16.xpose.msra.mxu0 0
  %8046 = vmatprep.subr.bf16.mxu0 0
  %8047 = vmatpush1.bf16.xpose.msra.mxu0 0
  %8048 = vmatprep.subr.bf16.mxu0 0
  %8049 = vmatpush1.bf16.xpose.msra.mxu0 0
  %8050 = vmatprep.subr.bf16.mxu0 0
  %8051 = vmatpush1.bf16.xpose.msra.mxu0 0
  %8052 = vmatprep.subr.bf16.mxu0 0
  %8053 = vmatpush1.bf16.xpose.msra.mxu0 0
  %8054 = vmatprep.subr.bf16.mxu0 0
  %8055 = vmatpush1.bf16.xpose.msra.mxu0 0
  %8056 = vmatprep.subr.bf16.mxu0 0
  %8057 = vmatpush1.bf16.xpose.msra.mxu0 0
  %8058 = vmatprep.subr.bf16.mxu0 0
  %8059 = vmatpush1.bf16.xpose.msra.mxu0 0
  %8060 = vmatprep.subr.bf16.mxu0 0
  %8061 = vmatpush1.bf16.xpose.msra.mxu0 0
  %8062 = vmatprep.subr.bf16.mxu0 0
  %8063 = vmatpush1.bf16.xpose.msra.mxu0 0
  %8064 = vmatprep.subr.bf16.mxu0 0
  %8065 = vmatpush1.bf16.xpose.msra.mxu0 0
  %8066 = vmatprep.mubr.bf16.mxu0 0
  %8067 = vmatmul.mubr.bf16.gmra.mrb[0].mxu0 %v8023
  %v8068 = vpop.f32.mrb[0].mxu0
  %v8069 = vadd.f32 0.0, %v8068
  %v8070 = vpop.f32.mrb[0].mxu0
  %v8071 = vpop.f32.mrb[0].mxu0
  %v8072 = vpop.f32.mrb[0].mxu0
  %8073 = vdwg.mxu0
  %v8074 = vmul.f32 %v8069, 0.1
  %v8075 = vsel %vm2565, %v8074, -inf
  %8076 = vmax.xlane.f32.xlu0 %v8075
  %v8077 = vpop.xlane.xlu0 %8076
  %v8078 = vsub.f32 %v8074, %v8077
  %v8079 = vmul.f32 %v8078, 1.442695
  %v8080 = vpow.pop %v8079
  %v8081 = vsel %vm2565, %v8080, 0.0
  %8082 = vadd.xlane.f32.xlu0 %v8081
  %v8083 = vpop.xlane.xlu0 %8082
  %v8084 = vrcp.pop %v8083
  %v8085 = vmul.f32 %v8080, %v8084
  %v8086 = vpack.c.bf16 %v8085, %v8085
  %v8088 = vshrl.u32 %v8015, 16
  %v8090 = vrot.slane %v8088, 2
  %v8091 = vshll.u32 %v8015, 16
  %v8093 = vrot.slane %v8091, 3
  %v8094 = vor.u32 %v8090, %v8093
  %v8096 = vsel %vm2578, %v8086, 0
  %v8099 = vand.u32 %v8094, %v2585
  %8101 = vmatprep.subr.bf16.mxu0 0
  %8102 = vmatpush1.bf16.msra.mxu0 %v8099
  %8103 = vmatprep.subr.bf16.mxu0 0
  %8104 = vmatpush1.bf16.msra.mxu0 0
  %8105 = vmatprep.subr.bf16.mxu0 0
  %8106 = vmatpush1.bf16.msra.mxu0 0
  %8107 = vmatprep.subr.bf16.mxu0 0
  %8108 = vmatpush1.bf16.msra.mxu0 0
  %8109 = vmatprep.subr.bf16.mxu0 0
  %8110 = vmatpush1.bf16.msra.mxu0 0
  %8111 = vmatprep.subr.bf16.mxu0 0
  %8112 = vmatpush1.bf16.msra.mxu0 0
  %8113 = vmatprep.subr.bf16.mxu0 0
  %8114 = vmatpush1.bf16.msra.mxu0 0
  %8115 = vmatprep.subr.bf16.mxu0 0
  %8116 = vmatpush1.bf16.msra.mxu0 0
  %8117 = vmatprep.subr.bf16.mxu0 0
  %8118 = vmatpush1.bf16.msra.mxu0 0
  %8119 = vmatprep.subr.bf16.mxu0 0
  %8120 = vmatpush1.bf16.msra.mxu0 0
  %8121 = vmatprep.subr.bf16.mxu0 0
  %8122 = vmatpush1.bf16.msra.mxu0 0
  %8123 = vmatprep.subr.bf16.mxu0 0
  %8124 = vmatpush1.bf16.msra.mxu0 0
  %8125 = vmatprep.subr.bf16.mxu0 0
  %8126 = vmatpush1.bf16.msra.mxu0 0
  %8127 = vmatprep.subr.bf16.mxu0 0
  %8128 = vmatpush1.bf16.msra.mxu0 0
  %8129 = vmatprep.subr.bf16.mxu0 0
  %8130 = vmatpush1.bf16.msra.mxu0 0
  %8131 = vmatprep.subr.bf16.mxu0 0
  %8132 = vmatpush1.bf16.msra.mxu0 0
  %8133 = vmatprep.mubr.bf16.mxu0 0
  %8134 = vmatmul.mubr.bf16.gmra.mrb[0].mxu0 %v8096
  %v8135 = vpop.f32.mrb[0].mxu0
  %v8136 = vadd.f32 0.0, %v8135
  %v8137 = vpop.f32.mrb[0].mxu0
  %v8138 = vpop.f32.mrb[0].mxu0
  %v8139 = vpop.f32.mrb[0].mxu0
  %8140 = vdwg.mxu0
  %v8142 = vrot.slane %v8136, 3
  %8144 = vst [vmem:[#allocation2] sm:$0xe0] %v8142
  %8145 = vst [vmem:[#allocation2 + $0x20] sm:$0x3] %v8142
  %v8146 = vpack.c.bf16 %v7169, %v7165
  %v8147 = vpack.c.bf16 %v7341, %v7337
  %v8148 = vpack.c.bf16 %v7513, %v7509
  %v8150 = vshrl.u32 %v8146, 16
  %v8152 = vrot.slane %v8150, 2
  %v8153 = vshll.u32 %v8146, 16
  %v8155 = vrot.slane %v8153, 3
  %v8156 = vor.u32 %v8152, %v8155
  %v8159 = vshrl.u32 %v8147, 16
  %v8161 = vrot.slane %v8159, 2
  %v8162 = vshll.u32 %v8147, 16
  %v8164 = vrot.slane %v8162, 3
  %v8165 = vor.u32 %v8161, %v8164
  %8167 = vmatprep.subr.bf16.mxu0 0
  %8168 = vmatpush1.bf16.xpose.msra.mxu0 %v8165
  %8169 = vmatprep.subr.bf16.mxu0 0
  %8170 = vmatpush1.bf16.xpose.msra.mxu0 0
  %8171 = vmatprep.subr.bf16.mxu0 0
  %8172 = vmatpush1.bf16.xpose.msra.mxu0 0
  %8173 = vmatprep.subr.bf16.mxu0 0
  %8174 = vmatpush1.bf16.xpose.msra.mxu0 0
  %8175 = vmatprep.subr.bf16.mxu0 0
  %8176 = vmatpush1.bf16.xpose.msra.mxu0 0
  %8177 = vmatprep.subr.bf16.mxu0 0
  %8178 = vmatpush1.bf16.xpose.msra.mxu0 0
  %8179 = vmatprep.subr.bf16.mxu0 0
  %8180 = vmatpush1.bf16.xpose.msra.mxu0 0
  %8181 = vmatprep.subr.bf16.mxu0 0
  %8182 = vmatpush1.bf16.xpose.msra.mxu0 0
  %8183 = vmatprep.subr.bf16.mxu0 0
  %8184 = vmatpush1.bf16.xpose.msra.mxu0 0
  %8185 = vmatprep.subr.bf16.mxu0 0
  %8186 = vmatpush1.bf16.xpose.msra.mxu0 0
  %8187 = vmatprep.subr.bf16.mxu0 0
  %8188 = vmatpush1.bf16.xpose.msra.mxu0 0
  %8189 = vmatprep.subr.bf16.mxu0 0
  %8190 = vmatpush1.bf16.xpose.msra.mxu0 0
  %8191 = vmatprep.subr.bf16.mxu0 0
  %8192 = vmatpush1.bf16.xpose.msra.mxu0 0
  %8193 = vmatprep.subr.bf16.mxu0 0
  %8194 = vmatpush1.bf16.xpose.msra.mxu0 0
  %8195 = vmatprep.subr.bf16.mxu0 0
  %8196 = vmatpush1.bf16.xpose.msra.mxu0 0
  %8197 = vmatprep.subr.bf16.mxu0 0
  %8198 = vmatpush1.bf16.xpose.msra.mxu0 0
  %8199 = vmatprep.mubr.bf16.mxu0 0
  %8200 = vmatmul.mubr.bf16.gmra.mrb[0].mxu0 %v8156
  %v8201 = vpop.f32.mrb[0].mxu0
  %v8202 = vadd.f32 0.0, %v8201
  %v8203 = vpop.f32.mrb[0].mxu0
  %v8204 = vpop.f32.mrb[0].mxu0
  %v8205 = vpop.f32.mrb[0].mxu0
  %8206 = vdwg.mxu0
  %v8207 = vmul.f32 %v8202, 0.1
  %v8208 = vsel %vm2565, %v8207, -inf
  %8209 = vmax.xlane.f32.xlu0 %v8208
  %v8210 = vpop.xlane.xlu0 %8209
  %v8211 = vsub.f32 %v8207, %v8210
  %v8212 = vmul.f32 %v8211, 1.442695
  %v8213 = vpow.pop %v8212
  %v8214 = vsel %vm2565, %v8213, 0.0
  %8215 = vadd.xlane.f32.xlu0 %v8214
  %v8216 = vpop.xlane.xlu0 %8215
  %v8217 = vrcp.pop %v8216
  %v8218 = vmul.f32 %v8213, %v8217
  %v8219 = vpack.c.bf16 %v8218, %v8218
  %v8221 = vshrl.u32 %v8148, 16
  %v8223 = vrot.slane %v8221, 2
  %v8224 = vshll.u32 %v8148, 16
  %v8226 = vrot.slane %v8224, 3
  %v8227 = vor.u32 %v8223, %v8226
  %v8229 = vsel %vm2578, %v8219, 0
  %v8232 = vand.u32 %v8227, %v2585
  %8234 = vmatprep.subr.bf16.mxu0 0
  %8235 = vmatpush1.bf16.msra.mxu0 %v8232
  %8236 = vmatprep.subr.bf16.mxu0 0
  %8237 = vmatpush1.bf16.msra.mxu0 0
  %8238 = vmatprep.subr.bf16.mxu0 0
  %8239 = vmatpush1.bf16.msra.mxu0 0
  %8240 = vmatprep.subr.bf16.mxu0 0
  %8241 = vmatpush1.bf16.msra.mxu0 0
  %8242 = vmatprep.subr.bf16.mxu0 0
  %8243 = vmatpush1.bf16.msra.mxu0 0
  %8244 = vmatprep.subr.bf16.mxu0 0
  %8245 = vmatpush1.bf16.msra.mxu0 0
  %8246 = vmatprep.subr.bf16.mxu0 0
  %8247 = vmatpush1.bf16.msra.mxu0 0
  %8248 = vmatprep.subr.bf16.mxu0 0
  %8249 = vmatpush1.bf16.msra.mxu0 0
  %8250 = vmatprep.subr.bf16.mxu0 0
  %8251 = vmatpush1.bf16.msra.mxu0 0
  %8252 = vmatprep.subr.bf16.mxu0 0
  %8253 = vmatpush1.bf16.msra.mxu0 0
  %8254 = vmatprep.subr.bf16.mxu0 0
  %8255 = vmatpush1.bf16.msra.mxu0 0
  %8256 = vmatprep.subr.bf16.mxu0 0
  %8257 = vmatpush1.bf16.msra.mxu0 0
  %8258 = vmatprep.subr.bf16.mxu0 0
  %8259 = vmatpush1.bf16.msra.mxu0 0
  %8260 = vmatprep.subr.bf16.mxu0 0
  %8261 = vmatpush1.bf16.msra.mxu0 0
  %8262 = vmatprep.subr.bf16.mxu0 0
  %8263 = vmatpush1.bf16.msra.mxu0 0
  %8264 = vmatprep.subr.bf16.mxu0 0
  %8265 = vmatpush1.bf16.msra.mxu0 0
  %8266 = vmatprep.mubr.bf16.mxu0 0
  %8267 = vmatmul.mubr.bf16.gmra.mrb[0].mxu0 %v8229
  %v8268 = vpop.f32.mrb[0].mxu0
  %v8269 = vadd.f32 0.0, %v8268
  %v8270 = vpop.f32.mrb[0].mxu0
  %v8271 = vpop.f32.mrb[0].mxu0
  %v8272 = vpop.f32.mrb[0].mxu0
  %8273 = vdwg.mxu0
  %v8275 = vrot.slane %v8269, 3
  %8277 = vst [vmem:[#allocation2 + $0x8] sm:$0xe0] %v8275
  %8278 = vst [vmem:[#allocation2 + $0x28] sm:$0x3] %v8275
  %v8279 = vpack.c.bf16 %v7253, %v7249
  %v8280 = vpack.c.bf16 %v7425, %v7421
  %v8281 = vpack.c.bf16 %v7597, %v7593
  %v8283 = vshrl.u32 %v8279, 16
  %v8285 = vrot.slane %v8283, 2
  %v8286 = vshll.u32 %v8279, 16
  %v8288 = vrot.slane %v8286, 3
  %v8289 = vor.u32 %v8285, %v8288
  %v8292 = vshrl.u32 %v8280, 16
  %v8294 = vrot.slane %v8292, 2
  %v8295 = vshll.u32 %v8280, 16
  %v8297 = vrot.slane %v8295, 3
  %v8298 = vor.u32 %v8294, %v8297
  %8300 = vmatprep.subr.bf16.mxu0 0
  %8301 = vmatpush1.bf16.xpose.msra.mxu0 %v8298
  %8302 = vmatprep.subr.bf16.mxu0 0
  %8303 = vmatpush1.bf16.xpose.msra.mxu0 0
  %8304 = vmatprep.subr.bf16.mxu0 0
  %8305 = vmatpush1.bf16.xpose.msra.mxu0 0
  %8306 = vmatprep.subr.bf16.mxu0 0
  %8307 = vmatpush1.bf16.xpose.msra.mxu0 0
  %8308 = vmatprep.subr.bf16.mxu0 0
  %8309 = vmatpush1.bf16.xpose.msra.mxu0 0
  %8310 = vmatprep.subr.bf16.mxu0 0
  %8311 = vmatpush1.bf16.xpose.msra.mxu0 0
  %8312 = vmatprep.subr.bf16.mxu0 0
  %8313 = vmatpush1.bf16.xpose.msra.mxu0 0
  %8314 = vmatprep.subr.bf16.mxu0 0
  %8315 = vmatpush1.bf16.xpose.msra.mxu0 0
  %8316 = vmatprep.subr.bf16.mxu0 0
  %8317 = vmatpush1.bf16.xpose.msra.mxu0 0
  %8318 = vmatprep.subr.bf16.mxu0 0
  %8319 = vmatpush1.bf16.xpose.msra.mxu0 0
  %8320 = vmatprep.subr.bf16.mxu0 0
  %8321 = vmatpush1.bf16.xpose.msra.mxu0 0
  %8322 = vmatprep.subr.bf16.mxu0 0
  %8323 = vmatpush1.bf16.xpose.msra.mxu0 0
  %8324 = vmatprep.subr.bf16.mxu0 0
  %8325 = vmatpush1.bf16.xpose.msra.mxu0 0
  %8326 = vmatprep.subr.bf16.mxu0 0
  %8327 = vmatpush1.bf16.xpose.msra.mxu0 0
  %8328 = vmatprep.subr.bf16.mxu0 0
  %8329 = vmatpush1.bf16.xpose.msra.mxu0 0
  %8330 = vmatprep.subr.bf16.mxu0 0
  %8331 = vmatpush1.bf16.xpose.msra.mxu0 0
  %8332 = vmatprep.mubr.bf16.mxu0 0
  %8333 = vmatmul.mubr.bf16.gmra.mrb[0].mxu0 %v8289
  %v8334 = vpop.f32.mrb[0].mxu0
  %v8335 = vadd.f32 0.0, %v8334
  %v8336 = vpop.f32.mrb[0].mxu0
  %v8337 = vpop.f32.mrb[0].mxu0
  %v8338 = vpop.f32.mrb[0].mxu0
  %8339 = vdwg.mxu0
  %v8340 = vmul.f32 %v8335, 0.1
  %v8341 = vsel %vm2565, %v8340, -inf
  %8342 = vmax.xlane.f32.xlu0 %v8341
  %v8343 = vpop.xlane.xlu0 %8342
  %v8344 = vsub.f32 %v8340, %v8343
  %v8345 = vmul.f32 %v8344, 1.442695
  %v8346 = vpow.pop %v8345
  %v8347 = vsel %vm2565, %v8346, 0.0
  %8348 = vadd.xlane.f32.xlu0 %v8347
  %v8349 = vpop.xlane.xlu0 %8348
  %v8350 = vrcp.pop %v8349
  %v8351 = vmul.f32 %v8346, %v8350
  %v8352 = vpack.c.bf16 %v8351, %v8351
  %v8354 = vshrl.u32 %v8281, 16
  %v8356 = vrot.slane %v8354, 2
  %v8357 = vshll.u32 %v8281, 16
  %v8359 = vrot.slane %v8357, 3
  %v8360 = vor.u32 %v8356, %v8359
  %v8362 = vsel %vm2578, %v8352, 0
  %v8365 = vand.u32 %v8360, %v2585
  %8367 = vmatprep.subr.bf16.mxu0 0
  %8368 = vmatpush1.bf16.msra.mxu0 %v8365
  %8369 = vmatprep.subr.bf16.mxu0 0
  %8370 = vmatpush1.bf16.msra.mxu0 0
  %8371 = vmatprep.subr.bf16.mxu0 0
  %8372 = vmatpush1.bf16.msra.mxu0 0
  %8373 = vmatprep.subr.bf16.mxu0 0
  %8374 = vmatpush1.bf16.msra.mxu0 0
  %8375 = vmatprep.subr.bf16.mxu0 0
  %8376 = vmatpush1.bf16.msra.mxu0 0
  %8377 = vmatprep.subr.bf16.mxu0 0
  %8378 = vmatpush1.bf16.msra.mxu0 0
  %8379 = vmatprep.subr.bf16.mxu0 0
  %8380 = vmatpush1.bf16.msra.mxu0 0
  %8381 = vmatprep.subr.bf16.mxu0 0
  %8382 = vmatpush1.bf16.msra.mxu0 0
  %8383 = vmatprep.subr.bf16.mxu0 0
  %8384 = vmatpush1.bf16.msra.mxu0 0
  %8385 = vmatprep.subr.bf16.mxu0 0
  %8386 = vmatpush1.bf16.msra.mxu0 0
  %8387 = vmatprep.subr.bf16.mxu0 0
  %8388 = vmatpush1.bf16.msra.mxu0 0
  %8389 = vmatprep.subr.bf16.mxu0 0
  %8390 = vmatpush1.bf16.msra.mxu0 0
  %8391 = vmatprep.subr.bf16.mxu0 0
  %8392 = vmatpush1.bf16.msra.mxu0 0
  %8393 = vmatprep.subr.bf16.mxu0 0
  %8394 = vmatpush1.bf16.msra.mxu0 0
  %8395 = vmatprep.subr.bf16.mxu0 0
  %8396 = vmatpush1.bf16.msra.mxu0 0
  %8397 = vmatprep.subr.bf16.mxu0 0
  %8398 = vmatpush1.bf16.msra.mxu0 0
  %8399 = vmatprep.mubr.bf16.mxu0 0
  %8400 = vmatmul.mubr.bf16.gmra.mrb[0].mxu0 %v8362
  %v8401 = vpop.f32.mrb[0].mxu0
  %v8402 = vadd.f32 0.0, %v8401
  %v8403 = vpop.f32.mrb[0].mxu0
  %v8404 = vpop.f32.mrb[0].mxu0
  %v8405 = vpop.f32.mrb[0].mxu0
  %8406 = vdwg.mxu0
  %v8408 = vrot.slane %v8402, 3
  %8410 = vst [vmem:[#allocation2 + $0x10] sm:$0xe0] %v8408
  %8411 = vst [vmem:[#allocation2 + $0x30] sm:$0x3] %v8408
  %v8412 = vpack.c.bf16 %v7255, %v7251
  %v8413 = vpack.c.bf16 %v7427, %v7423
  %v8414 = vpack.c.bf16 %v7599, %v7595
  %v8416 = vshrl.u32 %v8412, 16
  %v8418 = vrot.slane %v8416, 2
  %v8419 = vshll.u32 %v8412, 16
  %v8421 = vrot.slane %v8419, 3
  %v8422 = vor.u32 %v8418, %v8421
  %v8425 = vshrl.u32 %v8413, 16
  %v8427 = vrot.slane %v8425, 2
  %v8428 = vshll.u32 %v8413, 16
  %v8430 = vrot.slane %v8428, 3
  %v8431 = vor.u32 %v8427, %v8430
  %8433 = vmatprep.subr.bf16.mxu0 0
  %8434 = vmatpush1.bf16.xpose.msra.mxu0 %v8431
  %8435 = vmatprep.subr.bf16.mxu0 0
  %8436 = vmatpush1.bf16.xpose.msra.mxu0 0
  %8437 = vmatprep.subr.bf16.mxu0 0
  %8438 = vmatpush1.bf16.xpose.msra.mxu0 0
  %8439 = vmatprep.subr.bf16.mxu0 0
  %8440 = vmatpush1.bf16.xpose.msra.mxu0 0
  %8441 = vmatprep.subr.bf16.mxu0 0
  %8442 = vmatpush1.bf16.xpose.msra.mxu0 0
  %8443 = vmatprep.subr.bf16.mxu0 0
  %8444 = vmatpush1.bf16.xpose.msra.mxu0 0
  %8445 = vmatprep.subr.bf16.mxu0 0
  %8446 = vmatpush1.bf16.xpose.msra.mxu0 0
  %8447 = vmatprep.subr.bf16.mxu0 0
  %8448 = vmatpush1.bf16.xpose.msra.mxu0 0
  %8449 = vmatprep.subr.bf16.mxu0 0
  %8450 = vmatpush1.bf16.xpose.msra.mxu0 0
  %8451 = vmatprep.subr.bf16.mxu0 0
  %8452 = vmatpush1.bf16.xpose.msra.mxu0 0
  %8453 = vmatprep.subr.bf16.mxu0 0
  %8454 = vmatpush1.bf16.xpose.msra.mxu0 0
  %8455 = vmatprep.subr.bf16.mxu0 0
  %8456 = vmatpush1.bf16.xpose.msra.mxu0 0
  %8457 = vmatprep.subr.bf16.mxu0 0
  %8458 = vmatpush1.bf16.xpose.msra.mxu0 0
  %8459 = vmatprep.subr.bf16.mxu0 0
  %8460 = vmatpush1.bf16.xpose.msra.mxu0 0
  %8461 = vmatprep.subr.bf16.mxu0 0
  %8462 = vmatpush1.bf16.xpose.msra.mxu0 0
  %8463 = vmatprep.subr.bf16.mxu0 0
  %8464 = vmatpush1.bf16.xpose.msra.mxu0 0
  %8465 = vmatprep.mubr.bf16.mxu0 0
  %8466 = vmatmul.mubr.bf16.gmra.mrb[0].mxu0 %v8422
  %v8467 = vpop.f32.mrb[0].mxu0
  %v8468 = vadd.f32 0.0, %v8467
  %v8469 = vpop.f32.mrb[0].mxu0
  %v8470 = vpop.f32.mrb[0].mxu0
  %v8471 = vpop.f32.mrb[0].mxu0
  %8472 = vdwg.mxu0
  %v8473 = vmul.f32 %v8468, 0.1
  %v8474 = vsel %vm2565, %v8473, -inf
  %8475 = vmax.xlane.f32.xlu0 %v8474
  %v8476 = vpop.xlane.xlu0 %8475
  %v8477 = vsub.f32 %v8473, %v8476
  %v8478 = vmul.f32 %v8477, 1.442695
  %v8479 = vpow.pop %v8478
  %v8480 = vsel %vm2565, %v8479, 0.0
  %8481 = vadd.xlane.f32.xlu0 %v8480
  %v8482 = vpop.xlane.xlu0 %8481
  %v8483 = vrcp.pop %v8482
  %v8484 = vmul.f32 %v8479, %v8483
  %v8485 = vpack.c.bf16 %v8484, %v8484
  %v8487 = vshrl.u32 %v8414, 16
  %v8489 = vrot.slane %v8487, 2
  %v8490 = vshll.u32 %v8414, 16
  %v8492 = vrot.slane %v8490, 3
  %v8493 = vor.u32 %v8489, %v8492
  %v8495 = vsel %vm2578, %v8485, 0
  %v8498 = vand.u32 %v8493, %v2585
  %8500 = vmatprep.subr.bf16.mxu0 0
  %8501 = vmatpush1.bf16.msra.mxu0 %v8498
  %8502 = vmatprep.subr.bf16.mxu0 0
  %8503 = vmatpush1.bf16.msra.mxu0 0
  %8504 = vmatprep.subr.bf16.mxu0 0
  %8505 = vmatpush1.bf16.msra.mxu0 0
  %8506 = vmatprep.subr.bf16.mxu0 0
  %8507 = vmatpush1.bf16.msra.mxu0 0
  %8508 = vmatprep.subr.bf16.mxu0 0
  %8509 = vmatpush1.bf16.msra.mxu0 0
  %8510 = vmatprep.subr.bf16.mxu0 0
  %8511 = vmatpush1.bf16.msra.mxu0 0
  %8512 = vmatprep.subr.bf16.mxu0 0
  %8513 = vmatpush1.bf16.msra.mxu0 0
  %8514 = vmatprep.subr.bf16.mxu0 0
  %8515 = vmatpush1.bf16.msra.mxu0 0
  %8516 = vmatprep.subr.bf16.mxu0 0
  %8517 = vmatpush1.bf16.msra.mxu0 0
  %8518 = vmatprep.subr.bf16.mxu0 0
  %8519 = vmatpush1.bf16.msra.mxu0 0
  %8520 = vmatprep.subr.bf16.mxu0 0
  %8521 = vmatpush1.bf16.msra.mxu0 0
  %8522 = vmatprep.subr.bf16.mxu0 0
  %8523 = vmatpush1.bf16.msra.mxu0 0
  %8524 = vmatprep.subr.bf16.mxu0 0
  %8525 = vmatpush1.bf16.msra.mxu0 0
  %8526 = vmatprep.subr.bf16.mxu0 0
  %8527 = vmatpush1.bf16.msra.mxu0 0
  %8528 = vmatprep.subr.bf16.mxu0 0
  %8529 = vmatpush1.bf16.msra.mxu0 0
  %8530 = vmatprep.subr.bf16.mxu0 0
  %8531 = vmatpush1.bf16.msra.mxu0 0
  %8532 = vmatprep.mubr.bf16.mxu0 0
  %8533 = vmatmul.mubr.bf16.gmra.mrb[0].mxu0 %v8495
  %v8534 = vpop.f32.mrb[0].mxu0
  %v8535 = vadd.f32 0.0, %v8534
  %v8536 = vpop.f32.mrb[0].mxu0
  %v8537 = vpop.f32.mrb[0].mxu0
  %v8538 = vpop.f32.mrb[0].mxu0
  %8539 = vdwg.mxu0
  %v8541 = vrot.slane %v8535, 3
  %8543 = vst [vmem:[#allocation2 + $0x18] sm:$0xe0] %v8541
  %8544 = vst [vmem:[#allocation2 + $0x38] sm:$0x3] %v8541
  %v8545 = vld [vmem:[#allocation2] sm:$0xff]
  %v8546 = vld [vmem:[#allocation2 + $0x8] sm:$0xff]
  %v8547 = vld [vmem:[#allocation2 + $0x10] sm:$0xff]
  %v8548 = vld [vmem:[#allocation2 + $0x18] sm:$0xff]
  %v8549 = vld [vmem:[#allocation2 + $0x20] sm:$0x3]
  %v8550 = vld [vmem:[#allocation2 + $0x28] sm:$0x3]
  %v8551 = vld [vmem:[#allocation2 + $0x30] sm:$0x3]
  %v8552 = vld [vmem:[#allocation2 + $0x38] sm:$0x3]
  %v8553 = vpack.c.bf16 %v8549, %v8545
  %v8554 = vpack.c.bf16 %v8550, %v8546
  %v8555 = vpack.c.bf16 %v8551, %v8547
  %v8556 = vpack.c.bf16 %v8552, %v8548
  %v8557 = vld [vmem:[%s31] sm:$0xff]
  %v8558 = vld [vmem:[%s31 + $0x8] sm:$0xff]
  %v8559 = vld [vmem:[%s31 + $0x10] sm:$0xff]
  %v8560 = vld [vmem:[%s31 + $0x18] sm:$0xff]
  %v8561 = vld [vmem:[%s31 + $0x20] sm:$0xff]
  %v8562 = vld [vmem:[%s31 + $0x28] sm:$0xff]
  %v8563 = vld [vmem:[%s31 + $0x30] sm:$0xff]
  %v8564 = vld [vmem:[%s31 + $0x38] sm:$0xff]
  %v8565 = vld [vmem:[%s31 + $0x40] sm:$0xff]
  %v8566 = vld [vmem:[%s31 + $0x48] sm:$0xff]
  %v8567 = vld [vmem:[%s31 + $0x50] sm:$0xff]
  %v8568 = vld [vmem:[%s31 + $0x58] sm:$0xff]
  %v8569 = vld [vmem:[%s31 + $0x60] sm:$0xff]
  %v8570 = vld [vmem:[%s31 + $0x68] sm:$0xff]
  %v8571 = vld [vmem:[%s31 + $0x70] sm:$0xff]
  %v8572 = vld [vmem:[%s31 + $0x78] sm:$0xff]
  %v8573 = vld [vmem:[%s31 + $0x80] sm:$0xff]
  %v8574 = vld [vmem:[%s31 + $0x88] sm:$0xff]
  %v8575 = vld [vmem:[%s31 + $0x90] sm:$0xff]
  %v8576 = vld [vmem:[%s31 + $0x98] sm:$0xff]
  %v8577 = vld [vmem:[%s31 + $0xa0] sm:$0xff]
  %v8578 = vld [vmem:[%s31 + $0xa8] sm:$0xff]
  %v8579 = vld [vmem:[%s31 + $0xb0] sm:$0xff]
  %v8580 = vld [vmem:[%s31 + $0xb8] sm:$0xff]
  %v8581 = vld [vmem:[%s31 + $0xc0] sm:$0xff]
  %v8582 = vld [vmem:[%s31 + $0xc8] sm:$0xff]
  %v8583 = vld [vmem:[%s31 + $0xd0] sm:$0xff]
  %v8584 = vld [vmem:[%s31 + $0xd8] sm:$0xff]
  %v8585 = vld [vmem:[%s31 + $0xe0] sm:$0xff]
  %v8586 = vld [vmem:[%s31 + $0xe8] sm:$0xff]
  %v8587 = vld [vmem:[%s31 + $0xf0] sm:$0xff]
  %v8588 = vld [vmem:[%s31 + $0xf8] sm:$0xff]
  %v8589 = vld [vmem:[%s31 + $0x100] sm:$0xff]
  %v8590 = vld [vmem:[%s31 + $0x108] sm:$0xff]
  %v8591 = vld [vmem:[%s31 + $0x110] sm:$0xff]
  %v8592 = vld [vmem:[%s31 + $0x118] sm:$0xff]
  %v8593 = vld [vmem:[%s31 + $0x120] sm:$0xff]
  %v8594 = vld [vmem:[%s31 + $0x128] sm:$0xff]
  %v8595 = vld [vmem:[%s31 + $0x130] sm:$0xff]
  %v8596 = vld [vmem:[%s31 + $0x138] sm:$0xff]
  %v8597 = vld [vmem:[%s31 + $0x140] sm:$0xff]
  %v8598 = vld [vmem:[%s31 + $0x148] sm:$0xff]
  %v8599 = vld [vmem:[%s31 + $0x150] sm:$0xff]
  %v8600 = vld [vmem:[%s31 + $0x158] sm:$0xff]
  %v8601 = vld [vmem:[%s31 + $0x160] sm:$0xff]
  %v8602 = vld [vmem:[%s31 + $0x168] sm:$0xff]
  %v8603 = vld [vmem:[%s31 + $0x170] sm:$0xff]
  %v8604 = vld [vmem:[%s31 + $0x178] sm:$0xff]
  %v8605 = vld [vmem:[%s31 + $0x180] sm:$0xff]
  %v8606 = vld [vmem:[%s31 + $0x188] sm:$0xff]
  %v8607 = vld [vmem:[%s31 + $0x190] sm:$0xff]
  %v8608 = vld [vmem:[%s31 + $0x198] sm:$0xff]
  %v8609 = vld [vmem:[%s31 + $0x1a0] sm:$0xff]
  %v8610 = vld [vmem:[%s31 + $0x1a8] sm:$0xff]
  %v8611 = vld [vmem:[%s31 + $0x1b0] sm:$0xff]
  %v8612 = vld [vmem:[%s31 + $0x1b8] sm:$0xff]
  %v8613 = vld [vmem:[%s31 + $0x1c0] sm:$0xff]
  %v8614 = vld [vmem:[%s31 + $0x1c8] sm:$0xff]
  %v8615 = vld [vmem:[%s31 + $0x1d0] sm:$0xff]
  %v8616 = vld [vmem:[%s31 + $0x1d8] sm:$0xff]
  %v8617 = vld [vmem:[%s31 + $0x1e0] sm:$0xff]
  %v8618 = vld [vmem:[%s31 + $0x1e8] sm:$0xff]
  %v8619 = vld [vmem:[%s31 + $0x1f0] sm:$0xff]
  %v8620 = vld [vmem:[%s31 + $0x1f8] sm:$0xff]
  %v8621 = vld [vmem:[%s31 + $0x200] sm:$0xff]
  %v8622 = vld [vmem:[%s31 + $0x208] sm:$0xff]
  %v8623 = vld [vmem:[%s31 + $0x210] sm:$0xff]
  %v8624 = vld [vmem:[%s31 + $0x218] sm:$0xff]
  %v8625 = vld [vmem:[%s31 + $0x220] sm:$0xff]
  %v8626 = vld [vmem:[%s31 + $0x228] sm:$0xff]
  %v8627 = vld [vmem:[%s31 + $0x230] sm:$0xff]
  %v8628 = vld [vmem:[%s31 + $0x238] sm:$0xff]
  %v8629 = vld [vmem:[%s31 + $0x240] sm:$0xff]
  %v8630 = vld [vmem:[%s31 + $0x248] sm:$0xff]
  %v8631 = vld [vmem:[%s31 + $0x250] sm:$0xff]
  %v8632 = vld [vmem:[%s31 + $0x258] sm:$0xff]
  %v8633 = vld [vmem:[%s31 + $0x260] sm:$0xff]
  %v8634 = vld [vmem:[%s31 + $0x268] sm:$0xff]
  %v8635 = vld [vmem:[%s31 + $0x270] sm:$0xff]
  %v8636 = vld [vmem:[%s31 + $0x278] sm:$0xff]
  %v8637 = vld [vmem:[%s31 + $0x280] sm:$0xff]
  %v8638 = vld [vmem:[%s31 + $0x288] sm:$0xff]
  %v8639 = vld [vmem:[%s31 + $0x290] sm:$0xff]
  %v8640 = vld [vmem:[%s31 + $0x298] sm:$0xff]
  %v8641 = vld [vmem:[%s31 + $0x2a0] sm:$0xff]
  %v8642 = vld [vmem:[%s31 + $0x2a8] sm:$0xff]
  %v8643 = vld [vmem:[%s31 + $0x2b0] sm:$0xff]
  %v8644 = vld [vmem:[%s31 + $0x2b8] sm:$0xff]
  %v8645 = vld [vmem:[%s31 + $0x2c0] sm:$0xff]
  %v8646 = vld [vmem:[%s31 + $0x2c8] sm:$0xff]
  %v8647 = vld [vmem:[%s31 + $0x2d0] sm:$0xff]
  %v8648 = vld [vmem:[%s31 + $0x2d8] sm:$0xff]
  %v8649 = vld [vmem:[%s31 + $0x2e0] sm:$0xff]
  %v8650 = vld [vmem:[%s31 + $0x2e8] sm:$0xff]
  %v8651 = vld [vmem:[%s31 + $0x2f0] sm:$0xff]
  %v8652 = vld [vmem:[%s31 + $0x2f8] sm:$0xff]
  %v8653 = vld [vmem:[%s31 + $0x300] sm:$0xff]
  %v8654 = vld [vmem:[%s31 + $0x308] sm:$0xff]
  %v8655 = vld [vmem:[%s31 + $0x310] sm:$0xff]
  %v8656 = vld [vmem:[%s31 + $0x318] sm:$0xff]
  %v8657 = vld [vmem:[%s31 + $0x320] sm:$0xff]
  %v8658 = vld [vmem:[%s31 + $0x328] sm:$0xff]
  %v8659 = vld [vmem:[%s31 + $0x330] sm:$0xff]
  %v8660 = vld [vmem:[%s31 + $0x338] sm:$0xff]
  %v8661 = vld [vmem:[%s31 + $0x340] sm:$0xff]
  %v8662 = vld [vmem:[%s31 + $0x348] sm:$0xff]
  %v8663 = vld [vmem:[%s31 + $0x350] sm:$0xff]
  %v8664 = vld [vmem:[%s31 + $0x358] sm:$0xff]
  %v8665 = vld [vmem:[%s31 + $0x360] sm:$0xff]
  %v8666 = vld [vmem:[%s31 + $0x368] sm:$0xff]
  %v8667 = vld [vmem:[%s31 + $0x370] sm:$0xff]
  %v8668 = vld [vmem:[%s31 + $0x378] sm:$0xff]
  %v8669 = vld [vmem:[%s31 + $0x380] sm:$0xff]
  %v8670 = vld [vmem:[%s31 + $0x388] sm:$0xff]
  %v8671 = vld [vmem:[%s31 + $0x390] sm:$0xff]
  %v8672 = vld [vmem:[%s31 + $0x398] sm:$0xff]
  %v8673 = vld [vmem:[%s31 + $0x3a0] sm:$0xff]
  %v8674 = vld [vmem:[%s31 + $0x3a8] sm:$0xff]
  %v8675 = vld [vmem:[%s31 + $0x3b0] sm:$0xff]
  %v8676 = vld [vmem:[%s31 + $0x3b8] sm:$0xff]
  %v8677 = vld [vmem:[%s31 + $0x3c0] sm:$0xff]
  %v8678 = vld [vmem:[%s31 + $0x3c8] sm:$0xff]
  %v8679 = vld [vmem:[%s31 + $0x3d0] sm:$0xff]
  %v8680 = vld [vmem:[%s31 + $0x3d8] sm:$0xff]
  %v8681 = vld [vmem:[%s31 + $0x3e0] sm:$0xff]
  %v8682 = vld [vmem:[%s31 + $0x3e8] sm:$0xff]
  %v8683 = vld [vmem:[%s31 + $0x3f0] sm:$0xff]
  %v8684 = vld [vmem:[%s31 + $0x3f8] sm:$0xff]
  %v8685 = vld [vmem:[%s33] sm:$0xf]
  %v8687 = vlaneseq
  %v8688 = vshrl.u32 %v8687, 7
  %v8689 = vsub.s32 0, %v8688
  %v8690 = vrot.slane %v8685, %v8689
  %v8691 = vlaneseq
  %v8692 = vshrl.u32 %v8691, 7
  %v8693 = vsub.s32 1, %v8692
  %v8694 = vrot.slane %v8685, %v8693
  %v8695 = vlaneseq
  %v8696 = vshrl.u32 %v8695, 7
  %v8697 = vsub.s32 2, %v8696
  %v8698 = vrot.slane %v8685, %v8697
  %v8699 = vlaneseq
  %v8700 = vshrl.u32 %v8699, 7
  %v8701 = vsub.s32 3, %v8700
  %v8702 = vrot.slane %v8685, %v8701
  %v8835 = vunpack.c.l.b16 %v8557
  %v8836 = vunpack.c.h.b16 %v8557
  %v8837 = vunpack.c.l.b16 %v8558
  %v8838 = vunpack.c.h.b16 %v8558
  %v8839 = vunpack.c.l.b16 %v8559
  %v8840 = vunpack.c.h.b16 %v8559
  %v8841 = vunpack.c.l.b16 %v8560
  %v8842 = vunpack.c.h.b16 %v8560
  %v8843 = vunpack.c.l.b16 %v8561
  %v8844 = vunpack.c.h.b16 %v8561
  %v8845 = vunpack.c.l.b16 %v8562
  %v8846 = vunpack.c.h.b16 %v8562
  %v8847 = vunpack.c.l.b16 %v8563
  %v8848 = vunpack.c.h.b16 %v8563
  %v8849 = vunpack.c.l.b16 %v8564
  %v8850 = vunpack.c.h.b16 %v8564
  %v8851 = vunpack.c.l.b16 %v8565
  %v8852 = vunpack.c.h.b16 %v8565
  %v8853 = vunpack.c.l.b16 %v8566
  %v8854 = vunpack.c.h.b16 %v8566
  %v8855 = vunpack.c.l.b16 %v8567
  %v8856 = vunpack.c.h.b16 %v8567
  %v8857 = vunpack.c.l.b16 %v8568
  %v8858 = vunpack.c.h.b16 %v8568
  %v8859 = vunpack.c.l.b16 %v8569
  %v8860 = vunpack.c.h.b16 %v8569
  %v8861 = vunpack.c.l.b16 %v8570
  %v8862 = vunpack.c.h.b16 %v8570
  %v8863 = vunpack.c.l.b16 %v8571
  %v8864 = vunpack.c.h.b16 %v8571
  %v8865 = vunpack.c.l.b16 %v8572
  %v8866 = vunpack.c.h.b16 %v8572
  %v8867 = vunpack.c.l.b16 %v8573
  %v8868 = vunpack.c.h.b16 %v8573
  %v8869 = vunpack.c.l.b16 %v8574
  %v8870 = vunpack.c.h.b16 %v8574
  %v8871 = vunpack.c.l.b16 %v8575
  %v8872 = vunpack.c.h.b16 %v8575
  %v8873 = vunpack.c.l.b16 %v8576
  %v8874 = vunpack.c.h.b16 %v8576
  %v8875 = vunpack.c.l.b16 %v8577
  %v8876 = vunpack.c.h.b16 %v8577
  %v8877 = vunpack.c.l.b16 %v8578
  %v8878 = vunpack.c.h.b16 %v8578
  %v8879 = vunpack.c.l.b16 %v8579
  %v8880 = vunpack.c.h.b16 %v8579
  %v8881 = vunpack.c.l.b16 %v8580
  %v8882 = vunpack.c.h.b16 %v8580
  %v8883 = vunpack.c.l.b16 %v8581
  %v8884 = vunpack.c.h.b16 %v8581
  %v8885 = vunpack.c.l.b16 %v8582
  %v8886 = vunpack.c.h.b16 %v8582
  %v8887 = vunpack.c.l.b16 %v8583
  %v8888 = vunpack.c.h.b16 %v8583
  %v8889 = vunpack.c.l.b16 %v8584
  %v8890 = vunpack.c.h.b16 %v8584
  %v8891 = vunpack.c.l.b16 %v8585
  %v8892 = vunpack.c.h.b16 %v8585
  %v8893 = vunpack.c.l.b16 %v8586
  %v8894 = vunpack.c.h.b16 %v8586
  %v8895 = vunpack.c.l.b16 %v8587
  %v8896 = vunpack.c.h.b16 %v8587
  %v8897 = vunpack.c.l.b16 %v8588
  %v8898 = vunpack.c.h.b16 %v8588
  %v8899 = vunpack.c.l.b16 %v8589
  %v8900 = vunpack.c.h.b16 %v8589
  %v8901 = vunpack.c.l.b16 %v8590
  %v8902 = vunpack.c.h.b16 %v8590
  %v8903 = vunpack.c.l.b16 %v8591
  %v8904 = vunpack.c.h.b16 %v8591
  %v8905 = vunpack.c.l.b16 %v8592
  %v8906 = vunpack.c.h.b16 %v8592
  %v8907 = vunpack.c.l.b16 %v8593
  %v8908 = vunpack.c.h.b16 %v8593
  %v8909 = vunpack.c.l.b16 %v8594
  %v8910 = vunpack.c.h.b16 %v8594
  %v8911 = vunpack.c.l.b16 %v8595
  %v8912 = vunpack.c.h.b16 %v8595
  %v8913 = vunpack.c.l.b16 %v8596
  %v8914 = vunpack.c.h.b16 %v8596
  %v8915 = vunpack.c.l.b16 %v8597
  %v8916 = vunpack.c.h.b16 %v8597
  %v8917 = vunpack.c.l.b16 %v8598
  %v8918 = vunpack.c.h.b16 %v8598
  %v8919 = vunpack.c.l.b16 %v8599
  %v8920 = vunpack.c.h.b16 %v8599
  %v8921 = vunpack.c.l.b16 %v8600
  %v8922 = vunpack.c.h.b16 %v8600
  %v8923 = vunpack.c.l.b16 %v8601
  %v8924 = vunpack.c.h.b16 %v8601
  %v8925 = vunpack.c.l.b16 %v8602
  %v8926 = vunpack.c.h.b16 %v8602
  %v8927 = vunpack.c.l.b16 %v8603
  %v8928 = vunpack.c.h.b16 %v8603
  %v8929 = vunpack.c.l.b16 %v8604
  %v8930 = vunpack.c.h.b16 %v8604
  %v8931 = vunpack.c.l.b16 %v8605
  %v8932 = vunpack.c.h.b16 %v8605
  %v8933 = vunpack.c.l.b16 %v8606
  %v8934 = vunpack.c.h.b16 %v8606
  %v8935 = vunpack.c.l.b16 %v8607
  %v8936 = vunpack.c.h.b16 %v8607
  %v8937 = vunpack.c.l.b16 %v8608
  %v8938 = vunpack.c.h.b16 %v8608
  %v8939 = vunpack.c.l.b16 %v8609
  %v8940 = vunpack.c.h.b16 %v8609
  %v8941 = vunpack.c.l.b16 %v8610
  %v8942 = vunpack.c.h.b16 %v8610
  %v8943 = vunpack.c.l.b16 %v8611
  %v8944 = vunpack.c.h.b16 %v8611
  %v8945 = vunpack.c.l.b16 %v8612
  %v8946 = vunpack.c.h.b16 %v8612
  %v8947 = vunpack.c.l.b16 %v8613
  %v8948 = vunpack.c.h.b16 %v8613
  %v8949 = vunpack.c.l.b16 %v8614
  %v8950 = vunpack.c.h.b16 %v8614
  %v8951 = vunpack.c.l.b16 %v8615
  %v8952 = vunpack.c.h.b16 %v8615
  %v8953 = vunpack.c.l.b16 %v8616
  %v8954 = vunpack.c.h.b16 %v8616
  %v8955 = vunpack.c.l.b16 %v8617
  %v8956 = vunpack.c.h.b16 %v8617
  %v8957 = vunpack.c.l.b16 %v8618
  %v8958 = vunpack.c.h.b16 %v8618
  %v8959 = vunpack.c.l.b16 %v8619
  %v8960 = vunpack.c.h.b16 %v8619
  %v8961 = vunpack.c.l.b16 %v8620
  %v8962 = vunpack.c.h.b16 %v8620
  %v8963 = vunpack.c.l.b16 %v8621
  %v8964 = vunpack.c.h.b16 %v8621
  %v8965 = vunpack.c.l.b16 %v8622
  %v8966 = vunpack.c.h.b16 %v8622
  %v8967 = vunpack.c.l.b16 %v8623
  %v8968 = vunpack.c.h.b16 %v8623
  %v8969 = vunpack.c.l.b16 %v8624
  %v8970 = vunpack.c.h.b16 %v8624
  %v8971 = vunpack.c.l.b16 %v8625
  %v8972 = vunpack.c.h.b16 %v8625
  %v8973 = vunpack.c.l.b16 %v8626
  %v8974 = vunpack.c.h.b16 %v8626
  %v8975 = vunpack.c.l.b16 %v8627
  %v8976 = vunpack.c.h.b16 %v8627
  %v8977 = vunpack.c.l.b16 %v8628
  %v8978 = vunpack.c.h.b16 %v8628
  %v8979 = vunpack.c.l.b16 %v8629
  %v8980 = vunpack.c.h.b16 %v8629
  %v8981 = vunpack.c.l.b16 %v8630
  %v8982 = vunpack.c.h.b16 %v8630
  %v8983 = vunpack.c.l.b16 %v8631
  %v8984 = vunpack.c.h.b16 %v8631
  %v8985 = vunpack.c.l.b16 %v8632
  %v8986 = vunpack.c.h.b16 %v8632
  %v8987 = vunpack.c.l.b16 %v8633
  %v8988 = vunpack.c.h.b16 %v8633
  %v8989 = vunpack.c.l.b16 %v8634
  %v8990 = vunpack.c.h.b16 %v8634
  %v8991 = vunpack.c.l.b16 %v8635
  %v8992 = vunpack.c.h.b16 %v8635
  %v8993 = vunpack.c.l.b16 %v8636
  %v8994 = vunpack.c.h.b16 %v8636
  %v8995 = vunpack.c.l.b16 %v8637
  %v8996 = vunpack.c.h.b16 %v8637
  %v8997 = vunpack.c.l.b16 %v8638
  %v8998 = vunpack.c.h.b16 %v8638
  %v8999 = vunpack.c.l.b16 %v8639
  %v9000 = vunpack.c.h.b16 %v8639
  %v9001 = vunpack.c.l.b16 %v8640
  %v9002 = vunpack.c.h.b16 %v8640
  %v9003 = vunpack.c.l.b16 %v8641
  %v9004 = vunpack.c.h.b16 %v8641
  %v9005 = vunpack.c.l.b16 %v8642
  %v9006 = vunpack.c.h.b16 %v8642
  %v9007 = vunpack.c.l.b16 %v8643
  %v9008 = vunpack.c.h.b16 %v8643
  %v9009 = vunpack.c.l.b16 %v8644
  %v9010 = vunpack.c.h.b16 %v8644
  %v9011 = vunpack.c.l.b16 %v8645
  %v9012 = vunpack.c.h.b16 %v8645
  %v9013 = vunpack.c.l.b16 %v8646
  %v9014 = vunpack.c.h.b16 %v8646
  %v9015 = vunpack.c.l.b16 %v8647
  %v9016 = vunpack.c.h.b16 %v8647
  %v9017 = vunpack.c.l.b16 %v8648
  %v9018 = vunpack.c.h.b16 %v8648
  %v9019 = vunpack.c.l.b16 %v8649
  %v9020 = vunpack.c.h.b16 %v8649
  %v9021 = vunpack.c.l.b16 %v8650
  %v9022 = vunpack.c.h.b16 %v8650
  %v9023 = vunpack.c.l.b16 %v8651
  %v9024 = vunpack.c.h.b16 %v8651
  %v9025 = vunpack.c.l.b16 %v8652
  %v9026 = vunpack.c.h.b16 %v8652
  %v9027 = vunpack.c.l.b16 %v8653
  %v9028 = vunpack.c.h.b16 %v8653
  %v9029 = vunpack.c.l.b16 %v8654
  %v9030 = vunpack.c.h.b16 %v8654
  %v9031 = vunpack.c.l.b16 %v8655
  %v9032 = vunpack.c.h.b16 %v8655
  %v9033 = vunpack.c.l.b16 %v8656
  %v9034 = vunpack.c.h.b16 %v8656
  %v9035 = vunpack.c.l.b16 %v8657
  %v9036 = vunpack.c.h.b16 %v8657
  %v9037 = vunpack.c.l.b16 %v8658
  %v9038 = vunpack.c.h.b16 %v8658
  %v9039 = vunpack.c.l.b16 %v8659
  %v9040 = vunpack.c.h.b16 %v8659
  %v9041 = vunpack.c.l.b16 %v8660
  %v9042 = vunpack.c.h.b16 %v8660
  %v9043 = vunpack.c.l.b16 %v8661
  %v9044 = vunpack.c.h.b16 %v8661
  %v9045 = vunpack.c.l.b16 %v8662
  %v9046 = vunpack.c.h.b16 %v8662
  %v9047 = vunpack.c.l.b16 %v8663
  %v9048 = vunpack.c.h.b16 %v8663
  %v9049 = vunpack.c.l.b16 %v8664
  %v9050 = vunpack.c.h.b16 %v8664
  %v9051 = vunpack.c.l.b16 %v8665
  %v9052 = vunpack.c.h.b16 %v8665
  %v9053 = vunpack.c.l.b16 %v8666
  %v9054 = vunpack.c.h.b16 %v8666
  %v9055 = vunpack.c.l.b16 %v8667
  %v9056 = vunpack.c.h.b16 %v8667
  %v9057 = vunpack.c.l.b16 %v8668
  %v9058 = vunpack.c.h.b16 %v8668
  %v9059 = vunpack.c.l.b16 %v8669
  %v9060 = vunpack.c.h.b16 %v8669
  %v9061 = vunpack.c.l.b16 %v8670
  %v9062 = vunpack.c.h.b16 %v8670
  %v9063 = vunpack.c.l.b16 %v8671
  %v9064 = vunpack.c.h.b16 %v8671
  %v9065 = vunpack.c.l.b16 %v8672
  %v9066 = vunpack.c.h.b16 %v8672
  %v9067 = vunpack.c.l.b16 %v8673
  %v9068 = vunpack.c.h.b16 %v8673
  %v9069 = vunpack.c.l.b16 %v8674
  %v9070 = vunpack.c.h.b16 %v8674
  %v9071 = vunpack.c.l.b16 %v8675
  %v9072 = vunpack.c.h.b16 %v8675
  %v9073 = vunpack.c.l.b16 %v8676
  %v9074 = vunpack.c.h.b16 %v8676
  %v9075 = vunpack.c.l.b16 %v8677
  %v9076 = vunpack.c.h.b16 %v8677
  %v9077 = vunpack.c.l.b16 %v8678
  %v9078 = vunpack.c.h.b16 %v8678
  %v9079 = vunpack.c.l.b16 %v8679
  %v9080 = vunpack.c.h.b16 %v8679
  %v9081 = vunpack.c.l.b16 %v8680
  %v9082 = vunpack.c.h.b16 %v8680
  %v9083 = vunpack.c.l.b16 %v8681
  %v9084 = vunpack.c.h.b16 %v8681
  %v9085 = vunpack.c.l.b16 %v8682
  %v9086 = vunpack.c.h.b16 %v8682
  %v9087 = vunpack.c.l.b16 %v8683
  %v9088 = vunpack.c.h.b16 %v8683
  %v9089 = vunpack.c.l.b16 %v8684
  %v9090 = vunpack.c.h.b16 %v8684
  %v9091 = vpack.c.b16 %v8839, %v8835
  %v9092 = vpack.c.b16 %v8840, %v8836
  %v9093 = vpack.c.b16 %v8841, %v8837
  %v9094 = vpack.c.b16 %v8842, %v8838
  %v9095 = vpack.c.b16 %v8847, %v8843
  %v9096 = vpack.c.b16 %v8848, %v8844
  %v9097 = vpack.c.b16 %v8849, %v8845
  %v9098 = vpack.c.b16 %v8850, %v8846
  %v9099 = vpack.c.b16 %v8855, %v8851
  %v9100 = vpack.c.b16 %v8856, %v8852
  %v9101 = vpack.c.b16 %v8857, %v8853
  %v9102 = vpack.c.b16 %v8858, %v8854
  %v9103 = vpack.c.b16 %v8863, %v8859
  %v9104 = vpack.c.b16 %v8864, %v8860
  %v9105 = vpack.c.b16 %v8865, %v8861
  %v9106 = vpack.c.b16 %v8866, %v8862
  %v9107 = vpack.c.b16 %v8871, %v8867
  %v9108 = vpack.c.b16 %v8872, %v8868
  %v9109 = vpack.c.b16 %v8873, %v8869
  %v9110 = vpack.c.b16 %v8874, %v8870
  %v9111 = vpack.c.b16 %v8879, %v8875
  %v9112 = vpack.c.b16 %v8880, %v8876
  %v9113 = vpack.c.b16 %v8881, %v8877
  %v9114 = vpack.c.b16 %v8882, %v8878
  %v9115 = vpack.c.b16 %v8887, %v8883
  %v9116 = vpack.c.b16 %v8888, %v8884
  %v9117 = vpack.c.b16 %v8889, %v8885
  %v9118 = vpack.c.b16 %v8890, %v8886
  %v9119 = vpack.c.b16 %v8895, %v8891
  %v9120 = vpack.c.b16 %v8896, %v8892
  %v9121 = vpack.c.b16 %v8897, %v8893
  %v9122 = vpack.c.b16 %v8898, %v8894
  %v9123 = vpack.c.b16 %v8903, %v8899
  %v9124 = vpack.c.b16 %v8904, %v8900
  %v9125 = vpack.c.b16 %v8905, %v8901
  %v9126 = vpack.c.b16 %v8906, %v8902
  %v9127 = vpack.c.b16 %v8911, %v8907
  %v9128 = vpack.c.b16 %v8912, %v8908
  %v9129 = vpack.c.b16 %v8913, %v8909
  %v9130 = vpack.c.b16 %v8914, %v8910
  %v9131 = vpack.c.b16 %v8919, %v8915
  %v9132 = vpack.c.b16 %v8920, %v8916
  %v9133 = vpack.c.b16 %v8921, %v8917
  %v9134 = vpack.c.b16 %v8922, %v8918
  %v9135 = vpack.c.b16 %v8927, %v8923
  %v9136 = vpack.c.b16 %v8928, %v8924
  %v9137 = vpack.c.b16 %v8929, %v8925
  %v9138 = vpack.c.b16 %v8930, %v8926
  %v9139 = vpack.c.b16 %v8935, %v8931
  %v9140 = vpack.c.b16 %v8936, %v8932
  %v9141 = vpack.c.b16 %v8937, %v8933
  %v9142 = vpack.c.b16 %v8938, %v8934
  %v9143 = vpack.c.b16 %v8943, %v8939
  %v9144 = vpack.c.b16 %v8944, %v8940
  %v9145 = vpack.c.b16 %v8945, %v8941
  %v9146 = vpack.c.b16 %v8946, %v8942
  %v9147 = vpack.c.b16 %v8951, %v8947
  %v9148 = vpack.c.b16 %v8952, %v8948
  %v9149 = vpack.c.b16 %v8953, %v8949
  %v9150 = vpack.c.b16 %v8954, %v8950
  %v9151 = vpack.c.b16 %v8959, %v8955
  %v9152 = vpack.c.b16 %v8960, %v8956
  %v9153 = vpack.c.b16 %v8961, %v8957
  %v9154 = vpack.c.b16 %v8962, %v8958
  %v9155 = vpack.c.b16 %v8967, %v8963
  %v9156 = vpack.c.b16 %v8968, %v8964
  %v9157 = vpack.c.b16 %v8969, %v8965
  %v9158 = vpack.c.b16 %v8970, %v8966
  %v9159 = vpack.c.b16 %v8975, %v8971
  %v9160 = vpack.c.b16 %v8976, %v8972
  %v9161 = vpack.c.b16 %v8977, %v8973
  %v9162 = vpack.c.b16 %v8978, %v8974
  %v9163 = vpack.c.b16 %v8983, %v8979
  %v9164 = vpack.c.b16 %v8984, %v8980
  %v9165 = vpack.c.b16 %v8985, %v8981
  %v9166 = vpack.c.b16 %v8986, %v8982
  %v9167 = vpack.c.b16 %v8991, %v8987
  %v9168 = vpack.c.b16 %v8992, %v8988
  %v9169 = vpack.c.b16 %v8993, %v8989
  %v9170 = vpack.c.b16 %v8994, %v8990
  %v9171 = vpack.c.b16 %v8999, %v8995
  %v9172 = vpack.c.b16 %v9000, %v8996
  %v9173 = vpack.c.b16 %v9001, %v8997
  %v9174 = vpack.c.b16 %v9002, %v8998
  %v9175 = vpack.c.b16 %v9007, %v9003
  %v9176 = vpack.c.b16 %v9008, %v9004
  %v9177 = vpack.c.b16 %v9009, %v9005
  %v9178 = vpack.c.b16 %v9010, %v9006
  %v9179 = vpack.c.b16 %v9015, %v9011
  %v9180 = vpack.c.b16 %v9016, %v9012
  %v9181 = vpack.c.b16 %v9017, %v9013
  %v9182 = vpack.c.b16 %v9018, %v9014
  %v9183 = vpack.c.b16 %v9023, %v9019
  %v9184 = vpack.c.b16 %v9024, %v9020
  %v9185 = vpack.c.b16 %v9025, %v9021
  %v9186 = vpack.c.b16 %v9026, %v9022
  %v9187 = vpack.c.b16 %v9031, %v9027
  %v9188 = vpack.c.b16 %v9032, %v9028
  %v9189 = vpack.c.b16 %v9033, %v9029
  %v9190 = vpack.c.b16 %v9034, %v9030
  %v9191 = vpack.c.b16 %v9039, %v9035
  %v9192 = vpack.c.b16 %v9040, %v9036
  %v9193 = vpack.c.b16 %v9041, %v9037
  %v9194 = vpack.c.b16 %v9042, %v9038
  %v9195 = vpack.c.b16 %v9047, %v9043
  %v9196 = vpack.c.b16 %v9048, %v9044
  %v9197 = vpack.c.b16 %v9049, %v9045
  %v9198 = vpack.c.b16 %v9050, %v9046
  %v9199 = vpack.c.b16 %v9055, %v9051
  %v9200 = vpack.c.b16 %v9056, %v9052
  %v9201 = vpack.c.b16 %v9057, %v9053
  %v9202 = vpack.c.b16 %v9058, %v9054
  %v9203 = vpack.c.b16 %v9063, %v9059
  %v9204 = vpack.c.b16 %v9064, %v9060
  %v9205 = vpack.c.b16 %v9065, %v9061
  %v9206 = vpack.c.b16 %v9066, %v9062
  %v9207 = vpack.c.b16 %v9071, %v9067
  %v9208 = vpack.c.b16 %v9072, %v9068
  %v9209 = vpack.c.b16 %v9073, %v9069
  %v9210 = vpack.c.b16 %v9074, %v9070
  %v9211 = vpack.c.b16 %v9079, %v9075
  %v9212 = vpack.c.b16 %v9080, %v9076
  %v9213 = vpack.c.b16 %v9081, %v9077
  %v9214 = vpack.c.b16 %v9082, %v9078
  %v9215 = vpack.c.b16 %v9087, %v9083
  %v9216 = vpack.c.b16 %v9088, %v9084
  %v9217 = vpack.c.b16 %v9089, %v9085
  %v9218 = vpack.c.b16 %v9090, %v9086
  %9347 = vmatprep.subr.bf16.mxu0 %v9092
  %9348 = vmatpush1.bf16.msra.mxu0 %v9091
  %9349 = vmatprep.subr.bf16.mxu0 %v9096
  %9350 = vmatpush1.bf16.msra.mxu0 %v9095
  %9351 = vmatprep.subr.bf16.mxu0 %v9100
  %9352 = vmatpush1.bf16.msra.mxu0 %v9099
  %9353 = vmatprep.subr.bf16.mxu0 %v9104
  %9354 = vmatpush1.bf16.msra.mxu0 %v9103
  %9355 = vmatprep.subr.bf16.mxu0 %v9108
  %9356 = vmatpush1.bf16.msra.mxu0 %v9107
  %9357 = vmatprep.subr.bf16.mxu0 %v9112
  %9358 = vmatpush1.bf16.msra.mxu0 %v9111
  %9359 = vmatprep.subr.bf16.mxu0 %v9116
  %9360 = vmatpush1.bf16.msra.mxu0 %v9115
  %9361 = vmatprep.subr.bf16.mxu0 %v9120
  %9362 = vmatpush1.bf16.msra.mxu0 %v9119
  %9363 = vmatprep.subr.bf16.mxu0 %v9124
  %9364 = vmatpush1.bf16.msra.mxu0 %v9123
  %9365 = vmatprep.subr.bf16.mxu0 %v9128
  %9366 = vmatpush1.bf16.msra.mxu0 %v9127
  %9367 = vmatprep.subr.bf16.mxu0 %v9132
  %9368 = vmatpush1.bf16.msra.mxu0 %v9131
  %9369 = vmatprep.subr.bf16.mxu0 %v9136
  %9370 = vmatpush1.bf16.msra.mxu0 %v9135
  %9371 = vmatprep.subr.bf16.mxu0 %v9140
  %9372 = vmatpush1.bf16.msra.mxu0 %v9139
  %9373 = vmatprep.subr.bf16.mxu0 %v9144
  %9374 = vmatpush1.bf16.msra.mxu0 %v9143
  %9375 = vmatprep.subr.bf16.mxu0 %v9148
  %9376 = vmatpush1.bf16.msra.mxu0 %v9147
  %9377 = vmatprep.subr.bf16.mxu0 %v9152
  %9378 = vmatpush1.bf16.msra.mxu0 %v9151
  %9379 = vmatprep.mubr.bf16.mxu0 %v8554
  %9380 = vmatmul.mubr.bf16.gmra.mrb[0].mxu0 %v8553
  %v9381 = vpop.f32.mrb[0].mxu0
  %v9382 = vadd.f32 %v8690, %v9381
  %v9383 = vpop.f32.mrb[0].mxu0
  %v9384 = vadd.f32 %v8694, %v9383
  %v9385 = vpop.f32.mrb[0].mxu0
  %v9386 = vadd.f32 %v8690, %v9385
  %v9387 = vpop.f32.mrb[0].mxu0
  %v9388 = vadd.f32 %v8694, %v9387
  %9389 = vdwg.mxu0
  %9390 = vmatprep.subr.bf16.mxu0 %v9156
  %9391 = vmatpush1.bf16.msra.mxu0 %v9155
  %9392 = vmatprep.subr.bf16.mxu0 %v9160
  %9393 = vmatpush1.bf16.msra.mxu0 %v9159
  %9394 = vmatprep.subr.bf16.mxu0 %v9164
  %9395 = vmatpush1.bf16.msra.mxu0 %v9163
  %9396 = vmatprep.subr.bf16.mxu0 %v9168
  %9397 = vmatpush1.bf16.msra.mxu0 %v9167
  %9398 = vmatprep.subr.bf16.mxu0 %v9172
  %9399 = vmatpush1.bf16.msra.mxu0 %v9171
  %9400 = vmatprep.subr.bf16.mxu0 %v9176
  %9401 = vmatpush1.bf16.msra.mxu0 %v9175
  %9402 = vmatprep.subr.bf16.mxu0 %v9180
  %9403 = vmatpush1.bf16.msra.mxu0 %v9179
  %9404 = vmatprep.subr.bf16.mxu0 %v9184
  %9405 = vmatpush1.bf16.msra.mxu0 %v9183
  %9406 = vmatprep.subr.bf16.mxu0 %v9188
  %9407 = vmatpush1.bf16.msra.mxu0 %v9187
  %9408 = vmatprep.subr.bf16.mxu0 %v9192
  %9409 = vmatpush1.bf16.msra.mxu0 %v9191
  %9410 = vmatprep.subr.bf16.mxu0 %v9196
  %9411 = vmatpush1.bf16.msra.mxu0 %v9195
  %9412 = vmatprep.subr.bf16.mxu0 %v9200
  %9413 = vmatpush1.bf16.msra.mxu0 %v9199
  %9414 = vmatprep.subr.bf16.mxu0 %v9204
  %9415 = vmatpush1.bf16.msra.mxu0 %v9203
  %9416 = vmatprep.subr.bf16.mxu0 %v9208
  %9417 = vmatpush1.bf16.msra.mxu0 %v9207
  %9418 = vmatprep.subr.bf16.mxu0 %v9212
  %9419 = vmatpush1.bf16.msra.mxu0 %v9211
  %9420 = vmatprep.subr.bf16.mxu0 %v9216
  %9421 = vmatpush1.bf16.msra.mxu0 %v9215
  %9422 = vmatprep.mubr.bf16.mxu0 %v8556
  %9423 = vmatmul.mubr.bf16.gmra.mrb[0].mxu0 %v8555
  %v9424 = vpop.f32.mrb[0].mxu0
  %v9425 = vadd.f32 %v9382, %v9424
  %v9426 = vpop.f32.mrb[0].mxu0
  %v9427 = vadd.f32 %v9384, %v9426
  %v9428 = vpop.f32.mrb[0].mxu0
  %v9429 = vadd.f32 %v9386, %v9428
  %v9430 = vpop.f32.mrb[0].mxu0
  %v9431 = vadd.f32 %v9388, %v9430
  %9432 = vdwg.mxu0
  %9433 = vmatprep.subr.bf16.mxu0 %v9094
  %9434 = vmatpush1.bf16.msra.mxu0 %v9093
  %9435 = vmatprep.subr.bf16.mxu0 %v9098
  %9436 = vmatpush1.bf16.msra.mxu0 %v9097
  %9437 = vmatprep.subr.bf16.mxu0 %v9102
  %9438 = vmatpush1.bf16.msra.mxu0 %v9101
  %9439 = vmatprep.subr.bf16.mxu0 %v9106
  %9440 = vmatpush1.bf16.msra.mxu0 %v9105
  %9441 = vmatprep.subr.bf16.mxu0 %v9110
  %9442 = vmatpush1.bf16.msra.mxu0 %v9109
  %9443 = vmatprep.subr.bf16.mxu0 %v9114
  %9444 = vmatpush1.bf16.msra.mxu0 %v9113
  %9445 = vmatprep.subr.bf16.mxu0 %v9118
  %9446 = vmatpush1.bf16.msra.mxu0 %v9117
  %9447 = vmatprep.subr.bf16.mxu0 %v9122
  %9448 = vmatpush1.bf16.msra.mxu0 %v9121
  %9449 = vmatprep.subr.bf16.mxu0 %v9126
  %9450 = vmatpush1.bf16.msra.mxu0 %v9125
  %9451 = vmatprep.subr.bf16.mxu0 %v9130
  %9452 = vmatpush1.bf16.msra.mxu0 %v9129
  %9453 = vmatprep.subr.bf16.mxu0 %v9134
  %9454 = vmatpush1.bf16.msra.mxu0 %v9133
  %9455 = vmatprep.subr.bf16.mxu0 %v9138
  %9456 = vmatpush1.bf16.msra.mxu0 %v9137
  %9457 = vmatprep.subr.bf16.mxu0 %v9142
  %9458 = vmatpush1.bf16.msra.mxu0 %v9141
  %9459 = vmatprep.subr.bf16.mxu0 %v9146
  %9460 = vmatpush1.bf16.msra.mxu0 %v9145
  %9461 = vmatprep.subr.bf16.mxu0 %v9150
  %9462 = vmatpush1.bf16.msra.mxu0 %v9149
  %9463 = vmatprep.subr.bf16.mxu0 %v9154
  %9464 = vmatpush1.bf16.msra.mxu0 %v9153
  %9465 = vmatprep.mubr.bf16.mxu0 %v8554
  %9466 = vmatmul.mubr.bf16.gmra.mrb[0].mxu0 %v8553
  %v9467 = vpop.f32.mrb[0].mxu0
  %v9468 = vadd.f32 %v8698, %v9467
  %v9469 = vpop.f32.mrb[0].mxu0
  %v9470 = vadd.f32 %v8702, %v9469
  %v9471 = vpop.f32.mrb[0].mxu0
  %v9472 = vadd.f32 %v8698, %v9471
  %v9473 = vpop.f32.mrb[0].mxu0
  %v9474 = vadd.f32 %v8702, %v9473
  %9475 = vdwg.mxu0
  %9476 = vmatprep.subr.bf16.mxu0 %v9158
  %9477 = vmatpush1.bf16.msra.mxu0 %v9157
  %9478 = vmatprep.subr.bf16.mxu0 %v9162
  %9479 = vmatpush1.bf16.msra.mxu0 %v9161
  %9480 = vmatprep.subr.bf16.mxu0 %v9166
  %9481 = vmatpush1.bf16.msra.mxu0 %v9165
  %9482 = vmatprep.subr.bf16.mxu0 %v9170
  %9483 = vmatpush1.bf16.msra.mxu0 %v9169
  %9484 = vmatprep.subr.bf16.mxu0 %v9174
  %9485 = vmatpush1.bf16.msra.mxu0 %v9173
  %9486 = vmatprep.subr.bf16.mxu0 %v9178
  %9487 = vmatpush1.bf16.msra.mxu0 %v9177
  %9488 = vmatprep.subr.bf16.mxu0 %v9182
  %9489 = vmatpush1.bf16.msra.mxu0 %v9181
  %9490 = vmatprep.subr.bf16.mxu0 %v9186
  %9491 = vmatpush1.bf16.msra.mxu0 %v9185
  %9492 = vmatprep.subr.bf16.mxu0 %v9190
  %9493 = vmatpush1.bf16.msra.mxu0 %v9189
  %9494 = vmatprep.subr.bf16.mxu0 %v9194
  %9495 = vmatpush1.bf16.msra.mxu0 %v9193
  %9496 = vmatprep.subr.bf16.mxu0 %v9198
  %9497 = vmatpush1.bf16.msra.mxu0 %v9197
  %9498 = vmatprep.subr.bf16.mxu0 %v9202
  %9499 = vmatpush1.bf16.msra.mxu0 %v9201
  %9500 = vmatprep.subr.bf16.mxu0 %v9206
  %9501 = vmatpush1.bf16.msra.mxu0 %v9205
  %9502 = vmatprep.subr.bf16.mxu0 %v9210
  %9503 = vmatpush1.bf16.msra.mxu0 %v9209
  %9504 = vmatprep.subr.bf16.mxu0 %v9214
  %9505 = vmatpush1.bf16.msra.mxu0 %v9213
  %9506 = vmatprep.subr.bf16.mxu0 %v9218
  %9507 = vmatpush1.bf16.msra.mxu0 %v9217
  %9508 = vmatprep.mubr.bf16.mxu0 %v8556
  %9509 = vmatmul.mubr.bf16.gmra.mrb[0].mxu0 %v8555
  %v9510 = vpop.f32.mrb[0].mxu0
  %v9511 = vadd.f32 %v9468, %v9510
  %v9512 = vpop.f32.mrb[0].mxu0
  %v9513 = vadd.f32 %v9470, %v9512
  %v9514 = vpop.f32.mrb[0].mxu0
  %v9515 = vadd.f32 %v9472, %v9514
  %v9516 = vpop.f32.mrb[0].mxu0
  %v9517 = vadd.f32 %v9474, %v9516
  %9518 = vdwg.mxu0
  %v9519 = vadd.f32 %v5206, %v9425
  %v9520 = vadd.f32 %v5207, %v9427
  %v9521 = vadd.f32 %v5208, %v9511
  %v9522 = vadd.f32 %v5209, %v9513
  %v9523 = vadd.f32 %v5210, %v9429
  %v9524 = vadd.f32 %v5211, %v9431
  %v9525 = vadd.f32 %v5212, %v9515
  %v9526 = vadd.f32 %v5213, %v9517
  %v9527 = vadd.f32 %v9519, %v9520
  %v9528 = vadd.f32 %v9527, %v9521
  %v9529 = vsel %vm2001, %v9522, 0.0
  %v9530 = vadd.f32 %v9528, %v9529
  %9531 = vadd.xlane.f32.xlu0 %v9530
  %v9532 = vpop.xlane.xlu0 %9531
  %v9533 = vsel %vm2582, %v9523, 0.0
  %v9534 = vsel %vm2582, %v9524, 0.0
  %v9535 = vadd.f32 %v9533, %v9534
  %v9536 = vsel %vm2582, %v9525, 0.0
  %v9537 = vadd.f32 %v9535, %v9536
  %v9538 = vsel %vm4464, %v9526, 0.0
  %v9539 = vadd.f32 %v9537, %v9538
  %9540 = vadd.xlane.f32.xlu0 %v9539
  %v9541 = vpop.xlane.xlu0 %9540
  %v9542 = vmul.f32 %v9532, %v4469
  %v9543 = vmul.f32 %v9541, %v4469
  %v9544 = vsub.f32 %v9519, %v9542
  %v9545 = vsub.f32 %v9520, %v9542
  %v9546 = vsub.f32 %v9521, %v9542
  %v9547 = vsub.f32 %v9522, %v9542
  %v9548 = vsub.f32 %v9523, %v9543
  %v9549 = vsub.f32 %v9524, %v9543
  %v9550 = vsub.f32 %v9525, %v9543
  %v9551 = vsub.f32 %v9526, %v9543
  %v9552 = vmul.f32 %v9544, %v9544
  %v9553 = vmul.f32 %v9545, %v9545
  %v9554 = vmul.f32 %v9546, %v9546
  %v9555 = vmul.f32 %v9547, %v9547
  %v9556 = vmul.f32 %v9548, %v9548
  %v9557 = vmul.f32 %v9549, %v9549
  %v9558 = vmul.f32 %v9550, %v9550
  %v9559 = vmul.f32 %v9551, %v9551
  %v9560 = vadd.f32 %v9552, %v9553
  %v9561 = vadd.f32 %v9560, %v9554
  %v9562 = vsel %vm2001, %v9555, 0.0
  %v9563 = vadd.f32 %v9561, %v9562
  %9564 = vadd.xlane.f32.xlu0 %v9563
  %v9565 = vpop.xlane.xlu0 %9564
  %v9566 = vsel %vm2582, %v9556, 0.0
  %v9567 = vsel %vm2582, %v9557, 0.0
  %v9568 = vadd.f32 %v9566, %v9567
  %v9569 = vsel %vm2582, %v9558, 0.0
  %v9570 = vadd.f32 %v9568, %v9569
  %v9571 = vsel %vm4464, %v9559, 0.0
  %v9572 = vadd.f32 %v9570, %v9571
  %9573 = vadd.xlane.f32.xlu0 %v9572
  %v9574 = vpop.xlane.xlu0 %9573
  %v9575 = vmul.f32 %v9565, %v4469
  %v9576 = vmul.f32 %v9574, %v4469
  %v9577 = vadd.f32 %v9575, 1e-05
  %v9578 = vadd.f32 %v9576, 1e-05
  %v9579 = vrsqrt.pop %v9577
  %v9580 = vrsqrt.pop %v9578
  %v9581 = vmul.f32 %v9544, %v9579
  %v9582 = vmul.f32 %v9545, %v9579
  %v9583 = vmul.f32 %v9546, %v9579
  %v9584 = vmul.f32 %v9547, %v9579
  %v9585 = vmul.f32 %v9548, %v9580
  %v9586 = vmul.f32 %v9549, %v9580
  %v9587 = vmul.f32 %v9550, %v9580
  %v9588 = vmul.f32 %v9551, %v9580
  %v9589 = vld [vmem:[%s43] sm:$0xf]
  %v9591 = vlaneseq
  %v9592 = vshrl.u32 %v9591, 7
  %v9593 = vsub.s32 0, %v9592
  %v9594 = vrot.slane %v9589, %v9593
  %v9595 = vlaneseq
  %v9596 = vshrl.u32 %v9595, 7
  %v9597 = vsub.s32 1, %v9596
  %v9598 = vrot.slane %v9589, %v9597
  %v9599 = vlaneseq
  %v9600 = vshrl.u32 %v9599, 7
  %v9601 = vsub.s32 2, %v9600
  %v9602 = vrot.slane %v9589, %v9601
  %v9603 = vlaneseq
  %v9604 = vshrl.u32 %v9603, 7
  %v9605 = vsub.s32 3, %v9604
  %v9606 = vrot.slane %v9589, %v9605
  %v9611 = vmul.f32 %v9581, %v9594
  %v9612 = vmul.f32 %v9582, %v9598
  %v9613 = vmul.f32 %v9583, %v9602
  %v9614 = vmul.f32 %v9584, %v9606
  %v9615 = vmul.f32 %v9585, %v9594
  %v9616 = vmul.f32 %v9586, %v9598
  %v9617 = vmul.f32 %v9587, %v9602
  %v9618 = vmul.f32 %v9588, %v9606
  %v9619 = vld [vmem:[%s45] sm:$0xf]
  %v9621 = vlaneseq
  %v9622 = vshrl.u32 %v9621, 7
  %v9623 = vsub.s32 0, %v9622
  %v9624 = vrot.slane %v9619, %v9623
  %v9625 = vlaneseq
  %v9626 = vshrl.u32 %v9625, 7
  %v9627 = vsub.s32 1, %v9626
  %v9628 = vrot.slane %v9619, %v9627
  %v9629 = vlaneseq
  %v9630 = vshrl.u32 %v9629, 7
  %v9631 = vsub.s32 2, %v9630
  %v9632 = vrot.slane %v9619, %v9631
  %v9633 = vlaneseq
  %v9634 = vshrl.u32 %v9633, 7
  %v9635 = vsub.s32 3, %v9634
  %v9636 = vrot.slane %v9619, %v9635
  %v9641 = vadd.f32 %v9611, %v9624
  %v9642 = vadd.f32 %v9612, %v9628
  %v9643 = vadd.f32 %v9613, %v9632
  %v9644 = vadd.f32 %v9614, %v9636
  %v9645 = vadd.f32 %v9615, %v9624
  %v9646 = vadd.f32 %v9616, %v9628
  %v9647 = vadd.f32 %v9617, %v9632
  %v9648 = vadd.f32 %v9618, %v9636
  %v9649 = vpack.c.bf16 %v9645, %v9641
  %v9650 = vpack.c.bf16 %v9646, %v9642
  %v9651 = vpack.c.bf16 %v9647, %v9643
  %v9652 = vpack.c.bf16 %v9648, %v9644
  %v9653 = vld [vmem:[%s35] sm:$0xf]
  %v9654 = vld [vmem:[%s35 + $0x4] sm:$0xf]
  %v9655 = vld [vmem:[%s35 + $0x8] sm:$0xf]
  %v9656 = vld [vmem:[%s35 + $0xc] sm:$0xf]
  %v9657 = vld [vmem:[%s35 + $0x10] sm:$0xf]
  %v9658 = vld [vmem:[%s35 + $0x14] sm:$0xf]
  %v9659 = vld [vmem:[%s35 + $0x18] sm:$0xf]
  %v9660 = vld [vmem:[%s35 + $0x1c] sm:$0xf]
  %v9661 = vld [vmem:[%s35 + $0x20] sm:$0xf]
  %v9662 = vld [vmem:[%s35 + $0x24] sm:$0xf]
  %v9663 = vld [vmem:[%s35 + $0x28] sm:$0xf]
  %v9664 = vld [vmem:[%s35 + $0x2c] sm:$0xf]
  %v9665 = vld [vmem:[%s35 + $0x30] sm:$0xf]
  %v9666 = vld [vmem:[%s35 + $0x34] sm:$0xf]
  %v9667 = vld [vmem:[%s35 + $0x38] sm:$0xf]
  %v9668 = vld [vmem:[%s35 + $0x3c] sm:$0xf]
  %v9669 = vld [vmem:[%s35 + $0x40] sm:$0xf]
  %v9670 = vld [vmem:[%s35 + $0x44] sm:$0xf]
  %v9671 = vld [vmem:[%s35 + $0x48] sm:$0xf]
  %v9672 = vld [vmem:[%s35 + $0x4c] sm:$0xf]
  %v9673 = vld [vmem:[%s35 + $0x50] sm:$0xf]
  %v9674 = vld [vmem:[%s35 + $0x54] sm:$0xf]
  %v9675 = vld [vmem:[%s35 + $0x58] sm:$0xf]
  %v9676 = vld [vmem:[%s35 + $0x5c] sm:$0xf]
  %v9677 = vld [vmem:[%s35 + $0x60] sm:$0xf]
  %v9678 = vld [vmem:[%s35 + $0x64] sm:$0xf]
  %v9679 = vld [vmem:[%s35 + $0x68] sm:$0xf]
  %v9680 = vld [vmem:[%s35 + $0x6c] sm:$0xf]
  %v9681 = vld [vmem:[%s35 + $0x70] sm:$0xf]
  %v9682 = vld [vmem:[%s35 + $0x74] sm:$0xf]
  %v9683 = vld [vmem:[%s35 + $0x78] sm:$0xf]
  %v9684 = vld [vmem:[%s35 + $0x7c] sm:$0xf]
  %v9685 = vld [vmem:[%s35 + $0x80] sm:$0xf]
  %v9686 = vld [vmem:[%s35 + $0x84] sm:$0xf]
  %v9687 = vld [vmem:[%s35 + $0x88] sm:$0xf]
  %v9688 = vld [vmem:[%s35 + $0x8c] sm:$0xf]
  %v9689 = vld [vmem:[%s35 + $0x90] sm:$0xf]
  %v9690 = vld [vmem:[%s35 + $0x94] sm:$0xf]
  %v9691 = vld [vmem:[%s35 + $0x98] sm:$0xf]
  %v9692 = vld [vmem:[%s35 + $0x9c] sm:$0xf]
  %v9693 = vld [vmem:[%s35 + $0xa0] sm:$0xf]
  %v9694 = vld [vmem:[%s35 + $0xa4] sm:$0xf]
  %v9695 = vld [vmem:[%s35 + $0xa8] sm:$0xf]
  %v9696 = vld [vmem:[%s35 + $0xac] sm:$0xf]
  %v9697 = vld [vmem:[%s35 + $0xb0] sm:$0xf]
  %v9698 = vld [vmem:[%s35 + $0xb4] sm:$0xf]
  %v9699 = vld [vmem:[%s35 + $0xb8] sm:$0xf]
  %v9700 = vld [vmem:[%s35 + $0xbc] sm:$0xf]
  %v9701 = vld [vmem:[%s35 + $0xc0] sm:$0xf]
  %v9702 = vld [vmem:[%s35 + $0xc4] sm:$0xf]
  %v9703 = vld [vmem:[%s37] sm:$0x1]
  %v9705 = vlaneseq
  %v9706 = vshrl.u32 %v9705, 7
  %v9707 = vsub.s32 0, %v9706
  %v9708 = vrot.slane %v9703, %v9707
  %v9760 = vunpack.c.l.b16 %v9653
  %v9761 = vunpack.c.l.b16 %v9654
  %v9762 = vunpack.c.l.b16 %v9655
  %v9763 = vunpack.c.l.b16 %v9656
  %v9764 = vunpack.c.l.b16 %v9657
  %v9765 = vunpack.c.l.b16 %v9658
  %v9766 = vunpack.c.l.b16 %v9659
  %v9767 = vunpack.c.l.b16 %v9660
  %v9768 = vunpack.c.l.b16 %v9661
  %v9769 = vunpack.c.l.b16 %v9662
  %v9770 = vunpack.c.l.b16 %v9663
  %v9771 = vunpack.c.l.b16 %v9664
  %v9772 = vunpack.c.l.b16 %v9665
  %v9773 = vunpack.c.l.b16 %v9666
  %v9774 = vunpack.c.l.b16 %v9667
  %v9775 = vunpack.c.l.b16 %v9668
  %v9776 = vunpack.c.l.b16 %v9669
  %v9777 = vunpack.c.l.b16 %v9670
  %v9778 = vunpack.c.l.b16 %v9671
  %v9779 = vunpack.c.l.b16 %v9672
  %v9780 = vunpack.c.l.b16 %v9673
  %v9781 = vunpack.c.l.b16 %v9674
  %v9782 = vunpack.c.l.b16 %v9675
  %v9783 = vunpack.c.l.b16 %v9676
  %v9784 = vunpack.c.l.b16 %v9677
  %v9785 = vunpack.c.l.b16 %v9678
  %v9786 = vunpack.c.l.b16 %v9679
  %v9787 = vunpack.c.l.b16 %v9680
  %v9788 = vunpack.c.l.b16 %v9681
  %v9789 = vunpack.c.l.b16 %v9682
  %v9790 = vunpack.c.l.b16 %v9683
  %v9791 = vunpack.c.l.b16 %v9684
  %v9792 = vunpack.c.l.b16 %v9685
  %v9793 = vunpack.c.l.b16 %v9686
  %v9794 = vunpack.c.l.b16 %v9687
  %v9795 = vunpack.c.l.b16 %v9688
  %v9796 = vunpack.c.l.b16 %v9689
  %v9797 = vunpack.c.l.b16 %v9690
  %v9798 = vunpack.c.l.b16 %v9691
  %v9799 = vunpack.c.l.b16 %v9692
  %v9800 = vunpack.c.l.b16 %v9693
  %v9801 = vunpack.c.l.b16 %v9694
  %v9802 = vunpack.c.l.b16 %v9695
  %v9803 = vunpack.c.l.b16 %v9696
  %v9804 = vunpack.c.l.b16 %v9697
  %v9805 = vunpack.c.l.b16 %v9698
  %v9806 = vunpack.c.l.b16 %v9699
  %v9807 = vunpack.c.l.b16 %v9700
  %v9808 = vunpack.c.l.b16 %v9701
  %v9809 = vunpack.c.l.b16 %v9702
  %v9810 = vpack.c.b16 %v9761, %v9760
  %v9811 = vpack.c.b16 %v9763, %v9762
  %v9812 = vpack.c.b16 %v9765, %v9764
  %v9813 = vpack.c.b16 %v9767, %v9766
  %v9814 = vpack.c.b16 %v9769, %v9768
  %v9815 = vpack.c.b16 %v9771, %v9770
  %v9816 = vpack.c.b16 %v9773, %v9772
  %v9817 = vpack.c.b16 %v9775, %v9774
  %v9818 = vpack.c.b16 %v9777, %v9776
  %v9819 = vpack.c.b16 %v9779, %v9778
  %v9820 = vpack.c.b16 %v9781, %v9780
  %v9821 = vpack.c.b16 %v9783, %v9782
  %v9822 = vpack.c.b16 %v9785, %v9784
  %v9823 = vpack.c.b16 %v9787, %v9786
  %v9824 = vpack.c.b16 %v9789, %v9788
  %v9825 = vpack.c.b16 %v9791, %v9790
  %v9826 = vpack.c.b16 %v9793, %v9792
  %v9827 = vpack.c.b16 %v9795, %v9794
  %v9828 = vpack.c.b16 %v9797, %v9796
  %v9829 = vpack.c.b16 %v9799, %v9798
  %v9830 = vpack.c.b16 %v9801, %v9800
  %v9831 = vpack.c.b16 %v9803, %v9802
  %v9832 = vpack.c.b16 %v9805, %v9804
  %v9833 = vpack.c.b16 %v9807, %v9806
  %v9834 = vpack.c.b16 %v9809, %v9808
  %v9861 = vsel %vm2001, %v9652, 0
  %9863 = vmatprep.subr.bf16.mxu0 0
  %9864 = vmatpush1.bf16.msra.mxu0 %v9810
  %9865 = vmatprep.subr.bf16.mxu0 0
  %9866 = vmatpush1.bf16.msra.mxu0 %v9811
  %9867 = vmatprep.subr.bf16.mxu0 0
  %9868 = vmatpush1.bf16.msra.mxu0 %v9812
  %9869 = vmatprep.subr.bf16.mxu0 0
  %9870 = vmatpush1.bf16.msra.mxu0 %v9813
  %9871 = vmatprep.subr.bf16.mxu0 0
  %9872 = vmatpush1.bf16.msra.mxu0 %v9814
  %9873 = vmatprep.subr.bf16.mxu0 0
  %9874 = vmatpush1.bf16.msra.mxu0 %v9815
  %9875 = vmatprep.subr.bf16.mxu0 0
  %9876 = vmatpush1.bf16.msra.mxu0 %v9816
  %9877 = vmatprep.subr.bf16.mxu0 0
  %9878 = vmatpush1.bf16.msra.mxu0 %v9817
  %9879 = vmatprep.subr.bf16.mxu0 0
  %9880 = vmatpush1.bf16.msra.mxu0 %v9818
  %9881 = vmatprep.subr.bf16.mxu0 0
  %9882 = vmatpush1.bf16.msra.mxu0 %v9819
  %9883 = vmatprep.subr.bf16.mxu0 0
  %9884 = vmatpush1.bf16.msra.mxu0 %v9820
  %9885 = vmatprep.subr.bf16.mxu0 0
  %9886 = vmatpush1.bf16.msra.mxu0 %v9821
  %9887 = vmatprep.subr.bf16.mxu0 0
  %9888 = vmatpush1.bf16.msra.mxu0 %v9822
  %9889 = vmatprep.subr.bf16.mxu0 0
  %9890 = vmatpush1.bf16.msra.mxu0 %v9823
  %9891 = vmatprep.subr.bf16.mxu0 0
  %9892 = vmatpush1.bf16.msra.mxu0 %v9824
  %9893 = vmatprep.subr.bf16.mxu0 0
  %9894 = vmatpush1.bf16.msra.mxu0 %v9825
  %9895 = vmatprep.mubr.bf16.mxu0 %v9650
  %9896 = vmatmul.mubr.bf16.gmra.mrb[0].mxu0 %v9649
  %v9897 = vpop.f32.mrb[0].mxu0
  %v9898 = vadd.f32 %v9708, %v9897
  %v9899 = vpop.f32.mrb[0].mxu0
  %v9900 = vpop.f32.mrb[0].mxu0
  %v9901 = vadd.f32 %v9708, %v9900
  %v9902 = vpop.f32.mrb[0].mxu0
  %9903 = vdwg.mxu0
  %9904 = vmatprep.subr.bf16.mxu0 0
  %9905 = vmatpush1.bf16.msra.mxu0 %v9826
  %9906 = vmatprep.subr.bf16.mxu0 0
  %9907 = vmatpush1.bf16.msra.mxu0 %v9827
  %9908 = vmatprep.subr.bf16.mxu0 0
  %9909 = vmatpush1.bf16.msra.mxu0 %v9828
  %9910 = vmatprep.subr.bf16.mxu0 0
  %9911 = vmatpush1.bf16.msra.mxu0 %v9829
  %9912 = vmatprep.subr.bf16.mxu0 0
  %9913 = vmatpush1.bf16.msra.mxu0 %v9830
  %9914 = vmatprep.subr.bf16.mxu0 0
  %9915 = vmatpush1.bf16.msra.mxu0 %v9831
  %9916 = vmatprep.subr.bf16.mxu0 0
  %9917 = vmatpush1.bf16.msra.mxu0 %v9832
  %9918 = vmatprep.subr.bf16.mxu0 0
  %9919 = vmatpush1.bf16.msra.mxu0 %v9833
  %9920 = vmatprep.subr.bf16.mxu0 0
  %9921 = vmatpush1.bf16.msra.mxu0 %v9834
  %9922 = vmatprep.subr.bf16.mxu0 0
  %9923 = vmatpush1.bf16.msra.mxu0 0
  %9924 = vmatprep.subr.bf16.mxu0 0
  %9925 = vmatpush1.bf16.msra.mxu0 0
  %9926 = vmatprep.subr.bf16.mxu0 0
  %9927 = vmatpush1.bf16.msra.mxu0 0
  %9928 = vmatprep.subr.bf16.mxu0 0
  %9929 = vmatpush1.bf16.msra.mxu0 0
  %9930 = vmatprep.subr.bf16.mxu0 0
  %9931 = vmatpush1.bf16.msra.mxu0 0
  %9932 = vmatprep.subr.bf16.mxu0 0
  %9933 = vmatpush1.bf16.msra.mxu0 0
  %9934 = vmatprep.subr.bf16.mxu0 0
  %9935 = vmatpush1.bf16.msra.mxu0 0
  %9936 = vmatprep.mubr.bf16.mxu0 %v9861
  %9937 = vmatmul.mubr.bf16.gmra.mrb[0].mxu0 %v9651
  %v9938 = vpop.f32.mrb[0].mxu0
  %v9939 = vadd.f32 %v9898, %v9938
  %v9940 = vpop.f32.mrb[0].mxu0
  %v9941 = vpop.f32.mrb[0].mxu0
  %v9942 = vadd.f32 %v9901, %v9941
  %v9943 = vpop.f32.mrb[0].mxu0
  %9944 = vdwg.mxu0
  %v9945 = vmax.f32 %v9939, 0.0
  %v9946 = vmax.f32 %v9942, 0.0
  %v9947 = vpack.c.bf16 %v9946, %v9945
  %v9948 = vld [vmem:[%s39] sm:$0xff]
  %v9949 = vld [vmem:[%s39 + $0x8] sm:$0xff]
  %v9950 = vld [vmem:[%s39 + $0x10] sm:$0xff]
  %v9951 = vld [vmem:[%s39 + $0x18] sm:$0xff]
  %v9952 = vld [vmem:[%s39 + $0x20] sm:$0xff]
  %v9953 = vld [vmem:[%s39 + $0x28] sm:$0xff]
  %v9954 = vld [vmem:[%s39 + $0x30] sm:$0xff]
  %v9955 = vld [vmem:[%s39 + $0x38] sm:$0xff]
  %v9956 = vld [vmem:[%s39 + $0x40] sm:$0xff]
  %v9957 = vld [vmem:[%s39 + $0x48] sm:$0xff]
  %v9958 = vld [vmem:[%s39 + $0x50] sm:$0xff]
  %v9959 = vld [vmem:[%s39 + $0x58] sm:$0xff]
  %v9960 = vld [vmem:[%s39 + $0x60] sm:$0xff]
  %v9961 = vld [vmem:[%s39 + $0x68] sm:$0xff]
  %v9962 = vld [vmem:[%s39 + $0x70] sm:$0xff]
  %v9963 = vld [vmem:[%s39 + $0x78] sm:$0xff]
  %v9964 = vld [vmem:[%s41] sm:$0xf]
  %v9966 = vlaneseq
  %v9967 = vshrl.u32 %v9966, 7
  %v9968 = vsub.s32 0, %v9967
  %v9969 = vrot.slane %v9964, %v9968
  %v9970 = vlaneseq
  %v9971 = vshrl.u32 %v9970, 7
  %v9972 = vsub.s32 1, %v9971
  %v9973 = vrot.slane %v9964, %v9972
  %v9974 = vlaneseq
  %v9975 = vshrl.u32 %v9974, 7
  %v9976 = vsub.s32 2, %v9975
  %v9977 = vrot.slane %v9964, %v9976
  %v9978 = vlaneseq
  %v9979 = vshrl.u32 %v9978, 7
  %v9980 = vsub.s32 3, %v9979
  %v9981 = vrot.slane %v9964, %v9980
  %v10002 = vunpack.c.l.b16 %v9948
  %v10003 = vunpack.c.h.b16 %v9948
  %v10004 = vunpack.c.l.b16 %v9949
  %v10005 = vunpack.c.h.b16 %v9949
  %v10006 = vunpack.c.l.b16 %v9950
  %v10007 = vunpack.c.h.b16 %v9950
  %v10008 = vunpack.c.l.b16 %v9951
  %v10009 = vunpack.c.h.b16 %v9951
  %v10010 = vunpack.c.l.b16 %v9952
  %v10011 = vunpack.c.h.b16 %v9952
  %v10012 = vunpack.c.l.b16 %v9953
  %v10013 = vunpack.c.h.b16 %v9953
  %v10014 = vunpack.c.l.b16 %v9954
  %v10015 = vunpack.c.h.b16 %v9954
  %v10016 = vunpack.c.l.b16 %v9955
  %v10017 = vunpack.c.h.b16 %v9955
  %v10018 = vunpack.c.l.b16 %v9956
  %v10019 = vunpack.c.h.b16 %v9956
  %v10020 = vunpack.c.l.b16 %v9957
  %v10021 = vunpack.c.h.b16 %v9957
  %v10022 = vunpack.c.l.b16 %v9958
  %v10023 = vunpack.c.h.b16 %v9958
  %v10024 = vunpack.c.l.b16 %v9959
  %v10025 = vunpack.c.h.b16 %v9959
  %v10026 = vunpack.c.l.b16 %v9960
  %v10027 = vunpack.c.h.b16 %v9960
  %v10028 = vunpack.c.l.b16 %v9961
  %v10029 = vunpack.c.h.b16 %v9961
  %v10030 = vunpack.c.l.b16 %v9962
  %v10031 = vunpack.c.h.b16 %v9962
  %v10032 = vunpack.c.l.b16 %v9963
  %v10033 = vunpack.c.h.b16 %v9963
  %v10034 = vpack.c.b16 %v10006, %v10002
  %v10035 = vpack.c.b16 %v10007, %v10003
  %v10036 = vpack.c.b16 %v10008, %v10004
  %v10037 = vpack.c.b16 %v10009, %v10005
  %v10038 = vpack.c.b16 %v10014, %v10010
  %v10039 = vpack.c.b16 %v10015, %v10011
  %v10040 = vpack.c.b16 %v10016, %v10012
  %v10041 = vpack.c.b16 %v10017, %v10013
  %v10042 = vpack.c.b16 %v10022, %v10018
  %v10043 = vpack.c.b16 %v10023, %v10019
  %v10044 = vpack.c.b16 %v10024, %v10020
  %v10045 = vpack.c.b16 %v10025, %v10021
  %v10046 = vpack.c.b16 %v10030, %v10026
  %v10047 = vpack.c.b16 %v10031, %v10027
  %v10048 = vpack.c.b16 %v10032, %v10028
  %v10049 = vpack.c.b16 %v10033, %v10029
  %v10067 = vsel %vm4994, %v9947, 0
  %10069 = vmatprep.subr.bf16.mxu0 %v10035
  %10070 = vmatpush1.bf16.msra.mxu0 %v10034
  %10071 = vmatprep.subr.bf16.mxu0 %v10039
  %10072 = vmatpush1.bf16.msra.mxu0 %v10038
  %10073 = vmatprep.subr.bf16.mxu0 %v10043
  %10074 = vmatpush1.bf16.msra.mxu0 %v10042
  %10075 = vmatprep.subr.bf16.mxu0 %v10047
  %10076 = vmatpush1.bf16.msra.mxu0 %v10046
  %10077 = vmatprep.subr.bf16.mxu0 0
  %10078 = vmatpush1.bf16.msra.mxu0 0
  %10079 = vmatprep.subr.bf16.mxu0 0
  %10080 = vmatpush1.bf16.msra.mxu0 0
  %10081 = vmatprep.subr.bf16.mxu0 0
  %10082 = vmatpush1.bf16.msra.mxu0 0
  %10083 = vmatprep.subr.bf16.mxu0 0
  %10084 = vmatpush1.bf16.msra.mxu0 0
  %10085 = vmatprep.subr.bf16.mxu0 0
  %10086 = vmatpush1.bf16.msra.mxu0 0
  %10087 = vmatprep.subr.bf16.mxu0 0
  %10088 = vmatpush1.bf16.msra.mxu0 0
  %10089 = vmatprep.subr.bf16.mxu0 0
  %10090 = vmatpush1.bf16.msra.mxu0 0
  %10091 = vmatprep.subr.bf16.mxu0 0
  %10092 = vmatpush1.bf16.msra.mxu0 0
  %10093 = vmatprep.subr.bf16.mxu0 0
  %10094 = vmatpush1.bf16.msra.mxu0 0
  %10095 = vmatprep.subr.bf16.mxu0 0
  %10096 = vmatpush1.bf16.msra.mxu0 0
  %10097 = vmatprep.subr.bf16.mxu0 0
  %10098 = vmatpush1.bf16.msra.mxu0 0
  %10099 = vmatprep.subr.bf16.mxu0 0
  %10100 = vmatpush1.bf16.msra.mxu0 0
  %10101 = vmatprep.mubr.bf16.mxu0 0
  %10102 = vmatmul.mubr.bf16.gmra.mrb[0].mxu0 %v10067
  %v10103 = vpop.f32.mrb[0].mxu0
  %v10104 = vadd.f32 %v9969, %v10103
  %v10105 = vpop.f32.mrb[0].mxu0
  %v10106 = vadd.f32 %v9973, %v10105
  %v10107 = vpop.f32.mrb[0].mxu0
  %v10108 = vadd.f32 %v9969, %v10107
  %v10109 = vpop.f32.mrb[0].mxu0
  %v10110 = vadd.f32 %v9973, %v10109
  %10111 = vdwg.mxu0
  %10112 = vmatprep.subr.bf16.mxu0 %v10037
  %10113 = vmatpush1.bf16.msra.mxu0 %v10036
  %10114 = vmatprep.subr.bf16.mxu0 %v10041
  %10115 = vmatpush1.bf16.msra.mxu0 %v10040
  %10116 = vmatprep.subr.bf16.mxu0 %v10045
  %10117 = vmatpush1.bf16.msra.mxu0 %v10044
  %10118 = vmatprep.subr.bf16.mxu0 %v10049
  %10119 = vmatpush1.bf16.msra.mxu0 %v10048
  %10120 = vmatprep.subr.bf16.mxu0 0
  %10121 = vmatpush1.bf16.msra.mxu0 0
  %10122 = vmatprep.subr.bf16.mxu0 0
  %10123 = vmatpush1.bf16.msra.mxu0 0
  %10124 = vmatprep.subr.bf16.mxu0 0
  %10125 = vmatpush1.bf16.msra.mxu0 0
  %10126 = vmatprep.subr.bf16.mxu0 0
  %10127 = vmatpush1.bf16.msra.mxu0 0
  %10128 = vmatprep.subr.bf16.mxu0 0
  %10129 = vmatpush1.bf16.msra.mxu0 0
  %10130 = vmatprep.subr.bf16.mxu0 0
  %10131 = vmatpush1.bf16.msra.mxu0 0
  %10132 = vmatprep.subr.bf16.mxu0 0
  %10133 = vmatpush1.bf16.msra.mxu0 0
  %10134 = vmatprep.subr.bf16.mxu0 0
  %10135 = vmatpush1.bf16.msra.mxu0 0
  %10136 = vmatprep.subr.bf16.mxu0 0
  %10137 = vmatpush1.bf16.msra.mxu0 0
  %10138 = vmatprep.subr.bf16.mxu0 0
  %10139 = vmatpush1.bf16.msra.mxu0 0
  %10140 = vmatprep.subr.bf16.mxu0 0
  %10141 = vmatpush1.bf16.msra.mxu0 0
  %10142 = vmatprep.subr.bf16.mxu0 0
  %10143 = vmatpush1.bf16.msra.mxu0 0
  %10144 = vmatprep.mubr.bf16.mxu0 0
  %10145 = vmatmul.mubr.bf16.gmra.mrb[0].mxu0 %v10067
  %v10146 = vpop.f32.mrb[0].mxu0
  %v10147 = vadd.f32 %v9977, %v10146
  %v10148 = vpop.f32.mrb[0].mxu0
  %v10149 = vadd.f32 %v9981, %v10148
  %v10150 = vpop.f32.mrb[0].mxu0
  %v10151 = vadd.f32 %v9977, %v10150
  %v10152 = vpop.f32.mrb[0].mxu0
  %v10153 = vadd.f32 %v9981, %v10152
  %10154 = vdwg.mxu0
  %v10155 = vadd.f32 %v9641, %v10104
  %v10156 = vadd.f32 %v9642, %v10106
  %v10157 = vadd.f32 %v9643, %v10147
  %v10158 = vadd.f32 %v9644, %v10149
  %v10159 = vadd.f32 %v9645, %v10108
  %v10160 = vadd.f32 %v9646, %v10110
  %v10161 = vadd.f32 %v9647, %v10151
  %v10162 = vadd.f32 %v9648, %v10153
  %v10163 = vadd.f32 %v10155, %v10156
  %v10164 = vadd.f32 %v10163, %v10157
  %v10165 = vsel %vm2001, %v10158, 0.0
  %v10166 = vadd.f32 %v10164, %v10165
  %10167 = vadd.xlane.f32.xlu0 %v10166
  %v10168 = vpop.xlane.xlu0 %10167
  %v10169 = vsel %vm2582, %v10159, 0.0
  %v10170 = vsel %vm2582, %v10160, 0.0
  %v10171 = vadd.f32 %v10169, %v10170
  %v10172 = vsel %vm2582, %v10161, 0.0
  %v10173 = vadd.f32 %v10171, %v10172
  %v10174 = vsel %vm4464, %v10162, 0.0
  %v10175 = vadd.f32 %v10173, %v10174
  %10176 = vadd.xlane.f32.xlu0 %v10175
  %v10177 = vpop.xlane.xlu0 %10176
  %v10178 = vmul.f32 %v10168, %v4469
  %v10179 = vmul.f32 %v10177, %v4469
  %v10180 = vsub.f32 %v10155, %v10178
  %v10181 = vsub.f32 %v10156, %v10178
  %v10182 = vsub.f32 %v10157, %v10178
  %v10183 = vsub.f32 %v10158, %v10178
  %v10184 = vsub.f32 %v10159, %v10179
  %v10185 = vsub.f32 %v10160, %v10179
  %v10186 = vsub.f32 %v10161, %v10179
  %v10187 = vsub.f32 %v10162, %v10179
  %v10188 = vmul.f32 %v10180, %v10180
  %v10189 = vmul.f32 %v10181, %v10181
  %v10190 = vmul.f32 %v10182, %v10182
  %v10191 = vmul.f32 %v10183, %v10183
  %v10192 = vmul.f32 %v10184, %v10184
  %v10193 = vmul.f32 %v10185, %v10185
  %v10194 = vmul.f32 %v10186, %v10186
  %v10195 = vmul.f32 %v10187, %v10187
  %v10196 = vadd.f32 %v10188, %v10189
  %v10197 = vadd.f32 %v10196, %v10190
  %v10198 = vsel %vm2001, %v10191, 0.0
  %v10199 = vadd.f32 %v10197, %v10198
  %10200 = vadd.xlane.f32.xlu0 %v10199
  %v10201 = vpop.xlane.xlu0 %10200
  %v10202 = vsel %vm2582, %v10192, 0.0
  %v10203 = vsel %vm2582, %v10193, 0.0
  %v10204 = vadd.f32 %v10202, %v10203
  %v10205 = vsel %vm2582, %v10194, 0.0
  %v10206 = vadd.f32 %v10204, %v10205
  %v10207 = vsel %vm4464, %v10195, 0.0
  %v10208 = vadd.f32 %v10206, %v10207
  %10209 = vadd.xlane.f32.xlu0 %v10208
  %v10210 = vpop.xlane.xlu0 %10209
  %v10211 = vmul.f32 %v10201, %v4469
  %v10212 = vmul.f32 %v10210, %v4469
  %v10213 = vadd.f32 %v10211, 1e-05
  %v10214 = vadd.f32 %v10212, 1e-05
  %v10215 = vrsqrt.pop %v10213
  %v10216 = vrsqrt.pop %v10214
  %v10217 = vmul.f32 %v10180, %v10215
  %v10218 = vmul.f32 %v10181, %v10215
  %v10219 = vmul.f32 %v10182, %v10215
  %v10220 = vmul.f32 %v10183, %v10215
  %v10221 = vmul.f32 %v10184, %v10216
  %v10222 = vmul.f32 %v10185, %v10216
  %v10223 = vmul.f32 %v10186, %v10216
  %v10224 = vmul.f32 %v10187, %v10216
  %v10225 = vld [vmem:[%s47] sm:$0xf]
  %v10227 = vlaneseq
  %v10228 = vshrl.u32 %v10227, 7
  %v10229 = vsub.s32 0, %v10228
  %v10230 = vrot.slane %v10225, %v10229
  %v10231 = vlaneseq
  %v10232 = vshrl.u32 %v10231, 7
  %v10233 = vsub.s32 1, %v10232
  %v10234 = vrot.slane %v10225, %v10233
  %v10235 = vlaneseq
  %v10236 = vshrl.u32 %v10235, 7
  %v10237 = vsub.s32 2, %v10236
  %v10238 = vrot.slane %v10225, %v10237
  %v10239 = vlaneseq
  %v10240 = vshrl.u32 %v10239, 7
  %v10241 = vsub.s32 3, %v10240
  %v10242 = vrot.slane %v10225, %v10241
  %v10247 = vmul.f32 %v10217, %v10230
  %v10248 = vmul.f32 %v10218, %v10234
  %v10249 = vmul.f32 %v10219, %v10238
  %v10250 = vmul.f32 %v10220, %v10242
  %v10251 = vmul.f32 %v10221, %v10230
  %v10252 = vmul.f32 %v10222, %v10234
  %v10253 = vmul.f32 %v10223, %v10238
  %v10254 = vmul.f32 %v10224, %v10242
  %v10255 = vld [vmem:[%s49] sm:$0xf]
  %v10257 = vlaneseq
  %v10258 = vshrl.u32 %v10257, 7
  %v10259 = vsub.s32 0, %v10258
  %v10260 = vrot.slane %v10255, %v10259
  %v10261 = vlaneseq
  %v10262 = vshrl.u32 %v10261, 7
  %v10263 = vsub.s32 1, %v10262
  %v10264 = vrot.slane %v10255, %v10263
  %v10265 = vlaneseq
  %v10266 = vshrl.u32 %v10265, 7
  %v10267 = vsub.s32 2, %v10266
  %v10268 = vrot.slane %v10255, %v10267
  %v10269 = vlaneseq
  %v10270 = vshrl.u32 %v10269, 7
  %v10271 = vsub.s32 3, %v10270
  %v10272 = vrot.slane %v10255, %v10271
  %v10277 = vadd.f32 %v10247, %v10260
  %v10278 = vadd.f32 %v10248, %v10264
  %v10279 = vadd.f32 %v10249, %v10268
  %v10280 = vadd.f32 %v10250, %v10272
  %v10281 = vadd.f32 %v10251, %v10260
  %v10282 = vadd.f32 %v10252, %v10264
  %v10283 = vadd.f32 %v10253, %v10268
  %v10284 = vadd.f32 %v10254, %v10272
  %v10285 = vpack.c.bf16 %v10281, %v10277
  %v10286 = vpack.c.bf16 %v10282, %v10278
  %v10287 = vpack.c.bf16 %v10283, %v10279
  %v10288 = vpack.c.bf16 %v10284, %v10280
  %v10289 = vld [vmem:[%s51] sm:$0xff]
  %v10290 = vld [vmem:[%s51 + $0x8] sm:$0xff]
  %v10291 = vld [vmem:[%s51 + $0x10] sm:$0xff]
  %v10292 = vld [vmem:[%s51 + $0x18] sm:$0xff]
  %v10293 = vld [vmem:[%s51 + $0x20] sm:$0xff]
  %v10294 = vld [vmem:[%s51 + $0x28] sm:$0xff]
  %v10295 = vld [vmem:[%s51 + $0x30] sm:$0xff]
  %v10296 = vld [vmem:[%s51 + $0x38] sm:$0xff]
  %v10297 = vld [vmem:[%s51 + $0x40] sm:$0xff]
  %v10298 = vld [vmem:[%s51 + $0x48] sm:$0xff]
  %v10299 = vld [vmem:[%s51 + $0x50] sm:$0xff]
  %v10300 = vld [vmem:[%s51 + $0x58] sm:$0xff]
  %v10301 = vld [vmem:[%s51 + $0x60] sm:$0xff]
  %v10302 = vld [vmem:[%s51 + $0x68] sm:$0xff]
  %v10303 = vld [vmem:[%s51 + $0x70] sm:$0xff]
  %v10304 = vld [vmem:[%s51 + $0x78] sm:$0xff]
  %v10305 = vld [vmem:[%s51 + $0x80] sm:$0xff]
  %v10306 = vld [vmem:[%s51 + $0x88] sm:$0xff]
  %v10307 = vld [vmem:[%s51 + $0x90] sm:$0xff]
  %v10308 = vld [vmem:[%s51 + $0x98] sm:$0xff]
  %v10309 = vld [vmem:[%s51 + $0xa0] sm:$0xff]
  %v10310 = vld [vmem:[%s51 + $0xa8] sm:$0xff]
  %v10311 = vld [vmem:[%s51 + $0xb0] sm:$0xff]
  %v10312 = vld [vmem:[%s51 + $0xb8] sm:$0xff]
  %v10313 = vld [vmem:[%s51 + $0xc0] sm:$0xff]
  %v10314 = vld [vmem:[%s51 + $0xc8] sm:$0xff]
  %v10315 = vld [vmem:[%s51 + $0xd0] sm:$0xff]
  %v10316 = vld [vmem:[%s51 + $0xd8] sm:$0xff]
  %v10317 = vld [vmem:[%s51 + $0xe0] sm:$0xff]
  %v10318 = vld [vmem:[%s51 + $0xe8] sm:$0xff]
  %v10319 = vld [vmem:[%s51 + $0xf0] sm:$0xff]
  %v10320 = vld [vmem:[%s51 + $0xf8] sm:$0xff]
  %v10321 = vld [vmem:[%s51 + $0x100] sm:$0xff]
  %v10322 = vld [vmem:[%s51 + $0x108] sm:$0xff]
  %v10323 = vld [vmem:[%s51 + $0x110] sm:$0xff]
  %v10324 = vld [vmem:[%s51 + $0x118] sm:$0xff]
  %v10325 = vld [vmem:[%s51 + $0x120] sm:$0xff]
  %v10326 = vld [vmem:[%s51 + $0x128] sm:$0xff]
  %v10327 = vld [vmem:[%s51 + $0x130] sm:$0xff]
  %v10328 = vld [vmem:[%s51 + $0x138] sm:$0xff]
  %v10329 = vld [vmem:[%s51 + $0x140] sm:$0xff]
  %v10330 = vld [vmem:[%s51 + $0x148] sm:$0xff]
  %v10331 = vld [vmem:[%s51 + $0x150] sm:$0xff]
  %v10332 = vld [vmem:[%s51 + $0x158] sm:$0xff]
  %v10333 = vld [vmem:[%s51 + $0x160] sm:$0xff]
  %v10334 = vld [vmem:[%s51 + $0x168] sm:$0xff]
  %v10335 = vld [vmem:[%s51 + $0x170] sm:$0xff]
  %v10336 = vld [vmem:[%s51 + $0x178] sm:$0xff]
  %v10337 = vld [vmem:[%s51 + $0x180] sm:$0xff]
  %v10338 = vld [vmem:[%s51 + $0x188] sm:$0xff]
  %v10339 = vld [vmem:[%s51 + $0x190] sm:$0xff]
  %v10340 = vld [vmem:[%s51 + $0x198] sm:$0xff]
  %v10341 = vld [vmem:[%s51 + $0x1a0] sm:$0xff]
  %v10342 = vld [vmem:[%s51 + $0x1a8] sm:$0xff]
  %v10343 = vld [vmem:[%s51 + $0x1b0] sm:$0xff]
  %v10344 = vld [vmem:[%s51 + $0x1b8] sm:$0xff]
  %v10345 = vld [vmem:[%s51 + $0x1c0] sm:$0xff]
  %v10346 = vld [vmem:[%s51 + $0x1c8] sm:$0xff]
  %v10347 = vld [vmem:[%s51 + $0x1d0] sm:$0xff]
  %v10348 = vld [vmem:[%s51 + $0x1d8] sm:$0xff]
  %v10349 = vld [vmem:[%s51 + $0x1e0] sm:$0xff]
  %v10350 = vld [vmem:[%s51 + $0x1e8] sm:$0xff]
  %v10351 = vld [vmem:[%s51 + $0x1f0] sm:$0xff]
  %v10352 = vld [vmem:[%s51 + $0x1f8] sm:$0xff]
  %v10353 = vld [vmem:[%s51 + $0x200] sm:$0xff]
  %v10354 = vld [vmem:[%s51 + $0x208] sm:$0xff]
  %v10355 = vld [vmem:[%s51 + $0x210] sm:$0xff]
  %v10356 = vld [vmem:[%s51 + $0x218] sm:$0xff]
  %v10357 = vld [vmem:[%s51 + $0x220] sm:$0xff]
  %v10358 = vld [vmem:[%s51 + $0x228] sm:$0xff]
  %v10359 = vld [vmem:[%s51 + $0x230] sm:$0xff]
  %v10360 = vld [vmem:[%s51 + $0x238] sm:$0xff]
  %v10361 = vld [vmem:[%s51 + $0x240] sm:$0xff]
  %v10362 = vld [vmem:[%s51 + $0x248] sm:$0xff]
  %v10363 = vld [vmem:[%s51 + $0x250] sm:$0xff]
  %v10364 = vld [vmem:[%s51 + $0x258] sm:$0xff]
  %v10365 = vld [vmem:[%s51 + $0x260] sm:$0xff]
  %v10366 = vld [vmem:[%s51 + $0x268] sm:$0xff]
  %v10367 = vld [vmem:[%s51 + $0x270] sm:$0xff]
  %v10368 = vld [vmem:[%s51 + $0x278] sm:$0xff]
  %v10369 = vld [vmem:[%s51 + $0x280] sm:$0xff]
  %v10370 = vld [vmem:[%s51 + $0x288] sm:$0xff]
  %v10371 = vld [vmem:[%s51 + $0x290] sm:$0xff]
  %v10372 = vld [vmem:[%s51 + $0x298] sm:$0xff]
  %v10373 = vld [vmem:[%s51 + $0x2a0] sm:$0xff]
  %v10374 = vld [vmem:[%s51 + $0x2a8] sm:$0xff]
  %v10375 = vld [vmem:[%s51 + $0x2b0] sm:$0xff]
  %v10376 = vld [vmem:[%s51 + $0x2b8] sm:$0xff]
  %v10377 = vld [vmem:[%s51 + $0x2c0] sm:$0xff]
  %v10378 = vld [vmem:[%s51 + $0x2c8] sm:$0xff]
  %v10379 = vld [vmem:[%s51 + $0x2d0] sm:$0xff]
  %v10380 = vld [vmem:[%s51 + $0x2d8] sm:$0xff]
  %v10381 = vld [vmem:[%s51 + $0x2e0] sm:$0xff]
  %v10382 = vld [vmem:[%s51 + $0x2e8] sm:$0xff]
  %v10383 = vld [vmem:[%s51 + $0x2f0] sm:$0xff]
  %v10384 = vld [vmem:[%s51 + $0x2f8] sm:$0xff]
  %v10385 = vld [vmem:[%s51 + $0x300] sm:$0xff]
  %v10386 = vld [vmem:[%s51 + $0x308] sm:$0xff]
  %v10387 = vld [vmem:[%s51 + $0x310] sm:$0xff]
  %v10388 = vld [vmem:[%s51 + $0x318] sm:$0xff]
  %v10389 = vld [vmem:[%s53] sm:$0xf]
  %v10391 = vlaneseq
  %v10392 = vshrl.u32 %v10391, 7
  %v10393 = vsub.s32 0, %v10392
  %v10394 = vrot.slane %v10389, %v10393
  %v10395 = vlaneseq
  %v10396 = vshrl.u32 %v10395, 7
  %v10397 = vsub.s32 1, %v10396
  %v10398 = vrot.slane %v10389, %v10397
  %v10399 = vlaneseq
  %v10400 = vshrl.u32 %v10399, 7
  %v10401 = vsub.s32 2, %v10400
  %v10402 = vrot.slane %v10389, %v10401
  %v10403 = vlaneseq
  %v10404 = vshrl.u32 %v10403, 7
  %v10405 = vsub.s32 3, %v10404
  %v10406 = vrot.slane %v10389, %v10405
  %v10511 = vunpack.c.l.b16 %v10289
  %v10512 = vunpack.c.h.b16 %v10289
  %v10513 = vunpack.c.l.b16 %v10290
  %v10514 = vunpack.c.h.b16 %v10290
  %v10515 = vunpack.c.l.b16 %v10291
  %v10516 = vunpack.c.h.b16 %v10291
  %v10517 = vunpack.c.l.b16 %v10292
  %v10518 = vunpack.c.h.b16 %v10292
  %v10519 = vunpack.c.l.b16 %v10293
  %v10520 = vunpack.c.h.b16 %v10293
  %v10521 = vunpack.c.l.b16 %v10294
  %v10522 = vunpack.c.h.b16 %v10294
  %v10523 = vunpack.c.l.b16 %v10295
  %v10524 = vunpack.c.h.b16 %v10295
  %v10525 = vunpack.c.l.b16 %v10296
  %v10526 = vunpack.c.h.b16 %v10296
  %v10527 = vunpack.c.l.b16 %v10297
  %v10528 = vunpack.c.h.b16 %v10297
  %v10529 = vunpack.c.l.b16 %v10298
  %v10530 = vunpack.c.h.b16 %v10298
  %v10531 = vunpack.c.l.b16 %v10299
  %v10532 = vunpack.c.h.b16 %v10299
  %v10533 = vunpack.c.l.b16 %v10300
  %v10534 = vunpack.c.h.b16 %v10300
  %v10535 = vunpack.c.l.b16 %v10301
  %v10536 = vunpack.c.h.b16 %v10301
  %v10537 = vunpack.c.l.b16 %v10302
  %v10538 = vunpack.c.h.b16 %v10302
  %v10539 = vunpack.c.l.b16 %v10303
  %v10540 = vunpack.c.h.b16 %v10303
  %v10541 = vunpack.c.l.b16 %v10304
  %v10542 = vunpack.c.h.b16 %v10304
  %v10543 = vunpack.c.l.b16 %v10305
  %v10544 = vunpack.c.h.b16 %v10305
  %v10545 = vunpack.c.l.b16 %v10306
  %v10546 = vunpack.c.h.b16 %v10306
  %v10547 = vunpack.c.l.b16 %v10307
  %v10548 = vunpack.c.h.b16 %v10307
  %v10549 = vunpack.c.l.b16 %v10308
  %v10550 = vunpack.c.h.b16 %v10308
  %v10551 = vunpack.c.l.b16 %v10309
  %v10552 = vunpack.c.h.b16 %v10309
  %v10553 = vunpack.c.l.b16 %v10310
  %v10554 = vunpack.c.h.b16 %v10310
  %v10555 = vunpack.c.l.b16 %v10311
  %v10556 = vunpack.c.h.b16 %v10311
  %v10557 = vunpack.c.l.b16 %v10312
  %v10558 = vunpack.c.h.b16 %v10312
  %v10559 = vunpack.c.l.b16 %v10313
  %v10560 = vunpack.c.h.b16 %v10313
  %v10561 = vunpack.c.l.b16 %v10314
  %v10562 = vunpack.c.h.b16 %v10314
  %v10563 = vunpack.c.l.b16 %v10315
  %v10564 = vunpack.c.h.b16 %v10315
  %v10565 = vunpack.c.l.b16 %v10316
  %v10566 = vunpack.c.h.b16 %v10316
  %v10567 = vunpack.c.l.b16 %v10317
  %v10568 = vunpack.c.h.b16 %v10317
  %v10569 = vunpack.c.l.b16 %v10318
  %v10570 = vunpack.c.h.b16 %v10318
  %v10571 = vunpack.c.l.b16 %v10319
  %v10572 = vunpack.c.h.b16 %v10319
  %v10573 = vunpack.c.l.b16 %v10320
  %v10574 = vunpack.c.h.b16 %v10320
  %v10575 = vunpack.c.l.b16 %v10321
  %v10576 = vunpack.c.h.b16 %v10321
  %v10577 = vunpack.c.l.b16 %v10322
  %v10578 = vunpack.c.h.b16 %v10322
  %v10579 = vunpack.c.l.b16 %v10323
  %v10580 = vunpack.c.h.b16 %v10323
  %v10581 = vunpack.c.l.b16 %v10324
  %v10582 = vunpack.c.h.b16 %v10324
  %v10583 = vunpack.c.l.b16 %v10325
  %v10584 = vunpack.c.h.b16 %v10325
  %v10585 = vunpack.c.l.b16 %v10326
  %v10586 = vunpack.c.h.b16 %v10326
  %v10587 = vunpack.c.l.b16 %v10327
  %v10588 = vunpack.c.h.b16 %v10327
  %v10589 = vunpack.c.l.b16 %v10328
  %v10590 = vunpack.c.h.b16 %v10328
  %v10591 = vunpack.c.l.b16 %v10329
  %v10592 = vunpack.c.h.b16 %v10329
  %v10593 = vunpack.c.l.b16 %v10330
  %v10594 = vunpack.c.h.b16 %v10330
  %v10595 = vunpack.c.l.b16 %v10331
  %v10596 = vunpack.c.h.b16 %v10331
  %v10597 = vunpack.c.l.b16 %v10332
  %v10598 = vunpack.c.h.b16 %v10332
  %v10599 = vunpack.c.l.b16 %v10333
  %v10600 = vunpack.c.h.b16 %v10333
  %v10601 = vunpack.c.l.b16 %v10334
  %v10602 = vunpack.c.h.b16 %v10334
  %v10603 = vunpack.c.l.b16 %v10335
  %v10604 = vunpack.c.h.b16 %v10335
  %v10605 = vunpack.c.l.b16 %v10336
  %v10606 = vunpack.c.h.b16 %v10336
  %v10607 = vunpack.c.l.b16 %v10337
  %v10608 = vunpack.c.h.b16 %v10337
  %v10609 = vunpack.c.l.b16 %v10338
  %v10610 = vunpack.c.h.b16 %v10338
  %v10611 = vunpack.c.l.b16 %v10339
  %v10612 = vunpack.c.h.b16 %v10339
  %v10613 = vunpack.c.l.b16 %v10340
  %v10614 = vunpack.c.h.b16 %v10340
  %v10615 = vunpack.c.l.b16 %v10341
  %v10616 = vunpack.c.h.b16 %v10341
  %v10617 = vunpack.c.l.b16 %v10342
  %v10618 = vunpack.c.h.b16 %v10342
  %v10619 = vunpack.c.l.b16 %v10343
  %v10620 = vunpack.c.h.b16 %v10343
  %v10621 = vunpack.c.l.b16 %v10344
  %v10622 = vunpack.c.h.b16 %v10344
  %v10623 = vunpack.c.l.b16 %v10345
  %v10624 = vunpack.c.h.b16 %v10345
  %v10625 = vunpack.c.l.b16 %v10346
  %v10626 = vunpack.c.h.b16 %v10346
  %v10627 = vunpack.c.l.b16 %v10347
  %v10628 = vunpack.c.h.b16 %v10347
  %v10629 = vunpack.c.l.b16 %v10348
  %v10630 = vunpack.c.h.b16 %v10348
  %v10631 = vunpack.c.l.b16 %v10349
  %v10632 = vunpack.c.h.b16 %v10349
  %v10633 = vunpack.c.l.b16 %v10350
  %v10634 = vunpack.c.h.b16 %v10350
  %v10635 = vunpack.c.l.b16 %v10351
  %v10636 = vunpack.c.h.b16 %v10351
  %v10637 = vunpack.c.l.b16 %v10352
  %v10638 = vunpack.c.h.b16 %v10352
  %v10639 = vunpack.c.l.b16 %v10353
  %v10640 = vunpack.c.h.b16 %v10353
  %v10641 = vunpack.c.l.b16 %v10354
  %v10642 = vunpack.c.h.b16 %v10354
  %v10643 = vunpack.c.l.b16 %v10355
  %v10644 = vunpack.c.h.b16 %v10355
  %v10645 = vunpack.c.l.b16 %v10356
  %v10646 = vunpack.c.h.b16 %v10356
  %v10647 = vunpack.c.l.b16 %v10357
  %v10648 = vunpack.c.h.b16 %v10357
  %v10649 = vunpack.c.l.b16 %v10358
  %v10650 = vunpack.c.h.b16 %v10358
  %v10651 = vunpack.c.l.b16 %v10359
  %v10652 = vunpack.c.h.b16 %v10359
  %v10653 = vunpack.c.l.b16 %v10360
  %v10654 = vunpack.c.h.b16 %v10360
  %v10655 = vunpack.c.l.b16 %v10361
  %v10656 = vunpack.c.h.b16 %v10361
  %v10657 = vunpack.c.l.b16 %v10362
  %v10658 = vunpack.c.h.b16 %v10362
  %v10659 = vunpack.c.l.b16 %v10363
  %v10660 = vunpack.c.h.b16 %v10363
  %v10661 = vunpack.c.l.b16 %v10364
  %v10662 = vunpack.c.h.b16 %v10364
  %v10663 = vunpack.c.l.b16 %v10365
  %v10664 = vunpack.c.h.b16 %v10365
  %v10665 = vunpack.c.l.b16 %v10366
  %v10666 = vunpack.c.h.b16 %v10366
  %v10667 = vunpack.c.l.b16 %v10367
  %v10668 = vunpack.c.h.b16 %v10367
  %v10669 = vunpack.c.l.b16 %v10368
  %v10670 = vunpack.c.h.b16 %v10368
  %v10671 = vunpack.c.l.b16 %v10369
  %v10672 = vunpack.c.h.b16 %v10369
  %v10673 = vunpack.c.l.b16 %v10370
  %v10674 = vunpack.c.h.b16 %v10370
  %v10675 = vunpack.c.l.b16 %v10371
  %v10676 = vunpack.c.h.b16 %v10371
  %v10677 = vunpack.c.l.b16 %v10372
  %v10678 = vunpack.c.h.b16 %v10372
  %v10679 = vunpack.c.l.b16 %v10373
  %v10680 = vunpack.c.h.b16 %v10373
  %v10681 = vunpack.c.l.b16 %v10374
  %v10682 = vunpack.c.h.b16 %v10374
  %v10683 = vunpack.c.l.b16 %v10375
  %v10684 = vunpack.c.h.b16 %v10375
  %v10685 = vunpack.c.l.b16 %v10376
  %v10686 = vunpack.c.h.b16 %v10376
  %v10687 = vunpack.c.l.b16 %v10377
  %v10688 = vunpack.c.h.b16 %v10377
  %v10689 = vunpack.c.l.b16 %v10378
  %v10690 = vunpack.c.h.b16 %v10378
  %v10691 = vunpack.c.l.b16 %v10379
  %v10692 = vunpack.c.h.b16 %v10379
  %v10693 = vunpack.c.l.b16 %v10380
  %v10694 = vunpack.c.h.b16 %v10380
  %v10695 = vunpack.c.l.b16 %v10381
  %v10696 = vunpack.c.h.b16 %v10381
  %v10697 = vunpack.c.l.b16 %v10382
  %v10698 = vunpack.c.h.b16 %v10382
  %v10699 = vunpack.c.l.b16 %v10383
  %v10700 = vunpack.c.h.b16 %v10383
  %v10701 = vunpack.c.l.b16 %v10384
  %v10702 = vunpack.c.h.b16 %v10384
  %v10703 = vunpack.c.l.b16 %v10385
  %v10704 = vunpack.c.h.b16 %v10385
  %v10705 = vunpack.c.l.b16 %v10386
  %v10706 = vunpack.c.h.b16 %v10386
  %v10707 = vunpack.c.l.b16 %v10387
  %v10708 = vunpack.c.h.b16 %v10387
  %v10709 = vunpack.c.l.b16 %v10388
  %v10710 = vunpack.c.h.b16 %v10388
  %v10711 = vpack.c.b16 %v10515, %v10511
  %v10712 = vpack.c.b16 %v10516, %v10512
  %v10713 = vpack.c.b16 %v10517, %v10513
  %v10714 = vpack.c.b16 %v10518, %v10514
  %v10715 = vpack.c.b16 %v10523, %v10519
  %v10716 = vpack.c.b16 %v10524, %v10520
  %v10717 = vpack.c.b16 %v10525, %v10521
  %v10718 = vpack.c.b16 %v10526, %v10522
  %v10719 = vpack.c.b16 %v10531, %v10527
  %v10720 = vpack.c.b16 %v10532, %v10528
  %v10721 = vpack.c.b16 %v10533, %v10529
  %v10722 = vpack.c.b16 %v10534, %v10530
  %v10723 = vpack.c.b16 %v10539, %v10535
  %v10724 = vpack.c.b16 %v10540, %v10536
  %v10725 = vpack.c.b16 %v10541, %v10537
  %v10726 = vpack.c.b16 %v10542, %v10538
  %v10727 = vpack.c.b16 %v10547, %v10543
  %v10728 = vpack.c.b16 %v10548, %v10544
  %v10729 = vpack.c.b16 %v10549, %v10545
  %v10730 = vpack.c.b16 %v10550, %v10546
  %v10731 = vpack.c.b16 %v10555, %v10551
  %v10732 = vpack.c.b16 %v10556, %v10552
  %v10733 = vpack.c.b16 %v10557, %v10553
  %v10734 = vpack.c.b16 %v10558, %v10554
  %v10735 = vpack.c.b16 %v10563, %v10559
  %v10736 = vpack.c.b16 %v10564, %v10560
  %v10737 = vpack.c.b16 %v10565, %v10561
  %v10738 = vpack.c.b16 %v10566, %v10562
  %v10739 = vpack.c.b16 %v10571, %v10567
  %v10740 = vpack.c.b16 %v10572, %v10568
  %v10741 = vpack.c.b16 %v10573, %v10569
  %v10742 = vpack.c.b16 %v10574, %v10570
  %v10743 = vpack.c.b16 %v10579, %v10575
  %v10744 = vpack.c.b16 %v10580, %v10576
  %v10745 = vpack.c.b16 %v10581, %v10577
  %v10746 = vpack.c.b16 %v10582, %v10578
  %v10747 = vpack.c.b16 %v10587, %v10583
  %v10748 = vpack.c.b16 %v10588, %v10584
  %v10749 = vpack.c.b16 %v10589, %v10585
  %v10750 = vpack.c.b16 %v10590, %v10586
  %v10751 = vpack.c.b16 %v10595, %v10591
  %v10752 = vpack.c.b16 %v10596, %v10592
  %v10753 = vpack.c.b16 %v10597, %v10593
  %v10754 = vpack.c.b16 %v10598, %v10594
  %v10755 = vpack.c.b16 %v10603, %v10599
  %v10756 = vpack.c.b16 %v10604, %v10600
  %v10757 = vpack.c.b16 %v10605, %v10601
  %v10758 = vpack.c.b16 %v10606, %v10602
  %v10759 = vpack.c.b16 %v10611, %v10607
  %v10760 = vpack.c.b16 %v10612, %v10608
  %v10761 = vpack.c.b16 %v10613, %v10609
  %v10762 = vpack.c.b16 %v10614, %v10610
  %v10763 = vpack.c.b16 %v10619, %v10615
  %v10764 = vpack.c.b16 %v10620, %v10616
  %v10765 = vpack.c.b16 %v10621, %v10617
  %v10766 = vpack.c.b16 %v10622, %v10618
  %v10767 = vpack.c.b16 %v10627, %v10623
  %v10768 = vpack.c.b16 %v10628, %v10624
  %v10769 = vpack.c.b16 %v10629, %v10625
  %v10770 = vpack.c.b16 %v10630, %v10626
  %v10771 = vpack.c.b16 %v10635, %v10631
  %v10772 = vpack.c.b16 %v10636, %v10632
  %v10773 = vpack.c.b16 %v10637, %v10633
  %v10774 = vpack.c.b16 %v10638, %v10634
  %v10775 = vpack.c.b16 %v10643, %v10639
  %v10776 = vpack.c.b16 %v10644, %v10640
  %v10777 = vpack.c.b16 %v10645, %v10641
  %v10778 = vpack.c.b16 %v10646, %v10642
  %v10779 = vpack.c.b16 %v10651, %v10647
  %v10780 = vpack.c.b16 %v10652, %v10648
  %v10781 = vpack.c.b16 %v10653, %v10649
  %v10782 = vpack.c.b16 %v10654, %v10650
  %v10783 = vpack.c.b16 %v10659, %v10655
  %v10784 = vpack.c.b16 %v10660, %v10656
  %v10785 = vpack.c.b16 %v10661, %v10657
  %v10786 = vpack.c.b16 %v10662, %v10658
  %v10787 = vpack.c.b16 %v10667, %v10663
  %v10788 = vpack.c.b16 %v10668, %v10664
  %v10789 = vpack.c.b16 %v10669, %v10665
  %v10790 = vpack.c.b16 %v10670, %v10666
  %v10791 = vpack.c.b16 %v10675, %v10671
  %v10792 = vpack.c.b16 %v10676, %v10672
  %v10793 = vpack.c.b16 %v10677, %v10673
  %v10794 = vpack.c.b16 %v10678, %v10674
  %v10795 = vpack.c.b16 %v10683, %v10679
  %v10796 = vpack.c.b16 %v10684, %v10680
  %v10797 = vpack.c.b16 %v10685, %v10681
  %v10798 = vpack.c.b16 %v10686, %v10682
  %v10799 = vpack.c.b16 %v10691, %v10687
  %v10800 = vpack.c.b16 %v10692, %v10688
  %v10801 = vpack.c.b16 %v10693, %v10689
  %v10802 = vpack.c.b16 %v10694, %v10690
  %v10803 = vpack.c.b16 %v10699, %v10695
  %v10804 = vpack.c.b16 %v10700, %v10696
  %v10805 = vpack.c.b16 %v10701, %v10697
  %v10806 = vpack.c.b16 %v10702, %v10698
  %v10807 = vpack.c.b16 %v10707, %v10703
  %v10808 = vpack.c.b16 %v10708, %v10704
  %v10809 = vpack.c.b16 %v10709, %v10705
  %v10810 = vpack.c.b16 %v10710, %v10706
  %v10912 = vsel %vm2001, %v10288, 0
  %10914 = vmatprep.subr.bf16.mxu0 %v10712
  %10915 = vmatpush1.bf16.msra.mxu0 %v10711
  %10916 = vmatprep.subr.bf16.mxu0 %v10716
  %10917 = vmatpush1.bf16.msra.mxu0 %v10715
  %10918 = vmatprep.subr.bf16.mxu0 %v10720
  %10919 = vmatpush1.bf16.msra.mxu0 %v10719
  %10920 = vmatprep.subr.bf16.mxu0 %v10724
  %10921 = vmatpush1.bf16.msra.mxu0 %v10723
  %10922 = vmatprep.subr.bf16.mxu0 %v10728
  %10923 = vmatpush1.bf16.msra.mxu0 %v10727
  %10924 = vmatprep.subr.bf16.mxu0 %v10732
  %10925 = vmatpush1.bf16.msra.mxu0 %v10731
  %10926 = vmatprep.subr.bf16.mxu0 %v10736
  %10927 = vmatpush1.bf16.msra.mxu0 %v10735
  %10928 = vmatprep.subr.bf16.mxu0 %v10740
  %10929 = vmatpush1.bf16.msra.mxu0 %v10739
  %10930 = vmatprep.subr.bf16.mxu0 %v10744
  %10931 = vmatpush1.bf16.msra.mxu0 %v10743
  %10932 = vmatprep.subr.bf16.mxu0 %v10748
  %10933 = vmatpush1.bf16.msra.mxu0 %v10747
  %10934 = vmatprep.subr.bf16.mxu0 %v10752
  %10935 = vmatpush1.bf16.msra.mxu0 %v10751
  %10936 = vmatprep.subr.bf16.mxu0 %v10756
  %10937 = vmatpush1.bf16.msra.mxu0 %v10755
  %10938 = vmatprep.subr.bf16.mxu0 %v10760
  %10939 = vmatpush1.bf16.msra.mxu0 %v10759
  %10940 = vmatprep.subr.bf16.mxu0 %v10764
  %10941 = vmatpush1.bf16.msra.mxu0 %v10763
  %10942 = vmatprep.subr.bf16.mxu0 %v10768
  %10943 = vmatpush1.bf16.msra.mxu0 %v10767
  %10944 = vmatprep.subr.bf16.mxu0 %v10772
  %10945 = vmatpush1.bf16.msra.mxu0 %v10771
  %10946 = vmatprep.mubr.bf16.mxu0 %v10286
  %10947 = vmatmul.mubr.bf16.gmra.mrb[0].mxu0 %v10285
  %v10948 = vpop.f32.mrb[0].mxu0
  %v10949 = vadd.f32 %v10394, %v10948
  %v10950 = vpop.f32.mrb[0].mxu0
  %v10951 = vadd.f32 %v10398, %v10950
  %v10952 = vpop.f32.mrb[0].mxu0
  %v10953 = vadd.f32 %v10394, %v10952
  %v10954 = vpop.f32.mrb[0].mxu0
  %v10955 = vadd.f32 %v10398, %v10954
  %10956 = vdwg.mxu0
  %10957 = vmatprep.subr.bf16.mxu0 %v10776
  %10958 = vmatpush1.bf16.msra.mxu0 %v10775
  %10959 = vmatprep.subr.bf16.mxu0 %v10780
  %10960 = vmatpush1.bf16.msra.mxu0 %v10779
  %10961 = vmatprep.subr.bf16.mxu0 %v10784
  %10962 = vmatpush1.bf16.msra.mxu0 %v10783
  %10963 = vmatprep.subr.bf16.mxu0 %v10788
  %10964 = vmatpush1.bf16.msra.mxu0 %v10787
  %10965 = vmatprep.subr.bf16.mxu0 %v10792
  %10966 = vmatpush1.bf16.msra.mxu0 %v10791
  %10967 = vmatprep.subr.bf16.mxu0 %v10796
  %10968 = vmatpush1.bf16.msra.mxu0 %v10795
  %10969 = vmatprep.subr.bf16.mxu0 %v10800
  %10970 = vmatpush1.bf16.msra.mxu0 %v10799
  %10971 = vmatprep.subr.bf16.mxu0 %v10804
  %10972 = vmatpush1.bf16.msra.mxu0 %v10803
  %10973 = vmatprep.subr.bf16.mxu0 %v10808
  %10974 = vmatpush1.bf16.msra.mxu0 %v10807
  %10975 = vmatprep.subr.bf16.mxu0 0
  %10976 = vmatpush1.bf16.msra.mxu0 0
  %10977 = vmatprep.subr.bf16.mxu0 0
  %10978 = vmatpush1.bf16.msra.mxu0 0
  %10979 = vmatprep.subr.bf16.mxu0 0
  %10980 = vmatpush1.bf16.msra.mxu0 0
  %10981 = vmatprep.subr.bf16.mxu0 0
  %10982 = vmatpush1.bf16.msra.mxu0 0
  %10983 = vmatprep.subr.bf16.mxu0 0
  %10984 = vmatpush1.bf16.msra.mxu0 0
  %10985 = vmatprep.subr.bf16.mxu0 0
  %10986 = vmatpush1.bf16.msra.mxu0 0
  %10987 = vmatprep.subr.bf16.mxu0 0
  %10988 = vmatpush1.bf16.msra.mxu0 0
  %10989 = vmatprep.mubr.bf16.mxu0 %v10912
  %10990 = vmatmul.mubr.bf16.gmra.mrb[0].mxu0 %v10287
  %v10991 = vpop.f32.mrb[0].mxu0
  %v10992 = vadd.f32 %v10949, %v10991
  %v10993 = vpop.f32.mrb[0].mxu0
  %v10994 = vadd.f32 %v10951, %v10993
  %v10995 = vpop.f32.mrb[0].mxu0
  %v10996 = vadd.f32 %v10953, %v10995
  %v10997 = vpop.f32.mrb[0].mxu0
  %v10998 = vadd.f32 %v10955, %v10997
  %10999 = vdwg.mxu0
  %11000 = vmatprep.subr.bf16.mxu0 %v10714
  %11001 = vmatpush1.bf16.msra.mxu0 %v10713
  %11002 = vmatprep.subr.bf16.mxu0 %v10718
  %11003 = vmatpush1.bf16.msra.mxu0 %v10717
  %11004 = vmatprep.subr.bf16.mxu0 %v10722
  %11005 = vmatpush1.bf16.msra.mxu0 %v10721
  %11006 = vmatprep.subr.bf16.mxu0 %v10726
  %11007 = vmatpush1.bf16.msra.mxu0 %v10725
  %11008 = vmatprep.subr.bf16.mxu0 %v10730
  %11009 = vmatpush1.bf16.msra.mxu0 %v10729
  %11010 = vmatprep.subr.bf16.mxu0 %v10734
  %11011 = vmatpush1.bf16.msra.mxu0 %v10733
  %11012 = vmatprep.subr.bf16.mxu0 %v10738
  %11013 = vmatpush1.bf16.msra.mxu0 %v10737
  %11014 = vmatprep.subr.bf16.mxu0 %v10742
  %11015 = vmatpush1.bf16.msra.mxu0 %v10741
  %11016 = vmatprep.subr.bf16.mxu0 %v10746
  %11017 = vmatpush1.bf16.msra.mxu0 %v10745
  %11018 = vmatprep.subr.bf16.mxu0 %v10750
  %11019 = vmatpush1.bf16.msra.mxu0 %v10749
  %11020 = vmatprep.subr.bf16.mxu0 %v10754
  %11021 = vmatpush1.bf16.msra.mxu0 %v10753
  %11022 = vmatprep.subr.bf16.mxu0 %v10758
  %11023 = vmatpush1.bf16.msra.mxu0 %v10757
  %11024 = vmatprep.subr.bf16.mxu0 %v10762
  %11025 = vmatpush1.bf16.msra.mxu0 %v10761
  %11026 = vmatprep.subr.bf16.mxu0 %v10766
  %11027 = vmatpush1.bf16.msra.mxu0 %v10765
  %11028 = vmatprep.subr.bf16.mxu0 %v10770
  %11029 = vmatpush1.bf16.msra.mxu0 %v10769
  %11030 = vmatprep.subr.bf16.mxu0 %v10774
  %11031 = vmatpush1.bf16.msra.mxu0 %v10773
  %11032 = vmatprep.mubr.bf16.mxu0 %v10286
  %11033 = vmatmul.mubr.bf16.gmra.mrb[0].mxu0 %v10285
  %v11034 = vpop.f32.mrb[0].mxu0
  %v11035 = vadd.f32 %v10402, %v11034
  %v11036 = vpop.f32.mrb[0].mxu0
  %v11037 = vadd.f32 %v10406, %v11036
  %v11038 = vpop.f32.mrb[0].mxu0
  %v11039 = vadd.f32 %v10402, %v11038
  %v11040 = vpop.f32.mrb[0].mxu0
  %v11041 = vadd.f32 %v10406, %v11040
  %11042 = vdwg.mxu0
  %11043 = vmatprep.subr.bf16.mxu0 %v10778
  %11044 = vmatpush1.bf16.msra.mxu0 %v10777
  %11045 = vmatprep.subr.bf16.mxu0 %v10782
  %11046 = vmatpush1.bf16.msra.mxu0 %v10781
  %11047 = vmatprep.subr.bf16.mxu0 %v10786
  %11048 = vmatpush1.bf16.msra.mxu0 %v10785
  %11049 = vmatprep.subr.bf16.mxu0 %v10790
  %11050 = vmatpush1.bf16.msra.mxu0 %v10789
  %11051 = vmatprep.subr.bf16.mxu0 %v10794
  %11052 = vmatpush1.bf16.msra.mxu0 %v10793
  %11053 = vmatprep.subr.bf16.mxu0 %v10798
  %11054 = vmatpush1.bf16.msra.mxu0 %v10797
  %11055 = vmatprep.subr.bf16.mxu0 %v10802
  %11056 = vmatpush1.bf16.msra.mxu0 %v10801
  %11057 = vmatprep.subr.bf16.mxu0 %v10806
  %11058 = vmatpush1.bf16.msra.mxu0 %v10805
  %11059 = vmatprep.subr.bf16.mxu0 %v10810
  %11060 = vmatpush1.bf16.msra.mxu0 %v10809
  %11061 = vmatprep.subr.bf16.mxu0 0
  %11062 = vmatpush1.bf16.msra.mxu0 0
  %11063 = vmatprep.subr.bf16.mxu0 0
  %11064 = vmatpush1.bf16.msra.mxu0 0
  %11065 = vmatprep.subr.bf16.mxu0 0
  %11066 = vmatpush1.bf16.msra.mxu0 0
  %11067 = vmatprep.subr.bf16.mxu0 0
  %11068 = vmatpush1.bf16.msra.mxu0 0
  %11069 = vmatprep.subr.bf16.mxu0 0
  %11070 = vmatpush1.bf16.msra.mxu0 0
  %11071 = vmatprep.subr.bf16.mxu0 0
  %11072 = vmatpush1.bf16.msra.mxu0 0
  %11073 = vmatprep.subr.bf16.mxu0 0
  %11074 = vmatpush1.bf16.msra.mxu0 0
  %11075 = vmatprep.mubr.bf16.mxu0 %v10912
  %11076 = vmatmul.mubr.bf16.gmra.mrb[0].mxu0 %v10287
  %v11077 = vpop.f32.mrb[0].mxu0
  %v11078 = vadd.f32 %v11035, %v11077
  %v11079 = vpop.f32.mrb[0].mxu0
  %v11080 = vadd.f32 %v11037, %v11079
  %v11081 = vpop.f32.mrb[0].mxu0
  %v11082 = vadd.f32 %v11039, %v11081
  %v11083 = vpop.f32.mrb[0].mxu0
  %v11084 = vadd.f32 %v11041, %v11083
  %11085 = vdwg.mxu0
  %v11086 = vmax.f32 %v10992, 0.0
  %v11087 = vmax.f32 %v10994, 0.0
  %v11088 = vmax.f32 %v11078, 0.0
  %v11089 = vmax.f32 %v11080, 0.0
  %v11090 = vmax.f32 %v10996, 0.0
  %v11091 = vmax.f32 %v10998, 0.0
  %v11092 = vmax.f32 %v11082, 0.0
  %v11093 = vmax.f32 %v11084, 0.0
  %v11094 = vld [vmem:[%s55] sm:$0xf]
  %v11096 = vlaneseq
  %v11097 = vshrl.u32 %v11096, 7
  %v11098 = vsub.s32 0, %v11097
  %v11099 = vrot.slane %v11094, %v11098
  %v11100 = vlaneseq
  %v11101 = vshrl.u32 %v11100, 7
  %v11102 = vsub.s32 1, %v11101
  %v11103 = vrot.slane %v11094, %v11102
  %v11104 = vlaneseq
  %v11105 = vshrl.u32 %v11104, 7
  %v11106 = vsub.s32 2, %v11105
  %v11107 = vrot.slane %v11094, %v11106
  %v11108 = vlaneseq
  %v11109 = vshrl.u32 %v11108, 7
  %v11110 = vsub.s32 3, %v11109
  %v11111 = vrot.slane %v11094, %v11110
  %v11116 = vmul.f32 %v11086, %v11099
  %v11117 = vmul.f32 %v11087, %v11103
  %v11118 = vmul.f32 %v11088, %v11107
  %v11119 = vmul.f32 %v11089, %v11111
  %v11120 = vmul.f32 %v11090, %v11099
  %v11121 = vmul.f32 %v11091, %v11103
  %v11122 = vmul.f32 %v11092, %v11107
  %v11123 = vmul.f32 %v11093, %v11111
  %v11124 = vadd.f32 %v11116, %v11117
  %v11125 = vadd.f32 %v11124, %v11118
  %v11126 = vsel %vm2001, %v11119, 0.0
  %v11127 = vadd.f32 %v11125, %v11126
  %11128 = vadd.xlane.f32.xlu0 %v11127
  %v11129 = vpop.xlane.xlu0 %11128
  %v11130 = vsel %vm2582, %v11120, 0.0
  %v11131 = vsel %vm2582, %v11121, 0.0
  %v11132 = vadd.f32 %v11130, %v11131
  %v11133 = vsel %vm2582, %v11122, 0.0
  %v11134 = vadd.f32 %v11132, %v11133
  %v11135 = vsel %vm4464, %v11123, 0.0
  %v11136 = vadd.f32 %v11134, %v11135
  %11137 = vadd.xlane.f32.xlu0 %v11136
  %v11138 = vpop.xlane.xlu0 %11137
  %v11139 = vld [vmem:[#allocation3] sm:$0x1]
  %v11141 = vlaneseq
  %v11142 = vshrl.u32 %v11141, 7
  %v11143 = vsub.s32 0, %v11142
  %v11144 = vrot.slane %v11139, %v11143
  %v11146 = vadd.f32 %v11129, %v11144
  %v11147 = vadd.f32 %v11138, %v11144
  %vm11148 = vcmask 7168
  %11149 = vst.msk [vmem:[%s59] sm:$0xff] %vm11148, %v11146
  %vm11150 = vcmask 1024
  %11151 = vst.msk [vmem:[%s59 + $0x8] sm:$0x3] %vm11150, %v11147
  // Predicated region
  $region118: #{_forward.3} parent=0 // pred_check
    _
  $region119: #{_forward.3} parent=0 // pred_check_branch
    %11153 = sbr.rel (0) target = $region121
  $region120: #{_forward.3} parent=0 // pred_region
    _
  $region121: #{_forward.3} parent=0 // pred_fallthru
    _
  // Predicated region
  $region122: #{_forward.3} parent=0 // pred_check
    _
  $region123: #{_forward.3} parent=0 // pred_check_branch
    %11155 = sbr.rel (0) target = $region125
  $region124: #{_forward.3} parent=0 // pred_region
    _
  $region125: #{_forward.3} parent=0 // pred_fallthru
    _

</llo_original>
